<compile_context>
chip_gen: v7x
topology: tpu7x:2x2x1
jax: 0.10.0
libtpu: 0.0.40
codegen_flags: <defaults>
</compile_context>

<pallas_src>
import functools

import numpy as np
import jax
import jax.numpy as jnp
from jax import lax
from jax.experimental import pallas as pl
from jax.experimental.pallas import tpu as pltpu

EPS = 1e-5  # nn.InstanceNorm2d default eps (affine=False, biased variance)


# ---------------------------------------------------------------------------
# Exact bilinear x2 upsample operator (nn.Upsample(scale=2, bilinear,
# align_corners=False) semantics, edge clamp), built on the host.
# ---------------------------------------------------------------------------
def _bilinear_x2_matrix(n):
    a = np.zeros((2 * n, n), np.float32)
    for x in range(2 * n):
        s = (x + 0.5) * 0.5 - 0.5
        f = int(np.floor(s))
        t = s - f
        lo = min(max(f, 0), n - 1)
        hi = min(max(f + 1, 0), n - 1)
        a[x, lo] += 1.0 - t
        a[x, hi] += t
    return a


# ---------------------------------------------------------------------------
# Fused head kernel: upsample + concat-conv3x3 + IN + ReLU + conv3x3 + IN +
# ReLU + 1x1 conv + bias.   One grid step == one batch image.
# ---------------------------------------------------------------------------
def _fused_head_kernel(f2_ref, f1_ref, up_mat_ref,
                       w1a_ref, w1b_ref, w2_ref, wd_ref, bd_ref,
                       o_ref,
                       p2_ref, pu_ref, py_ref,
                       *, H, W, C2, C1, Cmid, Cout):
    HW = H * W

    def inst_norm_relu(acc):
        # Single-pass stats (sum / sum-of-squares), biased variance, f32.
        s = jnp.sum(acc, axis=0, keepdims=True)
        ss = jnp.sum(acc * acc, axis=0, keepdims=True)
        mean = s / float(HW)
        var = jnp.maximum(ss / float(HW) - mean * mean, 0.0)
        return jnp.maximum((acc - mean) * lax.rsqrt(var + EPS), 0.0)

    # ---- bilinear x2 upsample of the 160-ch stride-16 features (MXU) ----
    x1 = f1_ref[0]                                              # (Hh*Wh, C1) f32
    up = jnp.dot(up_mat_ref[...], x1,
                 preferred_element_type=jnp.float32)            # (H*W, C1)

    # ---- zero-padded conv inputs live in VMEM scratch (bf16 MXU operands) ----
    p2_ref[...] = jnp.zeros_like(p2_ref)
    pu_ref[...] = jnp.zeros_like(pu_ref)
    p2_ref[pl.ds(1, H), pl.ds(1, W), :] = f2_ref[0].astype(p2_ref.dtype)
    pu_ref[pl.ds(1, H), pl.ds(1, W), :] = up.reshape(H, W, C1).astype(pu_ref.dtype)

    # ---- conv1: 3x3 pad=1, split-K (56ch + 160ch) -> 128, IN, ReLU ----
    acc = jnp.zeros((HW, Cmid), jnp.float32)
    for dy in range(3):
        for dx in range(3):
            t = dy * 3 + dx
            a = p2_ref[pl.ds(dy, H), pl.ds(dx, W), :].reshape(HW, C2)
            b = pu_ref[pl.ds(dy, H), pl.ds(dx, W), :].reshape(HW, C1)
            acc = acc + jnp.dot(a, w1a_ref[t], preferred_element_type=jnp.float32)
            acc = acc + jnp.dot(b, w1b_ref[t], preferred_element_type=jnp.float32)
    y1 = inst_norm_relu(acc)                                    # (HW, 128) f32

    # ---- conv2: 3x3 pad=1, 128 -> 128, IN, ReLU ----
    py_ref[...] = jnp.zeros_like(py_ref)
    py_ref[pl.ds(1, H), pl.ds(1, W), :] = y1.reshape(H, W, Cmid).astype(py_ref.dtype)
    acc2 = jnp.zeros((HW, Cmid), jnp.float32)
    for dy in range(3):
        for dx in range(3):
            t = dy * 3 + dx
            c = py_ref[pl.ds(dy, H), pl.ds(dx, W), :].reshape(HW, Cmid)
            acc2 = acc2 + jnp.dot(c, w2_ref[t], preferred_element_type=jnp.float32)
    y2 = inst_norm_relu(acc2)                                   # (HW, 128) f32

    # ---- depth_layer: 1x1 conv with bias ----
    out = jnp.dot(y2, wd_ref[...], preferred_element_type=jnp.float32) + bd_ref[...]
    o_ref[0] = out.reshape(H, W, Cout).astype(o_ref.dtype)


def upsampling_head(f2, f1, w1, w2, wd, bd):
    """f2: (B,H,W,56) stride-8 feats, f1: (B,Hh,Wh,160) stride-16 feats (NHWC)."""
    B, H, W, C2 = f2.shape
    _, Hh, Wh, C1 = f1.shape
    Cmid = w2.shape[-1]
    Cout = wd.shape[-1]

    # Exact 2-D bilinear x2 operator (kron of the 1-D operators), f32.
    up_mat = jnp.asarray(np.kron(_bilinear_x2_matrix(Hh), _bilinear_x2_matrix(Wh)))

    # Weight prep: HWIO -> (9, Cin, Cout), bf16 MXU operands.
    # torch.cat([x, x_to_upsample]) => first 56 input channels are f2 (reduction_3),
    # the next 160 are the upsampled reduction_4 features.
    w1_9 = w1.reshape(9, C2 + C1, Cmid).astype(jnp.bfloat16)
    w1a = w1_9[:, :C2, :]
    w1b = w1_9[:, C2:, :]
    w2_9 = w2.reshape(9, Cmid, Cmid).astype(jnp.bfloat16)

    f1_flat = f1.reshape(B, Hh * Wh, C1)

    kernel = functools.partial(_fused_head_kernel, H=H, W=W,
                               C2=C2, C1=C1, Cmid=Cmid, Cout=Cout)
    return pl.pallas_call(
        kernel,
        out_shape=jax.ShapeDtypeStruct((B, H, W, Cout), jnp.float32),
        grid=(B,),
        in_specs=[
            pl.BlockSpec((1, H, W, C2), lambda b: (b, 0, 0, 0)),
            pl.BlockSpec((1, Hh * Wh, C1), lambda b: (b, 0, 0)),
            pl.BlockSpec((H * W, Hh * Wh), lambda b: (0, 0)),
            pl.BlockSpec((9, C2, Cmid), lambda b: (0, 0, 0)),
            pl.BlockSpec((9, C1, Cmid), lambda b: (0, 0, 0)),
            pl.BlockSpec((9, Cmid, Cmid), lambda b: (0, 0, 0)),
            pl.BlockSpec((Cmid, Cout), lambda b: (0, 0)),
            pl.BlockSpec((1, Cout), lambda b: (0, 0)),
        ],
        out_specs=pl.BlockSpec((1, H, W, Cout), lambda b: (b, 0, 0, 0)),
        scratch_shapes=[
            pltpu.VMEM((H + 2, W + 2, C2), jnp.bfloat16),
            pltpu.VMEM((H + 2, W + 2, C1), jnp.bfloat16),
            pltpu.VMEM((H + 2, W + 2, Cmid), jnp.bfloat16),
        ],
        compiler_params=pltpu.CompilerParams(
            dimension_semantics=("parallel",)),
    )(f2, f1_flat, up_mat, w1a, w1b, w2_9, wd, bd)


# ---------------------------------------------------------------------------
# Stand-in backbone (plain JAX, NHWC, static strides).
# TODO(synk): EfficientNet-b4 pretrained backbone (_conv_stem + MBConv blocks
# 0..21) is not reproducible in-script; this stand-in only matches the channel
# counts / strides of the endpoints Encoder_eff(downsample=8,'b4') consumes:
#   reduction_3: 56 ch @ stride 8, reduction_4: 160 ch @ stride 16.
# ---------------------------------------------------------------------------
def _conv_nhwc(x, w, stride):
    return lax.conv_general_dilated(
        x, w, (stride, stride), "SAME",
        dimension_numbers=("NHWC", "HWIO", "NHWC"))


def standin_backbone(x_nhwc, bb):
    h = x_nhwc
    for w in bb["stem_w"]:                       # three stride-2 stages -> /8
        h = jax.nn.relu(_conv_nhwc(h, w, 2))
    red3 = h                                     # (B, H/8,  W/8,  56)
    red4 = jax.nn.relu(_conv_nhwc(red3, bb["red4_w"], 2))  # (B, H/16, W/16, 160)
    return red3, red4


# ---------------------------------------------------------------------------
# Encoder_eff forward (downsample=8, version='b4')
# ---------------------------------------------------------------------------
def encoder_eff_forward(x_nchw, params):
    x_nhwc = jnp.transpose(x_nchw, (0, 2, 3, 1))
    red3, red4 = standin_backbone(x_nhwc, params["backbone"])
    y = upsampling_head(red3, red4,
                        params["up_conv1"], params["up_conv2"],
                        params["depth_w"], params["depth_b"])
    return jnp.transpose(y, (0, 3, 1, 2))        # back to NCHW


def init_params(key, C):
    ks = jax.random.split(key, 8)

    def w(k, shape, fan_in):
        return jax.random.normal(k, shape, jnp.float32) / jnp.sqrt(fan_in)

    backbone = {
        "stem_w": [
            w(ks[0], (3, 3, 3, 32), 27),
            w(ks[1], (3, 3, 32, 48), 288),
            w(ks[2], (3, 3, 48, 56), 432),
        ],
        "red4_w": w(ks[3], (3, 3, 56, 160), 504),
    }
    return {
        "backbone": backbone,
        # UpsamplingConcat: Conv2d(216,128,3,pad=1,bias=False) x2 (HWIO layout)
        "up_conv1": w(ks[4], (3, 3, 216, 128), 9 * 216),
        "up_conv2": w(ks[5], (3, 3, 128, 128), 9 * 128),
        # depth_layer: Conv2d(128, C, 1) with bias
        "depth_w": w(ks[6], (128, C), 128),
        "depth_b": jax.random.normal(ks[7], (1, C), jnp.float32) * 0.01,
    }


if __name__ == "__main__":
    C_OUT = 32
    B, H_IN, W_IN = 2, 64, 64

    key = jax.random.PRNGKey(0)
    kx, kp = jax.random.split(key)
    x = jax.random.normal(kx, (B, 3, H_IN, W_IN), jnp.float32)
    params = init_params(kp, C_OUT)

    out = jax.jit(encoder_eff_forward)(x, params)
    out = jax.block_until_ready(out)

    assert out.shape == (B, C_OUT, H_IN // 8, W_IN // 8), out.shape
    assert bool(jnp.isfinite(out).all())
    print("KERNEL_OK")
</pallas_src>

<mosaic_0001>
module attributes {stable_mosaic.version = 11 : i64} {
  func.func @_fused_head_kernel(%arg0: i32, %arg1: memref<1x8x8x56xf32, #tpu.memory_space<vmem>>, %arg2: memref<1x16x160xf32, #tpu.memory_space<vmem>>, %arg3: memref<64x16xf32, #tpu.memory_space<vmem>>, %arg4: memref<9x56x128xbf16, #tpu.memory_space<vmem>>, %arg5: memref<9x160x128xbf16, #tpu.memory_space<vmem>>, %arg6: memref<9x128x128xbf16, #tpu.memory_space<vmem>>, %arg7: memref<128x32xf32, #tpu.memory_space<vmem>>, %arg8: memref<1x32xf32, #tpu.memory_space<vmem>>, %arg9: memref<1x8x8x32xf32, #tpu.memory_space<vmem>>, %arg10: memref<10x10x56xbf16, #tpu.memory_space<vmem>>, %arg11: memref<10x10x160xbf16, #tpu.memory_space<vmem>>, %arg12: memref<10x10x128xbf16, #tpu.memory_space<vmem>>) attributes {dimension_semantics = [#tpu.dimension_semantics<parallel>], iteration_bounds = array<i64: 2>, scalar_prefetch = 0 : i64, scratch_operands = 3 : i64, tpu.core_type = #tpu.core_type<tc>, window_params = [{transform_indices = @transform_0, window_bounds = array<i64: 1, 8, 8, 56>}, {transform_indices = @transform_1, window_bounds = array<i64: 1, 16, 160>}, {pipeline_mode = #tpu.pipeline_mode<synchronous>, transform_indices = @transform_2, window_bounds = array<i64: 64, 16>}, {pipeline_mode = #tpu.pipeline_mode<synchronous>, transform_indices = @transform_3, window_bounds = array<i64: 9, 56, 128>}, {pipeline_mode = #tpu.pipeline_mode<synchronous>, transform_indices = @transform_4, window_bounds = array<i64: 9, 160, 128>}, {pipeline_mode = #tpu.pipeline_mode<synchronous>, transform_indices = @transform_5, window_bounds = array<i64: 9, 128, 128>}, {pipeline_mode = #tpu.pipeline_mode<synchronous>, transform_indices = @transform_6, window_bounds = array<i64: 128, 32>}, {pipeline_mode = #tpu.pipeline_mode<synchronous>, transform_indices = @transform_7, window_bounds = array<i64: 1, 32>}, {transform_indices = @transform_8, window_bounds = array<i64: 1, 8, 8, 32>}]} {
    %c0 = arith.constant 0 : index
    %c0_0 = arith.constant 0 : index
    %c0_1 = arith.constant 0 : index
    %0 = vector.load %arg2[%c0, %c0_0, %c0_1] : memref<1x16x160xf32, #tpu.memory_space<vmem>>, vector<1x16x160xf32>
    %1 = vector.shape_cast %0 : vector<1x16x160xf32> to vector<16x160xf32>
    %c0_2 = arith.constant 0 : index
    %c0_3 = arith.constant 0 : index
    %2 = vector.load %arg3[%c0_2, %c0_3] : memref<64x16xf32, #tpu.memory_space<vmem>>, vector<64x16xf32>
    %cst = arith.constant dense<0.000000e+00> : vector<64x160xf32>
    %3 = tpu.matmul %2, %1, %cst {dimension_numbers = #tpu.dot_dimension_numbers<[1], [0], [0], [1], [0, 0, 1, 1], [], []>} : vector<64x16xf32>, vector<16x160xf32>, vector<64x160xf32> -> vector<64x160xf32>
    %cst_4 = arith.constant 0.000000e+00 : bf16
    %4 = vector.broadcast %cst_4 : bf16 to vector<10x10x56xbf16>
    %c0_5 = arith.constant 0 : index
    %c0_6 = arith.constant 0 : index
    %c0_7 = arith.constant 0 : index
    %5 = vector.load %arg10[%c0_5, %c0_6, %c0_7] : memref<10x10x56xbf16, #tpu.memory_space<vmem>>, vector<10x10x56xbf16>
    tpu.vector_store %arg10[%c0_5, %c0_6, %c0_7], %4 {strides = array<i32>} : memref<10x10x56xbf16, #tpu.memory_space<vmem>>, vector<10x10x56xbf16>,
    %cst_8 = arith.constant 0.000000e+00 : bf16
    %6 = vector.broadcast %cst_8 : bf16 to vector<10x10x160xbf16>
    %c0_9 = arith.constant 0 : index
    %c0_10 = arith.constant 0 : index
    %c0_11 = arith.constant 0 : index
    %7 = vector.load %arg11[%c0_9, %c0_10, %c0_11] : memref<10x10x160xbf16, #tpu.memory_space<vmem>>, vector<10x10x160xbf16>
    tpu.vector_store %arg11[%c0_9, %c0_10, %c0_11], %6 {strides = array<i32>} : memref<10x10x160xbf16, #tpu.memory_space<vmem>>, vector<10x10x160xbf16>,
    %c0_12 = arith.constant 0 : index
    %c0_13 = arith.constant 0 : index
    %c0_14 = arith.constant 0 : index
    %c0_15 = arith.constant 0 : index
    %8 = vector.load %arg1[%c0_12, %c0_13, %c0_14, %c0_15] : memref<1x8x8x56xf32, #tpu.memory_space<vmem>>, vector<1x8x8x56xf32>
    %9 = vector.shape_cast %8 : vector<1x8x8x56xf32> to vector<8x8x56xf32>
    %10 = arith.truncf %9 : vector<8x8x56xf32> to vector<8x8x56xbf16>
    %c1 = arith.constant 1 : index
    %c1_16 = arith.constant 1 : index
    %c0_17 = arith.constant 0 : index
    %11 = vector.load %arg10[%c1, %c1_16, %c0_17] : memref<10x10x56xbf16, #tpu.memory_space<vmem>>, vector<8x8x56xbf16>
    tpu.vector_store %arg10[%c1, %c1_16, %c0_17], %10 {strides = array<i32>} : memref<10x10x56xbf16, #tpu.memory_space<vmem>>, vector<8x8x56xbf16>,
    %12 = vector.shape_cast %3 : vector<64x160xf32> to vector<8x8x160xf32>
    %13 = arith.truncf %12 : vector<8x8x160xf32> to vector<8x8x160xbf16>
    %c1_18 = arith.constant 1 : index
    %c1_19 = arith.constant 1 : index
    %c0_20 = arith.constant 0 : index
    %14 = vector.load %arg11[%c1_18, %c1_19, %c0_20] : memref<10x10x160xbf16, #tpu.memory_space<vmem>>, vector<8x8x160xbf16>
    tpu.vector_store %arg11[%c1_18, %c1_19, %c0_20], %13 {strides = array<i32>} : memref<10x10x160xbf16, #tpu.memory_space<vmem>>, vector<8x8x160xbf16>,
    %cst_21 = arith.constant 0.000000e+00 : f32
    %15 = vector.broadcast %cst_21 : f32 to vector<64x128xf32>
    %c0_22 = arith.constant 0 : index
    %c0_23 = arith.constant 0 : index
    %c0_24 = arith.constant 0 : index
    %16 = vector.load %arg10[%c0_22, %c0_23, %c0_24] : memref<10x10x56xbf16, #tpu.memory_space<vmem>>, vector<8x8x56xbf16>
    %17 = vector.shape_cast %16 : vector<8x8x56xbf16> to vector<64x56xbf16>
    %c0_25 = arith.constant 0 : index
    %c0_26 = arith.constant 0 : index
    %c0_27 = arith.constant 0 : index
    %18 = vector.load %arg11[%c0_25, %c0_26, %c0_27] : memref<10x10x160xbf16, #tpu.memory_space<vmem>>, vector<8x8x160xbf16>
    %19 = vector.shape_cast %18 : vector<8x8x160xbf16> to vector<64x160xbf16>
    %c0_28 = arith.constant 0 : index
    %c0_29 = arith.constant 0 : index
    %c0_30 = arith.constant 0 : index
    %20 = vector.load %arg4[%c0_28, %c0_29, %c0_30] : memref<9x56x128xbf16, #tpu.memory_space<vmem>>, vector<1x56x128xbf16>
    %21 = vector.shape_cast %20 : vector<1x56x128xbf16> to vector<56x128xbf16>
    %cst_31 = arith.constant dense<0.000000e+00> : vector<64x128xf32>
    %22 = tpu.matmul %17, %21, %cst_31 {dimension_numbers = #tpu.dot_dimension_numbers<[1], [0], [0], [1], [0, 0, 1, 1], [], []>} : vector<64x56xbf16>, vector<56x128xbf16>, vector<64x128xf32> -> vector<64x128xf32>
    %23 = arith.addf %15, %22 : vector<64x128xf32>
    %c0_32 = arith.constant 0 : index
    %c0_33 = arith.constant 0 : index
    %c0_34 = arith.constant 0 : index
    %24 = vector.load %arg5[%c0_32, %c0_33, %c0_34] : memref<9x160x128xbf16, #tpu.memory_space<vmem>>, vector<1x160x128xbf16>
    %25 = vector.shape_cast %24 : vector<1x160x128xbf16> to vector<160x128xbf16>
    %cst_35 = arith.constant dense<0.000000e+00> : vector<64x128xf32>
    %26 = tpu.matmul %19, %25, %cst_35 {dimension_numbers = #tpu.dot_dimension_numbers<[1], [0], [0], [1], [0, 0, 1, 1], [], []>} : vector<64x160xbf16>, vector<160x128xbf16>, vector<64x128xf32> -> vector<64x128xf32>
    %27 = arith.addf %23, %26 : vector<64x128xf32>
    %c0_36 = arith.constant 0 : index
    %c1_37 = arith.constant 1 : index
    %c0_38 = arith.constant 0 : index
    %28 = vector.load %arg10[%c0_36, %c1_37, %c0_38] : memref<10x10x56xbf16, #tpu.memory_space<vmem>>, vector<8x8x56xbf16>
    %29 = vector.shape_cast %28 : vector<8x8x56xbf16> to vector<64x56xbf16>
    %c0_39 = arith.constant 0 : index
    %c1_40 = arith.constant 1 : index
    %c0_41 = arith.constant 0 : index
    %30 = vector.load %arg11[%c0_39, %c1_40, %c0_41] : memref<10x10x160xbf16, #tpu.memory_space<vmem>>, vector<8x8x160xbf16>
    %31 = vector.shape_cast %30 : vector<8x8x160xbf16> to vector<64x160xbf16>
    %c1_42 = arith.constant 1 : index
    %c0_43 = arith.constant 0 : index
    %c0_44 = arith.constant 0 : index
    %32 = vector.load %arg4[%c1_42, %c0_43, %c0_44] : memref<9x56x128xbf16, #tpu.memory_space<vmem>>, vector<1x56x128xbf16>
    %33 = vector.shape_cast %32 : vector<1x56x128xbf16> to vector<56x128xbf16>
    %cst_45 = arith.constant dense<0.000000e+00> : vector<64x128xf32>
    %34 = tpu.matmul %29, %33, %cst_45 {dimension_numbers = #tpu.dot_dimension_numbers<[1], [0], [0], [1], [0, 0, 1, 1], [], []>} : vector<64x56xbf16>, vector<56x128xbf16>, vector<64x128xf32> -> vector<64x128xf32>
    %35 = arith.addf %27, %34 : vector<64x128xf32>
    %c1_46 = arith.constant 1 : index
    %c0_47 = arith.constant 0 : index
    %c0_48 = arith.constant 0 : index
    %36 = vector.load %arg5[%c1_46, %c0_47, %c0_48] : memref<9x160x128xbf16, #tpu.memory_space<vmem>>, vector<1x160x128xbf16>
    %37 = vector.shape_cast %36 : vector<1x160x128xbf16> to vector<160x128xbf16>
    %cst_49 = arith.constant dense<0.000000e+00> : vector<64x128xf32>
    %38 = tpu.matmul %31, %37, %cst_49 {dimension_numbers = #tpu.dot_dimension_numbers<[1], [0], [0], [1], [0, 0, 1, 1], [], []>} : vector<64x160xbf16>, vector<160x128xbf16>, vector<64x128xf32> -> vector<64x128xf32>
    %39 = arith.addf %35, %38 : vector<64x128xf32>
    %c0_50 = arith.constant 0 : index
    %c2 = arith.constant 2 : index
    %c0_51 = arith.constant 0 : index
    %40 = vector.load %arg10[%c0_50, %c2, %c0_51] : memref<10x10x56xbf16, #tpu.memory_space<vmem>>, vector<8x8x56xbf16>
    %41 = vector.shape_cast %40 : vector<8x8x56xbf16> to vector<64x56xbf16>
    %c0_52 = arith.constant 0 : index
    %c2_53 = arith.constant 2 : index
    %c0_54 = arith.constant 0 : index
    %42 = vector.load %arg11[%c0_52, %c2_53, %c0_54] : memref<10x10x160xbf16, #tpu.memory_space<vmem>>, vector<8x8x160xbf16>
    %43 = vector.shape_cast %42 : vector<8x8x160xbf16> to vector<64x160xbf16>
    %c2_55 = arith.constant 2 : index
    %c0_56 = arith.constant 0 : index
    %c0_57 = arith.constant 0 : index
    %44 = vector.load %arg4[%c2_55, %c0_56, %c0_57] : memref<9x56x128xbf16, #tpu.memory_space<vmem>>, vector<1x56x128xbf16>
    %45 = vector.shape_cast %44 : vector<1x56x128xbf16> to vector<56x128xbf16>
    %cst_58 = arith.constant dense<0.000000e+00> : vector<64x128xf32>
    %46 = tpu.matmul %41, %45, %cst_58 {dimension_numbers = #tpu.dot_dimension_numbers<[1], [0], [0], [1], [0, 0, 1, 1], [], []>} : vector<64x56xbf16>, vector<56x128xbf16>, vector<64x128xf32> -> vector<64x128xf32>
    %47 = arith.addf %39, %46 : vector<64x128xf32>
    %c2_59 = arith.constant 2 : index
    %c0_60 = arith.constant 0 : index
    %c0_61 = arith.constant 0 : index
    %48 = vector.load %arg5[%c2_59, %c0_60, %c0_61] : memref<9x160x128xbf16, #tpu.memory_space<vmem>>, vector<1x160x128xbf16>
    %49 = vector.shape_cast %48 : vector<1x160x128xbf16> to vector<160x128xbf16>
    %cst_62 = arith.constant dense<0.000000e+00> : vector<64x128xf32>
    %50 = tpu.matmul %43, %49, %cst_62 {dimension_numbers = #tpu.dot_dimension_numbers<[1], [0], [0], [1], [0, 0, 1, 1], [], []>} : vector<64x160xbf16>, vector<160x128xbf16>, vector<64x128xf32> -> vector<64x128xf32>
    %51 = arith.addf %47, %50 : vector<64x128xf32>
    %c1_63 = arith.constant 1 : index
    %c0_64 = arith.constant 0 : index
    %c0_65 = arith.constant 0 : index
    %52 = vector.load %arg10[%c1_63, %c0_64, %c0_65] : memref<10x10x56xbf16, #tpu.memory_space<vmem>>, vector<8x8x56xbf16>
    %53 = vector.shape_cast %52 : vector<8x8x56xbf16> to vector<64x56xbf16>
    %c1_66 = arith.constant 1 : index
    %c0_67 = arith.constant 0 : index
    %c0_68 = arith.constant 0 : index
    %54 = vector.load %arg11[%c1_66, %c0_67, %c0_68] : memref<10x10x160xbf16, #tpu.memory_space<vmem>>, vector<8x8x160xbf16>
    %55 = vector.shape_cast %54 : vector<8x8x160xbf16> to vector<64x160xbf16>
    %c3 = arith.constant 3 : index
    %c0_69 = arith.constant 0 : index
    %c0_70 = arith.constant 0 : index
    %56 = vector.load %arg4[%c3, %c0_69, %c0_70] : memref<9x56x128xbf16, #tpu.memory_space<vmem>>, vector<1x56x128xbf16>
    %57 = vector.shape_cast %56 : vector<1x56x128xbf16> to vector<56x128xbf16>
    %cst_71 = arith.constant dense<0.000000e+00> : vector<64x128xf32>
    %58 = tpu.matmul %53, %57, %cst_71 {dimension_numbers = #tpu.dot_dimension_numbers<[1], [0], [0], [1], [0, 0, 1, 1], [], []>} : vector<64x56xbf16>, vector<56x128xbf16>, vector<64x128xf32> -> vector<64x128xf32>
    %59 = arith.addf %51, %58 : vector<64x128xf32>
    %c3_72 = arith.constant 3 : index
    %c0_73 = arith.constant 0 : index
    %c0_74 = arith.constant 0 : index
    %60 = vector.load %arg5[%c3_72, %c0_73, %c0_74] : memref<9x160x128xbf16, #tpu.memory_space<vmem>>, vector<1x160x128xbf16>
    %61 = vector.shape_cast %60 : vector<1x160x128xbf16> to vector<160x128xbf16>
    %cst_75 = arith.constant dense<0.000000e+00> : vector<64x128xf32>
    %62 = tpu.matmul %55, %61, %cst_75 {dimension_numbers = #tpu.dot_dimension_numbers<[1], [0], [0], [1], [0, 0, 1, 1], [], []>} : vector<64x160xbf16>, vector<160x128xbf16>, vector<64x128xf32> -> vector<64x128xf32>
    %63 = arith.addf %59, %62 : vector<64x128xf32>
    %c1_76 = arith.constant 1 : index
    %c1_77 = arith.constant 1 : index
    %c0_78 = arith.constant 0 : index
    %64 = vector.load %arg10[%c1_76, %c1_77, %c0_78] : memref<10x10x56xbf16, #tpu.memory_space<vmem>>, vector<8x8x56xbf16>
    %65 = vector.shape_cast %64 : vector<8x8x56xbf16> to vector<64x56xbf16>
    %c1_79 = arith.constant 1 : index
    %c1_80 = arith.constant 1 : index
    %c0_81 = arith.constant 0 : index
    %66 = vector.load %arg11[%c1_79, %c1_80, %c0_81] : memref<10x10x160xbf16, #tpu.memory_space<vmem>>, vector<8x8x160xbf16>
    %67 = vector.shape_cast %66 : vector<8x8x160xbf16> to vector<64x160xbf16>
    %c4 = arith.constant 4 : index
    %c0_82 = arith.constant 0 : index
    %c0_83 = arith.constant 0 : index
    %68 = vector.load %arg4[%c4, %c0_82, %c0_83] : memref<9x56x128xbf16, #tpu.memory_space<vmem>>, vector<1x56x128xbf16>
    %69 = vector.shape_cast %68 : vector<1x56x128xbf16> to vector<56x128xbf16>
    %cst_84 = arith.constant dense<0.000000e+00> : vector<64x128xf32>
    %70 = tpu.matmul %65, %69, %cst_84 {dimension_numbers = #tpu.dot_dimension_numbers<[1], [0], [0], [1], [0, 0, 1, 1], [], []>} : vector<64x56xbf16>, vector<56x128xbf16>, vector<64x128xf32> -> vector<64x128xf32>
    %71 = arith.addf %63, %70 : vector<64x128xf32>
    %c4_85 = arith.constant 4 : index
    %c0_86 = arith.constant 0 : index
    %c0_87 = arith.constant 0 : index
    %72 = vector.load %arg5[%c4_85, %c0_86, %c0_87] : memref<9x160x128xbf16, #tpu.memory_space<vmem>>, vector<1x160x128xbf16>
    %73 = vector.shape_cast %72 : vector<1x160x128xbf16> to vector<160x128xbf16>
    %cst_88 = arith.constant dense<0.000000e+00> : vector<64x128xf32>
    %74 = tpu.matmul %67, %73, %cst_88 {dimension_numbers = #tpu.dot_dimension_numbers<[1], [0], [0], [1], [0, 0, 1, 1], [], []>} : vector<64x160xbf16>, vector<160x128xbf16>, vector<64x128xf32> -> vector<64x128xf32>
    %75 = arith.addf %71, %74 : vector<64x128xf32>
    %c1_89 = arith.constant 1 : index
    %c2_90 = arith.constant 2 : index
    %c0_91 = arith.constant 0 : index
    %76 = vector.load %arg10[%c1_89, %c2_90, %c0_91] : memref<10x10x56xbf16, #tpu.memory_space<vmem>>, vector<8x8x56xbf16>
    %77 = vector.shape_cast %76 : vector<8x8x56xbf16> to vector<64x56xbf16>
    %c1_92 = arith.constant 1 : index
    %c2_93 = arith.constant 2 : index
    %c0_94 = arith.constant 0 : index
    %78 = vector.load %arg11[%c1_92, %c2_93, %c0_94] : memref<10x10x160xbf16, #tpu.memory_space<vmem>>, vector<8x8x160xbf16>
    %79 = vector.shape_cast %78 : vector<8x8x160xbf16> to vector<64x160xbf16>
    %c5 = arith.constant 5 : index
    %c0_95 = arith.constant 0 : index
    %c0_96 = arith.constant 0 : index
    %80 = vector.load %arg4[%c5, %c0_95, %c0_96] : memref<9x56x128xbf16, #tpu.memory_space<vmem>>, vector<1x56x128xbf16>
    %81 = vector.shape_cast %80 : vector<1x56x128xbf16> to vector<56x128xbf16>
    %cst_97 = arith.constant dense<0.000000e+00> : vector<64x128xf32>
    %82 = tpu.matmul %77, %81, %cst_97 {dimension_numbers = #tpu.dot_dimension_numbers<[1], [0], [0], [1], [0, 0, 1, 1], [], []>} : vector<64x56xbf16>, vector<56x128xbf16>, vector<64x128xf32> -> vector<64x128xf32>
    %83 = arith.addf %75, %82 : vector<64x128xf32>
    %c5_98 = arith.constant 5 : index
    %c0_99 = arith.constant 0 : index
    %c0_100 = arith.constant 0 : index
    %84 = vector.load %arg5[%c5_98, %c0_99, %c0_100] : memref<9x160x128xbf16, #tpu.memory_space<vmem>>, vector<1x160x128xbf16>
    %85 = vector.shape_cast %84 : vector<1x160x128xbf16> to vector<160x128xbf16>
    %cst_101 = arith.constant dense<0.000000e+00> : vector<64x128xf32>
    %86 = tpu.matmul %79, %85, %cst_101 {dimension_numbers = #tpu.dot_dimension_numbers<[1], [0], [0], [1], [0, 0, 1, 1], [], []>} : vector<64x160xbf16>, vector<160x128xbf16>, vector<64x128xf32> -> vector<64x128xf32>
    %87 = arith.addf %83, %86 : vector<64x128xf32>
    %c2_102 = arith.constant 2 : index
    %c0_103 = arith.constant 0 : index
    %c0_104 = arith.constant 0 : index
    %88 = vector.load %arg10[%c2_102, %c0_103, %c0_104] : memref<10x10x56xbf16, #tpu.memory_space<vmem>>, vector<8x8x56xbf16>
    %89 = vector.shape_cast %88 : vector<8x8x56xbf16> to vector<64x56xbf16>
    %c2_105 = arith.constant 2 : index
    %c0_106 = arith.constant 0 : index
    %c0_107 = arith.constant 0 : index
    %90 = vector.load %arg11[%c2_105, %c0_106, %c0_107] : memref<10x10x160xbf16, #tpu.memory_space<vmem>>, vector<8x8x160xbf16>
    %91 = vector.shape_cast %90 : vector<8x8x160xbf16> to vector<64x160xbf16>
    %c6 = arith.constant 6 : index
    %c0_108 = arith.constant 0 : index
    %c0_109 = arith.constant 0 : index
    %92 = vector.load %arg4[%c6, %c0_108, %c0_109] : memref<9x56x128xbf16, #tpu.memory_space<vmem>>, vector<1x56x128xbf16>
    %93 = vector.shape_cast %92 : vector<1x56x128xbf16> to vector<56x128xbf16>
    %cst_110 = arith.constant dense<0.000000e+00> : vector<64x128xf32>
    %94 = tpu.matmul %89, %93, %cst_110 {dimension_numbers = #tpu.dot_dimension_numbers<[1], [0], [0], [1], [0, 0, 1, 1], [], []>} : vector<64x56xbf16>, vector<56x128xbf16>, vector<64x128xf32> -> vector<64x128xf32>
    %95 = arith.addf %87, %94 : vector<64x128xf32>
    %c6_111 = arith.constant 6 : index
    %c0_112 = arith.constant 0 : index
    %c0_113 = arith.constant 0 : index
    %96 = vector.load %arg5[%c6_111, %c0_112, %c0_113] : memref<9x160x128xbf16, #tpu.memory_space<vmem>>, vector<1x160x128xbf16>
    %97 = vector.shape_cast %96 : vector<1x160x128xbf16> to vector<160x128xbf16>
    %cst_114 = arith.constant dense<0.000000e+00> : vector<64x128xf32>
    %98 = tpu.matmul %91, %97, %cst_114 {dimension_numbers = #tpu.dot_dimension_numbers<[1], [0], [0], [1], [0, 0, 1, 1], [], []>} : vector<64x160xbf16>, vector<160x128xbf16>, vector<64x128xf32> -> vector<64x128xf32>
    %99 = arith.addf %95, %98 : vector<64x128xf32>
    %c2_115 = arith.constant 2 : index
    %c1_116 = arith.constant 1 : index
    %c0_117 = arith.constant 0 : index
    %100 = vector.load %arg10[%c2_115, %c1_116, %c0_117] : memref<10x10x56xbf16, #tpu.memory_space<vmem>>, vector<8x8x56xbf16>
    %101 = vector.shape_cast %100 : vector<8x8x56xbf16> to vector<64x56xbf16>
    %c2_118 = arith.constant 2 : index
    %c1_119 = arith.constant 1 : index
    %c0_120 = arith.constant 0 : index
    %102 = vector.load %arg11[%c2_118, %c1_119, %c0_120] : memref<10x10x160xbf16, #tpu.memory_space<vmem>>, vector<8x8x160xbf16>
    %103 = vector.shape_cast %102 : vector<8x8x160xbf16> to vector<64x160xbf16>
    %c7 = arith.constant 7 : index
    %c0_121 = arith.constant 0 : index
    %c0_122 = arith.constant 0 : index
    %104 = vector.load %arg4[%c7, %c0_121, %c0_122] : memref<9x56x128xbf16, #tpu.memory_space<vmem>>, vector<1x56x128xbf16>
    %105 = vector.shape_cast %104 : vector<1x56x128xbf16> to vector<56x128xbf16>
    %cst_123 = arith.constant dense<0.000000e+00> : vector<64x128xf32>
    %106 = tpu.matmul %101, %105, %cst_123 {dimension_numbers = #tpu.dot_dimension_numbers<[1], [0], [0], [1], [0, 0, 1, 1], [], []>} : vector<64x56xbf16>, vector<56x128xbf16>, vector<64x128xf32> -> vector<64x128xf32>
    %107 = arith.addf %99, %106 : vector<64x128xf32>
    %c7_124 = arith.constant 7 : index
    %c0_125 = arith.constant 0 : index
    %c0_126 = arith.constant 0 : index
    %108 = vector.load %arg5[%c7_124, %c0_125, %c0_126] : memref<9x160x128xbf16, #tpu.memory_space<vmem>>, vector<1x160x128xbf16>
    %109 = vector.shape_cast %108 : vector<1x160x128xbf16> to vector<160x128xbf16>
    %cst_127 = arith.constant dense<0.000000e+00> : vector<64x128xf32>
    %110 = tpu.matmul %103, %109, %cst_127 {dimension_numbers = #tpu.dot_dimension_numbers<[1], [0], [0], [1], [0, 0, 1, 1], [], []>} : vector<64x160xbf16>, vector<160x128xbf16>, vector<64x128xf32> -> vector<64x128xf32>
    %111 = arith.addf %107, %110 : vector<64x128xf32>
    %c2_128 = arith.constant 2 : index
    %c2_129 = arith.constant 2 : index
    %c0_130 = arith.constant 0 : index
    %112 = vector.load %arg10[%c2_128, %c2_129, %c0_130] : memref<10x10x56xbf16, #tpu.memory_space<vmem>>, vector<8x8x56xbf16>
    %113 = vector.shape_cast %112 : vector<8x8x56xbf16> to vector<64x56xbf16>
    %c2_131 = arith.constant 2 : index
    %c2_132 = arith.constant 2 : index
    %c0_133 = arith.constant 0 : index
    %114 = vector.load %arg11[%c2_131, %c2_132, %c0_133] : memref<10x10x160xbf16, #tpu.memory_space<vmem>>, vector<8x8x160xbf16>
    %115 = vector.shape_cast %114 : vector<8x8x160xbf16> to vector<64x160xbf16>
    %c8 = arith.constant 8 : index
    %c0_134 = arith.constant 0 : index
    %c0_135 = arith.constant 0 : index
    %116 = vector.load %arg4[%c8, %c0_134, %c0_135] : memref<9x56x128xbf16, #tpu.memory_space<vmem>>, vector<1x56x128xbf16>
    %117 = vector.shape_cast %116 : vector<1x56x128xbf16> to vector<56x128xbf16>
    %cst_136 = arith.constant dense<0.000000e+00> : vector<64x128xf32>
    %118 = tpu.matmul %113, %117, %cst_136 {dimension_numbers = #tpu.dot_dimension_numbers<[1], [0], [0], [1], [0, 0, 1, 1], [], []>} : vector<64x56xbf16>, vector<56x128xbf16>, vector<64x128xf32> -> vector<64x128xf32>
    %119 = arith.addf %111, %118 : vector<64x128xf32>
    %c8_137 = arith.constant 8 : index
    %c0_138 = arith.constant 0 : index
    %c0_139 = arith.constant 0 : index
    %120 = vector.load %arg5[%c8_137, %c0_138, %c0_139] : memref<9x160x128xbf16, #tpu.memory_space<vmem>>, vector<1x160x128xbf16>
    %121 = vector.shape_cast %120 : vector<1x160x128xbf16> to vector<160x128xbf16>
    %cst_140 = arith.constant dense<0.000000e+00> : vector<64x128xf32>
    %122 = tpu.matmul %115, %121, %cst_140 {dimension_numbers = #tpu.dot_dimension_numbers<[1], [0], [0], [1], [0, 0, 1, 1], [], []>} : vector<64x160xbf16>, vector<160x128xbf16>, vector<64x128xf32> -> vector<64x128xf32>
    %123 = arith.addf %119, %122 : vector<64x128xf32>
    %cst_141 = arith.constant dense<0.000000e+00> : vector<128xf32>
    %124 = vector.multi_reduction <add>, %123, %cst_141 [0] : vector<64x128xf32> to vector<128xf32>
    %125 = vector.shape_cast %124 : vector<128xf32> to vector<1x128xf32>
    %126 = arith.mulf %123, %123 : vector<64x128xf32>
    %cst_142 = arith.constant dense<0.000000e+00> : vector<128xf32>
    %127 = vector.multi_reduction <add>, %126, %cst_142 [0] : vector<64x128xf32> to vector<128xf32>
    %128 = vector.shape_cast %127 : vector<128xf32> to vector<1x128xf32>
    %cst_143 = arith.constant 6.400000e+01 : f32
    %129 = vector.broadcast %cst_143 : f32 to vector<1x128xf32>
    %130 = arith.divf %125, %129 : vector<1x128xf32>
    %cst_144 = arith.constant 6.400000e+01 : f32
    %131 = vector.broadcast %cst_144 : f32 to vector<1x128xf32>
    %132 = arith.divf %128, %131 : vector<1x128xf32>
    %133 = arith.mulf %130, %130 : vector<1x128xf32>
    %134 = arith.subf %132, %133 : vector<1x128xf32>
    %cst_145 = arith.constant 0.000000e+00 : f32
    %135 = vector.broadcast %cst_145 : f32 to vector<1x128xf32>
    %136 = arith.maximumf %134, %135 : vector<1x128xf32>
    %137 = vector.broadcast %130 : vector<1x128xf32> to vector<64x128xf32>
    %138 = arith.subf %123, %137 : vector<64x128xf32>
    %cst_146 = arith.constant 9.99999974E-6 : f32
    %139 = vector.broadcast %cst_146 : f32 to vector<1x128xf32>
    %140 = arith.addf %136, %139 : vector<1x128xf32>
    %141 = math.rsqrt %140 : vector<1x128xf32>
    %142 = vector.broadcast %141 : vector<1x128xf32> to vector<64x128xf32>
    %143 = arith.mulf %138, %142 : vector<64x128xf32>
    %cst_147 = arith.constant 0.000000e+00 : f32
    %144 = vector.broadcast %cst_147 : f32 to vector<64x128xf32>
    %145 = arith.maximumf %143, %144 : vector<64x128xf32>
    %cst_148 = arith.constant 0.000000e+00 : bf16
    %146 = vector.broadcast %cst_148 : bf16 to vector<10x10x128xbf16>
    %c0_149 = arith.constant 0 : index
    %c0_150 = arith.constant 0 : index
    %c0_151 = arith.constant 0 : index
    %147 = vector.load %arg12[%c0_149, %c0_150, %c0_151] : memref<10x10x128xbf16, #tpu.memory_space<vmem>>, vector<10x10x128xbf16>
    tpu.vector_store %arg12[%c0_149, %c0_150, %c0_151], %146 {strides = array<i32>} : memref<10x10x128xbf16, #tpu.memory_space<vmem>>, vector<10x10x128xbf16>,
    %148 = vector.shape_cast %145 : vector<64x128xf32> to vector<8x8x128xf32>
    %149 = arith.truncf %148 : vector<8x8x128xf32> to vector<8x8x128xbf16>
    %c1_152 = arith.constant 1 : index
    %c1_153 = arith.constant 1 : index
    %c0_154 = arith.constant 0 : index
    %150 = vector.load %arg12[%c1_152, %c1_153, %c0_154] : memref<10x10x128xbf16, #tpu.memory_space<vmem>>, vector<8x8x128xbf16>
    tpu.vector_store %arg12[%c1_152, %c1_153, %c0_154], %149 {strides = array<i32>} : memref<10x10x128xbf16, #tpu.memory_space<vmem>>, vector<8x8x128xbf16>,
    %cst_155 = arith.constant 0.000000e+00 : f32
    %151 = vector.broadcast %cst_155 : f32 to vector<64x128xf32>
    %c0_156 = arith.constant 0 : index
    %c0_157 = arith.constant 0 : index
    %c0_158 = arith.constant 0 : index
    %152 = vector.load %arg12[%c0_156, %c0_157, %c0_158] : memref<10x10x128xbf16, #tpu.memory_space<vmem>>, vector<8x8x128xbf16>
    %153 = vector.shape_cast %152 : vector<8x8x128xbf16> to vector<64x128xbf16>
    %c0_159 = arith.constant 0 : index
    %c0_160 = arith.constant 0 : index
    %c0_161 = arith.constant 0 : index
    %154 = vector.load %arg6[%c0_159, %c0_160, %c0_161] : memref<9x128x128xbf16, #tpu.memory_space<vmem>>, vector<1x128x128xbf16>
    %155 = vector.shape_cast %154 : vector<1x128x128xbf16> to vector<128x128xbf16>
    %cst_162 = arith.constant dense<0.000000e+00> : vector<64x128xf32>
    %156 = tpu.matmul %153, %155, %cst_162 {dimension_numbers = #tpu.dot_dimension_numbers<[1], [0], [0], [1], [0, 0, 1, 1], [], []>} : vector<64x128xbf16>, vector<128x128xbf16>, vector<64x128xf32> -> vector<64x128xf32>
    %157 = arith.addf %151, %156 : vector<64x128xf32>
    %c0_163 = arith.constant 0 : index
    %c1_164 = arith.constant 1 : index
    %c0_165 = arith.constant 0 : index
    %158 = vector.load %arg12[%c0_163, %c1_164, %c0_165] : memref<10x10x128xbf16, #tpu.memory_space<vmem>>, vector<8x8x128xbf16>
    %159 = vector.shape_cast %158 : vector<8x8x128xbf16> to vector<64x128xbf16>
    %c1_166 = arith.constant 1 : index
    %c0_167 = arith.constant 0 : index
    %c0_168 = arith.constant 0 : index
    %160 = vector.load %arg6[%c1_166, %c0_167, %c0_168] : memref<9x128x128xbf16, #tpu.memory_space<vmem>>, vector<1x128x128xbf16>
    %161 = vector.shape_cast %160 : vector<1x128x128xbf16> to vector<128x128xbf16>
    %cst_169 = arith.constant dense<0.000000e+00> : vector<64x128xf32>
    %162 = tpu.matmul %159, %161, %cst_169 {dimension_numbers = #tpu.dot_dimension_numbers<[1], [0], [0], [1], [0, 0, 1, 1], [], []>} : vector<64x128xbf16>, vector<128x128xbf16>, vector<64x128xf32> -> vector<64x128xf32>
    %163 = arith.addf %157, %162 : vector<64x128xf32>
    %c0_170 = arith.constant 0 : index
    %c2_171 = arith.constant 2 : index
    %c0_172 = arith.constant 0 : index
    %164 = vector.load %arg12[%c0_170, %c2_171, %c0_172] : memref<10x10x128xbf16, #tpu.memory_space<vmem>>, vector<8x8x128xbf16>
    %165 = vector.shape_cast %164 : vector<8x8x128xbf16> to vector<64x128xbf16>
    %c2_173 = arith.constant 2 : index
    %c0_174 = arith.constant 0 : index
    %c0_175 = arith.constant 0 : index
    %166 = vector.load %arg6[%c2_173, %c0_174, %c0_175] : memref<9x128x128xbf16, #tpu.memory_space<vmem>>, vector<1x128x128xbf16>
    %167 = vector.shape_cast %166 : vector<1x128x128xbf16> to vector<128x128xbf16>
    %cst_176 = arith.constant dense<0.000000e+00> : vector<64x128xf32>
    %168 = tpu.matmul %165, %167, %cst_176 {dimension_numbers = #tpu.dot_dimension_numbers<[1], [0], [0], [1], [0, 0, 1, 1], [], []>} : vector<64x128xbf16>, vector<128x128xbf16>, vector<64x128xf32> -> vector<64x128xf32>
    %169 = arith.addf %163, %168 : vector<64x128xf32>
    %c1_177 = arith.constant 1 : index
    %c0_178 = arith.constant 0 : index
    %c0_179 = arith.constant 0 : index
    %170 = vector.load %arg12[%c1_177, %c0_178, %c0_179] : memref<10x10x128xbf16, #tpu.memory_space<vmem>>, vector<8x8x128xbf16>
    %171 = vector.shape_cast %170 : vector<8x8x128xbf16> to vector<64x128xbf16>
    %c3_180 = arith.constant 3 : index
    %c0_181 = arith.constant 0 : index
    %c0_182 = arith.constant 0 : index
    %172 = vector.load %arg6[%c3_180, %c0_181, %c0_182] : memref<9x128x128xbf16, #tpu.memory_space<vmem>>, vector<1x128x128xbf16>
    %173 = vector.shape_cast %172 : vector<1x128x128xbf16> to vector<128x128xbf16>
    %cst_183 = arith.constant dense<0.000000e+00> : vector<64x128xf32>
    %174 = tpu.matmul %171, %173, %cst_183 {dimension_numbers = #tpu.dot_dimension_numbers<[1], [0], [0], [1], [0, 0, 1, 1], [], []>} : vector<64x128xbf16>, vector<128x128xbf16>, vector<64x128xf32> -> vector<64x128xf32>
    %175 = arith.addf %169, %174 : vector<64x128xf32>
    %c1_184 = arith.constant 1 : index
    %c1_185 = arith.constant 1 : index
    %c0_186 = arith.constant 0 : index
    %176 = vector.load %arg12[%c1_184, %c1_185, %c0_186] : memref<10x10x128xbf16, #tpu.memory_space<vmem>>, vector<8x8x128xbf16>
    %177 = vector.shape_cast %176 : vector<8x8x128xbf16> to vector<64x128xbf16>
    %c4_187 = arith.constant 4 : index
    %c0_188 = arith.constant 0 : index
    %c0_189 = arith.constant 0 : index
    %178 = vector.load %arg6[%c4_187, %c0_188, %c0_189] : memref<9x128x128xbf16, #tpu.memory_space<vmem>>, vector<1x128x128xbf16>
    %179 = vector.shape_cast %178 : vector<1x128x128xbf16> to vector<128x128xbf16>
    %cst_190 = arith.constant dense<0.000000e+00> : vector<64x128xf32>
    %180 = tpu.matmul %177, %179, %cst_190 {dimension_numbers = #tpu.dot_dimension_numbers<[1], [0], [0], [1], [0, 0, 1, 1], [], []>} : vector<64x128xbf16>, vector<128x128xbf16>, vector<64x128xf32> -> vector<64x128xf32>
    %181 = arith.addf %175, %180 : vector<64x128xf32>
    %c1_191 = arith.constant 1 : index
    %c2_192 = arith.constant 2 : index
    %c0_193 = arith.constant 0 : index
    %182 = vector.load %arg12[%c1_191, %c2_192, %c0_193] : memref<10x10x128xbf16, #tpu.memory_space<vmem>>, vector<8x8x128xbf16>
    %183 = vector.shape_cast %182 : vector<8x8x128xbf16> to vector<64x128xbf16>
    %c5_194 = arith.constant 5 : index
    %c0_195 = arith.constant 0 : index
    %c0_196 = arith.constant 0 : index
    %184 = vector.load %arg6[%c5_194, %c0_195, %c0_196] : memref<9x128x128xbf16, #tpu.memory_space<vmem>>, vector<1x128x128xbf16>
    %185 = vector.shape_cast %184 : vector<1x128x128xbf16> to vector<128x128xbf16>
    %cst_197 = arith.constant dense<0.000000e+00> : vector<64x128xf32>
    %186 = tpu.matmul %183, %185, %cst_197 {dimension_numbers = #tpu.dot_dimension_numbers<[1], [0], [0], [1], [0, 0, 1, 1], [], []>} : vector<64x128xbf16>, vector<128x128xbf16>, vector<64x128xf32> -> vector<64x128xf32>
    %187 = arith.addf %181, %186 : vector<64x128xf32>
    %c2_198 = arith.constant 2 : index
    %c0_199 = arith.constant 0 : index
    %c0_200 = arith.constant 0 : index
    %188 = vector.load %arg12[%c2_198, %c0_199, %c0_200] : memref<10x10x128xbf16, #tpu.memory_space<vmem>>, vector<8x8x128xbf16>
    %189 = vector.shape_cast %188 : vector<8x8x128xbf16> to vector<64x128xbf16>
    %c6_201 = arith.constant 6 : index
    %c0_202 = arith.constant 0 : index
    %c0_203 = arith.constant 0 : index
    %190 = vector.load %arg6[%c6_201, %c0_202, %c0_203] : memref<9x128x128xbf16, #tpu.memory_space<vmem>>, vector<1x128x128xbf16>
    %191 = vector.shape_cast %190 : vector<1x128x128xbf16> to vector<128x128xbf16>
    %cst_204 = arith.constant dense<0.000000e+00> : vector<64x128xf32>
    %192 = tpu.matmul %189, %191, %cst_204 {dimension_numbers = #tpu.dot_dimension_numbers<[1], [0], [0], [1], [0, 0, 1, 1], [], []>} : vector<64x128xbf16>, vector<128x128xbf16>, vector<64x128xf32> -> vector<64x128xf32>
    %193 = arith.addf %187, %192 : vector<64x128xf32>
    %c2_205 = arith.constant 2 : index
    %c1_206 = arith.constant 1 : index
    %c0_207 = arith.constant 0 : index
    %194 = vector.load %arg12[%c2_205, %c1_206, %c0_207] : memref<10x10x128xbf16, #tpu.memory_space<vmem>>, vector<8x8x128xbf16>
    %195 = vector.shape_cast %194 : vector<8x8x128xbf16> to vector<64x128xbf16>
    %c7_208 = arith.constant 7 : index
    %c0_209 = arith.constant 0 : index
    %c0_210 = arith.constant 0 : index
    %196 = vector.load %arg6[%c7_208, %c0_209, %c0_210] : memref<9x128x128xbf16, #tpu.memory_space<vmem>>, vector<1x128x128xbf16>
    %197 = vector.shape_cast %196 : vector<1x128x128xbf16> to vector<128x128xbf16>
    %cst_211 = arith.constant dense<0.000000e+00> : vector<64x128xf32>
    %198 = tpu.matmul %195, %197, %cst_211 {dimension_numbers = #tpu.dot_dimension_numbers<[1], [0], [0], [1], [0, 0, 1, 1], [], []>} : vector<64x128xbf16>, vector<128x128xbf16>, vector<64x128xf32> -> vector<64x128xf32>
    %199 = arith.addf %193, %198 : vector<64x128xf32>
    %c2_212 = arith.constant 2 : index
    %c2_213 = arith.constant 2 : index
    %c0_214 = arith.constant 0 : index
    %200 = vector.load %arg12[%c2_212, %c2_213, %c0_214] : memref<10x10x128xbf16, #tpu.memory_space<vmem>>, vector<8x8x128xbf16>
    %201 = vector.shape_cast %200 : vector<8x8x128xbf16> to vector<64x128xbf16>
    %c8_215 = arith.constant 8 : index
    %c0_216 = arith.constant 0 : index
    %c0_217 = arith.constant 0 : index
    %202 = vector.load %arg6[%c8_215, %c0_216, %c0_217] : memref<9x128x128xbf16, #tpu.memory_space<vmem>>, vector<1x128x128xbf16>
    %203 = vector.shape_cast %202 : vector<1x128x128xbf16> to vector<128x128xbf16>
    %cst_218 = arith.constant dense<0.000000e+00> : vector<64x128xf32>
    %204 = tpu.matmul %201, %203, %cst_218 {dimension_numbers = #tpu.dot_dimension_numbers<[1], [0], [0], [1], [0, 0, 1, 1], [], []>} : vector<64x128xbf16>, vector<128x128xbf16>, vector<64x128xf32> -> vector<64x128xf32>
    %205 = arith.addf %199, %204 : vector<64x128xf32>
    %cst_219 = arith.constant dense<0.000000e+00> : vector<128xf32>
    %206 = vector.multi_reduction <add>, %205, %cst_219 [0] : vector<64x128xf32> to vector<128xf32>
    %207 = vector.shape_cast %206 : vector<128xf32> to vector<1x128xf32>
    %208 = arith.mulf %205, %205 : vector<64x128xf32>
    %cst_220 = arith.constant dense<0.000000e+00> : vector<128xf32>
    %209 = vector.multi_reduction <add>, %208, %cst_220 [0] : vector<64x128xf32> to vector<128xf32>
    %210 = vector.shape_cast %209 : vector<128xf32> to vector<1x128xf32>
    %cst_221 = arith.constant 6.400000e+01 : f32
    %211 = vector.broadcast %cst_221 : f32 to vector<1x128xf32>
    %212 = arith.divf %207, %211 : vector<1x128xf32>
    %cst_222 = arith.constant 6.400000e+01 : f32
    %213 = vector.broadcast %cst_222 : f32 to vector<1x128xf32>
    %214 = arith.divf %210, %213 : vector<1x128xf32>
    %215 = arith.mulf %212, %212 : vector<1x128xf32>
    %216 = arith.subf %214, %215 : vector<1x128xf32>
    %cst_223 = arith.constant 0.000000e+00 : f32
    %217 = vector.broadcast %cst_223 : f32 to vector<1x128xf32>
    %218 = arith.maximumf %216, %217 : vector<1x128xf32>
    %219 = vector.broadcast %212 : vector<1x128xf32> to vector<64x128xf32>
    %220 = arith.subf %205, %219 : vector<64x128xf32>
    %cst_224 = arith.constant 9.99999974E-6 : f32
    %221 = vector.broadcast %cst_224 : f32 to vector<1x128xf32>
    %222 = arith.addf %218, %221 : vector<1x128xf32>
    %223 = math.rsqrt %222 : vector<1x128xf32>
    %224 = vector.broadcast %223 : vector<1x128xf32> to vector<64x128xf32>
    %225 = arith.mulf %220, %224 : vector<64x128xf32>
    %cst_225 = arith.constant 0.000000e+00 : f32
    %226 = vector.broadcast %cst_225 : f32 to vector<64x128xf32>
    %227 = arith.maximumf %225, %226 : vector<64x128xf32>
    %c0_226 = arith.constant 0 : index
    %c0_227 = arith.constant 0 : index
    %228 = vector.load %arg7[%c0_226, %c0_227] : memref<128x32xf32, #tpu.memory_space<vmem>>, vector<128x32xf32>
    %cst_228 = arith.constant dense<0.000000e+00> : vector<64x32xf32>
    %229 = tpu.matmul %227, %228, %cst_228 {dimension_numbers = #tpu.dot_dimension_numbers<[1], [0], [0], [1], [0, 0, 1, 1], [], []>} : vector<64x128xf32>, vector<128x32xf32>, vector<64x32xf32> -> vector<64x32xf32>
    %c0_229 = arith.constant 0 : index
    %c0_230 = arith.constant 0 : index
    %230 = vector.load %arg8[%c0_229, %c0_230] : memref<1x32xf32, #tpu.memory_space<vmem>>, vector<1x32xf32>
    %231 = vector.broadcast %230 : vector<1x32xf32> to vector<64x32xf32>
    %232 = arith.addf %229, %231 : vector<64x32xf32>
    %233 = vector.shape_cast %232 : vector<64x32xf32> to vector<8x8x32xf32>
    %c0_231 = arith.constant 0 : index
    %c0_232 = arith.constant 0 : index
    %c0_233 = arith.constant 0 : index
    %c0_234 = arith.constant 0 : index
    %234 = vector.load %arg9[%c0_231, %c0_232, %c0_233, %c0_234] : memref<1x8x8x32xf32, #tpu.memory_space<vmem>>, vector<1x8x8x32xf32>
    %235 = vector.shape_cast %234 : vector<1x8x8x32xf32> to vector<8x8x32xf32>
    %236 = vector.shape_cast %233 : vector<8x8x32xf32> to vector<1x8x8x32xf32>
    tpu.vector_store %arg9[%c0_231, %c0_232, %c0_233, %c0_234], %236 {strides = array<i32>} : memref<1x8x8x32xf32, #tpu.memory_space<vmem>>, vector<1x8x8x32xf32>,
    return
  }
  func.func @transform_0(%arg0: i32) -> (i32, i32, i32, i32) {
    %c0_i32 = arith.constant 0 : i32
    %c0_i32_0 = arith.constant 0 : i32
    %c0_i32_1 = arith.constant 0 : i32
    %c0_i32_2 = arith.constant 0 : i32
    return %arg0, %c0_i32, %c0_i32_0, %c0_i32_1 : i32, i32, i32, i32
  }
  func.func @transform_1(%arg0: i32) -> (i32, i32, i32) {
    %c0_i32 = arith.constant 0 : i32
    %c0_i32_0 = arith.constant 0 : i32
    %c0_i32_1 = arith.constant 0 : i32
    return %arg0, %c0_i32, %c0_i32_0 : i32, i32, i32
  }
  func.func @transform_2(%arg0: i32) -> (i32, i32) {
    %c0_i32 = arith.constant 0 : i32
    %c0_i32_0 = arith.constant 0 : i32
    %c0_i32_1 = arith.constant 0 : i32
    return %c0_i32, %c0_i32_0 : i32, i32
  }
  func.func @transform_3(%arg0: i32) -> (i32, i32, i32) {
    %c0_i32 = arith.constant 0 : i32
    %c0_i32_0 = arith.constant 0 : i32
    %c0_i32_1 = arith.constant 0 : i32
    %c0_i32_2 = arith.constant 0 : i32
    return %c0_i32, %c0_i32_0, %c0_i32_1 : i32, i32, i32
  }
  func.func @transform_4(%arg0: i32) -> (i32, i32, i32) {
    %c0_i32 = arith.constant 0 : i32
    %c0_i32_0 = arith.constant 0 : i32
    %c0_i32_1 = arith.constant 0 : i32
    %c0_i32_2 = arith.constant 0 : i32
    return %c0_i32, %c0_i32_0, %c0_i32_1 : i32, i32, i32
  }
  func.func @transform_5(%arg0: i32) -> (i32, i32, i32) {
    %c0_i32 = arith.constant 0 : i32
    %c0_i32_0 = arith.constant 0 : i32
    %c0_i32_1 = arith.constant 0 : i32
    %c0_i32_2 = arith.constant 0 : i32
    return %c0_i32, %c0_i32_0, %c0_i32_1 : i32, i32, i32
  }
  func.func @transform_6(%arg0: i32) -> (i32, i32) {
    %c0_i32 = arith.constant 0 : i32
    %c0_i32_0 = arith.constant 0 : i32
    %c0_i32_1 = arith.constant 0 : i32
    return %c0_i32, %c0_i32_0 : i32, i32
  }
  func.func @transform_7(%arg0: i32) -> (i32, i32) {
    %c0_i32 = arith.constant 0 : i32
    %c0_i32_0 = arith.constant 0 : i32
    %c0_i32_1 = arith.constant 0 : i32
    return %c0_i32, %c0_i32_0 : i32, i32
  }
  func.func @transform_8(%arg0: i32) -> (i32, i32, i32, i32) {
    %c0_i32 = arith.constant 0 : i32
    %c0_i32_0 = arith.constant 0 : i32
    %c0_i32_1 = arith.constant 0 : i32
    %c0_i32_2 = arith.constant 0 : i32
    return %arg0, %c0_i32, %c0_i32_0, %c0_i32_1 : i32, i32, i32, i32
  }
}

</mosaic_0001>

<llo_original>
// kernel: encoder_eff_forward.1
$region0: #{encoder_eff_forward.1}
  #allocation0 [shape = 'u32[]', space=smem, size = 0x4, offset = 0x4, fixed_abs, tag = 'smem constant byte address 0x4 - core index']
  #allocation1 [shape = 'u32[144,128]{1,0:T(1,128)}', space=vmem, size = 0x12000, scoped, tag = 'internal scratch']
  #allocation2 [shape = 'bf16[10,10,56]{2,1,0:T(8,128)(2,1)}', space=vmem, size = 0xa000, scoped, tag = 'scratch operand']
  #allocation3 [shape = 'bf16[10,10,160]{2,1,0:T(8,128)(2,1)}', space=vmem, size = 0x14000, scoped, tag = 'scratch operand']
  #allocation4 [shape = 'bf16[10,10,128]{2,1,0:T(8,128)(2,1)}', space=vmem, size = 0xa000, scoped, tag = 'scratch operand']
  %s0 = inlined_call_operand.vmem [shape: f32[2,8,8,56], index: 0, kind: input, shape index: {}]
  %s1 = inlined_call_operand.vmem [shape: f32[2,16,160], index: 1, kind: input, shape index: {}]
  %s2 = inlined_call_operand.vmem [shape: f32[64,16], index: 2, kind: input, shape index: {}]
  %s3 = inlined_call_operand.vmem [shape: bf16[9,56,128], index: 3, kind: input, shape index: {}]
  %s4 = inlined_call_operand.vmem [shape: bf16[9,160,128], index: 4, kind: input, shape index: {}]
  %s5 = inlined_call_operand.vmem [shape: bf16[9,128,128], index: 5, kind: input, shape index: {}]
  %s6 = inlined_call_operand.vmem [shape: f32[128,32], index: 6, kind: input, shape index: {}]
  %s7 = inlined_call_operand.vmem [shape: f32[1,32], index: 7, kind: input, shape index: {}]
  %s8 = inlined_call_operand.hbm [shape: f32[2,8,8,32], index: 8, kind: output, shape index: {}]
  %s9 = sld [smem:[#allocation0]]
  $region65: #{encoder_eff_forward.1} parent=0
    _
  %s11 = ssub.s32 1, %s9
  %s12 = scalar_select 0, %s11, %s9
  $region1: #{encoder_eff_forward.1} parent=0
    #allocation5 [shape = 'u8[65536]{0}', space=vmem, size = 0x10000, scoped, tag = 'output window, operand 0']
    #allocation6 [shape = 's32[2]{0}', space=sflag, size = 0x8, scoped, tag = 'scoped memory for encoder_eff_forward.1']
    %13 = vsyncpa [#allocation6], 0
    %s14 = scalar_lea.sflag [#allocation6], 1
    %15 = vsyncpa %s14, 0
    loop: start=0, step=1, limit=4
    $region2: #{encoder_eff_forward.1} parent=1 // loop_pre_header
      _
    $region3: #{encoder_eff_forward.1} parent=1 // loop_header
      %s17 = sphi 0, %s21
      %p18 = scmp.ge.s32.totalorder %s17, 4
      %s27 = sphi 0, %s29
      %s30 = sphi 0, %s27
      %s31 = sphi 0, %s30
      %s47 = sphi 0, %s31
      %s53 = sphi 0, %s55
      %s56 = sphi 0, %s53
      %s57 = sphi 0, %s56
      %s73 = sphi 0, %s57
      %s77 = sphi 0, %s77
      %s79 = sphi 0, %s77
      %s80 = sphi 0, %s79
      %s94 = sphi 0, %s80
      %s98 = sphi 0, %s98
      %s100 = sphi 0, %s98
      %s101 = sphi 0, %s100
      %s115 = sphi 0, %s101
      %s119 = sphi 0, %s119
      %s121 = sphi 0, %s119
      %s122 = sphi 0, %s121
      %s136 = sphi 0, %s122
      %s140 = sphi 0, %s140
      %s142 = sphi 0, %s140
      %s143 = sphi 0, %s142
      %s157 = sphi 0, %s143
      %s161 = sphi 0, %s161
      %s163 = sphi 0, %s161
      %s164 = sphi 0, %s163
      %s178 = sphi 0, %s164
      %s182 = sphi 0, %s182
      %s184 = sphi 0, %s182
      %s185 = sphi 0, %s184
      %s199 = sphi 0, %s185
      %s205 = sphi 0, %s207
      %s208 = sphi 0, %s205
      %s209 = sphi 0, %s208
      %s225 = sphi 0, %s209
    $region4: #{encoder_eff_forward.1} parent=1 // loop_header_branch
      %20 = sbr.rel (%p18) target = $region8
    $region5: #{encoder_eff_forward.1} parent=1 // loop_body
      %s22 = ssub.s32 %s17, 1
      %s23 = ssub.s32 %s17, 2
      %s24 = sadd.s32 %s17, 1
      %s25 = ssub.s32 %s17, %s24
      %p26 = scmp.eq.s32.totalorder %s25, 0
      %s28 = sadd.s32 %s27, 1
      %s29 = scalar_select %p26, %s27, %s28
      %p32 = pneg %p26
      %p33 = scmp.eq.s32.totalorder %s17, 1
      %p34 = por %p32, %p33
      %p35 = scmp.ne.s32.totalorder %s27, %s30
      %p36 = scmp.eq.s32.totalorder %s17, 0
      %p37 = por %p35, %p36
      %p38 = scmp.ne.s32.totalorder %s27, %s30
      %p39 = scmp.eq.s32.totalorder %s22, 1
      %p40 = por %p38, %p39
      %p41 = scmp.ne.s32.totalorder %s30, %s31
      %p42 = scmp.eq.s32.totalorder %s22, 0
      %p43 = por %p41, %p42
      %p44 = scmp.ne.s32.totalorder %s30, %s31
      %p45 = scmp.eq.s32.totalorder %s23, 1
      %p46 = por %p44, %p45
      %p48 = scmp.ne.s32.totalorder %s31, %s47
      %p49 = scmp.eq.s32.totalorder %s23, 0
      %p50 = por %p48, %p49
      %s51 = ssub.s32 %s17, %s24
      %p52 = scmp.eq.s32.totalorder %s51, 0
      %s54 = sadd.s32 %s53, 1
      %s55 = scalar_select %p52, %s53, %s54
      %p58 = pneg %p52
      %p59 = scmp.eq.s32.totalorder %s17, 1
      %p60 = por %p58, %p59
      %p61 = scmp.ne.s32.totalorder %s53, %s56
      %p62 = scmp.eq.s32.totalorder %s17, 0
      %p63 = por %p61, %p62
      %p64 = scmp.ne.s32.totalorder %s53, %s56
      %p65 = scmp.eq.s32.totalorder %s22, 1
      %p66 = por %p64, %p65
      %p67 = scmp.ne.s32.totalorder %s56, %s57
      %p68 = scmp.eq.s32.totalorder %s22, 0
      %p69 = por %p67, %p68
      %p70 = scmp.ne.s32.totalorder %s56, %s57
      %p71 = scmp.eq.s32.totalorder %s23, 1
      %p72 = por %p70, %p71
      %p74 = scmp.ne.s32.totalorder %s57, %s73
      %p75 = scmp.eq.s32.totalorder %s23, 0
      %p76 = por %p74, %p75
      %s78 = sadd.s32 %s77, 1
      %p81 = scmp.eq.s32.totalorder %s17, 1
      %p82 = scmp.ne.s32.totalorder %s77, %s79
      %p83 = scmp.eq.s32.totalorder %s17, 0
      %p84 = por %p82, %p83
      %p85 = scmp.ne.s32.totalorder %s77, %s79
      %p86 = scmp.eq.s32.totalorder %s22, 1
      %p87 = por %p85, %p86
      %p88 = scmp.ne.s32.totalorder %s79, %s80
      %p89 = scmp.eq.s32.totalorder %s22, 0
      %p90 = por %p88, %p89
      %p91 = scmp.ne.s32.totalorder %s79, %s80
      %p92 = scmp.eq.s32.totalorder %s23, 1
      %p93 = por %p91, %p92
      %p95 = scmp.ne.s32.totalorder %s80, %s94
      %p96 = scmp.eq.s32.totalorder %s23, 0
      %p97 = por %p95, %p96
      %s99 = sadd.s32 %s98, 1
      %p102 = scmp.eq.s32.totalorder %s17, 1
      %p103 = scmp.ne.s32.totalorder %s98, %s100
      %p104 = scmp.eq.s32.totalorder %s17, 0
      %p105 = por %p103, %p104
      %p106 = scmp.ne.s32.totalorder %s98, %s100
      %p107 = scmp.eq.s32.totalorder %s22, 1
      %p108 = por %p106, %p107
      %p109 = scmp.ne.s32.totalorder %s100, %s101
      %p110 = scmp.eq.s32.totalorder %s22, 0
      %p111 = por %p109, %p110
      %p112 = scmp.ne.s32.totalorder %s100, %s101
      %p113 = scmp.eq.s32.totalorder %s23, 1
      %p114 = por %p112, %p113
      %p116 = scmp.ne.s32.totalorder %s101, %s115
      %p117 = scmp.eq.s32.totalorder %s23, 0
      %p118 = por %p116, %p117
      %s120 = sadd.s32 %s119, 1
      %p123 = scmp.eq.s32.totalorder %s17, 1
      %p124 = scmp.ne.s32.totalorder %s119, %s121
      %p125 = scmp.eq.s32.totalorder %s17, 0
      %p126 = por %p124, %p125
      %p127 = scmp.ne.s32.totalorder %s119, %s121
      %p128 = scmp.eq.s32.totalorder %s22, 1
      %p129 = por %p127, %p128
      %p130 = scmp.ne.s32.totalorder %s121, %s122
      %p131 = scmp.eq.s32.totalorder %s22, 0
      %p132 = por %p130, %p131
      %p133 = scmp.ne.s32.totalorder %s121, %s122
      %p134 = scmp.eq.s32.totalorder %s23, 1
      %p135 = por %p133, %p134
      %p137 = scmp.ne.s32.totalorder %s122, %s136
      %p138 = scmp.eq.s32.totalorder %s23, 0
      %p139 = por %p137, %p138
      %s141 = sadd.s32 %s140, 1
      %p144 = scmp.eq.s32.totalorder %s17, 1
      %p145 = scmp.ne.s32.totalorder %s140, %s142
      %p146 = scmp.eq.s32.totalorder %s17, 0
      %p147 = por %p145, %p146
      %p148 = scmp.ne.s32.totalorder %s140, %s142
      %p149 = scmp.eq.s32.totalorder %s22, 1
      %p150 = por %p148, %p149
      %p151 = scmp.ne.s32.totalorder %s142, %s143
      %p152 = scmp.eq.s32.totalorder %s22, 0
      %p153 = por %p151, %p152
      %p154 = scmp.ne.s32.totalorder %s142, %s143
      %p155 = scmp.eq.s32.totalorder %s23, 1
      %p156 = por %p154, %p155
      %p158 = scmp.ne.s32.totalorder %s143, %s157
      %p159 = scmp.eq.s32.totalorder %s23, 0
      %p160 = por %p158, %p159
      %s162 = sadd.s32 %s161, 1
      %p165 = scmp.eq.s32.totalorder %s17, 1
      %p166 = scmp.ne.s32.totalorder %s161, %s163
      %p167 = scmp.eq.s32.totalorder %s17, 0
      %p168 = por %p166, %p167
      %p169 = scmp.ne.s32.totalorder %s161, %s163
      %p170 = scmp.eq.s32.totalorder %s22, 1
      %p171 = por %p169, %p170
      %p172 = scmp.ne.s32.totalorder %s163, %s164
      %p173 = scmp.eq.s32.totalorder %s22, 0
      %p174 = por %p172, %p173
      %p175 = scmp.ne.s32.totalorder %s163, %s164
      %p176 = scmp.eq.s32.totalorder %s23, 1
      %p177 = por %p175, %p176
      %p179 = scmp.ne.s32.totalorder %s164, %s178
      %p180 = scmp.eq.s32.totalorder %s23, 0
      %p181 = por %p179, %p180
      %s183 = sadd.s32 %s182, 1
      %p186 = scmp.eq.s32.totalorder %s17, 1
      %p187 = scmp.ne.s32.totalorder %s182, %s184
      %p188 = scmp.eq.s32.totalorder %s17, 0
      %p189 = por %p187, %p188
      %p190 = scmp.ne.s32.totalorder %s182, %s184
      %p191 = scmp.eq.s32.totalorder %s22, 1
      %p192 = por %p190, %p191
      %p193 = scmp.ne.s32.totalorder %s184, %s185
      %p194 = scmp.eq.s32.totalorder %s22, 0
      %p195 = por %p193, %p194
      %p196 = scmp.ne.s32.totalorder %s184, %s185
      %p197 = scmp.eq.s32.totalorder %s23, 1
      %p198 = por %p196, %p197
      %p200 = scmp.ne.s32.totalorder %s185, %s199
      %p201 = scmp.eq.s32.totalorder %s23, 0
      %p202 = por %p200, %p201
      %s203 = ssub.s32 %s17, %s24
      %p204 = scmp.eq.s32.totalorder %s203, 0
      %s206 = sadd.s32 %s205, 1
      %s207 = scalar_select %p204, %s205, %s206
      %p210 = pneg %p204
      %p211 = scmp.eq.s32.totalorder %s17, 1
      %p212 = por %p210, %p211
      %p213 = scmp.ne.s32.totalorder %s205, %s208
      %p214 = scmp.eq.s32.totalorder %s17, 0
      %p215 = por %p213, %p214
      %p216 = scmp.ne.s32.totalorder %s205, %s208
      %p217 = scmp.eq.s32.totalorder %s22, 1
      %p218 = por %p216, %p217
      %p219 = scmp.ne.s32.totalorder %s208, %s209
      %p220 = scmp.eq.s32.totalorder %s22, 0
      %p221 = por %p219, %p220
      %p222 = scmp.ne.s32.totalorder %s208, %s209
      %p223 = scmp.eq.s32.totalorder %s23, 1
      %p224 = por %p222, %p223
      %p226 = scmp.ne.s32.totalorder %s209, %s225
      %p227 = scmp.eq.s32.totalorder %s23, 0
      %p228 = por %p226, %p227
      %p229 = scmp.le.s32.totalorder 1, %s17
      %p230 = scmp.lt.s32.totalorder %s17, 3
      %p231 = pnand %p229, %p230
      %p232 = pneg %p231
      // Predicated region
      $region9: #{encoder_eff_forward.1} parent=5 // pred_check
        _
      $region10: #{encoder_eff_forward.1} parent=5 // pred_check_branch
        %234 = sbr.rel (%p231) target = $region12
      $region11: #{encoder_eff_forward.1} parent=5 // pred_region
        %s235 = ssub.s32 %s17, 1
        // Predicated region
        $region13: #{encoder_eff_forward.1} parent=11 // pred_check
          %p236 = pneg %p90
        $region14: #{encoder_eff_forward.1} parent=11 // pred_check_branch
          %238 = sbr.rel (%p236) target = $region16
        $region15: #{encoder_eff_forward.1} parent=11 // pred_region
          _
        $region16: #{encoder_eff_forward.1} parent=11 // pred_fallthru
          _
        // Predicated region
        $region17: #{encoder_eff_forward.1} parent=11 // pred_check
          %p239 = pneg %p111
        $region18: #{encoder_eff_forward.1} parent=11 // pred_check_branch
          %241 = sbr.rel (%p239) target = $region20
        $region19: #{encoder_eff_forward.1} parent=11 // pred_region
          _
        $region20: #{encoder_eff_forward.1} parent=11 // pred_fallthru
          _
        // Predicated region
        $region21: #{encoder_eff_forward.1} parent=11 // pred_check
          %p242 = pneg %p132
        $region22: #{encoder_eff_forward.1} parent=11 // pred_check_branch
          %244 = sbr.rel (%p242) target = $region24
        $region23: #{encoder_eff_forward.1} parent=11 // pred_region
          _
        $region24: #{encoder_eff_forward.1} parent=11 // pred_fallthru
          _
        // Predicated region
        $region25: #{encoder_eff_forward.1} parent=11 // pred_check
          %p245 = pneg %p153
        $region26: #{encoder_eff_forward.1} parent=11 // pred_check_branch
          %247 = sbr.rel (%p245) target = $region28
        $region27: #{encoder_eff_forward.1} parent=11 // pred_region
          _
        $region28: #{encoder_eff_forward.1} parent=11 // pred_fallthru
          _
        // Predicated region
        $region29: #{encoder_eff_forward.1} parent=11 // pred_check
          %p248 = pneg %p174
        $region30: #{encoder_eff_forward.1} parent=11 // pred_check_branch
          %250 = sbr.rel (%p248) target = $region32
        $region31: #{encoder_eff_forward.1} parent=11 // pred_region
          _
        $region32: #{encoder_eff_forward.1} parent=11 // pred_fallthru
          _
        // Predicated region
        $region33: #{encoder_eff_forward.1} parent=11 // pred_check
          %p251 = pneg %p195
        $region34: #{encoder_eff_forward.1} parent=11 // pred_check_branch
          %253 = sbr.rel (%p251) target = $region36
        $region35: #{encoder_eff_forward.1} parent=11 // pred_region
          _
        $region36: #{encoder_eff_forward.1} parent=11 // pred_fallthru
          _
      $region12: #{encoder_eff_forward.1} parent=5 // pred_fallthru
        _
      %p254 = scmp.lt.s32.totalorder %s17, 2
      // Predicated region
      $region37: #{encoder_eff_forward.1} parent=5 // pred_check
        %p255 = pneg %p254
      $region38: #{encoder_eff_forward.1} parent=5 // pred_check_branch
        %257 = sbr.rel (%p255) target = $region40
      $region39: #{encoder_eff_forward.1} parent=5 // pred_region
        // Predicated region
        $region41: #{encoder_eff_forward.1} parent=39 // pred_check
          %p258 = pneg %p37
        $region42: #{encoder_eff_forward.1} parent=39 // pred_check_branch
          %260 = sbr.rel (%p258) target = $region44
        $region43: #{encoder_eff_forward.1} parent=39 // pred_region
          %p261 = scmp.lt.s32.totalorder %s17, 1
          %s262 = scalar_select %p261, %s17, 1
          %s263 = smul.addr %s262, 8
          %s264 = smul.addr %s263, 8
          %s265 = scalar_lea.vmem %s0, %s264
        $region44: #{encoder_eff_forward.1} parent=39 // pred_fallthru
          _
        // Predicated region
        $region45: #{encoder_eff_forward.1} parent=39 // pred_check
          %p266 = pneg %p63
        $region46: #{encoder_eff_forward.1} parent=39 // pred_check_branch
          %268 = sbr.rel (%p266) target = $region48
        $region47: #{encoder_eff_forward.1} parent=39 // pred_region
          %p269 = scmp.lt.s32.totalorder %s17, 1
          %s270 = scalar_select %p269, %s17, 1
          %s271 = smul.addr %s270, 4
          %s272 = smul.addr %s271, 8
          %s273 = scalar_lea.vmem %s1, %s272
        $region48: #{encoder_eff_forward.1} parent=39 // pred_fallthru
          _
      $region40: #{encoder_eff_forward.1} parent=5 // pred_fallthru
        _
      %p274 = scmp.le.s32.totalorder 1, %s17
      %p275 = scmp.lt.s32.totalorder %s17, 3
      %p276 = pnand %p274, %p275
      %p277 = pneg %p276
      // Predicated region
      $region49: #{encoder_eff_forward.1} parent=5 // pred_check
        _
      $region50: #{encoder_eff_forward.1} parent=5 // pred_check_branch
        %279 = sbr.rel (%p276) target = $region52
      $region51: #{encoder_eff_forward.1} parent=5 // pred_region
        %s280 = ssub.s32 %s17, 1
        %p281 = scmp.lt.s32.totalorder %s22, 1
        %s282 = scalar_select %p281, %s22, 1
        %s283 = smul.addr %s282, 8
        %s284 = smul.addr %s283, 8
        %s285 = scalar_lea.vmem %s0, %s284
        %p286 = pneg %p43
        %p287 = pneg %p40
        %p288 = scmp.lt.s32.totalorder %s22, 1
        %s289 = scalar_select %p288, %s22, 1
        %s290 = smul.addr %s289, 4
        %s291 = smul.addr %s290, 8
        %s292 = scalar_lea.vmem %s1, %s291
        %p293 = pneg %p69
        %p294 = pneg %p66
        %p295 = pneg %p90
        %p296 = pneg %p87
        %p297 = pneg %p111
        %p298 = pneg %p108
        %p299 = pneg %p132
        %p300 = pneg %p129
        %p301 = pneg %p153
        %p302 = pneg %p150
        %p303 = pneg %p174
        %p304 = pneg %p171
        %p305 = pneg %p195
        %p306 = pneg %p192
        %p307 = pneg %p221
        %p308 = pneg %p218
        %s309 = sand.u32 %s208, 1
        %s310 = scalar_lea.sflag [#allocation6], %s309
        %s311 = sand.u32 %s208, 1
        %s312 = smul.addr %s311, 64
        %s313 = scalar_lea.vmem [#allocation5], %s312
        %p314 = scmp.lt.s32.totalorder %s22, 1
        %s315 = scalar_select %p314, %s22, 1
        %s316 = smul.addr %s315, 8
        %s317 = smul.addr %s316, 8
        %s318 = scalar_lea.vmem %s0, %s317
        %p319 = scmp.lt.s32.totalorder %s22, 1
        %s320 = scalar_select %p319, %s22, 1
        %s321 = smul.addr %s320, 4
        %s322 = smul.addr %s321, 8
        %s323 = scalar_lea.vmem %s1, %s322
        %v325 = vld [vmem:[%s323] sm:$0xff]
        %v326 = vld [vmem:[%s323 + $0x8] sm:$0xff]
        %v327 = vld [vmem:[%s323 + $0x10] sm:$0xff]
        %v328 = vld [vmem:[%s323 + $0x18] sm:$0xff]
        %v329 = vld [vmem:[%s2] sm:$0xff]
        %v330 = vld [vmem:[%s2 + $0x8] sm:$0xff]
        %v331 = vld [vmem:[%s2 + $0x10] sm:$0xff]
        %v332 = vld [vmem:[%s2 + $0x18] sm:$0xff]
        %v333 = vld [vmem:[%s2 + $0x20] sm:$0xff]
        %v334 = vld [vmem:[%s2 + $0x28] sm:$0xff]
        %v335 = vld [vmem:[%s2 + $0x30] sm:$0xff]
        %v336 = vld [vmem:[%s2 + $0x38] sm:$0xff]
        %vm337 = vcmask 130048
        %v339 = vsel %vm337, %v329, 0
        %v342 = vsel %vm337, %v330, 0
        %v345 = vsel %vm337, %v331, 0
        %v348 = vsel %vm337, %v332, 0
        %v351 = vsel %vm337, %v333, 0
        %v354 = vsel %vm337, %v334, 0
        %v357 = vsel %vm337, %v335, 0
        %v360 = vsel %vm337, %v336, 0
        %362 = vmatprep.subr.mxu0 %v326
        %363 = vmatpush1.msra.mxu0 %v325
        %364 = vmatprep.subr.mxu0 %v328
        %365 = vmatpush1.msra.mxu0 %v327
        %366 = vmatprep.subr.mxu0 0.0
        %367 = vmatpush1.msra.mxu0 0.0
        %368 = vmatprep.subr.mxu0 0.0
        %369 = vmatpush1.msra.mxu0 0.0
        %370 = vmatprep.subr.mxu0 0.0
        %371 = vmatpush1.msra.mxu0 0.0
        %372 = vmatprep.subr.mxu0 0.0
        %373 = vmatpush1.msra.mxu0 0.0
        %374 = vmatprep.subr.mxu0 0.0
        %375 = vmatpush1.msra.mxu0 0.0
        %376 = vmatprep.subr.mxu0 0.0
        %377 = vmatpush1.msra.mxu0 0.0
        %378 = vmatprep.subr.mxu0 0.0
        %379 = vmatpush1.msra.mxu0 0.0
        %380 = vmatprep.subr.mxu0 0.0
        %381 = vmatpush1.msra.mxu0 0.0
        %382 = vmatprep.subr.mxu0 0.0
        %383 = vmatpush1.msra.mxu0 0.0
        %384 = vmatprep.subr.mxu0 0.0
        %385 = vmatpush1.msra.mxu0 0.0
        %386 = vmatprep.subr.mxu0 0.0
        %387 = vmatpush1.msra.mxu0 0.0
        %388 = vmatprep.subr.mxu0 0.0
        %389 = vmatpush1.msra.mxu0 0.0
        %390 = vmatprep.subr.mxu0 0.0
        %391 = vmatpush1.msra.mxu0 0.0
        %392 = vmatprep.subr.mxu0 0.0
        %393 = vmatpush1.msra.mxu0 0.0
        %394 = vmatprep.subr.mxu0 0.0
        %395 = vmatpush1.msra.mxu0 0.0
        %396 = vmatprep.subr.mxu0 0.0
        %397 = vmatpush1.msra.mxu0 0.0
        %398 = vmatprep.subr.mxu0 0.0
        %399 = vmatpush1.msra.mxu0 0.0
        %400 = vmatprep.subr.mxu0 0.0
        %401 = vmatpush1.msra.mxu0 0.0
        %402 = vmatprep.subr.mxu0 0.0
        %403 = vmatpush1.msra.mxu0 0.0
        %404 = vmatprep.subr.mxu0 0.0
        %405 = vmatpush1.msra.mxu0 0.0
        %406 = vmatprep.subr.mxu0 0.0
        %407 = vmatpush1.msra.mxu0 0.0
        %408 = vmatprep.subr.mxu0 0.0
        %409 = vmatpush1.msra.mxu0 0.0
        %410 = vmatprep.subr.mxu0 0.0
        %411 = vmatpush1.msra.mxu0 0.0
        %412 = vmatprep.subr.mxu0 0.0
        %413 = vmatpush1.msra.mxu0 0.0
        %414 = vmatprep.subr.mxu0 0.0
        %415 = vmatpush1.msra.mxu0 0.0
        %416 = vmatprep.subr.mxu0 0.0
        %417 = vmatpush1.msra.mxu0 0.0
        %418 = vmatprep.subr.mxu0 0.0
        %419 = vmatpush1.msra.mxu0 0.0
        %420 = vmatprep.subr.mxu0 0.0
        %421 = vmatpush1.msra.mxu0 0.0
        %422 = vmatprep.subr.mxu0 0.0
        %423 = vmatpush1.msra.mxu0 0.0
        %424 = vmatprep.subr.mxu0 0.0
        %425 = vmatpush1.msra.mxu0 0.0
        %426 = vmatprep.mubr.f32.mxu0 0.0
        %427 = vmatmul.mubr.f32.gmra.mrb[0].mxu0 %v339
        %v428 = vpop.f32.mrb[0].mxu0
        %v429 = vadd.f32 0.0, %v428
        %v430 = vpop.f32.mrb[0].mxu0
        %v431 = vadd.f32 0.0, %v430
        %432 = vmatprep.mubr.f32.mxu0 0.0
        %433 = vmatmul.mubr.f32.gmra.mrb[0].mxu0 %v342
        %v434 = vpop.f32.mrb[0].mxu0
        %v435 = vadd.f32 0.0, %v434
        %v436 = vpop.f32.mrb[0].mxu0
        %v437 = vadd.f32 0.0, %v436
        %438 = vmatprep.mubr.f32.mxu0 0.0
        %439 = vmatmul.mubr.f32.gmra.mrb[0].mxu0 %v345
        %v440 = vpop.f32.mrb[0].mxu0
        %v441 = vadd.f32 0.0, %v440
        %v442 = vpop.f32.mrb[0].mxu0
        %v443 = vadd.f32 0.0, %v442
        %444 = vmatprep.mubr.f32.mxu0 0.0
        %445 = vmatmul.mubr.f32.gmra.mrb[0].mxu0 %v348
        %v446 = vpop.f32.mrb[0].mxu0
        %v447 = vadd.f32 0.0, %v446
        %v448 = vpop.f32.mrb[0].mxu0
        %v449 = vadd.f32 0.0, %v448
        %450 = vmatprep.mubr.f32.mxu0 0.0
        %451 = vmatmul.mubr.f32.gmra.mrb[0].mxu0 %v351
        %v452 = vpop.f32.mrb[0].mxu0
        %v453 = vadd.f32 0.0, %v452
        %v454 = vpop.f32.mrb[0].mxu0
        %v455 = vadd.f32 0.0, %v454
        %456 = vmatprep.mubr.f32.mxu0 0.0
        %457 = vmatmul.mubr.f32.gmra.mrb[0].mxu0 %v354
        %v458 = vpop.f32.mrb[0].mxu0
        %v459 = vadd.f32 0.0, %v458
        %v460 = vpop.f32.mrb[0].mxu0
        %v461 = vadd.f32 0.0, %v460
        %462 = vmatprep.mubr.f32.mxu0 0.0
        %463 = vmatmul.mubr.f32.gmra.mrb[0].mxu0 %v357
        %v464 = vpop.f32.mrb[0].mxu0
        %v465 = vadd.f32 0.0, %v464
        %v466 = vpop.f32.mrb[0].mxu0
        %v467 = vadd.f32 0.0, %v466
        %468 = vmatprep.mubr.f32.mxu0 0.0
        %469 = vmatmul.mubr.f32.gmra.mrb[0].mxu0 %v360
        %v470 = vpop.f32.mrb[0].mxu0
        %v471 = vadd.f32 0.0, %v470
        %v472 = vpop.f32.mrb[0].mxu0
        %v473 = vadd.f32 0.0, %v472
        %474 = vdwg.mxu0
        %vm475 = vcmask 453632
        %476 = vst.msk [vmem:[#allocation2] sm:$0xf] %vm475, 0
        %vm477 = vcmask 450560
        %478 = vst.msk [vmem:[#allocation2 + $0x4] sm:$0x1] %vm477, 0
        %479 = vst.msk [vmem:[#allocation2 + $0x8] sm:$0xf] %vm475, 0
        %480 = vst.msk [vmem:[#allocation2 + $0xc] sm:$0x1] %vm477, 0
        %481 = vst.msk [vmem:[#allocation2 + $0x10] sm:$0xf] %vm475, 0
        %482 = vst.msk [vmem:[#allocation2 + $0x14] sm:$0x1] %vm477, 0
        %483 = vst.msk [vmem:[#allocation2 + $0x18] sm:$0xf] %vm475, 0
        %484 = vst.msk [vmem:[#allocation2 + $0x1c] sm:$0x1] %vm477, 0
        %485 = vst.msk [vmem:[#allocation2 + $0x20] sm:$0xf] %vm475, 0
        %486 = vst.msk [vmem:[#allocation2 + $0x24] sm:$0x1] %vm477, 0
        %487 = vst.msk [vmem:[#allocation2 + $0x28] sm:$0xf] %vm475, 0
        %488 = vst.msk [vmem:[#allocation2 + $0x2c] sm:$0x1] %vm477, 0
        %489 = vst.msk [vmem:[#allocation2 + $0x30] sm:$0xf] %vm475, 0
        %490 = vst.msk [vmem:[#allocation2 + $0x34] sm:$0x1] %vm477, 0
        %491 = vst.msk [vmem:[#allocation2 + $0x38] sm:$0xf] %vm475, 0
        %492 = vst.msk [vmem:[#allocation2 + $0x3c] sm:$0x1] %vm477, 0
        %493 = vst.msk [vmem:[#allocation2 + $0x40] sm:$0xf] %vm475, 0
        %494 = vst.msk [vmem:[#allocation2 + $0x44] sm:$0x1] %vm477, 0
        %495 = vst.msk [vmem:[#allocation2 + $0x48] sm:$0xf] %vm475, 0
        %496 = vst.msk [vmem:[#allocation2 + $0x4c] sm:$0x1] %vm477, 0
        %vm497 = vcmask 1043456
        %vm498 = vcmask 261124
        %vm499 = vmor %vm498, %vm497
        %500 = vst.msk [vmem:[#allocation3] sm:$0xff] %vm499, 0
        %vm501 = vcmask 1040384
        %vm502 = vcmask 258052
        %vm503 = vmor %vm502, %vm501
        %504 = vst.msk [vmem:[#allocation3 + $0x8] sm:$0x11] %vm503, 0
        %505 = vst.msk [vmem:[#allocation3 + $0x10] sm:$0xff] %vm499, 0
        %506 = vst.msk [vmem:[#allocation3 + $0x18] sm:$0x11] %vm503, 0
        %507 = vst.msk [vmem:[#allocation3 + $0x20] sm:$0xff] %vm499, 0
        %508 = vst.msk [vmem:[#allocation3 + $0x28] sm:$0x11] %vm503, 0
        %509 = vst.msk [vmem:[#allocation3 + $0x30] sm:$0xff] %vm499, 0
        %510 = vst.msk [vmem:[#allocation3 + $0x38] sm:$0x11] %vm503, 0
        %511 = vst.msk [vmem:[#allocation3 + $0x40] sm:$0xff] %vm499, 0
        %512 = vst.msk [vmem:[#allocation3 + $0x48] sm:$0x11] %vm503, 0
        %513 = vst.msk [vmem:[#allocation3 + $0x50] sm:$0xff] %vm499, 0
        %514 = vst.msk [vmem:[#allocation3 + $0x58] sm:$0x11] %vm503, 0
        %515 = vst.msk [vmem:[#allocation3 + $0x60] sm:$0xff] %vm499, 0
        %516 = vst.msk [vmem:[#allocation3 + $0x68] sm:$0x11] %vm503, 0
        %517 = vst.msk [vmem:[#allocation3 + $0x70] sm:$0xff] %vm499, 0
        %518 = vst.msk [vmem:[#allocation3 + $0x78] sm:$0x11] %vm503, 0
        %519 = vst.msk [vmem:[#allocation3 + $0x80] sm:$0xff] %vm499, 0
        %520 = vst.msk [vmem:[#allocation3 + $0x88] sm:$0x11] %vm503, 0
        %521 = vst.msk [vmem:[#allocation3 + $0x90] sm:$0xff] %vm499, 0
        %522 = vst.msk [vmem:[#allocation3 + $0x98] sm:$0x11] %vm503, 0
        %v523 = vld [vmem:[%s318] sm:$0xff]
        %v524 = vld [vmem:[%s318 + $0x8] sm:$0xff]
        %v525 = vld [vmem:[%s318 + $0x10] sm:$0xff]
        %v526 = vld [vmem:[%s318 + $0x18] sm:$0xff]
        %v527 = vld [vmem:[%s318 + $0x20] sm:$0xff]
        %v528 = vld [vmem:[%s318 + $0x28] sm:$0xff]
        %v529 = vld [vmem:[%s318 + $0x30] sm:$0xff]
        %v530 = vld [vmem:[%s318 + $0x38] sm:$0xff]
        %v531 = vpack.c.bf16 %v523, %v523
        %v532 = vpack.c.bf16 %v524, %v524
        %v533 = vpack.c.bf16 %v525, %v525
        %v534 = vpack.c.bf16 %v526, %v526
        %v535 = vpack.c.bf16 %v527, %v527
        %v536 = vpack.c.bf16 %v528, %v528
        %v537 = vpack.c.bf16 %v529, %v529
        %v538 = vpack.c.bf16 %v530, %v530
        %v547 = vunpack.c.l.b16 %v531
        %v548 = vunpack.c.l.b16 %v532
        %v549 = vunpack.c.l.b16 %v533
        %v550 = vunpack.c.l.b16 %v534
        %v551 = vunpack.c.l.b16 %v535
        %v552 = vunpack.c.l.b16 %v536
        %v553 = vunpack.c.l.b16 %v537
        %v554 = vunpack.c.l.b16 %v538
        %v555 = vpack.c.b16 %v547, %v547
        %v556 = vpack.c.b16 %v548, %v548
        %v557 = vpack.c.b16 %v549, %v549
        %v558 = vpack.c.b16 %v550, %v550
        %v559 = vpack.c.b16 %v551, %v551
        %v560 = vpack.c.b16 %v552, %v552
        %v561 = vpack.c.b16 %v553, %v553
        %v562 = vpack.c.b16 %v554, %v554
        %v564 = vshrl.u32 %v555, 16
        %v566 = vrot.slane %v564, 7
        %v567 = vshll.u32 %v555, 16
        %v569 = vor.u32 %v566, %v567
        %v570 = vrot.slane %v566, 4
        %v572 = vshrl.u32 %v556, 16
        %v574 = vrot.slane %v572, 7
        %v575 = vshll.u32 %v556, 16
        %v577 = vor.u32 %v574, %v575
        %v578 = vrot.slane %v574, 4
        %v580 = vshrl.u32 %v557, 16
        %v582 = vrot.slane %v580, 7
        %v583 = vshll.u32 %v557, 16
        %v585 = vor.u32 %v582, %v583
        %v586 = vrot.slane %v582, 4
        %v588 = vshrl.u32 %v558, 16
        %v590 = vrot.slane %v588, 7
        %v591 = vshll.u32 %v558, 16
        %v593 = vor.u32 %v590, %v591
        %v594 = vrot.slane %v590, 4
        %v596 = vshrl.u32 %v559, 16
        %v598 = vrot.slane %v596, 7
        %v599 = vshll.u32 %v559, 16
        %v601 = vor.u32 %v598, %v599
        %v602 = vrot.slane %v598, 4
        %v604 = vshrl.u32 %v560, 16
        %v606 = vrot.slane %v604, 7
        %v607 = vshll.u32 %v560, 16
        %v609 = vor.u32 %v606, %v607
        %v610 = vrot.slane %v606, 4
        %v612 = vshrl.u32 %v561, 16
        %v614 = vrot.slane %v612, 7
        %v615 = vshll.u32 %v561, 16
        %v617 = vor.u32 %v614, %v615
        %v618 = vrot.slane %v614, 4
        %v620 = vshrl.u32 %v562, 16
        %v622 = vrot.slane %v620, 7
        %v623 = vshll.u32 %v562, 16
        %v625 = vor.u32 %v622, %v623
        %v626 = vrot.slane %v622, 4
        %s643 = scalar_lea.vmem [#allocation2], 8
        %vm644 = vcmask 453632
        %vm645 = vsmask.f32 7938
        %vm646 = vmand %vm644, %vm645
        %v647 = vld [vmem:[%s643] sm:$0xf]
        %v648 = vsel %vm646, %v569, %v647
        %649 = vst [vmem:[%s643] sm:$0xf] %v648
        %vm650 = vcmask 450560
        %vm651 = vsmask.f32 256
        %vm652 = vmand %vm650, %vm651
        %v653 = vld [vmem:[%s643 + $0x4] sm:$0x1]
        %v654 = vsel %vm652, %v570, %v653
        %655 = vst [vmem:[%s643 + $0x4] sm:$0x1] %v654
        %v656 = vld [vmem:[%s643 + $0x8] sm:$0xf]
        %v657 = vsel %vm646, %v577, %v656
        %658 = vst [vmem:[%s643 + $0x8] sm:$0xf] %v657
        %v659 = vld [vmem:[%s643 + $0xc] sm:$0x1]
        %v660 = vsel %vm652, %v578, %v659
        %661 = vst [vmem:[%s643 + $0xc] sm:$0x1] %v660
        %v662 = vld [vmem:[%s643 + $0x10] sm:$0xf]
        %v663 = vsel %vm646, %v585, %v662
        %664 = vst [vmem:[%s643 + $0x10] sm:$0xf] %v663
        %v665 = vld [vmem:[%s643 + $0x14] sm:$0x1]
        %v666 = vsel %vm652, %v586, %v665
        %667 = vst [vmem:[%s643 + $0x14] sm:$0x1] %v666
        %v668 = vld [vmem:[%s643 + $0x18] sm:$0xf]
        %v669 = vsel %vm646, %v593, %v668
        %670 = vst [vmem:[%s643 + $0x18] sm:$0xf] %v669
        %v671 = vld [vmem:[%s643 + $0x1c] sm:$0x1]
        %v672 = vsel %vm652, %v594, %v671
        %673 = vst [vmem:[%s643 + $0x1c] sm:$0x1] %v672
        %v674 = vld [vmem:[%s643 + $0x20] sm:$0xf]
        %v675 = vsel %vm646, %v601, %v674
        %676 = vst [vmem:[%s643 + $0x20] sm:$0xf] %v675
        %v677 = vld [vmem:[%s643 + $0x24] sm:$0x1]
        %v678 = vsel %vm652, %v602, %v677
        %679 = vst [vmem:[%s643 + $0x24] sm:$0x1] %v678
        %v680 = vld [vmem:[%s643 + $0x28] sm:$0xf]
        %v681 = vsel %vm646, %v609, %v680
        %682 = vst [vmem:[%s643 + $0x28] sm:$0xf] %v681
        %v683 = vld [vmem:[%s643 + $0x2c] sm:$0x1]
        %v684 = vsel %vm652, %v610, %v683
        %685 = vst [vmem:[%s643 + $0x2c] sm:$0x1] %v684
        %v686 = vld [vmem:[%s643 + $0x30] sm:$0xf]
        %v687 = vsel %vm646, %v617, %v686
        %688 = vst [vmem:[%s643 + $0x30] sm:$0xf] %v687
        %v689 = vld [vmem:[%s643 + $0x34] sm:$0x1]
        %v690 = vsel %vm652, %v618, %v689
        %691 = vst [vmem:[%s643 + $0x34] sm:$0x1] %v690
        %v692 = vld [vmem:[%s643 + $0x38] sm:$0xf]
        %v693 = vsel %vm646, %v625, %v692
        %694 = vst [vmem:[%s643 + $0x38] sm:$0xf] %v693
        %v695 = vld [vmem:[%s643 + $0x3c] sm:$0x1]
        %v696 = vsel %vm652, %v626, %v695
        %697 = vst [vmem:[%s643 + $0x3c] sm:$0x1] %v696
        %v698 = vpack.c.bf16 %v429, %v429
        %v699 = vpack.c.bf16 %v431, %v431
        %v700 = vpack.c.bf16 %v435, %v435
        %v701 = vpack.c.bf16 %v437, %v437
        %v702 = vpack.c.bf16 %v441, %v441
        %v703 = vpack.c.bf16 %v443, %v443
        %v704 = vpack.c.bf16 %v447, %v447
        %v705 = vpack.c.bf16 %v449, %v449
        %v706 = vpack.c.bf16 %v453, %v453
        %v707 = vpack.c.bf16 %v455, %v455
        %v708 = vpack.c.bf16 %v459, %v459
        %v709 = vpack.c.bf16 %v461, %v461
        %v710 = vpack.c.bf16 %v465, %v465
        %v711 = vpack.c.bf16 %v467, %v467
        %v712 = vpack.c.bf16 %v471, %v471
        %v713 = vpack.c.bf16 %v473, %v473
        %v730 = vunpack.c.l.b16 %v698
        %v731 = vunpack.c.l.b16 %v699
        %v732 = vunpack.c.l.b16 %v700
        %v733 = vunpack.c.l.b16 %v701
        %v734 = vunpack.c.l.b16 %v702
        %v735 = vunpack.c.l.b16 %v703
        %v736 = vunpack.c.l.b16 %v704
        %v737 = vunpack.c.l.b16 %v705
        %v738 = vunpack.c.l.b16 %v706
        %v739 = vunpack.c.l.b16 %v707
        %v740 = vunpack.c.l.b16 %v708
        %v741 = vunpack.c.l.b16 %v709
        %v742 = vunpack.c.l.b16 %v710
        %v743 = vunpack.c.l.b16 %v711
        %v744 = vunpack.c.l.b16 %v712
        %v745 = vunpack.c.l.b16 %v713
        %v746 = vpack.c.b16 %v731, %v730
        %v747 = vpack.c.b16 %v733, %v732
        %v748 = vpack.c.b16 %v735, %v734
        %v749 = vpack.c.b16 %v737, %v736
        %v750 = vpack.c.b16 %v739, %v738
        %v751 = vpack.c.b16 %v741, %v740
        %v752 = vpack.c.b16 %v743, %v742
        %v753 = vpack.c.b16 %v745, %v744
        %v755 = vshrl.u32 %v746, 16
        %v757 = vrot.slane %v755, 7
        %v758 = vshll.u32 %v746, 16
        %v760 = vor.u32 %v757, %v758
        %v761 = vrot.slane %v757, 4
        %v763 = vshrl.u32 %v747, 16
        %v765 = vrot.slane %v763, 7
        %v766 = vshll.u32 %v747, 16
        %v768 = vor.u32 %v765, %v766
        %v769 = vrot.slane %v765, 4
        %v771 = vshrl.u32 %v748, 16
        %v773 = vrot.slane %v771, 7
        %v774 = vshll.u32 %v748, 16
        %v776 = vor.u32 %v773, %v774
        %v777 = vrot.slane %v773, 4
        %v779 = vshrl.u32 %v749, 16
        %v781 = vrot.slane %v779, 7
        %v782 = vshll.u32 %v749, 16
        %v784 = vor.u32 %v781, %v782
        %v785 = vrot.slane %v781, 4
        %v787 = vshrl.u32 %v750, 16
        %v789 = vrot.slane %v787, 7
        %v790 = vshll.u32 %v750, 16
        %v792 = vor.u32 %v789, %v790
        %v793 = vrot.slane %v789, 4
        %v795 = vshrl.u32 %v751, 16
        %v797 = vrot.slane %v795, 7
        %v798 = vshll.u32 %v751, 16
        %v800 = vor.u32 %v797, %v798
        %v801 = vrot.slane %v797, 4
        %v803 = vshrl.u32 %v752, 16
        %v805 = vrot.slane %v803, 7
        %v806 = vshll.u32 %v752, 16
        %v808 = vor.u32 %v805, %v806
        %v809 = vrot.slane %v805, 4
        %v811 = vshrl.u32 %v753, 16
        %v813 = vrot.slane %v811, 7
        %v814 = vshll.u32 %v753, 16
        %v816 = vor.u32 %v813, %v814
        %v817 = vrot.slane %v813, 4
        %s834 = scalar_lea.vmem [#allocation3], 16
        %vm835 = vcmask 1043456
        %vm836 = vmand %vm835, %vm645
        %vm837 = vcmask 261124
        %vm838 = vsmask.f32 7954
        %vm839 = vmand %vm837, %vm838
        %vm840 = vmor %vm839, %vm836
        %v841 = vld [vmem:[%s834] sm:$0xff]
        %v842 = vsel %vm840, %v760, %v841
        %843 = vst [vmem:[%s834] sm:$0xff] %v842
        %vm844 = vcmask 1040384
        %vm845 = vmand %vm844, %vm651
        %vm846 = vcmask 258052
        %vm847 = vsmask.f32 4352
        %vm848 = vmand %vm846, %vm847
        %vm849 = vmor %vm848, %vm845
        %v850 = vld [vmem:[%s834 + $0x8] sm:$0x11]
        %v851 = vsel %vm849, %v761, %v850
        %852 = vst [vmem:[%s834 + $0x8] sm:$0x11] %v851
        %v853 = vld [vmem:[%s834 + $0x10] sm:$0xff]
        %v854 = vsel %vm840, %v768, %v853
        %855 = vst [vmem:[%s834 + $0x10] sm:$0xff] %v854
        %v856 = vld [vmem:[%s834 + $0x18] sm:$0x11]
        %v857 = vsel %vm849, %v769, %v856
        %858 = vst [vmem:[%s834 + $0x18] sm:$0x11] %v857
        %v859 = vld [vmem:[%s834 + $0x20] sm:$0xff]
        %v860 = vsel %vm840, %v776, %v859
        %861 = vst [vmem:[%s834 + $0x20] sm:$0xff] %v860
        %v862 = vld [vmem:[%s834 + $0x28] sm:$0x11]
        %v863 = vsel %vm849, %v777, %v862
        %864 = vst [vmem:[%s834 + $0x28] sm:$0x11] %v863
        %v865 = vld [vmem:[%s834 + $0x30] sm:$0xff]
        %v866 = vsel %vm840, %v784, %v865
        %867 = vst [vmem:[%s834 + $0x30] sm:$0xff] %v866
        %v868 = vld [vmem:[%s834 + $0x38] sm:$0x11]
        %v869 = vsel %vm849, %v785, %v868
        %870 = vst [vmem:[%s834 + $0x38] sm:$0x11] %v869
        %v871 = vld [vmem:[%s834 + $0x40] sm:$0xff]
        %v872 = vsel %vm840, %v792, %v871
        %873 = vst [vmem:[%s834 + $0x40] sm:$0xff] %v872
        %v874 = vld [vmem:[%s834 + $0x48] sm:$0x11]
        %v875 = vsel %vm849, %v793, %v874
        %876 = vst [vmem:[%s834 + $0x48] sm:$0x11] %v875
        %v877 = vld [vmem:[%s834 + $0x50] sm:$0xff]
        %v878 = vsel %vm840, %v800, %v877
        %879 = vst [vmem:[%s834 + $0x50] sm:$0xff] %v878
        %v880 = vld [vmem:[%s834 + $0x58] sm:$0x11]
        %v881 = vsel %vm849, %v801, %v880
        %882 = vst [vmem:[%s834 + $0x58] sm:$0x11] %v881
        %v883 = vld [vmem:[%s834 + $0x60] sm:$0xff]
        %v884 = vsel %vm840, %v808, %v883
        %885 = vst [vmem:[%s834 + $0x60] sm:$0xff] %v884
        %v886 = vld [vmem:[%s834 + $0x68] sm:$0x11]
        %v887 = vsel %vm849, %v809, %v886
        %888 = vst [vmem:[%s834 + $0x68] sm:$0x11] %v887
        %v889 = vld [vmem:[%s834 + $0x70] sm:$0xff]
        %v890 = vsel %vm840, %v816, %v889
        %891 = vst [vmem:[%s834 + $0x70] sm:$0xff] %v890
        %v892 = vld [vmem:[%s834 + $0x78] sm:$0x11]
        %v893 = vsel %vm849, %v817, %v892
        %894 = vst [vmem:[%s834 + $0x78] sm:$0x11] %v893
        %v895 = vld [vmem:[#allocation2] sm:$0xf]
        %v896 = vld [vmem:[#allocation2 + $0x8] sm:$0xf]
        %v897 = vld [vmem:[#allocation2 + $0x10] sm:$0xf]
        %v898 = vld [vmem:[#allocation2 + $0x18] sm:$0xf]
        %v899 = vld [vmem:[#allocation2 + $0x20] sm:$0xf]
        %v900 = vld [vmem:[#allocation2 + $0x28] sm:$0xf]
        %v901 = vld [vmem:[#allocation2 + $0x30] sm:$0xf]
        %v902 = vld [vmem:[#allocation2 + $0x38] sm:$0xf]
        %v903 = vld [vmem:[#allocation3] sm:$0xff]
        %v904 = vld [vmem:[#allocation3 + $0x10] sm:$0xff]
        %v905 = vld [vmem:[#allocation3 + $0x20] sm:$0xff]
        %v906 = vld [vmem:[#allocation3 + $0x30] sm:$0xff]
        %v907 = vld [vmem:[#allocation3 + $0x40] sm:$0xff]
        %v908 = vld [vmem:[#allocation3 + $0x50] sm:$0xff]
        %v909 = vld [vmem:[#allocation3 + $0x60] sm:$0xff]
        %v910 = vld [vmem:[#allocation3 + $0x70] sm:$0xff]
        %v911 = vld [vmem:[%s3] sm:$0xf]
        %v912 = vld [vmem:[%s3 + $0x4] sm:$0xf]
        %v913 = vld [vmem:[%s3 + $0x8] sm:$0xf]
        %v914 = vld [vmem:[%s3 + $0xc] sm:$0xf]
        %v915 = vld [vmem:[%s3 + $0x10] sm:$0xf]
        %v916 = vld [vmem:[%s3 + $0x14] sm:$0xf]
        %v917 = vld [vmem:[%s3 + $0x18] sm:$0xf]
        %v918 = vld [vmem:[%s4] sm:$0xf]
        %v919 = vld [vmem:[%s4 + $0x4] sm:$0xf]
        %v920 = vld [vmem:[%s4 + $0x8] sm:$0xf]
        %v921 = vld [vmem:[%s4 + $0xc] sm:$0xf]
        %v922 = vld [vmem:[%s4 + $0x10] sm:$0xf]
        %v923 = vld [vmem:[%s4 + $0x14] sm:$0xf]
        %v924 = vld [vmem:[%s4 + $0x18] sm:$0xf]
        %v925 = vld [vmem:[%s4 + $0x1c] sm:$0xf]
        %v926 = vld [vmem:[%s4 + $0x20] sm:$0xf]
        %v927 = vld [vmem:[%s4 + $0x24] sm:$0xf]
        %v928 = vld [vmem:[%s4 + $0x28] sm:$0xf]
        %v929 = vld [vmem:[%s4 + $0x2c] sm:$0xf]
        %v930 = vld [vmem:[%s4 + $0x30] sm:$0xf]
        %v931 = vld [vmem:[%s4 + $0x34] sm:$0xf]
        %v932 = vld [vmem:[%s4 + $0x38] sm:$0xf]
        %v933 = vld [vmem:[%s4 + $0x3c] sm:$0xf]
        %v934 = vld [vmem:[%s4 + $0x40] sm:$0xf]
        %v935 = vld [vmem:[%s4 + $0x44] sm:$0xf]
        %v936 = vld [vmem:[%s4 + $0x48] sm:$0xf]
        %v937 = vld [vmem:[%s4 + $0x4c] sm:$0xf]
        %v946 = vunpack.c.l.b16 %v903
        %v947 = vunpack.c.h.b16 %v903
        %v948 = vunpack.c.l.b16 %v904
        %v949 = vunpack.c.h.b16 %v904
        %v950 = vunpack.c.l.b16 %v905
        %v951 = vunpack.c.h.b16 %v905
        %v952 = vunpack.c.l.b16 %v906
        %v953 = vunpack.c.h.b16 %v906
        %v954 = vunpack.c.l.b16 %v907
        %v955 = vunpack.c.h.b16 %v907
        %v956 = vunpack.c.l.b16 %v908
        %v957 = vunpack.c.h.b16 %v908
        %v958 = vunpack.c.l.b16 %v909
        %v959 = vunpack.c.h.b16 %v909
        %v960 = vunpack.c.l.b16 %v910
        %v961 = vunpack.c.h.b16 %v910
        %v962 = vpack.c.b16 %v948, %v946
        %v963 = vpack.c.b16 %v949, %v947
        %v964 = vpack.c.b16 %v952, %v950
        %v965 = vpack.c.b16 %v953, %v951
        %v966 = vpack.c.b16 %v956, %v954
        %v967 = vpack.c.b16 %v957, %v955
        %v968 = vpack.c.b16 %v960, %v958
        %v969 = vpack.c.b16 %v961, %v959
        %v994 = vunpack.c.l.b16 %v918
        %v995 = vunpack.c.l.b16 %v919
        %v996 = vunpack.c.l.b16 %v920
        %v997 = vunpack.c.l.b16 %v921
        %v998 = vunpack.c.l.b16 %v922
        %v999 = vunpack.c.l.b16 %v923
        %v1000 = vunpack.c.l.b16 %v924
        %v1001 = vunpack.c.l.b16 %v925
        %v1002 = vunpack.c.l.b16 %v926
        %v1003 = vunpack.c.l.b16 %v927
        %v1004 = vunpack.c.l.b16 %v928
        %v1005 = vunpack.c.l.b16 %v929
        %v1006 = vunpack.c.l.b16 %v930
        %v1007 = vunpack.c.l.b16 %v931
        %v1008 = vunpack.c.l.b16 %v932
        %v1009 = vunpack.c.l.b16 %v933
        %v1010 = vunpack.c.l.b16 %v934
        %v1011 = vunpack.c.l.b16 %v935
        %v1012 = vunpack.c.l.b16 %v936
        %v1013 = vunpack.c.l.b16 %v937
        %v1014 = vpack.c.b16 %v995, %v994
        %v1015 = vpack.c.b16 %v997, %v996
        %v1016 = vpack.c.b16 %v999, %v998
        %v1017 = vpack.c.b16 %v1001, %v1000
        %v1018 = vpack.c.b16 %v1003, %v1002
        %v1019 = vpack.c.b16 %v1005, %v1004
        %v1020 = vpack.c.b16 %v1007, %v1006
        %v1021 = vpack.c.b16 %v1009, %v1008
        %v1022 = vpack.c.b16 %v1011, %v1010
        %v1023 = vpack.c.b16 %v1013, %v1012
        %vm1034 = vcmask 261120
        %v1036 = vsel %vm1034, %v963, 0
        %v1039 = vsel %vm1034, %v965, 0
        %v1042 = vsel %vm1034, %v967, 0
        %v1045 = vsel %vm1034, %v969, 0
        %1047 = vmatprep.subr.bf16.mxu0 0
        %1048 = vmatpush1.bf16.msra.mxu0 %v1014
        %1049 = vmatprep.subr.bf16.mxu0 0
        %1050 = vmatpush1.bf16.msra.mxu0 %v1015
        %1051 = vmatprep.subr.bf16.mxu0 0
        %1052 = vmatpush1.bf16.msra.mxu0 %v1016
        %1053 = vmatprep.subr.bf16.mxu0 0
        %1054 = vmatpush1.bf16.msra.mxu0 %v1017
        %1055 = vmatprep.subr.bf16.mxu0 0
        %1056 = vmatpush1.bf16.msra.mxu0 %v1018
        %1057 = vmatprep.subr.bf16.mxu0 0
        %1058 = vmatpush1.bf16.msra.mxu0 %v1019
        %1059 = vmatprep.subr.bf16.mxu0 0
        %1060 = vmatpush1.bf16.msra.mxu0 %v1020
        %1061 = vmatprep.subr.bf16.mxu0 0
        %1062 = vmatpush1.bf16.msra.mxu0 %v1021
        %1063 = vmatprep.subr.bf16.mxu0 0
        %1064 = vmatpush1.bf16.msra.mxu0 %v1022
        %1065 = vmatprep.subr.bf16.mxu0 0
        %1066 = vmatpush1.bf16.msra.mxu0 %v1023
        %1067 = vmatprep.subr.bf16.mxu0 0
        %1068 = vmatpush1.bf16.msra.mxu0 0
        %1069 = vmatprep.subr.bf16.mxu0 0
        %1070 = vmatpush1.bf16.msra.mxu0 0
        %1071 = vmatprep.subr.bf16.mxu0 0
        %1072 = vmatpush1.bf16.msra.mxu0 0
        %1073 = vmatprep.subr.bf16.mxu0 0
        %1074 = vmatpush1.bf16.msra.mxu0 0
        %1075 = vmatprep.subr.bf16.mxu0 0
        %1076 = vmatpush1.bf16.msra.mxu0 0
        %1077 = vmatprep.subr.bf16.mxu0 0
        %1078 = vmatpush1.bf16.msra.mxu0 0
        %1079 = vmatprep.mubr.bf16.mxu0 %v1036
        %1080 = vmatmul.mubr.bf16.gmra.mrb[0].mxu0 %v962
        %v1081 = vpop.f32.mrb[0].mxu0
        %v1082 = vadd.f32 0.0, %v1081
        %v1083 = vpop.f32.mrb[0].mxu0
        %v1084 = vpop.f32.mrb[0].mxu0
        %v1085 = vadd.f32 0.0, %v1084
        %v1086 = vpop.f32.mrb[0].mxu0
        %1087 = vmatprep.mubr.bf16.mxu0 %v1039
        %1088 = vmatmul.mubr.bf16.gmra.mrb[0].mxu0 %v964
        %v1089 = vpop.f32.mrb[0].mxu0
        %v1090 = vadd.f32 0.0, %v1089
        %v1091 = vpop.f32.mrb[0].mxu0
        %v1092 = vpop.f32.mrb[0].mxu0
        %v1093 = vadd.f32 0.0, %v1092
        %v1094 = vpop.f32.mrb[0].mxu0
        %1095 = vmatprep.mubr.bf16.mxu0 %v1042
        %1096 = vmatmul.mubr.bf16.gmra.mrb[0].mxu0 %v966
        %v1097 = vpop.f32.mrb[0].mxu0
        %v1098 = vadd.f32 0.0, %v1097
        %v1099 = vpop.f32.mrb[0].mxu0
        %v1100 = vpop.f32.mrb[0].mxu0
        %v1101 = vadd.f32 0.0, %v1100
        %v1102 = vpop.f32.mrb[0].mxu0
        %1103 = vmatprep.mubr.bf16.mxu0 %v1045
        %1104 = vmatmul.mubr.bf16.gmra.mrb[0].mxu0 %v968
        %v1105 = vpop.f32.mrb[0].mxu0
        %v1106 = vadd.f32 0.0, %v1105
        %v1107 = vpop.f32.mrb[0].mxu0
        %v1108 = vpop.f32.mrb[0].mxu0
        %v1109 = vadd.f32 0.0, %v1108
        %v1110 = vpop.f32.mrb[0].mxu0
        %1111 = vdwg.mxu0
        %v1120 = vunpack.c.l.b16 %v895
        %v1121 = vunpack.c.l.b16 %v896
        %v1122 = vunpack.c.l.b16 %v897
        %v1123 = vunpack.c.l.b16 %v898
        %v1124 = vunpack.c.l.b16 %v899
        %v1125 = vunpack.c.l.b16 %v900
        %v1126 = vunpack.c.l.b16 %v901
        %v1127 = vunpack.c.l.b16 %v902
        %v1128 = vpack.c.b16 %v1121, %v1120
        %v1129 = vpack.c.b16 %v1123, %v1122
        %v1130 = vpack.c.b16 %v1125, %v1124
        %v1131 = vpack.c.b16 %v1127, %v1126
        %v1139 = vunpack.c.l.b16 %v911
        %v1140 = vunpack.c.l.b16 %v912
        %v1141 = vunpack.c.l.b16 %v913
        %v1142 = vunpack.c.l.b16 %v914
        %v1143 = vunpack.c.l.b16 %v915
        %v1144 = vunpack.c.l.b16 %v916
        %v1145 = vunpack.c.l.b16 %v917
        %v1146 = vpack.c.b16 %v1140, %v1139
        %v1147 = vpack.c.b16 %v1142, %v1141
        %v1148 = vpack.c.b16 %v1144, %v1143
        %v1149 = vpack.c.b16 %v1145, %v1145
        %vm1153 = vcmask 457728
        %v1155 = vsel %vm1153, %v1128, 0
        %v1158 = vsel %vm1153, %v1129, 0
        %v1161 = vsel %vm1153, %v1130, 0
        %v1164 = vsel %vm1153, %v1131, 0
        %v1167 = vsel %vm497, %v1149, 0
        %1169 = vmatprep.subr.bf16.mxu0 0
        %1170 = vmatpush1.bf16.msra.mxu0 %v1146
        %1171 = vmatprep.subr.bf16.mxu0 0
        %1172 = vmatpush1.bf16.msra.mxu0 %v1147
        %1173 = vmatprep.subr.bf16.mxu0 0
        %1174 = vmatpush1.bf16.msra.mxu0 %v1148
        %1175 = vmatprep.subr.bf16.mxu0 0
        %1176 = vmatpush1.bf16.msra.mxu0 %v1167
        %1177 = vmatprep.subr.bf16.mxu0 0
        %1178 = vmatpush1.bf16.msra.mxu0 0
        %1179 = vmatprep.subr.bf16.mxu0 0
        %1180 = vmatpush1.bf16.msra.mxu0 0
        %1181 = vmatprep.subr.bf16.mxu0 0
        %1182 = vmatpush1.bf16.msra.mxu0 0
        %1183 = vmatprep.subr.bf16.mxu0 0
        %1184 = vmatpush1.bf16.msra.mxu0 0
        %1185 = vmatprep.subr.bf16.mxu0 0
        %1186 = vmatpush1.bf16.msra.mxu0 0
        %1187 = vmatprep.subr.bf16.mxu0 0
        %1188 = vmatpush1.bf16.msra.mxu0 0
        %1189 = vmatprep.subr.bf16.mxu0 0
        %1190 = vmatpush1.bf16.msra.mxu0 0
        %1191 = vmatprep.subr.bf16.mxu0 0
        %1192 = vmatpush1.bf16.msra.mxu0 0
        %1193 = vmatprep.subr.bf16.mxu0 0
        %1194 = vmatpush1.bf16.msra.mxu0 0
        %1195 = vmatprep.subr.bf16.mxu0 0
        %1196 = vmatpush1.bf16.msra.mxu0 0
        %1197 = vmatprep.subr.bf16.mxu0 0
        %1198 = vmatpush1.bf16.msra.mxu0 0
        %1199 = vmatprep.subr.bf16.mxu0 0
        %1200 = vmatpush1.bf16.msra.mxu0 0
        %1201 = vmatprep.mubr.bf16.mxu0 0
        %1202 = vmatmul.mubr.bf16.gmra.mrb[0].mxu0 %v1155
        %v1203 = vpop.f32.mrb[0].mxu0
        %v1204 = vadd.f32 %v1082, %v1203
        %v1205 = vpop.f32.mrb[0].mxu0
        %v1206 = vpop.f32.mrb[0].mxu0
        %v1207 = vadd.f32 %v1085, %v1206
        %v1208 = vpop.f32.mrb[0].mxu0
        %1209 = vmatprep.mubr.bf16.mxu0 0
        %1210 = vmatmul.mubr.bf16.gmra.mrb[0].mxu0 %v1158
        %v1211 = vpop.f32.mrb[0].mxu0
        %v1212 = vadd.f32 %v1090, %v1211
        %v1213 = vpop.f32.mrb[0].mxu0
        %v1214 = vpop.f32.mrb[0].mxu0
        %v1215 = vadd.f32 %v1093, %v1214
        %v1216 = vpop.f32.mrb[0].mxu0
        %1217 = vmatprep.mubr.bf16.mxu0 0
        %1218 = vmatmul.mubr.bf16.gmra.mrb[0].mxu0 %v1161
        %v1219 = vpop.f32.mrb[0].mxu0
        %v1220 = vadd.f32 %v1098, %v1219
        %v1221 = vpop.f32.mrb[0].mxu0
        %v1222 = vpop.f32.mrb[0].mxu0
        %v1223 = vadd.f32 %v1101, %v1222
        %v1224 = vpop.f32.mrb[0].mxu0
        %1225 = vmatprep.mubr.bf16.mxu0 0
        %1226 = vmatmul.mubr.bf16.gmra.mrb[0].mxu0 %v1164
        %v1227 = vpop.f32.mrb[0].mxu0
        %v1228 = vadd.f32 %v1106, %v1227
        %v1229 = vpop.f32.mrb[0].mxu0
        %v1230 = vpop.f32.mrb[0].mxu0
        %v1231 = vadd.f32 %v1109, %v1230
        %v1232 = vpop.f32.mrb[0].mxu0
        %1233 = vdwg.mxu0
        %v1234 = vld [vmem:[#allocation2] sm:$0xf]
        %v1235 = vld [vmem:[#allocation2 + $0x4] sm:$0x1]
        %v1236 = vld [vmem:[#allocation2 + $0x8] sm:$0xf]
        %v1237 = vld [vmem:[#allocation2 + $0xc] sm:$0x1]
        %v1238 = vld [vmem:[#allocation2 + $0x10] sm:$0xf]
        %v1239 = vld [vmem:[#allocation2 + $0x14] sm:$0x1]
        %v1240 = vld [vmem:[#allocation2 + $0x18] sm:$0xf]
        %v1241 = vld [vmem:[#allocation2 + $0x1c] sm:$0x1]
        %v1242 = vld [vmem:[#allocation2 + $0x20] sm:$0xf]
        %v1243 = vld [vmem:[#allocation2 + $0x24] sm:$0x1]
        %v1244 = vld [vmem:[#allocation2 + $0x28] sm:$0xf]
        %v1245 = vld [vmem:[#allocation2 + $0x2c] sm:$0x1]
        %v1246 = vld [vmem:[#allocation2 + $0x30] sm:$0xf]
        %v1247 = vld [vmem:[#allocation2 + $0x34] sm:$0x1]
        %v1248 = vld [vmem:[#allocation2 + $0x38] sm:$0xf]
        %v1249 = vld [vmem:[#allocation2 + $0x3c] sm:$0x1]
        %vm1250 = vsmask.f32 3328
        %vm1251 = vsmask.f32 7440
        %vm1252 = vmor %vm1250, %vm1251
        %v1254 = vshrl.u32 %v1234, 16
        %v1256 = vrot.slane %v1254, 4
        %v1257 = vshll.u32 %v1234, 16
        %v1259 = vrot.slane %v1257, 5
        %v1260 = vor.u32 %v1256, %v1259
        %v1261 = vrot.slane %v1260, 4
        %v1263 = vshll.u32 %v1235, 16
        %v1265 = vrot.slane %v1263, 5
        %v1266 = vsel %vm1252, %v1261, %v1265
        %v1268 = vshrl.u32 %v1236, 16
        %v1270 = vrot.slane %v1268, 4
        %v1271 = vshll.u32 %v1236, 16
        %v1273 = vrot.slane %v1271, 5
        %v1274 = vor.u32 %v1270, %v1273
        %v1275 = vrot.slane %v1274, 4
        %v1277 = vshll.u32 %v1237, 16
        %v1279 = vrot.slane %v1277, 5
        %v1280 = vsel %vm1252, %v1275, %v1279
        %v1282 = vshrl.u32 %v1238, 16
        %v1284 = vrot.slane %v1282, 4
        %v1285 = vshll.u32 %v1238, 16
        %v1287 = vrot.slane %v1285, 5
        %v1288 = vor.u32 %v1284, %v1287
        %v1289 = vrot.slane %v1288, 4
        %v1291 = vshll.u32 %v1239, 16
        %v1293 = vrot.slane %v1291, 5
        %v1294 = vsel %vm1252, %v1289, %v1293
        %v1296 = vshrl.u32 %v1240, 16
        %v1298 = vrot.slane %v1296, 4
        %v1299 = vshll.u32 %v1240, 16
        %v1301 = vrot.slane %v1299, 5
        %v1302 = vor.u32 %v1298, %v1301
        %v1303 = vrot.slane %v1302, 4
        %v1305 = vshll.u32 %v1241, 16
        %v1307 = vrot.slane %v1305, 5
        %v1308 = vsel %vm1252, %v1303, %v1307
        %v1310 = vshrl.u32 %v1242, 16
        %v1312 = vrot.slane %v1310, 4
        %v1313 = vshll.u32 %v1242, 16
        %v1315 = vrot.slane %v1313, 5
        %v1316 = vor.u32 %v1312, %v1315
        %v1317 = vrot.slane %v1316, 4
        %v1319 = vshll.u32 %v1243, 16
        %v1321 = vrot.slane %v1319, 5
        %v1322 = vsel %vm1252, %v1317, %v1321
        %v1324 = vshrl.u32 %v1244, 16
        %v1326 = vrot.slane %v1324, 4
        %v1327 = vshll.u32 %v1244, 16
        %v1329 = vrot.slane %v1327, 5
        %v1330 = vor.u32 %v1326, %v1329
        %v1331 = vrot.slane %v1330, 4
        %v1333 = vshll.u32 %v1245, 16
        %v1335 = vrot.slane %v1333, 5
        %v1336 = vsel %vm1252, %v1331, %v1335
        %v1338 = vshrl.u32 %v1246, 16
        %v1340 = vrot.slane %v1338, 4
        %v1341 = vshll.u32 %v1246, 16
        %v1343 = vrot.slane %v1341, 5
        %v1344 = vor.u32 %v1340, %v1343
        %v1345 = vrot.slane %v1344, 4
        %v1347 = vshll.u32 %v1247, 16
        %v1349 = vrot.slane %v1347, 5
        %v1350 = vsel %vm1252, %v1345, %v1349
        %v1352 = vshrl.u32 %v1248, 16
        %v1354 = vrot.slane %v1352, 4
        %v1355 = vshll.u32 %v1248, 16
        %v1357 = vrot.slane %v1355, 5
        %v1358 = vor.u32 %v1354, %v1357
        %v1359 = vrot.slane %v1358, 4
        %v1361 = vshll.u32 %v1249, 16
        %v1363 = vrot.slane %v1361, 5
        %v1364 = vsel %vm1252, %v1359, %v1363
        %v1365 = vld [vmem:[#allocation3] sm:$0xff]
        %v1366 = vld [vmem:[#allocation3 + $0x8] sm:$0x11]
        %v1367 = vld [vmem:[#allocation3 + $0x10] sm:$0xff]
        %v1368 = vld [vmem:[#allocation3 + $0x18] sm:$0x11]
        %v1369 = vld [vmem:[#allocation3 + $0x20] sm:$0xff]
        %v1370 = vld [vmem:[#allocation3 + $0x28] sm:$0x11]
        %v1371 = vld [vmem:[#allocation3 + $0x30] sm:$0xff]
        %v1372 = vld [vmem:[#allocation3 + $0x38] sm:$0x11]
        %v1373 = vld [vmem:[#allocation3 + $0x40] sm:$0xff]
        %v1374 = vld [vmem:[#allocation3 + $0x48] sm:$0x11]
        %v1375 = vld [vmem:[#allocation3 + $0x50] sm:$0xff]
        %v1376 = vld [vmem:[#allocation3 + $0x58] sm:$0x11]
        %v1377 = vld [vmem:[#allocation3 + $0x60] sm:$0xff]
        %v1378 = vld [vmem:[#allocation3 + $0x68] sm:$0x11]
        %v1379 = vld [vmem:[#allocation3 + $0x70] sm:$0xff]
        %v1380 = vld [vmem:[#allocation3 + $0x78] sm:$0x11]
        %v1382 = vshrl.u32 %v1365, 16
        %v1384 = vrot.slane %v1382, 4
        %v1385 = vshll.u32 %v1365, 16
        %v1387 = vrot.slane %v1385, 5
        %v1388 = vor.u32 %v1384, %v1387
        %v1389 = vrot.slane %v1388, 4
        %v1391 = vshll.u32 %v1366, 16
        %v1393 = vrot.slane %v1391, 5
        %v1394 = vsel %vm1252, %v1389, %v1393
        %v1396 = vshrl.u32 %v1367, 16
        %v1398 = vrot.slane %v1396, 4
        %v1399 = vshll.u32 %v1367, 16
        %v1401 = vrot.slane %v1399, 5
        %v1402 = vor.u32 %v1398, %v1401
        %v1403 = vrot.slane %v1402, 4
        %v1405 = vshll.u32 %v1368, 16
        %v1407 = vrot.slane %v1405, 5
        %v1408 = vsel %vm1252, %v1403, %v1407
        %v1410 = vshrl.u32 %v1369, 16
        %v1412 = vrot.slane %v1410, 4
        %v1413 = vshll.u32 %v1369, 16
        %v1415 = vrot.slane %v1413, 5
        %v1416 = vor.u32 %v1412, %v1415
        %v1417 = vrot.slane %v1416, 4
        %v1419 = vshll.u32 %v1370, 16
        %v1421 = vrot.slane %v1419, 5
        %v1422 = vsel %vm1252, %v1417, %v1421
        %v1424 = vshrl.u32 %v1371, 16
        %v1426 = vrot.slane %v1424, 4
        %v1427 = vshll.u32 %v1371, 16
        %v1429 = vrot.slane %v1427, 5
        %v1430 = vor.u32 %v1426, %v1429
        %v1431 = vrot.slane %v1430, 4
        %v1433 = vshll.u32 %v1372, 16
        %v1435 = vrot.slane %v1433, 5
        %v1436 = vsel %vm1252, %v1431, %v1435
        %v1438 = vshrl.u32 %v1373, 16
        %v1440 = vrot.slane %v1438, 4
        %v1441 = vshll.u32 %v1373, 16
        %v1443 = vrot.slane %v1441, 5
        %v1444 = vor.u32 %v1440, %v1443
        %v1445 = vrot.slane %v1444, 4
        %v1447 = vshll.u32 %v1374, 16
        %v1449 = vrot.slane %v1447, 5
        %v1450 = vsel %vm1252, %v1445, %v1449
        %v1452 = vshrl.u32 %v1375, 16
        %v1454 = vrot.slane %v1452, 4
        %v1455 = vshll.u32 %v1375, 16
        %v1457 = vrot.slane %v1455, 5
        %v1458 = vor.u32 %v1454, %v1457
        %v1459 = vrot.slane %v1458, 4
        %v1461 = vshll.u32 %v1376, 16
        %v1463 = vrot.slane %v1461, 5
        %v1464 = vsel %vm1252, %v1459, %v1463
        %v1466 = vshrl.u32 %v1377, 16
        %v1468 = vrot.slane %v1466, 4
        %v1469 = vshll.u32 %v1377, 16
        %v1471 = vrot.slane %v1469, 5
        %v1472 = vor.u32 %v1468, %v1471
        %v1473 = vrot.slane %v1472, 4
        %v1475 = vshll.u32 %v1378, 16
        %v1477 = vrot.slane %v1475, 5
        %v1478 = vsel %vm1252, %v1473, %v1477
        %v1480 = vshrl.u32 %v1379, 16
        %v1482 = vrot.slane %v1480, 4
        %v1483 = vshll.u32 %v1379, 16
        %v1485 = vrot.slane %v1483, 5
        %v1486 = vor.u32 %v1482, %v1485
        %v1487 = vrot.slane %v1486, 4
        %v1489 = vshll.u32 %v1380, 16
        %v1491 = vrot.slane %v1489, 5
        %v1492 = vsel %vm1252, %v1487, %v1491
        %s1493 = scalar_lea.vmem %s3, 28
        %v1494 = vld [vmem:[%s1493] sm:$0xf]
        %v1495 = vld [vmem:[%s1493 + $0x4] sm:$0xf]
        %v1496 = vld [vmem:[%s1493 + $0x8] sm:$0xf]
        %v1497 = vld [vmem:[%s1493 + $0xc] sm:$0xf]
        %v1498 = vld [vmem:[%s1493 + $0x10] sm:$0xf]
        %v1499 = vld [vmem:[%s1493 + $0x14] sm:$0xf]
        %v1500 = vld [vmem:[%s1493 + $0x18] sm:$0xf]
        %v1501 = vunpack.c.l.b16 %v1266
        %v1502 = vunpack.c.l.b16 %v1280
        %v1503 = vunpack.c.l.b16 %v1294
        %v1504 = vunpack.c.l.b16 %v1308
        %v1505 = vunpack.c.l.b16 %v1322
        %v1506 = vunpack.c.l.b16 %v1336
        %v1507 = vunpack.c.l.b16 %v1350
        %v1508 = vunpack.c.l.b16 %v1364
        %v1509 = vpack.c.b16 %v1502, %v1501
        %v1510 = vpack.c.b16 %v1504, %v1503
        %v1511 = vpack.c.b16 %v1506, %v1505
        %v1512 = vpack.c.b16 %v1508, %v1507
        %v1520 = vunpack.c.l.b16 %v1494
        %v1521 = vunpack.c.l.b16 %v1495
        %v1522 = vunpack.c.l.b16 %v1496
        %v1523 = vunpack.c.l.b16 %v1497
        %v1524 = vunpack.c.l.b16 %v1498
        %v1525 = vunpack.c.l.b16 %v1499
        %v1526 = vunpack.c.l.b16 %v1500
        %v1527 = vpack.c.b16 %v1521, %v1520
        %v1528 = vpack.c.b16 %v1523, %v1522
        %v1529 = vpack.c.b16 %v1525, %v1524
        %v1530 = vpack.c.b16 %v1526, %v1526
        %v1535 = vsel %vm1153, %v1509, 0
        %v1538 = vsel %vm1153, %v1510, 0
        %v1541 = vsel %vm1153, %v1511, 0
        %v1544 = vsel %vm1153, %v1512, 0
        %v1547 = vsel %vm497, %v1530, 0
        %1549 = vmatprep.subr.bf16.mxu0 0
        %1550 = vmatpush1.bf16.msra.mxu0 %v1527
        %1551 = vmatprep.subr.bf16.mxu0 0
        %1552 = vmatpush1.bf16.msra.mxu0 %v1528
        %1553 = vmatprep.subr.bf16.mxu0 0
        %1554 = vmatpush1.bf16.msra.mxu0 %v1529
        %1555 = vmatprep.subr.bf16.mxu0 0
        %1556 = vmatpush1.bf16.msra.mxu0 %v1547
        %1557 = vmatprep.subr.bf16.mxu0 0
        %1558 = vmatpush1.bf16.msra.mxu0 0
        %1559 = vmatprep.subr.bf16.mxu0 0
        %1560 = vmatpush1.bf16.msra.mxu0 0
        %1561 = vmatprep.subr.bf16.mxu0 0
        %1562 = vmatpush1.bf16.msra.mxu0 0
        %1563 = vmatprep.subr.bf16.mxu0 0
        %1564 = vmatpush1.bf16.msra.mxu0 0
        %1565 = vmatprep.subr.bf16.mxu0 0
        %1566 = vmatpush1.bf16.msra.mxu0 0
        %1567 = vmatprep.subr.bf16.mxu0 0
        %1568 = vmatpush1.bf16.msra.mxu0 0
        %1569 = vmatprep.subr.bf16.mxu0 0
        %1570 = vmatpush1.bf16.msra.mxu0 0
        %1571 = vmatprep.subr.bf16.mxu0 0
        %1572 = vmatpush1.bf16.msra.mxu0 0
        %1573 = vmatprep.subr.bf16.mxu0 0
        %1574 = vmatpush1.bf16.msra.mxu0 0
        %1575 = vmatprep.subr.bf16.mxu0 0
        %1576 = vmatpush1.bf16.msra.mxu0 0
        %1577 = vmatprep.subr.bf16.mxu0 0
        %1578 = vmatpush1.bf16.msra.mxu0 0
        %1579 = vmatprep.subr.bf16.mxu0 0
        %1580 = vmatpush1.bf16.msra.mxu0 0
        %1581 = vmatprep.mubr.bf16.mxu0 0
        %1582 = vmatmul.mubr.bf16.gmra.mrb[0].mxu0 %v1535
        %v1583 = vpop.f32.mrb[0].mxu0
        %v1584 = vadd.f32 0.0, %v1583
        %v1585 = vpop.f32.mrb[0].mxu0
        %v1586 = vpop.f32.mrb[0].mxu0
        %v1587 = vadd.f32 0.0, %v1586
        %v1588 = vpop.f32.mrb[0].mxu0
        %1589 = vmatprep.mubr.bf16.mxu0 0
        %1590 = vmatmul.mubr.bf16.gmra.mrb[0].mxu0 %v1538
        %v1591 = vpop.f32.mrb[0].mxu0
        %v1592 = vadd.f32 0.0, %v1591
        %v1593 = vpop.f32.mrb[0].mxu0
        %v1594 = vpop.f32.mrb[0].mxu0
        %v1595 = vadd.f32 0.0, %v1594
        %v1596 = vpop.f32.mrb[0].mxu0
        %1597 = vmatprep.mubr.bf16.mxu0 0
        %1598 = vmatmul.mubr.bf16.gmra.mrb[0].mxu0 %v1541
        %v1599 = vpop.f32.mrb[0].mxu0
        %v1600 = vadd.f32 0.0, %v1599
        %v1601 = vpop.f32.mrb[0].mxu0
        %v1602 = vpop.f32.mrb[0].mxu0
        %v1603 = vadd.f32 0.0, %v1602
        %v1604 = vpop.f32.mrb[0].mxu0
        %1605 = vmatprep.mubr.bf16.mxu0 0
        %1606 = vmatmul.mubr.bf16.gmra.mrb[0].mxu0 %v1544
        %v1607 = vpop.f32.mrb[0].mxu0
        %v1608 = vadd.f32 0.0, %v1607
        %v1609 = vpop.f32.mrb[0].mxu0
        %v1610 = vpop.f32.mrb[0].mxu0
        %v1611 = vadd.f32 0.0, %v1610
        %v1612 = vpop.f32.mrb[0].mxu0
        %1613 = vdwg.mxu0
        %v1614 = vadd.f32 %v1204, %v1584
        %v1615 = vadd.f32 %v1207, %v1587
        %v1616 = vadd.f32 %v1212, %v1592
        %v1617 = vadd.f32 %v1215, %v1595
        %v1618 = vadd.f32 %v1220, %v1600
        %v1619 = vadd.f32 %v1223, %v1603
        %v1620 = vadd.f32 %v1228, %v1608
        %v1621 = vadd.f32 %v1231, %v1611
        %s1622 = scalar_lea.vmem %s4, 80
        %v1623 = vld [vmem:[%s1622] sm:$0xf]
        %v1624 = vld [vmem:[%s1622 + $0x4] sm:$0xf]
        %v1625 = vld [vmem:[%s1622 + $0x8] sm:$0xf]
        %v1626 = vld [vmem:[%s1622 + $0xc] sm:$0xf]
        %v1627 = vld [vmem:[%s1622 + $0x10] sm:$0xf]
        %v1628 = vld [vmem:[%s1622 + $0x14] sm:$0xf]
        %v1629 = vld [vmem:[%s1622 + $0x18] sm:$0xf]
        %v1630 = vld [vmem:[%s1622 + $0x1c] sm:$0xf]
        %v1631 = vld [vmem:[%s1622 + $0x20] sm:$0xf]
        %v1632 = vld [vmem:[%s1622 + $0x24] sm:$0xf]
        %v1633 = vld [vmem:[%s1622 + $0x28] sm:$0xf]
        %v1634 = vld [vmem:[%s1622 + $0x2c] sm:$0xf]
        %v1635 = vld [vmem:[%s1622 + $0x30] sm:$0xf]
        %v1636 = vld [vmem:[%s1622 + $0x34] sm:$0xf]
        %v1637 = vld [vmem:[%s1622 + $0x38] sm:$0xf]
        %v1638 = vld [vmem:[%s1622 + $0x3c] sm:$0xf]
        %v1639 = vld [vmem:[%s1622 + $0x40] sm:$0xf]
        %v1640 = vld [vmem:[%s1622 + $0x44] sm:$0xf]
        %v1641 = vld [vmem:[%s1622 + $0x48] sm:$0xf]
        %v1642 = vld [vmem:[%s1622 + $0x4c] sm:$0xf]
        %v1643 = vunpack.c.l.b16 %v1394
        %v1644 = vunpack.c.h.b16 %v1394
        %v1645 = vunpack.c.l.b16 %v1408
        %v1646 = vunpack.c.h.b16 %v1408
        %v1647 = vunpack.c.l.b16 %v1422
        %v1648 = vunpack.c.h.b16 %v1422
        %v1649 = vunpack.c.l.b16 %v1436
        %v1650 = vunpack.c.h.b16 %v1436
        %v1651 = vunpack.c.l.b16 %v1450
        %v1652 = vunpack.c.h.b16 %v1450
        %v1653 = vunpack.c.l.b16 %v1464
        %v1654 = vunpack.c.h.b16 %v1464
        %v1655 = vunpack.c.l.b16 %v1478
        %v1656 = vunpack.c.h.b16 %v1478
        %v1657 = vunpack.c.l.b16 %v1492
        %v1658 = vunpack.c.h.b16 %v1492
        %v1659 = vpack.c.b16 %v1645, %v1643
        %v1660 = vpack.c.b16 %v1646, %v1644
        %v1661 = vpack.c.b16 %v1649, %v1647
        %v1662 = vpack.c.b16 %v1650, %v1648
        %v1663 = vpack.c.b16 %v1653, %v1651
        %v1664 = vpack.c.b16 %v1654, %v1652
        %v1665 = vpack.c.b16 %v1657, %v1655
        %v1666 = vpack.c.b16 %v1658, %v1656
        %v1691 = vunpack.c.l.b16 %v1623
        %v1692 = vunpack.c.l.b16 %v1624
        %v1693 = vunpack.c.l.b16 %v1625
        %v1694 = vunpack.c.l.b16 %v1626
        %v1695 = vunpack.c.l.b16 %v1627
        %v1696 = vunpack.c.l.b16 %v1628
        %v1697 = vunpack.c.l.b16 %v1629
        %v1698 = vunpack.c.l.b16 %v1630
        %v1699 = vunpack.c.l.b16 %v1631
        %v1700 = vunpack.c.l.b16 %v1632
        %v1701 = vunpack.c.l.b16 %v1633
        %v1702 = vunpack.c.l.b16 %v1634
        %v1703 = vunpack.c.l.b16 %v1635
        %v1704 = vunpack.c.l.b16 %v1636
        %v1705 = vunpack.c.l.b16 %v1637
        %v1706 = vunpack.c.l.b16 %v1638
        %v1707 = vunpack.c.l.b16 %v1639
        %v1708 = vunpack.c.l.b16 %v1640
        %v1709 = vunpack.c.l.b16 %v1641
        %v1710 = vunpack.c.l.b16 %v1642
        %v1711 = vpack.c.b16 %v1692, %v1691
        %v1712 = vpack.c.b16 %v1694, %v1693
        %v1713 = vpack.c.b16 %v1696, %v1695
        %v1714 = vpack.c.b16 %v1698, %v1697
        %v1715 = vpack.c.b16 %v1700, %v1699
        %v1716 = vpack.c.b16 %v1702, %v1701
        %v1717 = vpack.c.b16 %v1704, %v1703
        %v1718 = vpack.c.b16 %v1706, %v1705
        %v1719 = vpack.c.b16 %v1708, %v1707
        %v1720 = vpack.c.b16 %v1710, %v1709
        %v1732 = vsel %vm1034, %v1660, 0
        %v1735 = vsel %vm1034, %v1662, 0
        %v1738 = vsel %vm1034, %v1664, 0
        %v1741 = vsel %vm1034, %v1666, 0
        %1743 = vmatprep.subr.bf16.mxu0 0
        %1744 = vmatpush1.bf16.msra.mxu0 %v1711
        %1745 = vmatprep.subr.bf16.mxu0 0
        %1746 = vmatpush1.bf16.msra.mxu0 %v1712
        %1747 = vmatprep.subr.bf16.mxu0 0
        %1748 = vmatpush1.bf16.msra.mxu0 %v1713
        %1749 = vmatprep.subr.bf16.mxu0 0
        %1750 = vmatpush1.bf16.msra.mxu0 %v1714
        %1751 = vmatprep.subr.bf16.mxu0 0
        %1752 = vmatpush1.bf16.msra.mxu0 %v1715
        %1753 = vmatprep.subr.bf16.mxu0 0
        %1754 = vmatpush1.bf16.msra.mxu0 %v1716
        %1755 = vmatprep.subr.bf16.mxu0 0
        %1756 = vmatpush1.bf16.msra.mxu0 %v1717
        %1757 = vmatprep.subr.bf16.mxu0 0
        %1758 = vmatpush1.bf16.msra.mxu0 %v1718
        %1759 = vmatprep.subr.bf16.mxu0 0
        %1760 = vmatpush1.bf16.msra.mxu0 %v1719
        %1761 = vmatprep.subr.bf16.mxu0 0
        %1762 = vmatpush1.bf16.msra.mxu0 %v1720
        %1763 = vmatprep.subr.bf16.mxu0 0
        %1764 = vmatpush1.bf16.msra.mxu0 0
        %1765 = vmatprep.subr.bf16.mxu0 0
        %1766 = vmatpush1.bf16.msra.mxu0 0
        %1767 = vmatprep.subr.bf16.mxu0 0
        %1768 = vmatpush1.bf16.msra.mxu0 0
        %1769 = vmatprep.subr.bf16.mxu0 0
        %1770 = vmatpush1.bf16.msra.mxu0 0
        %1771 = vmatprep.subr.bf16.mxu0 0
        %1772 = vmatpush1.bf16.msra.mxu0 0
        %1773 = vmatprep.subr.bf16.mxu0 0
        %1774 = vmatpush1.bf16.msra.mxu0 0
        %1775 = vmatprep.mubr.bf16.mxu0 %v1732
        %1776 = vmatmul.mubr.bf16.gmra.mrb[0].mxu0 %v1659
        %v1777 = vpop.f32.mrb[0].mxu0
        %v1778 = vadd.f32 0.0, %v1777
        %v1779 = vpop.f32.mrb[0].mxu0
        %v1780 = vpop.f32.mrb[0].mxu0
        %v1781 = vadd.f32 0.0, %v1780
        %v1782 = vpop.f32.mrb[0].mxu0
        %1783 = vmatprep.mubr.bf16.mxu0 %v1735
        %1784 = vmatmul.mubr.bf16.gmra.mrb[0].mxu0 %v1661
        %v1785 = vpop.f32.mrb[0].mxu0
        %v1786 = vadd.f32 0.0, %v1785
        %v1787 = vpop.f32.mrb[0].mxu0
        %v1788 = vpop.f32.mrb[0].mxu0
        %v1789 = vadd.f32 0.0, %v1788
        %v1790 = vpop.f32.mrb[0].mxu0
        %1791 = vmatprep.mubr.bf16.mxu0 %v1738
        %1792 = vmatmul.mubr.bf16.gmra.mrb[0].mxu0 %v1663
        %v1793 = vpop.f32.mrb[0].mxu0
        %v1794 = vadd.f32 0.0, %v1793
        %v1795 = vpop.f32.mrb[0].mxu0
        %v1796 = vpop.f32.mrb[0].mxu0
        %v1797 = vadd.f32 0.0, %v1796
        %v1798 = vpop.f32.mrb[0].mxu0
        %1799 = vmatprep.mubr.bf16.mxu0 %v1741
        %1800 = vmatmul.mubr.bf16.gmra.mrb[0].mxu0 %v1665
        %v1801 = vpop.f32.mrb[0].mxu0
        %v1802 = vadd.f32 0.0, %v1801
        %v1803 = vpop.f32.mrb[0].mxu0
        %v1804 = vpop.f32.mrb[0].mxu0
        %v1805 = vadd.f32 0.0, %v1804
        %v1806 = vpop.f32.mrb[0].mxu0
        %1807 = vdwg.mxu0
        %v1808 = vadd.f32 %v1614, %v1778
        %v1809 = vadd.f32 %v1615, %v1781
        %v1810 = vadd.f32 %v1616, %v1786
        %v1811 = vadd.f32 %v1617, %v1789
        %v1812 = vadd.f32 %v1618, %v1794
        %v1813 = vadd.f32 %v1619, %v1797
        %v1814 = vadd.f32 %v1620, %v1802
        %v1815 = vadd.f32 %v1621, %v1805
        %v1816 = vld [vmem:[#allocation2] sm:$0xe]
        %v1817 = vld [vmem:[#allocation2 + $0x8] sm:$0xe]
        %v1818 = vld [vmem:[#allocation2 + $0x10] sm:$0xe]
        %v1819 = vld [vmem:[#allocation2 + $0x18] sm:$0xe]
        %v1820 = vld [vmem:[#allocation2 + $0x20] sm:$0xe]
        %v1821 = vld [vmem:[#allocation2 + $0x28] sm:$0xe]
        %v1822 = vld [vmem:[#allocation2 + $0x30] sm:$0xe]
        %v1823 = vld [vmem:[#allocation2 + $0x38] sm:$0xe]
        %vm1840 = vcmask 1042432
        %vm1841 = vcmask 1046532
        %vm1842 = vmor %vm1840, %vm1841
        %v1843 = vrot.slane %v1816, 5
        %v1844 = vrot.slane %v1843, 4
        %v1845 = vrot.slane %v1235, 5
        %v1846 = vsel %vm1842, %v1844, %v1845
        %v1847 = vrot.slane %v1817, 5
        %v1848 = vrot.slane %v1847, 4
        %v1849 = vrot.slane %v1237, 5
        %v1850 = vsel %vm1842, %v1848, %v1849
        %v1851 = vrot.slane %v1818, 5
        %v1852 = vrot.slane %v1851, 4
        %v1853 = vrot.slane %v1239, 5
        %v1854 = vsel %vm1842, %v1852, %v1853
        %v1855 = vrot.slane %v1819, 5
        %v1856 = vrot.slane %v1855, 4
        %v1857 = vrot.slane %v1241, 5
        %v1858 = vsel %vm1842, %v1856, %v1857
        %v1859 = vrot.slane %v1820, 5
        %v1860 = vrot.slane %v1859, 4
        %v1861 = vrot.slane %v1243, 5
        %v1862 = vsel %vm1842, %v1860, %v1861
        %v1863 = vrot.slane %v1821, 5
        %v1864 = vrot.slane %v1863, 4
        %v1865 = vrot.slane %v1245, 5
        %v1866 = vsel %vm1842, %v1864, %v1865
        %v1867 = vrot.slane %v1822, 5
        %v1868 = vrot.slane %v1867, 4
        %v1869 = vrot.slane %v1247, 5
        %v1870 = vsel %vm1842, %v1868, %v1869
        %v1871 = vrot.slane %v1823, 5
        %v1872 = vrot.slane %v1871, 4
        %v1873 = vrot.slane %v1249, 5
        %v1874 = vsel %vm1842, %v1872, %v1873
        %v1875 = vld [vmem:[#allocation3] sm:$0xee]
        %v1876 = vld [vmem:[#allocation3 + $0x10] sm:$0xee]
        %v1877 = vld [vmem:[#allocation3 + $0x20] sm:$0xee]
        %v1878 = vld [vmem:[#allocation3 + $0x30] sm:$0xee]
        %v1879 = vld [vmem:[#allocation3 + $0x40] sm:$0xee]
        %v1880 = vld [vmem:[#allocation3 + $0x50] sm:$0xee]
        %v1881 = vld [vmem:[#allocation3 + $0x60] sm:$0xee]
        %v1882 = vld [vmem:[#allocation3 + $0x70] sm:$0xee]
        %v1899 = vrot.slane %v1875, 5
        %v1900 = vrot.slane %v1899, 4
        %v1901 = vrot.slane %v1366, 5
        %v1902 = vsel %vm1842, %v1900, %v1901
        %v1903 = vrot.slane %v1876, 5
        %v1904 = vrot.slane %v1903, 4
        %v1905 = vrot.slane %v1368, 5
        %v1906 = vsel %vm1842, %v1904, %v1905
        %v1907 = vrot.slane %v1877, 5
        %v1908 = vrot.slane %v1907, 4
        %v1909 = vrot.slane %v1370, 5
        %v1910 = vsel %vm1842, %v1908, %v1909
        %v1911 = vrot.slane %v1878, 5
        %v1912 = vrot.slane %v1911, 4
        %v1913 = vrot.slane %v1372, 5
        %v1914 = vsel %vm1842, %v1912, %v1913
        %v1915 = vrot.slane %v1879, 5
        %v1916 = vrot.slane %v1915, 4
        %v1917 = vrot.slane %v1374, 5
        %v1918 = vsel %vm1842, %v1916, %v1917
        %v1919 = vrot.slane %v1880, 5
        %v1920 = vrot.slane %v1919, 4
        %v1921 = vrot.slane %v1376, 5
        %v1922 = vsel %vm1842, %v1920, %v1921
        %v1923 = vrot.slane %v1881, 5
        %v1924 = vrot.slane %v1923, 4
        %v1925 = vrot.slane %v1378, 5
        %v1926 = vsel %vm1842, %v1924, %v1925
        %v1927 = vrot.slane %v1882, 5
        %v1928 = vrot.slane %v1927, 4
        %v1929 = vrot.slane %v1380, 5
        %v1930 = vsel %vm1842, %v1928, %v1929
        %s1931 = scalar_lea.vmem %s3, 56
        %v1932 = vld [vmem:[%s1931] sm:$0xf]
        %v1933 = vld [vmem:[%s1931 + $0x4] sm:$0xf]
        %v1934 = vld [vmem:[%s1931 + $0x8] sm:$0xf]
        %v1935 = vld [vmem:[%s1931 + $0xc] sm:$0xf]
        %v1936 = vld [vmem:[%s1931 + $0x10] sm:$0xf]
        %v1937 = vld [vmem:[%s1931 + $0x14] sm:$0xf]
        %v1938 = vld [vmem:[%s1931 + $0x18] sm:$0xf]
        %v1939 = vunpack.c.l.b16 %v1846
        %v1940 = vunpack.c.l.b16 %v1850
        %v1941 = vunpack.c.l.b16 %v1854
        %v1942 = vunpack.c.l.b16 %v1858
        %v1943 = vunpack.c.l.b16 %v1862
        %v1944 = vunpack.c.l.b16 %v1866
        %v1945 = vunpack.c.l.b16 %v1870
        %v1946 = vunpack.c.l.b16 %v1874
        %v1947 = vpack.c.b16 %v1940, %v1939
        %v1948 = vpack.c.b16 %v1942, %v1941
        %v1949 = vpack.c.b16 %v1944, %v1943
        %v1950 = vpack.c.b16 %v1946, %v1945
        %v1958 = vunpack.c.l.b16 %v1932
        %v1959 = vunpack.c.l.b16 %v1933
        %v1960 = vunpack.c.l.b16 %v1934
        %v1961 = vunpack.c.l.b16 %v1935
        %v1962 = vunpack.c.l.b16 %v1936
        %v1963 = vunpack.c.l.b16 %v1937
        %v1964 = vunpack.c.l.b16 %v1938
        %v1965 = vpack.c.b16 %v1959, %v1958
        %v1966 = vpack.c.b16 %v1961, %v1960
        %v1967 = vpack.c.b16 %v1963, %v1962
        %v1968 = vpack.c.b16 %v1964, %v1964
        %v1973 = vsel %vm1153, %v1947, 0
        %v1976 = vsel %vm1153, %v1948, 0
        %v1979 = vsel %vm1153, %v1949, 0
        %v1982 = vsel %vm1153, %v1950, 0
        %v1985 = vsel %vm497, %v1968, 0
        %1987 = vmatprep.subr.bf16.mxu0 0
        %1988 = vmatpush1.bf16.msra.mxu0 %v1965
        %1989 = vmatprep.subr.bf16.mxu0 0
        %1990 = vmatpush1.bf16.msra.mxu0 %v1966
        %1991 = vmatprep.subr.bf16.mxu0 0
        %1992 = vmatpush1.bf16.msra.mxu0 %v1967
        %1993 = vmatprep.subr.bf16.mxu0 0
        %1994 = vmatpush1.bf16.msra.mxu0 %v1985
        %1995 = vmatprep.subr.bf16.mxu0 0
        %1996 = vmatpush1.bf16.msra.mxu0 0
        %1997 = vmatprep.subr.bf16.mxu0 0
        %1998 = vmatpush1.bf16.msra.mxu0 0
        %1999 = vmatprep.subr.bf16.mxu0 0
        %2000 = vmatpush1.bf16.msra.mxu0 0
        %2001 = vmatprep.subr.bf16.mxu0 0
        %2002 = vmatpush1.bf16.msra.mxu0 0
        %2003 = vmatprep.subr.bf16.mxu0 0
        %2004 = vmatpush1.bf16.msra.mxu0 0
        %2005 = vmatprep.subr.bf16.mxu0 0
        %2006 = vmatpush1.bf16.msra.mxu0 0
        %2007 = vmatprep.subr.bf16.mxu0 0
        %2008 = vmatpush1.bf16.msra.mxu0 0
        %2009 = vmatprep.subr.bf16.mxu0 0
        %2010 = vmatpush1.bf16.msra.mxu0 0
        %2011 = vmatprep.subr.bf16.mxu0 0
        %2012 = vmatpush1.bf16.msra.mxu0 0
        %2013 = vmatprep.subr.bf16.mxu0 0
        %2014 = vmatpush1.bf16.msra.mxu0 0
        %2015 = vmatprep.subr.bf16.mxu0 0
        %2016 = vmatpush1.bf16.msra.mxu0 0
        %2017 = vmatprep.subr.bf16.mxu0 0
        %2018 = vmatpush1.bf16.msra.mxu0 0
        %2019 = vmatprep.mubr.bf16.mxu0 0
        %2020 = vmatmul.mubr.bf16.gmra.mrb[0].mxu0 %v1973
        %v2021 = vpop.f32.mrb[0].mxu0
        %v2022 = vadd.f32 0.0, %v2021
        %v2023 = vpop.f32.mrb[0].mxu0
        %v2024 = vpop.f32.mrb[0].mxu0
        %v2025 = vadd.f32 0.0, %v2024
        %v2026 = vpop.f32.mrb[0].mxu0
        %2027 = vmatprep.mubr.bf16.mxu0 0
        %2028 = vmatmul.mubr.bf16.gmra.mrb[0].mxu0 %v1976
        %v2029 = vpop.f32.mrb[0].mxu0
        %v2030 = vadd.f32 0.0, %v2029
        %v2031 = vpop.f32.mrb[0].mxu0
        %v2032 = vpop.f32.mrb[0].mxu0
        %v2033 = vadd.f32 0.0, %v2032
        %v2034 = vpop.f32.mrb[0].mxu0
        %2035 = vmatprep.mubr.bf16.mxu0 0
        %2036 = vmatmul.mubr.bf16.gmra.mrb[0].mxu0 %v1979
        %v2037 = vpop.f32.mrb[0].mxu0
        %v2038 = vadd.f32 0.0, %v2037
        %v2039 = vpop.f32.mrb[0].mxu0
        %v2040 = vpop.f32.mrb[0].mxu0
        %v2041 = vadd.f32 0.0, %v2040
        %v2042 = vpop.f32.mrb[0].mxu0
        %2043 = vmatprep.mubr.bf16.mxu0 0
        %2044 = vmatmul.mubr.bf16.gmra.mrb[0].mxu0 %v1982
        %v2045 = vpop.f32.mrb[0].mxu0
        %v2046 = vadd.f32 0.0, %v2045
        %v2047 = vpop.f32.mrb[0].mxu0
        %v2048 = vpop.f32.mrb[0].mxu0
        %v2049 = vadd.f32 0.0, %v2048
        %v2050 = vpop.f32.mrb[0].mxu0
        %2051 = vdwg.mxu0
        %v2052 = vadd.f32 %v1808, %v2022
        %v2053 = vadd.f32 %v1809, %v2025
        %v2054 = vadd.f32 %v1810, %v2030
        %v2055 = vadd.f32 %v1811, %v2033
        %v2056 = vadd.f32 %v1812, %v2038
        %v2057 = vadd.f32 %v1813, %v2041
        %v2058 = vadd.f32 %v1814, %v2046
        %v2059 = vadd.f32 %v1815, %v2049
        %s2060 = scalar_lea.vmem %s4, 160
        %v2061 = vld [vmem:[%s2060] sm:$0xf]
        %v2062 = vld [vmem:[%s2060 + $0x4] sm:$0xf]
        %v2063 = vld [vmem:[%s2060 + $0x8] sm:$0xf]
        %v2064 = vld [vmem:[%s2060 + $0xc] sm:$0xf]
        %v2065 = vld [vmem:[%s2060 + $0x10] sm:$0xf]
        %v2066 = vld [vmem:[%s2060 + $0x14] sm:$0xf]
        %v2067 = vld [vmem:[%s2060 + $0x18] sm:$0xf]
        %v2068 = vld [vmem:[%s2060 + $0x1c] sm:$0xf]
        %v2069 = vld [vmem:[%s2060 + $0x20] sm:$0xf]
        %v2070 = vld [vmem:[%s2060 + $0x24] sm:$0xf]
        %v2071 = vld [vmem:[%s2060 + $0x28] sm:$0xf]
        %v2072 = vld [vmem:[%s2060 + $0x2c] sm:$0xf]
        %v2073 = vld [vmem:[%s2060 + $0x30] sm:$0xf]
        %v2074 = vld [vmem:[%s2060 + $0x34] sm:$0xf]
        %v2075 = vld [vmem:[%s2060 + $0x38] sm:$0xf]
        %v2076 = vld [vmem:[%s2060 + $0x3c] sm:$0xf]
        %v2077 = vld [vmem:[%s2060 + $0x40] sm:$0xf]
        %v2078 = vld [vmem:[%s2060 + $0x44] sm:$0xf]
        %v2079 = vld [vmem:[%s2060 + $0x48] sm:$0xf]
        %v2080 = vld [vmem:[%s2060 + $0x4c] sm:$0xf]
        %v2081 = vunpack.c.l.b16 %v1902
        %v2082 = vunpack.c.h.b16 %v1902
        %v2083 = vunpack.c.l.b16 %v1906
        %v2084 = vunpack.c.h.b16 %v1906
        %v2085 = vunpack.c.l.b16 %v1910
        %v2086 = vunpack.c.h.b16 %v1910
        %v2087 = vunpack.c.l.b16 %v1914
        %v2088 = vunpack.c.h.b16 %v1914
        %v2089 = vunpack.c.l.b16 %v1918
        %v2090 = vunpack.c.h.b16 %v1918
        %v2091 = vunpack.c.l.b16 %v1922
        %v2092 = vunpack.c.h.b16 %v1922
        %v2093 = vunpack.c.l.b16 %v1926
        %v2094 = vunpack.c.h.b16 %v1926
        %v2095 = vunpack.c.l.b16 %v1930
        %v2096 = vunpack.c.h.b16 %v1930
        %v2097 = vpack.c.b16 %v2083, %v2081
        %v2098 = vpack.c.b16 %v2084, %v2082
        %v2099 = vpack.c.b16 %v2087, %v2085
        %v2100 = vpack.c.b16 %v2088, %v2086
        %v2101 = vpack.c.b16 %v2091, %v2089
        %v2102 = vpack.c.b16 %v2092, %v2090
        %v2103 = vpack.c.b16 %v2095, %v2093
        %v2104 = vpack.c.b16 %v2096, %v2094
        %v2129 = vunpack.c.l.b16 %v2061
        %v2130 = vunpack.c.l.b16 %v2062
        %v2131 = vunpack.c.l.b16 %v2063
        %v2132 = vunpack.c.l.b16 %v2064
        %v2133 = vunpack.c.l.b16 %v2065
        %v2134 = vunpack.c.l.b16 %v2066
        %v2135 = vunpack.c.l.b16 %v2067
        %v2136 = vunpack.c.l.b16 %v2068
        %v2137 = vunpack.c.l.b16 %v2069
        %v2138 = vunpack.c.l.b16 %v2070
        %v2139 = vunpack.c.l.b16 %v2071
        %v2140 = vunpack.c.l.b16 %v2072
        %v2141 = vunpack.c.l.b16 %v2073
        %v2142 = vunpack.c.l.b16 %v2074
        %v2143 = vunpack.c.l.b16 %v2075
        %v2144 = vunpack.c.l.b16 %v2076
        %v2145 = vunpack.c.l.b16 %v2077
        %v2146 = vunpack.c.l.b16 %v2078
        %v2147 = vunpack.c.l.b16 %v2079
        %v2148 = vunpack.c.l.b16 %v2080
        %v2149 = vpack.c.b16 %v2130, %v2129
        %v2150 = vpack.c.b16 %v2132, %v2131
        %v2151 = vpack.c.b16 %v2134, %v2133
        %v2152 = vpack.c.b16 %v2136, %v2135
        %v2153 = vpack.c.b16 %v2138, %v2137
        %v2154 = vpack.c.b16 %v2140, %v2139
        %v2155 = vpack.c.b16 %v2142, %v2141
        %v2156 = vpack.c.b16 %v2144, %v2143
        %v2157 = vpack.c.b16 %v2146, %v2145
        %v2158 = vpack.c.b16 %v2148, %v2147
        %v2170 = vsel %vm1034, %v2098, 0
        %v2173 = vsel %vm1034, %v2100, 0
        %v2176 = vsel %vm1034, %v2102, 0
        %v2179 = vsel %vm1034, %v2104, 0
        %2181 = vmatprep.subr.bf16.mxu0 0
        %2182 = vmatpush1.bf16.msra.mxu0 %v2149
        %2183 = vmatprep.subr.bf16.mxu0 0
        %2184 = vmatpush1.bf16.msra.mxu0 %v2150
        %2185 = vmatprep.subr.bf16.mxu0 0
        %2186 = vmatpush1.bf16.msra.mxu0 %v2151
        %2187 = vmatprep.subr.bf16.mxu0 0
        %2188 = vmatpush1.bf16.msra.mxu0 %v2152
        %2189 = vmatprep.subr.bf16.mxu0 0
        %2190 = vmatpush1.bf16.msra.mxu0 %v2153
        %2191 = vmatprep.subr.bf16.mxu0 0
        %2192 = vmatpush1.bf16.msra.mxu0 %v2154
        %2193 = vmatprep.subr.bf16.mxu0 0
        %2194 = vmatpush1.bf16.msra.mxu0 %v2155
        %2195 = vmatprep.subr.bf16.mxu0 0
        %2196 = vmatpush1.bf16.msra.mxu0 %v2156
        %2197 = vmatprep.subr.bf16.mxu0 0
        %2198 = vmatpush1.bf16.msra.mxu0 %v2157
        %2199 = vmatprep.subr.bf16.mxu0 0
        %2200 = vmatpush1.bf16.msra.mxu0 %v2158
        %2201 = vmatprep.subr.bf16.mxu0 0
        %2202 = vmatpush1.bf16.msra.mxu0 0
        %2203 = vmatprep.subr.bf16.mxu0 0
        %2204 = vmatpush1.bf16.msra.mxu0 0
        %2205 = vmatprep.subr.bf16.mxu0 0
        %2206 = vmatpush1.bf16.msra.mxu0 0
        %2207 = vmatprep.subr.bf16.mxu0 0
        %2208 = vmatpush1.bf16.msra.mxu0 0
        %2209 = vmatprep.subr.bf16.mxu0 0
        %2210 = vmatpush1.bf16.msra.mxu0 0
        %2211 = vmatprep.subr.bf16.mxu0 0
        %2212 = vmatpush1.bf16.msra.mxu0 0
        %2213 = vmatprep.mubr.bf16.mxu0 %v2170
        %2214 = vmatmul.mubr.bf16.gmra.mrb[0].mxu0 %v2097
        %v2215 = vpop.f32.mrb[0].mxu0
        %v2216 = vadd.f32 0.0, %v2215
        %v2217 = vpop.f32.mrb[0].mxu0
        %v2218 = vpop.f32.mrb[0].mxu0
        %v2219 = vadd.f32 0.0, %v2218
        %v2220 = vpop.f32.mrb[0].mxu0
        %2221 = vmatprep.mubr.bf16.mxu0 %v2173
        %2222 = vmatmul.mubr.bf16.gmra.mrb[0].mxu0 %v2099
        %v2223 = vpop.f32.mrb[0].mxu0
        %v2224 = vadd.f32 0.0, %v2223
        %v2225 = vpop.f32.mrb[0].mxu0
        %v2226 = vpop.f32.mrb[0].mxu0
        %v2227 = vadd.f32 0.0, %v2226
        %v2228 = vpop.f32.mrb[0].mxu0
        %2229 = vmatprep.mubr.bf16.mxu0 %v2176
        %2230 = vmatmul.mubr.bf16.gmra.mrb[0].mxu0 %v2101
        %v2231 = vpop.f32.mrb[0].mxu0
        %v2232 = vadd.f32 0.0, %v2231
        %v2233 = vpop.f32.mrb[0].mxu0
        %v2234 = vpop.f32.mrb[0].mxu0
        %v2235 = vadd.f32 0.0, %v2234
        %v2236 = vpop.f32.mrb[0].mxu0
        %2237 = vmatprep.mubr.bf16.mxu0 %v2179
        %2238 = vmatmul.mubr.bf16.gmra.mrb[0].mxu0 %v2103
        %v2239 = vpop.f32.mrb[0].mxu0
        %v2240 = vadd.f32 0.0, %v2239
        %v2241 = vpop.f32.mrb[0].mxu0
        %v2242 = vpop.f32.mrb[0].mxu0
        %v2243 = vadd.f32 0.0, %v2242
        %v2244 = vpop.f32.mrb[0].mxu0
        %2245 = vdwg.mxu0
        %v2246 = vadd.f32 %v2052, %v2216
        %v2247 = vadd.f32 %v2053, %v2219
        %v2248 = vadd.f32 %v2054, %v2224
        %v2249 = vadd.f32 %v2055, %v2227
        %v2250 = vadd.f32 %v2056, %v2232
        %v2251 = vadd.f32 %v2057, %v2235
        %v2252 = vadd.f32 %v2058, %v2240
        %v2253 = vadd.f32 %v2059, %v2243
        %v2254 = vld [vmem:[%s643] sm:$0xf]
        %v2255 = vld [vmem:[%s643 + $0x8] sm:$0xf]
        %v2256 = vld [vmem:[%s643 + $0x10] sm:$0xf]
        %v2257 = vld [vmem:[%s643 + $0x18] sm:$0xf]
        %v2258 = vld [vmem:[%s643 + $0x20] sm:$0xf]
        %v2259 = vld [vmem:[%s643 + $0x28] sm:$0xf]
        %v2260 = vld [vmem:[%s643 + $0x30] sm:$0xf]
        %v2261 = vld [vmem:[%s643 + $0x38] sm:$0xf]
        %v2262 = vld [vmem:[%s834] sm:$0xff]
        %v2263 = vld [vmem:[%s834 + $0x10] sm:$0xff]
        %v2264 = vld [vmem:[%s834 + $0x20] sm:$0xff]
        %v2265 = vld [vmem:[%s834 + $0x30] sm:$0xff]
        %v2266 = vld [vmem:[%s834 + $0x40] sm:$0xff]
        %v2267 = vld [vmem:[%s834 + $0x50] sm:$0xff]
        %v2268 = vld [vmem:[%s834 + $0x60] sm:$0xff]
        %v2269 = vld [vmem:[%s834 + $0x70] sm:$0xff]
        %s2270 = scalar_lea.vmem %s3, 84
        %v2271 = vld [vmem:[%s2270] sm:$0xf]
        %v2272 = vld [vmem:[%s2270 + $0x4] sm:$0xf]
        %v2273 = vld [vmem:[%s2270 + $0x8] sm:$0xf]
        %v2274 = vld [vmem:[%s2270 + $0xc] sm:$0xf]
        %v2275 = vld [vmem:[%s2270 + $0x10] sm:$0xf]
        %v2276 = vld [vmem:[%s2270 + $0x14] sm:$0xf]
        %v2277 = vld [vmem:[%s2270 + $0x18] sm:$0xf]
        %v2286 = vunpack.c.l.b16 %v2254
        %v2287 = vunpack.c.l.b16 %v2255
        %v2288 = vunpack.c.l.b16 %v2256
        %v2289 = vunpack.c.l.b16 %v2257
        %v2290 = vunpack.c.l.b16 %v2258
        %v2291 = vunpack.c.l.b16 %v2259
        %v2292 = vunpack.c.l.b16 %v2260
        %v2293 = vunpack.c.l.b16 %v2261
        %v2294 = vpack.c.b16 %v2287, %v2286
        %v2295 = vpack.c.b16 %v2289, %v2288
        %v2296 = vpack.c.b16 %v2291, %v2290
        %v2297 = vpack.c.b16 %v2293, %v2292
        %v2305 = vunpack.c.l.b16 %v2271
        %v2306 = vunpack.c.l.b16 %v2272
        %v2307 = vunpack.c.l.b16 %v2273
        %v2308 = vunpack.c.l.b16 %v2274
        %v2309 = vunpack.c.l.b16 %v2275
        %v2310 = vunpack.c.l.b16 %v2276
        %v2311 = vunpack.c.l.b16 %v2277
        %v2312 = vpack.c.b16 %v2306, %v2305
        %v2313 = vpack.c.b16 %v2308, %v2307
        %v2314 = vpack.c.b16 %v2310, %v2309
        %v2315 = vpack.c.b16 %v2311, %v2311
        %v2320 = vsel %vm1153, %v2294, 0
        %v2323 = vsel %vm1153, %v2295, 0
        %v2326 = vsel %vm1153, %v2296, 0
        %v2329 = vsel %vm1153, %v2297, 0
        %v2332 = vsel %vm497, %v2315, 0
        %2334 = vmatprep.subr.bf16.mxu0 0
        %2335 = vmatpush1.bf16.msra.mxu0 %v2312
        %2336 = vmatprep.subr.bf16.mxu0 0
        %2337 = vmatpush1.bf16.msra.mxu0 %v2313
        %2338 = vmatprep.subr.bf16.mxu0 0
        %2339 = vmatpush1.bf16.msra.mxu0 %v2314
        %2340 = vmatprep.subr.bf16.mxu0 0
        %2341 = vmatpush1.bf16.msra.mxu0 %v2332
        %2342 = vmatprep.subr.bf16.mxu0 0
        %2343 = vmatpush1.bf16.msra.mxu0 0
        %2344 = vmatprep.subr.bf16.mxu0 0
        %2345 = vmatpush1.bf16.msra.mxu0 0
        %2346 = vmatprep.subr.bf16.mxu0 0
        %2347 = vmatpush1.bf16.msra.mxu0 0
        %2348 = vmatprep.subr.bf16.mxu0 0
        %2349 = vmatpush1.bf16.msra.mxu0 0
        %2350 = vmatprep.subr.bf16.mxu0 0
        %2351 = vmatpush1.bf16.msra.mxu0 0
        %2352 = vmatprep.subr.bf16.mxu0 0
        %2353 = vmatpush1.bf16.msra.mxu0 0
        %2354 = vmatprep.subr.bf16.mxu0 0
        %2355 = vmatpush1.bf16.msra.mxu0 0
        %2356 = vmatprep.subr.bf16.mxu0 0
        %2357 = vmatpush1.bf16.msra.mxu0 0
        %2358 = vmatprep.subr.bf16.mxu0 0
        %2359 = vmatpush1.bf16.msra.mxu0 0
        %2360 = vmatprep.subr.bf16.mxu0 0
        %2361 = vmatpush1.bf16.msra.mxu0 0
        %2362 = vmatprep.subr.bf16.mxu0 0
        %2363 = vmatpush1.bf16.msra.mxu0 0
        %2364 = vmatprep.subr.bf16.mxu0 0
        %2365 = vmatpush1.bf16.msra.mxu0 0
        %2366 = vmatprep.mubr.bf16.mxu0 0
        %2367 = vmatmul.mubr.bf16.gmra.mrb[0].mxu0 %v2320
        %v2368 = vpop.f32.mrb[0].mxu0
        %v2369 = vadd.f32 0.0, %v2368
        %v2370 = vpop.f32.mrb[0].mxu0
        %v2371 = vpop.f32.mrb[0].mxu0
        %v2372 = vadd.f32 0.0, %v2371
        %v2373 = vpop.f32.mrb[0].mxu0
        %2374 = vmatprep.mubr.bf16.mxu0 0
        %2375 = vmatmul.mubr.bf16.gmra.mrb[0].mxu0 %v2323
        %v2376 = vpop.f32.mrb[0].mxu0
        %v2377 = vadd.f32 0.0, %v2376
        %v2378 = vpop.f32.mrb[0].mxu0
        %v2379 = vpop.f32.mrb[0].mxu0
        %v2380 = vadd.f32 0.0, %v2379
        %v2381 = vpop.f32.mrb[0].mxu0
        %2382 = vmatprep.mubr.bf16.mxu0 0
        %2383 = vmatmul.mubr.bf16.gmra.mrb[0].mxu0 %v2326
        %v2384 = vpop.f32.mrb[0].mxu0
        %v2385 = vadd.f32 0.0, %v2384
        %v2386 = vpop.f32.mrb[0].mxu0
        %v2387 = vpop.f32.mrb[0].mxu0
        %v2388 = vadd.f32 0.0, %v2387
        %v2389 = vpop.f32.mrb[0].mxu0
        %2390 = vmatprep.mubr.bf16.mxu0 0
        %2391 = vmatmul.mubr.bf16.gmra.mrb[0].mxu0 %v2329
        %v2392 = vpop.f32.mrb[0].mxu0
        %v2393 = vadd.f32 0.0, %v2392
        %v2394 = vpop.f32.mrb[0].mxu0
        %v2395 = vpop.f32.mrb[0].mxu0
        %v2396 = vadd.f32 0.0, %v2395
        %v2397 = vpop.f32.mrb[0].mxu0
        %2398 = vdwg.mxu0
        %v2399 = vadd.f32 %v2246, %v2369
        %v2400 = vadd.f32 %v2247, %v2372
        %v2401 = vadd.f32 %v2248, %v2377
        %v2402 = vadd.f32 %v2249, %v2380
        %v2403 = vadd.f32 %v2250, %v2385
        %v2404 = vadd.f32 %v2251, %v2388
        %v2405 = vadd.f32 %v2252, %v2393
        %v2406 = vadd.f32 %v2253, %v2396
        %s2407 = scalar_lea.vmem %s4, 240
        %v2408 = vld [vmem:[%s2407] sm:$0xf]
        %v2409 = vld [vmem:[%s2407 + $0x4] sm:$0xf]
        %v2410 = vld [vmem:[%s2407 + $0x8] sm:$0xf]
        %v2411 = vld [vmem:[%s2407 + $0xc] sm:$0xf]
        %v2412 = vld [vmem:[%s2407 + $0x10] sm:$0xf]
        %v2413 = vld [vmem:[%s2407 + $0x14] sm:$0xf]
        %v2414 = vld [vmem:[%s2407 + $0x18] sm:$0xf]
        %v2415 = vld [vmem:[%s2407 + $0x1c] sm:$0xf]
        %v2416 = vld [vmem:[%s2407 + $0x20] sm:$0xf]
        %v2417 = vld [vmem:[%s2407 + $0x24] sm:$0xf]
        %v2418 = vld [vmem:[%s2407 + $0x28] sm:$0xf]
        %v2419 = vld [vmem:[%s2407 + $0x2c] sm:$0xf]
        %v2420 = vld [vmem:[%s2407 + $0x30] sm:$0xf]
        %v2421 = vld [vmem:[%s2407 + $0x34] sm:$0xf]
        %v2422 = vld [vmem:[%s2407 + $0x38] sm:$0xf]
        %v2423 = vld [vmem:[%s2407 + $0x3c] sm:$0xf]
        %v2424 = vld [vmem:[%s2407 + $0x40] sm:$0xf]
        %v2425 = vld [vmem:[%s2407 + $0x44] sm:$0xf]
        %v2426 = vld [vmem:[%s2407 + $0x48] sm:$0xf]
        %v2427 = vld [vmem:[%s2407 + $0x4c] sm:$0xf]
        %v2436 = vunpack.c.l.b16 %v2262
        %v2437 = vunpack.c.h.b16 %v2262
        %v2438 = vunpack.c.l.b16 %v2263
        %v2439 = vunpack.c.h.b16 %v2263
        %v2440 = vunpack.c.l.b16 %v2264
        %v2441 = vunpack.c.h.b16 %v2264
        %v2442 = vunpack.c.l.b16 %v2265
        %v2443 = vunpack.c.h.b16 %v2265
        %v2444 = vunpack.c.l.b16 %v2266
        %v2445 = vunpack.c.h.b16 %v2266
        %v2446 = vunpack.c.l.b16 %v2267
        %v2447 = vunpack.c.h.b16 %v2267
        %v2448 = vunpack.c.l.b16 %v2268
        %v2449 = vunpack.c.h.b16 %v2268
        %v2450 = vunpack.c.l.b16 %v2269
        %v2451 = vunpack.c.h.b16 %v2269
        %v2452 = vpack.c.b16 %v2438, %v2436
        %v2453 = vpack.c.b16 %v2439, %v2437
        %v2454 = vpack.c.b16 %v2442, %v2440
        %v2455 = vpack.c.b16 %v2443, %v2441
        %v2456 = vpack.c.b16 %v2446, %v2444
        %v2457 = vpack.c.b16 %v2447, %v2445
        %v2458 = vpack.c.b16 %v2450, %v2448
        %v2459 = vpack.c.b16 %v2451, %v2449
        %v2484 = vunpack.c.l.b16 %v2408
        %v2485 = vunpack.c.l.b16 %v2409
        %v2486 = vunpack.c.l.b16 %v2410
        %v2487 = vunpack.c.l.b16 %v2411
        %v2488 = vunpack.c.l.b16 %v2412
        %v2489 = vunpack.c.l.b16 %v2413
        %v2490 = vunpack.c.l.b16 %v2414
        %v2491 = vunpack.c.l.b16 %v2415
        %v2492 = vunpack.c.l.b16 %v2416
        %v2493 = vunpack.c.l.b16 %v2417
        %v2494 = vunpack.c.l.b16 %v2418
        %v2495 = vunpack.c.l.b16 %v2419
        %v2496 = vunpack.c.l.b16 %v2420
        %v2497 = vunpack.c.l.b16 %v2421
        %v2498 = vunpack.c.l.b16 %v2422
        %v2499 = vunpack.c.l.b16 %v2423
        %v2500 = vunpack.c.l.b16 %v2424
        %v2501 = vunpack.c.l.b16 %v2425
        %v2502 = vunpack.c.l.b16 %v2426
        %v2503 = vunpack.c.l.b16 %v2427
        %v2504 = vpack.c.b16 %v2485, %v2484
        %v2505 = vpack.c.b16 %v2487, %v2486
        %v2506 = vpack.c.b16 %v2489, %v2488
        %v2507 = vpack.c.b16 %v2491, %v2490
        %v2508 = vpack.c.b16 %v2493, %v2492
        %v2509 = vpack.c.b16 %v2495, %v2494
        %v2510 = vpack.c.b16 %v2497, %v2496
        %v2511 = vpack.c.b16 %v2499, %v2498
        %v2512 = vpack.c.b16 %v2501, %v2500
        %v2513 = vpack.c.b16 %v2503, %v2502
        %v2525 = vsel %vm1034, %v2453, 0
        %v2528 = vsel %vm1034, %v2455, 0
        %v2531 = vsel %vm1034, %v2457, 0
        %v2534 = vsel %vm1034, %v2459, 0
        %2536 = vmatprep.subr.bf16.mxu0 0
        %2537 = vmatpush1.bf16.msra.mxu0 %v2504
        %2538 = vmatprep.subr.bf16.mxu0 0
        %2539 = vmatpush1.bf16.msra.mxu0 %v2505
        %2540 = vmatprep.subr.bf16.mxu0 0
        %2541 = vmatpush1.bf16.msra.mxu0 %v2506
        %2542 = vmatprep.subr.bf16.mxu0 0
        %2543 = vmatpush1.bf16.msra.mxu0 %v2507
        %2544 = vmatprep.subr.bf16.mxu0 0
        %2545 = vmatpush1.bf16.msra.mxu0 %v2508
        %2546 = vmatprep.subr.bf16.mxu0 0
        %2547 = vmatpush1.bf16.msra.mxu0 %v2509
        %2548 = vmatprep.subr.bf16.mxu0 0
        %2549 = vmatpush1.bf16.msra.mxu0 %v2510
        %2550 = vmatprep.subr.bf16.mxu0 0
        %2551 = vmatpush1.bf16.msra.mxu0 %v2511
        %2552 = vmatprep.subr.bf16.mxu0 0
        %2553 = vmatpush1.bf16.msra.mxu0 %v2512
        %2554 = vmatprep.subr.bf16.mxu0 0
        %2555 = vmatpush1.bf16.msra.mxu0 %v2513
        %2556 = vmatprep.subr.bf16.mxu0 0
        %2557 = vmatpush1.bf16.msra.mxu0 0
        %2558 = vmatprep.subr.bf16.mxu0 0
        %2559 = vmatpush1.bf16.msra.mxu0 0
        %2560 = vmatprep.subr.bf16.mxu0 0
        %2561 = vmatpush1.bf16.msra.mxu0 0
        %2562 = vmatprep.subr.bf16.mxu0 0
        %2563 = vmatpush1.bf16.msra.mxu0 0
        %2564 = vmatprep.subr.bf16.mxu0 0
        %2565 = vmatpush1.bf16.msra.mxu0 0
        %2566 = vmatprep.subr.bf16.mxu0 0
        %2567 = vmatpush1.bf16.msra.mxu0 0
        %2568 = vmatprep.mubr.bf16.mxu0 %v2525
        %2569 = vmatmul.mubr.bf16.gmra.mrb[0].mxu0 %v2452
        %v2570 = vpop.f32.mrb[0].mxu0
        %v2571 = vadd.f32 0.0, %v2570
        %v2572 = vpop.f32.mrb[0].mxu0
        %v2573 = vpop.f32.mrb[0].mxu0
        %v2574 = vadd.f32 0.0, %v2573
        %v2575 = vpop.f32.mrb[0].mxu0
        %2576 = vmatprep.mubr.bf16.mxu0 %v2528
        %2577 = vmatmul.mubr.bf16.gmra.mrb[0].mxu0 %v2454
        %v2578 = vpop.f32.mrb[0].mxu0
        %v2579 = vadd.f32 0.0, %v2578
        %v2580 = vpop.f32.mrb[0].mxu0
        %v2581 = vpop.f32.mrb[0].mxu0
        %v2582 = vadd.f32 0.0, %v2581
        %v2583 = vpop.f32.mrb[0].mxu0
        %2584 = vmatprep.mubr.bf16.mxu0 %v2531
        %2585 = vmatmul.mubr.bf16.gmra.mrb[0].mxu0 %v2456
        %v2586 = vpop.f32.mrb[0].mxu0
        %v2587 = vadd.f32 0.0, %v2586
        %v2588 = vpop.f32.mrb[0].mxu0
        %v2589 = vpop.f32.mrb[0].mxu0
        %v2590 = vadd.f32 0.0, %v2589
        %v2591 = vpop.f32.mrb[0].mxu0
        %2592 = vmatprep.mubr.bf16.mxu0 %v2534
        %2593 = vmatmul.mubr.bf16.gmra.mrb[0].mxu0 %v2458
        %v2594 = vpop.f32.mrb[0].mxu0
        %v2595 = vadd.f32 0.0, %v2594
        %v2596 = vpop.f32.mrb[0].mxu0
        %v2597 = vpop.f32.mrb[0].mxu0
        %v2598 = vadd.f32 0.0, %v2597
        %v2599 = vpop.f32.mrb[0].mxu0
        %2600 = vdwg.mxu0
        %v2601 = vadd.f32 %v2399, %v2571
        %v2602 = vadd.f32 %v2400, %v2574
        %v2603 = vadd.f32 %v2401, %v2579
        %v2604 = vadd.f32 %v2402, %v2582
        %v2605 = vadd.f32 %v2403, %v2587
        %v2606 = vadd.f32 %v2404, %v2590
        %v2607 = vadd.f32 %v2405, %v2595
        %v2608 = vadd.f32 %v2406, %v2598
        %v2609 = vld [vmem:[%s643] sm:$0xf]
        %v2610 = vld [vmem:[%s643 + $0x4] sm:$0x1]
        %v2611 = vld [vmem:[%s643 + $0x8] sm:$0xf]
        %v2612 = vld [vmem:[%s643 + $0xc] sm:$0x1]
        %v2613 = vld [vmem:[%s643 + $0x10] sm:$0xf]
        %v2614 = vld [vmem:[%s643 + $0x14] sm:$0x1]
        %v2615 = vld [vmem:[%s643 + $0x18] sm:$0xf]
        %v2616 = vld [vmem:[%s643 + $0x1c] sm:$0x1]
        %v2617 = vld [vmem:[%s643 + $0x20] sm:$0xf]
        %v2618 = vld [vmem:[%s643 + $0x24] sm:$0x1]
        %v2619 = vld [vmem:[%s643 + $0x28] sm:$0xf]
        %v2620 = vld [vmem:[%s643 + $0x2c] sm:$0x1]
        %v2621 = vld [vmem:[%s643 + $0x30] sm:$0xf]
        %v2622 = vld [vmem:[%s643 + $0x34] sm:$0x1]
        %v2623 = vld [vmem:[%s643 + $0x38] sm:$0xf]
        %v2624 = vld [vmem:[%s643 + $0x3c] sm:$0x1]
        %v2626 = vshrl.u32 %v2609, 16
        %v2628 = vrot.slane %v2626, 4
        %v2629 = vshll.u32 %v2609, 16
        %v2631 = vrot.slane %v2629, 5
        %v2632 = vor.u32 %v2628, %v2631
        %v2633 = vrot.slane %v2632, 4
        %v2635 = vshll.u32 %v2610, 16
        %v2637 = vrot.slane %v2635, 5
        %v2638 = vsel %vm1252, %v2633, %v2637
        %v2640 = vshrl.u32 %v2611, 16
        %v2642 = vrot.slane %v2640, 4
        %v2643 = vshll.u32 %v2611, 16
        %v2645 = vrot.slane %v2643, 5
        %v2646 = vor.u32 %v2642, %v2645
        %v2647 = vrot.slane %v2646, 4
        %v2649 = vshll.u32 %v2612, 16
        %v2651 = vrot.slane %v2649, 5
        %v2652 = vsel %vm1252, %v2647, %v2651
        %v2654 = vshrl.u32 %v2613, 16
        %v2656 = vrot.slane %v2654, 4
        %v2657 = vshll.u32 %v2613, 16
        %v2659 = vrot.slane %v2657, 5
        %v2660 = vor.u32 %v2656, %v2659
        %v2661 = vrot.slane %v2660, 4
        %v2663 = vshll.u32 %v2614, 16
        %v2665 = vrot.slane %v2663, 5
        %v2666 = vsel %vm1252, %v2661, %v2665
        %v2668 = vshrl.u32 %v2615, 16
        %v2670 = vrot.slane %v2668, 4
        %v2671 = vshll.u32 %v2615, 16
        %v2673 = vrot.slane %v2671, 5
        %v2674 = vor.u32 %v2670, %v2673
        %v2675 = vrot.slane %v2674, 4
        %v2677 = vshll.u32 %v2616, 16
        %v2679 = vrot.slane %v2677, 5
        %v2680 = vsel %vm1252, %v2675, %v2679
        %v2682 = vshrl.u32 %v2617, 16
        %v2684 = vrot.slane %v2682, 4
        %v2685 = vshll.u32 %v2617, 16
        %v2687 = vrot.slane %v2685, 5
        %v2688 = vor.u32 %v2684, %v2687
        %v2689 = vrot.slane %v2688, 4
        %v2691 = vshll.u32 %v2618, 16
        %v2693 = vrot.slane %v2691, 5
        %v2694 = vsel %vm1252, %v2689, %v2693
        %v2696 = vshrl.u32 %v2619, 16
        %v2698 = vrot.slane %v2696, 4
        %v2699 = vshll.u32 %v2619, 16
        %v2701 = vrot.slane %v2699, 5
        %v2702 = vor.u32 %v2698, %v2701
        %v2703 = vrot.slane %v2702, 4
        %v2705 = vshll.u32 %v2620, 16
        %v2707 = vrot.slane %v2705, 5
        %v2708 = vsel %vm1252, %v2703, %v2707
        %v2710 = vshrl.u32 %v2621, 16
        %v2712 = vrot.slane %v2710, 4
        %v2713 = vshll.u32 %v2621, 16
        %v2715 = vrot.slane %v2713, 5
        %v2716 = vor.u32 %v2712, %v2715
        %v2717 = vrot.slane %v2716, 4
        %v2719 = vshll.u32 %v2622, 16
        %v2721 = vrot.slane %v2719, 5
        %v2722 = vsel %vm1252, %v2717, %v2721
        %v2724 = vshrl.u32 %v2623, 16
        %v2726 = vrot.slane %v2724, 4
        %v2727 = vshll.u32 %v2623, 16
        %v2729 = vrot.slane %v2727, 5
        %v2730 = vor.u32 %v2726, %v2729
        %v2731 = vrot.slane %v2730, 4
        %v2733 = vshll.u32 %v2624, 16
        %v2735 = vrot.slane %v2733, 5
        %v2736 = vsel %vm1252, %v2731, %v2735
        %v2737 = vld [vmem:[%s834] sm:$0xff]
        %v2738 = vld [vmem:[%s834 + $0x8] sm:$0x11]
        %v2739 = vld [vmem:[%s834 + $0x10] sm:$0xff]
        %v2740 = vld [vmem:[%s834 + $0x18] sm:$0x11]
        %v2741 = vld [vmem:[%s834 + $0x20] sm:$0xff]
        %v2742 = vld [vmem:[%s834 + $0x28] sm:$0x11]
        %v2743 = vld [vmem:[%s834 + $0x30] sm:$0xff]
        %v2744 = vld [vmem:[%s834 + $0x38] sm:$0x11]
        %v2745 = vld [vmem:[%s834 + $0x40] sm:$0xff]
        %v2746 = vld [vmem:[%s834 + $0x48] sm:$0x11]
        %v2747 = vld [vmem:[%s834 + $0x50] sm:$0xff]
        %v2748 = vld [vmem:[%s834 + $0x58] sm:$0x11]
        %v2749 = vld [vmem:[%s834 + $0x60] sm:$0xff]
        %v2750 = vld [vmem:[%s834 + $0x68] sm:$0x11]
        %v2751 = vld [vmem:[%s834 + $0x70] sm:$0xff]
        %v2752 = vld [vmem:[%s834 + $0x78] sm:$0x11]
        %v2754 = vshrl.u32 %v2737, 16
        %v2756 = vrot.slane %v2754, 4
        %v2757 = vshll.u32 %v2737, 16
        %v2759 = vrot.slane %v2757, 5
        %v2760 = vor.u32 %v2756, %v2759
        %v2761 = vrot.slane %v2760, 4
        %v2763 = vshll.u32 %v2738, 16
        %v2765 = vrot.slane %v2763, 5
        %v2766 = vsel %vm1252, %v2761, %v2765
        %v2768 = vshrl.u32 %v2739, 16
        %v2770 = vrot.slane %v2768, 4
        %v2771 = vshll.u32 %v2739, 16
        %v2773 = vrot.slane %v2771, 5
        %v2774 = vor.u32 %v2770, %v2773
        %v2775 = vrot.slane %v2774, 4
        %v2777 = vshll.u32 %v2740, 16
        %v2779 = vrot.slane %v2777, 5
        %v2780 = vsel %vm1252, %v2775, %v2779
        %v2782 = vshrl.u32 %v2741, 16
        %v2784 = vrot.slane %v2782, 4
        %v2785 = vshll.u32 %v2741, 16
        %v2787 = vrot.slane %v2785, 5
        %v2788 = vor.u32 %v2784, %v2787
        %v2789 = vrot.slane %v2788, 4
        %v2791 = vshll.u32 %v2742, 16
        %v2793 = vrot.slane %v2791, 5
        %v2794 = vsel %vm1252, %v2789, %v2793
        %v2796 = vshrl.u32 %v2743, 16
        %v2798 = vrot.slane %v2796, 4
        %v2799 = vshll.u32 %v2743, 16
        %v2801 = vrot.slane %v2799, 5
        %v2802 = vor.u32 %v2798, %v2801
        %v2803 = vrot.slane %v2802, 4
        %v2805 = vshll.u32 %v2744, 16
        %v2807 = vrot.slane %v2805, 5
        %v2808 = vsel %vm1252, %v2803, %v2807
        %v2810 = vshrl.u32 %v2745, 16
        %v2812 = vrot.slane %v2810, 4
        %v2813 = vshll.u32 %v2745, 16
        %v2815 = vrot.slane %v2813, 5
        %v2816 = vor.u32 %v2812, %v2815
        %v2817 = vrot.slane %v2816, 4
        %v2819 = vshll.u32 %v2746, 16
        %v2821 = vrot.slane %v2819, 5
        %v2822 = vsel %vm1252, %v2817, %v2821
        %v2824 = vshrl.u32 %v2747, 16
        %v2826 = vrot.slane %v2824, 4
        %v2827 = vshll.u32 %v2747, 16
        %v2829 = vrot.slane %v2827, 5
        %v2830 = vor.u32 %v2826, %v2829
        %v2831 = vrot.slane %v2830, 4
        %v2833 = vshll.u32 %v2748, 16
        %v2835 = vrot.slane %v2833, 5
        %v2836 = vsel %vm1252, %v2831, %v2835
        %v2838 = vshrl.u32 %v2749, 16
        %v2840 = vrot.slane %v2838, 4
        %v2841 = vshll.u32 %v2749, 16
        %v2843 = vrot.slane %v2841, 5
        %v2844 = vor.u32 %v2840, %v2843
        %v2845 = vrot.slane %v2844, 4
        %v2847 = vshll.u32 %v2750, 16
        %v2849 = vrot.slane %v2847, 5
        %v2850 = vsel %vm1252, %v2845, %v2849
        %v2852 = vshrl.u32 %v2751, 16
        %v2854 = vrot.slane %v2852, 4
        %v2855 = vshll.u32 %v2751, 16
        %v2857 = vrot.slane %v2855, 5
        %v2858 = vor.u32 %v2854, %v2857
        %v2859 = vrot.slane %v2858, 4
        %v2861 = vshll.u32 %v2752, 16
        %v2863 = vrot.slane %v2861, 5
        %v2864 = vsel %vm1252, %v2859, %v2863
        %s2865 = scalar_lea.vmem %s3, 112
        %v2866 = vld [vmem:[%s2865] sm:$0xf]
        %v2867 = vld [vmem:[%s2865 + $0x4] sm:$0xf]
        %v2868 = vld [vmem:[%s2865 + $0x8] sm:$0xf]
        %v2869 = vld [vmem:[%s2865 + $0xc] sm:$0xf]
        %v2870 = vld [vmem:[%s2865 + $0x10] sm:$0xf]
        %v2871 = vld [vmem:[%s2865 + $0x14] sm:$0xf]
        %v2872 = vld [vmem:[%s2865 + $0x18] sm:$0xf]
        %v2873 = vunpack.c.l.b16 %v2638
        %v2874 = vunpack.c.l.b16 %v2652
        %v2875 = vunpack.c.l.b16 %v2666
        %v2876 = vunpack.c.l.b16 %v2680
        %v2877 = vunpack.c.l.b16 %v2694
        %v2878 = vunpack.c.l.b16 %v2708
        %v2879 = vunpack.c.l.b16 %v2722
        %v2880 = vunpack.c.l.b16 %v2736
        %v2881 = vpack.c.b16 %v2874, %v2873
        %v2882 = vpack.c.b16 %v2876, %v2875
        %v2883 = vpack.c.b16 %v2878, %v2877
        %v2884 = vpack.c.b16 %v2880, %v2879
        %v2892 = vunpack.c.l.b16 %v2866
        %v2893 = vunpack.c.l.b16 %v2867
        %v2894 = vunpack.c.l.b16 %v2868
        %v2895 = vunpack.c.l.b16 %v2869
        %v2896 = vunpack.c.l.b16 %v2870
        %v2897 = vunpack.c.l.b16 %v2871
        %v2898 = vunpack.c.l.b16 %v2872
        %v2899 = vpack.c.b16 %v2893, %v2892
        %v2900 = vpack.c.b16 %v2895, %v2894
        %v2901 = vpack.c.b16 %v2897, %v2896
        %v2902 = vpack.c.b16 %v2898, %v2898
        %v2907 = vsel %vm1153, %v2881, 0
        %v2910 = vsel %vm1153, %v2882, 0
        %v2913 = vsel %vm1153, %v2883, 0
        %v2916 = vsel %vm1153, %v2884, 0
        %v2919 = vsel %vm497, %v2902, 0
        %2921 = vmatprep.subr.bf16.mxu0 0
        %2922 = vmatpush1.bf16.msra.mxu0 %v2899
        %2923 = vmatprep.subr.bf16.mxu0 0
        %2924 = vmatpush1.bf16.msra.mxu0 %v2900
        %2925 = vmatprep.subr.bf16.mxu0 0
        %2926 = vmatpush1.bf16.msra.mxu0 %v2901
        %2927 = vmatprep.subr.bf16.mxu0 0
        %2928 = vmatpush1.bf16.msra.mxu0 %v2919
        %2929 = vmatprep.subr.bf16.mxu0 0
        %2930 = vmatpush1.bf16.msra.mxu0 0
        %2931 = vmatprep.subr.bf16.mxu0 0
        %2932 = vmatpush1.bf16.msra.mxu0 0
        %2933 = vmatprep.subr.bf16.mxu0 0
        %2934 = vmatpush1.bf16.msra.mxu0 0
        %2935 = vmatprep.subr.bf16.mxu0 0
        %2936 = vmatpush1.bf16.msra.mxu0 0
        %2937 = vmatprep.subr.bf16.mxu0 0
        %2938 = vmatpush1.bf16.msra.mxu0 0
        %2939 = vmatprep.subr.bf16.mxu0 0
        %2940 = vmatpush1.bf16.msra.mxu0 0
        %2941 = vmatprep.subr.bf16.mxu0 0
        %2942 = vmatpush1.bf16.msra.mxu0 0
        %2943 = vmatprep.subr.bf16.mxu0 0
        %2944 = vmatpush1.bf16.msra.mxu0 0
        %2945 = vmatprep.subr.bf16.mxu0 0
        %2946 = vmatpush1.bf16.msra.mxu0 0
        %2947 = vmatprep.subr.bf16.mxu0 0
        %2948 = vmatpush1.bf16.msra.mxu0 0
        %2949 = vmatprep.subr.bf16.mxu0 0
        %2950 = vmatpush1.bf16.msra.mxu0 0
        %2951 = vmatprep.subr.bf16.mxu0 0
        %2952 = vmatpush1.bf16.msra.mxu0 0
        %2953 = vmatprep.mubr.bf16.mxu0 0
        %2954 = vmatmul.mubr.bf16.gmra.mrb[0].mxu0 %v2907
        %v2955 = vpop.f32.mrb[0].mxu0
        %v2956 = vadd.f32 0.0, %v2955
        %v2957 = vpop.f32.mrb[0].mxu0
        %v2958 = vpop.f32.mrb[0].mxu0
        %v2959 = vadd.f32 0.0, %v2958
        %v2960 = vpop.f32.mrb[0].mxu0
        %2961 = vmatprep.mubr.bf16.mxu0 0
        %2962 = vmatmul.mubr.bf16.gmra.mrb[0].mxu0 %v2910
        %v2963 = vpop.f32.mrb[0].mxu0
        %v2964 = vadd.f32 0.0, %v2963
        %v2965 = vpop.f32.mrb[0].mxu0
        %v2966 = vpop.f32.mrb[0].mxu0
        %v2967 = vadd.f32 0.0, %v2966
        %v2968 = vpop.f32.mrb[0].mxu0
        %2969 = vmatprep.mubr.bf16.mxu0 0
        %2970 = vmatmul.mubr.bf16.gmra.mrb[0].mxu0 %v2913
        %v2971 = vpop.f32.mrb[0].mxu0
        %v2972 = vadd.f32 0.0, %v2971
        %v2973 = vpop.f32.mrb[0].mxu0
        %v2974 = vpop.f32.mrb[0].mxu0
        %v2975 = vadd.f32 0.0, %v2974
        %v2976 = vpop.f32.mrb[0].mxu0
        %2977 = vmatprep.mubr.bf16.mxu0 0
        %2978 = vmatmul.mubr.bf16.gmra.mrb[0].mxu0 %v2916
        %v2979 = vpop.f32.mrb[0].mxu0
        %v2980 = vadd.f32 0.0, %v2979
        %v2981 = vpop.f32.mrb[0].mxu0
        %v2982 = vpop.f32.mrb[0].mxu0
        %v2983 = vadd.f32 0.0, %v2982
        %v2984 = vpop.f32.mrb[0].mxu0
        %2985 = vdwg.mxu0
        %v2986 = vadd.f32 %v2601, %v2956
        %v2987 = vadd.f32 %v2602, %v2959
        %v2988 = vadd.f32 %v2603, %v2964
        %v2989 = vadd.f32 %v2604, %v2967
        %v2990 = vadd.f32 %v2605, %v2972
        %v2991 = vadd.f32 %v2606, %v2975
        %v2992 = vadd.f32 %v2607, %v2980
        %v2993 = vadd.f32 %v2608, %v2983
        %s2994 = scalar_lea.vmem %s4, 320
        %v2995 = vld [vmem:[%s2994] sm:$0xf]
        %v2996 = vld [vmem:[%s2994 + $0x4] sm:$0xf]
        %v2997 = vld [vmem:[%s2994 + $0x8] sm:$0xf]
        %v2998 = vld [vmem:[%s2994 + $0xc] sm:$0xf]
        %v2999 = vld [vmem:[%s2994 + $0x10] sm:$0xf]
        %v3000 = vld [vmem:[%s2994 + $0x14] sm:$0xf]
        %v3001 = vld [vmem:[%s2994 + $0x18] sm:$0xf]
        %v3002 = vld [vmem:[%s2994 + $0x1c] sm:$0xf]
        %v3003 = vld [vmem:[%s2994 + $0x20] sm:$0xf]
        %v3004 = vld [vmem:[%s2994 + $0x24] sm:$0xf]
        %v3005 = vld [vmem:[%s2994 + $0x28] sm:$0xf]
        %v3006 = vld [vmem:[%s2994 + $0x2c] sm:$0xf]
        %v3007 = vld [vmem:[%s2994 + $0x30] sm:$0xf]
        %v3008 = vld [vmem:[%s2994 + $0x34] sm:$0xf]
        %v3009 = vld [vmem:[%s2994 + $0x38] sm:$0xf]
        %v3010 = vld [vmem:[%s2994 + $0x3c] sm:$0xf]
        %v3011 = vld [vmem:[%s2994 + $0x40] sm:$0xf]
        %v3012 = vld [vmem:[%s2994 + $0x44] sm:$0xf]
        %v3013 = vld [vmem:[%s2994 + $0x48] sm:$0xf]
        %v3014 = vld [vmem:[%s2994 + $0x4c] sm:$0xf]
        %v3015 = vunpack.c.l.b16 %v2766
        %v3016 = vunpack.c.h.b16 %v2766
        %v3017 = vunpack.c.l.b16 %v2780
        %v3018 = vunpack.c.h.b16 %v2780
        %v3019 = vunpack.c.l.b16 %v2794
        %v3020 = vunpack.c.h.b16 %v2794
        %v3021 = vunpack.c.l.b16 %v2808
        %v3022 = vunpack.c.h.b16 %v2808
        %v3023 = vunpack.c.l.b16 %v2822
        %v3024 = vunpack.c.h.b16 %v2822
        %v3025 = vunpack.c.l.b16 %v2836
        %v3026 = vunpack.c.h.b16 %v2836
        %v3027 = vunpack.c.l.b16 %v2850
        %v3028 = vunpack.c.h.b16 %v2850
        %v3029 = vunpack.c.l.b16 %v2864
        %v3030 = vunpack.c.h.b16 %v2864
        %v3031 = vpack.c.b16 %v3017, %v3015
        %v3032 = vpack.c.b16 %v3018, %v3016
        %v3033 = vpack.c.b16 %v3021, %v3019
        %v3034 = vpack.c.b16 %v3022, %v3020
        %v3035 = vpack.c.b16 %v3025, %v3023
        %v3036 = vpack.c.b16 %v3026, %v3024
        %v3037 = vpack.c.b16 %v3029, %v3027
        %v3038 = vpack.c.b16 %v3030, %v3028
        %v3063 = vunpack.c.l.b16 %v2995
        %v3064 = vunpack.c.l.b16 %v2996
        %v3065 = vunpack.c.l.b16 %v2997
        %v3066 = vunpack.c.l.b16 %v2998
        %v3067 = vunpack.c.l.b16 %v2999
        %v3068 = vunpack.c.l.b16 %v3000
        %v3069 = vunpack.c.l.b16 %v3001
        %v3070 = vunpack.c.l.b16 %v3002
        %v3071 = vunpack.c.l.b16 %v3003
        %v3072 = vunpack.c.l.b16 %v3004
        %v3073 = vunpack.c.l.b16 %v3005
        %v3074 = vunpack.c.l.b16 %v3006
        %v3075 = vunpack.c.l.b16 %v3007
        %v3076 = vunpack.c.l.b16 %v3008
        %v3077 = vunpack.c.l.b16 %v3009
        %v3078 = vunpack.c.l.b16 %v3010
        %v3079 = vunpack.c.l.b16 %v3011
        %v3080 = vunpack.c.l.b16 %v3012
        %v3081 = vunpack.c.l.b16 %v3013
        %v3082 = vunpack.c.l.b16 %v3014
        %v3083 = vpack.c.b16 %v3064, %v3063
        %v3084 = vpack.c.b16 %v3066, %v3065
        %v3085 = vpack.c.b16 %v3068, %v3067
        %v3086 = vpack.c.b16 %v3070, %v3069
        %v3087 = vpack.c.b16 %v3072, %v3071
        %v3088 = vpack.c.b16 %v3074, %v3073
        %v3089 = vpack.c.b16 %v3076, %v3075
        %v3090 = vpack.c.b16 %v3078, %v3077
        %v3091 = vpack.c.b16 %v3080, %v3079
        %v3092 = vpack.c.b16 %v3082, %v3081
        %v3104 = vsel %vm1034, %v3032, 0
        %v3107 = vsel %vm1034, %v3034, 0
        %v3110 = vsel %vm1034, %v3036, 0
        %v3113 = vsel %vm1034, %v3038, 0
        %3115 = vmatprep.subr.bf16.mxu0 0
        %3116 = vmatpush1.bf16.msra.mxu0 %v3083
        %3117 = vmatprep.subr.bf16.mxu0 0
        %3118 = vmatpush1.bf16.msra.mxu0 %v3084
        %3119 = vmatprep.subr.bf16.mxu0 0
        %3120 = vmatpush1.bf16.msra.mxu0 %v3085
        %3121 = vmatprep.subr.bf16.mxu0 0
        %3122 = vmatpush1.bf16.msra.mxu0 %v3086
        %3123 = vmatprep.subr.bf16.mxu0 0
        %3124 = vmatpush1.bf16.msra.mxu0 %v3087
        %3125 = vmatprep.subr.bf16.mxu0 0
        %3126 = vmatpush1.bf16.msra.mxu0 %v3088
        %3127 = vmatprep.subr.bf16.mxu0 0
        %3128 = vmatpush1.bf16.msra.mxu0 %v3089
        %3129 = vmatprep.subr.bf16.mxu0 0
        %3130 = vmatpush1.bf16.msra.mxu0 %v3090
        %3131 = vmatprep.subr.bf16.mxu0 0
        %3132 = vmatpush1.bf16.msra.mxu0 %v3091
        %3133 = vmatprep.subr.bf16.mxu0 0
        %3134 = vmatpush1.bf16.msra.mxu0 %v3092
        %3135 = vmatprep.subr.bf16.mxu0 0
        %3136 = vmatpush1.bf16.msra.mxu0 0
        %3137 = vmatprep.subr.bf16.mxu0 0
        %3138 = vmatpush1.bf16.msra.mxu0 0
        %3139 = vmatprep.subr.bf16.mxu0 0
        %3140 = vmatpush1.bf16.msra.mxu0 0
        %3141 = vmatprep.subr.bf16.mxu0 0
        %3142 = vmatpush1.bf16.msra.mxu0 0
        %3143 = vmatprep.subr.bf16.mxu0 0
        %3144 = vmatpush1.bf16.msra.mxu0 0
        %3145 = vmatprep.subr.bf16.mxu0 0
        %3146 = vmatpush1.bf16.msra.mxu0 0
        %3147 = vmatprep.mubr.bf16.mxu0 %v3104
        %3148 = vmatmul.mubr.bf16.gmra.mrb[0].mxu0 %v3031
        %v3149 = vpop.f32.mrb[0].mxu0
        %v3150 = vadd.f32 0.0, %v3149
        %v3151 = vpop.f32.mrb[0].mxu0
        %v3152 = vpop.f32.mrb[0].mxu0
        %v3153 = vadd.f32 0.0, %v3152
        %v3154 = vpop.f32.mrb[0].mxu0
        %3155 = vmatprep.mubr.bf16.mxu0 %v3107
        %3156 = vmatmul.mubr.bf16.gmra.mrb[0].mxu0 %v3033
        %v3157 = vpop.f32.mrb[0].mxu0
        %v3158 = vadd.f32 0.0, %v3157
        %v3159 = vpop.f32.mrb[0].mxu0
        %v3160 = vpop.f32.mrb[0].mxu0
        %v3161 = vadd.f32 0.0, %v3160
        %v3162 = vpop.f32.mrb[0].mxu0
        %3163 = vmatprep.mubr.bf16.mxu0 %v3110
        %3164 = vmatmul.mubr.bf16.gmra.mrb[0].mxu0 %v3035
        %v3165 = vpop.f32.mrb[0].mxu0
        %v3166 = vadd.f32 0.0, %v3165
        %v3167 = vpop.f32.mrb[0].mxu0
        %v3168 = vpop.f32.mrb[0].mxu0
        %v3169 = vadd.f32 0.0, %v3168
        %v3170 = vpop.f32.mrb[0].mxu0
        %3171 = vmatprep.mubr.bf16.mxu0 %v3113
        %3172 = vmatmul.mubr.bf16.gmra.mrb[0].mxu0 %v3037
        %v3173 = vpop.f32.mrb[0].mxu0
        %v3174 = vadd.f32 0.0, %v3173
        %v3175 = vpop.f32.mrb[0].mxu0
        %v3176 = vpop.f32.mrb[0].mxu0
        %v3177 = vadd.f32 0.0, %v3176
        %v3178 = vpop.f32.mrb[0].mxu0
        %3179 = vdwg.mxu0
        %v3180 = vadd.f32 %v2986, %v3150
        %v3181 = vadd.f32 %v2987, %v3153
        %v3182 = vadd.f32 %v2988, %v3158
        %v3183 = vadd.f32 %v2989, %v3161
        %v3184 = vadd.f32 %v2990, %v3166
        %v3185 = vadd.f32 %v2991, %v3169
        %v3186 = vadd.f32 %v2992, %v3174
        %v3187 = vadd.f32 %v2993, %v3177
        %v3188 = vld [vmem:[%s643] sm:$0xe]
        %v3189 = vld [vmem:[%s643 + $0x8] sm:$0xe]
        %v3190 = vld [vmem:[%s643 + $0x10] sm:$0xe]
        %v3191 = vld [vmem:[%s643 + $0x18] sm:$0xe]
        %v3192 = vld [vmem:[%s643 + $0x20] sm:$0xe]
        %v3193 = vld [vmem:[%s643 + $0x28] sm:$0xe]
        %v3194 = vld [vmem:[%s643 + $0x30] sm:$0xe]
        %v3195 = vld [vmem:[%s643 + $0x38] sm:$0xe]
        %v3212 = vrot.slane %v3188, 5
        %v3213 = vrot.slane %v3212, 4
        %v3214 = vrot.slane %v2610, 5
        %v3215 = vsel %vm1842, %v3213, %v3214
        %v3216 = vrot.slane %v3189, 5
        %v3217 = vrot.slane %v3216, 4
        %v3218 = vrot.slane %v2612, 5
        %v3219 = vsel %vm1842, %v3217, %v3218
        %v3220 = vrot.slane %v3190, 5
        %v3221 = vrot.slane %v3220, 4
        %v3222 = vrot.slane %v2614, 5
        %v3223 = vsel %vm1842, %v3221, %v3222
        %v3224 = vrot.slane %v3191, 5
        %v3225 = vrot.slane %v3224, 4
        %v3226 = vrot.slane %v2616, 5
        %v3227 = vsel %vm1842, %v3225, %v3226
        %v3228 = vrot.slane %v3192, 5
        %v3229 = vrot.slane %v3228, 4
        %v3230 = vrot.slane %v2618, 5
        %v3231 = vsel %vm1842, %v3229, %v3230
        %v3232 = vrot.slane %v3193, 5
        %v3233 = vrot.slane %v3232, 4
        %v3234 = vrot.slane %v2620, 5
        %v3235 = vsel %vm1842, %v3233, %v3234
        %v3236 = vrot.slane %v3194, 5
        %v3237 = vrot.slane %v3236, 4
        %v3238 = vrot.slane %v2622, 5
        %v3239 = vsel %vm1842, %v3237, %v3238
        %v3240 = vrot.slane %v3195, 5
        %v3241 = vrot.slane %v3240, 4
        %v3242 = vrot.slane %v2624, 5
        %v3243 = vsel %vm1842, %v3241, %v3242
        %v3244 = vld [vmem:[%s834] sm:$0xee]
        %v3245 = vld [vmem:[%s834 + $0x10] sm:$0xee]
        %v3246 = vld [vmem:[%s834 + $0x20] sm:$0xee]
        %v3247 = vld [vmem:[%s834 + $0x30] sm:$0xee]
        %v3248 = vld [vmem:[%s834 + $0x40] sm:$0xee]
        %v3249 = vld [vmem:[%s834 + $0x50] sm:$0xee]
        %v3250 = vld [vmem:[%s834 + $0x60] sm:$0xee]
        %v3251 = vld [vmem:[%s834 + $0x70] sm:$0xee]
        %v3268 = vrot.slane %v3244, 5
        %v3269 = vrot.slane %v3268, 4
        %v3270 = vrot.slane %v2738, 5
        %v3271 = vsel %vm1842, %v3269, %v3270
        %v3272 = vrot.slane %v3245, 5
        %v3273 = vrot.slane %v3272, 4
        %v3274 = vrot.slane %v2740, 5
        %v3275 = vsel %vm1842, %v3273, %v3274
        %v3276 = vrot.slane %v3246, 5
        %v3277 = vrot.slane %v3276, 4
        %v3278 = vrot.slane %v2742, 5
        %v3279 = vsel %vm1842, %v3277, %v3278
        %v3280 = vrot.slane %v3247, 5
        %v3281 = vrot.slane %v3280, 4
        %v3282 = vrot.slane %v2744, 5
        %v3283 = vsel %vm1842, %v3281, %v3282
        %v3284 = vrot.slane %v3248, 5
        %v3285 = vrot.slane %v3284, 4
        %v3286 = vrot.slane %v2746, 5
        %v3287 = vsel %vm1842, %v3285, %v3286
        %v3288 = vrot.slane %v3249, 5
        %v3289 = vrot.slane %v3288, 4
        %v3290 = vrot.slane %v2748, 5
        %v3291 = vsel %vm1842, %v3289, %v3290
        %v3292 = vrot.slane %v3250, 5
        %v3293 = vrot.slane %v3292, 4
        %v3294 = vrot.slane %v2750, 5
        %v3295 = vsel %vm1842, %v3293, %v3294
        %v3296 = vrot.slane %v3251, 5
        %v3297 = vrot.slane %v3296, 4
        %v3298 = vrot.slane %v2752, 5
        %v3299 = vsel %vm1842, %v3297, %v3298
        %s3300 = scalar_lea.vmem %s3, 140
        %v3301 = vld [vmem:[%s3300] sm:$0xf]
        %v3302 = vld [vmem:[%s3300 + $0x4] sm:$0xf]
        %v3303 = vld [vmem:[%s3300 + $0x8] sm:$0xf]
        %v3304 = vld [vmem:[%s3300 + $0xc] sm:$0xf]
        %v3305 = vld [vmem:[%s3300 + $0x10] sm:$0xf]
        %v3306 = vld [vmem:[%s3300 + $0x14] sm:$0xf]
        %v3307 = vld [vmem:[%s3300 + $0x18] sm:$0xf]
        %v3308 = vunpack.c.l.b16 %v3215
        %v3309 = vunpack.c.l.b16 %v3219
        %v3310 = vunpack.c.l.b16 %v3223
        %v3311 = vunpack.c.l.b16 %v3227
        %v3312 = vunpack.c.l.b16 %v3231
        %v3313 = vunpack.c.l.b16 %v3235
        %v3314 = vunpack.c.l.b16 %v3239
        %v3315 = vunpack.c.l.b16 %v3243
        %v3316 = vpack.c.b16 %v3309, %v3308
        %v3317 = vpack.c.b16 %v3311, %v3310
        %v3318 = vpack.c.b16 %v3313, %v3312
        %v3319 = vpack.c.b16 %v3315, %v3314
        %v3327 = vunpack.c.l.b16 %v3301
        %v3328 = vunpack.c.l.b16 %v3302
        %v3329 = vunpack.c.l.b16 %v3303
        %v3330 = vunpack.c.l.b16 %v3304
        %v3331 = vunpack.c.l.b16 %v3305
        %v3332 = vunpack.c.l.b16 %v3306
        %v3333 = vunpack.c.l.b16 %v3307
        %v3334 = vpack.c.b16 %v3328, %v3327
        %v3335 = vpack.c.b16 %v3330, %v3329
        %v3336 = vpack.c.b16 %v3332, %v3331
        %v3337 = vpack.c.b16 %v3333, %v3333
        %v3342 = vsel %vm1153, %v3316, 0
        %v3345 = vsel %vm1153, %v3317, 0
        %v3348 = vsel %vm1153, %v3318, 0
        %v3351 = vsel %vm1153, %v3319, 0
        %v3354 = vsel %vm497, %v3337, 0
        %3356 = vmatprep.subr.bf16.mxu0 0
        %3357 = vmatpush1.bf16.msra.mxu0 %v3334
        %3358 = vmatprep.subr.bf16.mxu0 0
        %3359 = vmatpush1.bf16.msra.mxu0 %v3335
        %3360 = vmatprep.subr.bf16.mxu0 0
        %3361 = vmatpush1.bf16.msra.mxu0 %v3336
        %3362 = vmatprep.subr.bf16.mxu0 0
        %3363 = vmatpush1.bf16.msra.mxu0 %v3354
        %3364 = vmatprep.subr.bf16.mxu0 0
        %3365 = vmatpush1.bf16.msra.mxu0 0
        %3366 = vmatprep.subr.bf16.mxu0 0
        %3367 = vmatpush1.bf16.msra.mxu0 0
        %3368 = vmatprep.subr.bf16.mxu0 0
        %3369 = vmatpush1.bf16.msra.mxu0 0
        %3370 = vmatprep.subr.bf16.mxu0 0
        %3371 = vmatpush1.bf16.msra.mxu0 0
        %3372 = vmatprep.subr.bf16.mxu0 0
        %3373 = vmatpush1.bf16.msra.mxu0 0
        %3374 = vmatprep.subr.bf16.mxu0 0
        %3375 = vmatpush1.bf16.msra.mxu0 0
        %3376 = vmatprep.subr.bf16.mxu0 0
        %3377 = vmatpush1.bf16.msra.mxu0 0
        %3378 = vmatprep.subr.bf16.mxu0 0
        %3379 = vmatpush1.bf16.msra.mxu0 0
        %3380 = vmatprep.subr.bf16.mxu0 0
        %3381 = vmatpush1.bf16.msra.mxu0 0
        %3382 = vmatprep.subr.bf16.mxu0 0
        %3383 = vmatpush1.bf16.msra.mxu0 0
        %3384 = vmatprep.subr.bf16.mxu0 0
        %3385 = vmatpush1.bf16.msra.mxu0 0
        %3386 = vmatprep.subr.bf16.mxu0 0
        %3387 = vmatpush1.bf16.msra.mxu0 0
        %3388 = vmatprep.mubr.bf16.mxu0 0
        %3389 = vmatmul.mubr.bf16.gmra.mrb[0].mxu0 %v3342
        %v3390 = vpop.f32.mrb[0].mxu0
        %v3391 = vadd.f32 0.0, %v3390
        %v3392 = vpop.f32.mrb[0].mxu0
        %v3393 = vpop.f32.mrb[0].mxu0
        %v3394 = vadd.f32 0.0, %v3393
        %v3395 = vpop.f32.mrb[0].mxu0
        %3396 = vmatprep.mubr.bf16.mxu0 0
        %3397 = vmatmul.mubr.bf16.gmra.mrb[0].mxu0 %v3345
        %v3398 = vpop.f32.mrb[0].mxu0
        %v3399 = vadd.f32 0.0, %v3398
        %v3400 = vpop.f32.mrb[0].mxu0
        %v3401 = vpop.f32.mrb[0].mxu0
        %v3402 = vadd.f32 0.0, %v3401
        %v3403 = vpop.f32.mrb[0].mxu0
        %3404 = vmatprep.mubr.bf16.mxu0 0
        %3405 = vmatmul.mubr.bf16.gmra.mrb[0].mxu0 %v3348
        %v3406 = vpop.f32.mrb[0].mxu0
        %v3407 = vadd.f32 0.0, %v3406
        %v3408 = vpop.f32.mrb[0].mxu0
        %v3409 = vpop.f32.mrb[0].mxu0
        %v3410 = vadd.f32 0.0, %v3409
        %v3411 = vpop.f32.mrb[0].mxu0
        %3412 = vmatprep.mubr.bf16.mxu0 0
        %3413 = vmatmul.mubr.bf16.gmra.mrb[0].mxu0 %v3351
        %v3414 = vpop.f32.mrb[0].mxu0
        %v3415 = vadd.f32 0.0, %v3414
        %v3416 = vpop.f32.mrb[0].mxu0
        %v3417 = vpop.f32.mrb[0].mxu0
        %v3418 = vadd.f32 0.0, %v3417
        %v3419 = vpop.f32.mrb[0].mxu0
        %3420 = vdwg.mxu0
        %v3421 = vadd.f32 %v3180, %v3391
        %v3422 = vadd.f32 %v3181, %v3394
        %v3423 = vadd.f32 %v3182, %v3399
        %v3424 = vadd.f32 %v3183, %v3402
        %v3425 = vadd.f32 %v3184, %v3407
        %v3426 = vadd.f32 %v3185, %v3410
        %v3427 = vadd.f32 %v3186, %v3415
        %v3428 = vadd.f32 %v3187, %v3418
        %s3429 = scalar_lea.vmem %s4, 400
        %v3430 = vld [vmem:[%s3429] sm:$0xf]
        %v3431 = vld [vmem:[%s3429 + $0x4] sm:$0xf]
        %v3432 = vld [vmem:[%s3429 + $0x8] sm:$0xf]
        %v3433 = vld [vmem:[%s3429 + $0xc] sm:$0xf]
        %v3434 = vld [vmem:[%s3429 + $0x10] sm:$0xf]
        %v3435 = vld [vmem:[%s3429 + $0x14] sm:$0xf]
        %v3436 = vld [vmem:[%s3429 + $0x18] sm:$0xf]
        %v3437 = vld [vmem:[%s3429 + $0x1c] sm:$0xf]
        %v3438 = vld [vmem:[%s3429 + $0x20] sm:$0xf]
        %v3439 = vld [vmem:[%s3429 + $0x24] sm:$0xf]
        %v3440 = vld [vmem:[%s3429 + $0x28] sm:$0xf]
        %v3441 = vld [vmem:[%s3429 + $0x2c] sm:$0xf]
        %v3442 = vld [vmem:[%s3429 + $0x30] sm:$0xf]
        %v3443 = vld [vmem:[%s3429 + $0x34] sm:$0xf]
        %v3444 = vld [vmem:[%s3429 + $0x38] sm:$0xf]
        %v3445 = vld [vmem:[%s3429 + $0x3c] sm:$0xf]
        %v3446 = vld [vmem:[%s3429 + $0x40] sm:$0xf]
        %v3447 = vld [vmem:[%s3429 + $0x44] sm:$0xf]
        %v3448 = vld [vmem:[%s3429 + $0x48] sm:$0xf]
        %v3449 = vld [vmem:[%s3429 + $0x4c] sm:$0xf]
        %v3450 = vunpack.c.l.b16 %v3271
        %v3451 = vunpack.c.h.b16 %v3271
        %v3452 = vunpack.c.l.b16 %v3275
        %v3453 = vunpack.c.h.b16 %v3275
        %v3454 = vunpack.c.l.b16 %v3279
        %v3455 = vunpack.c.h.b16 %v3279
        %v3456 = vunpack.c.l.b16 %v3283
        %v3457 = vunpack.c.h.b16 %v3283
        %v3458 = vunpack.c.l.b16 %v3287
        %v3459 = vunpack.c.h.b16 %v3287
        %v3460 = vunpack.c.l.b16 %v3291
        %v3461 = vunpack.c.h.b16 %v3291
        %v3462 = vunpack.c.l.b16 %v3295
        %v3463 = vunpack.c.h.b16 %v3295
        %v3464 = vunpack.c.l.b16 %v3299
        %v3465 = vunpack.c.h.b16 %v3299
        %v3466 = vpack.c.b16 %v3452, %v3450
        %v3467 = vpack.c.b16 %v3453, %v3451
        %v3468 = vpack.c.b16 %v3456, %v3454
        %v3469 = vpack.c.b16 %v3457, %v3455
        %v3470 = vpack.c.b16 %v3460, %v3458
        %v3471 = vpack.c.b16 %v3461, %v3459
        %v3472 = vpack.c.b16 %v3464, %v3462
        %v3473 = vpack.c.b16 %v3465, %v3463
        %v3498 = vunpack.c.l.b16 %v3430
        %v3499 = vunpack.c.l.b16 %v3431
        %v3500 = vunpack.c.l.b16 %v3432
        %v3501 = vunpack.c.l.b16 %v3433
        %v3502 = vunpack.c.l.b16 %v3434
        %v3503 = vunpack.c.l.b16 %v3435
        %v3504 = vunpack.c.l.b16 %v3436
        %v3505 = vunpack.c.l.b16 %v3437
        %v3506 = vunpack.c.l.b16 %v3438
        %v3507 = vunpack.c.l.b16 %v3439
        %v3508 = vunpack.c.l.b16 %v3440
        %v3509 = vunpack.c.l.b16 %v3441
        %v3510 = vunpack.c.l.b16 %v3442
        %v3511 = vunpack.c.l.b16 %v3443
        %v3512 = vunpack.c.l.b16 %v3444
        %v3513 = vunpack.c.l.b16 %v3445
        %v3514 = vunpack.c.l.b16 %v3446
        %v3515 = vunpack.c.l.b16 %v3447
        %v3516 = vunpack.c.l.b16 %v3448
        %v3517 = vunpack.c.l.b16 %v3449
        %v3518 = vpack.c.b16 %v3499, %v3498
        %v3519 = vpack.c.b16 %v3501, %v3500
        %v3520 = vpack.c.b16 %v3503, %v3502
        %v3521 = vpack.c.b16 %v3505, %v3504
        %v3522 = vpack.c.b16 %v3507, %v3506
        %v3523 = vpack.c.b16 %v3509, %v3508
        %v3524 = vpack.c.b16 %v3511, %v3510
        %v3525 = vpack.c.b16 %v3513, %v3512
        %v3526 = vpack.c.b16 %v3515, %v3514
        %v3527 = vpack.c.b16 %v3517, %v3516
        %v3539 = vsel %vm1034, %v3467, 0
        %v3542 = vsel %vm1034, %v3469, 0
        %v3545 = vsel %vm1034, %v3471, 0
        %v3548 = vsel %vm1034, %v3473, 0
        %3550 = vmatprep.subr.bf16.mxu0 0
        %3551 = vmatpush1.bf16.msra.mxu0 %v3518
        %3552 = vmatprep.subr.bf16.mxu0 0
        %3553 = vmatpush1.bf16.msra.mxu0 %v3519
        %3554 = vmatprep.subr.bf16.mxu0 0
        %3555 = vmatpush1.bf16.msra.mxu0 %v3520
        %3556 = vmatprep.subr.bf16.mxu0 0
        %3557 = vmatpush1.bf16.msra.mxu0 %v3521
        %3558 = vmatprep.subr.bf16.mxu0 0
        %3559 = vmatpush1.bf16.msra.mxu0 %v3522
        %3560 = vmatprep.subr.bf16.mxu0 0
        %3561 = vmatpush1.bf16.msra.mxu0 %v3523
        %3562 = vmatprep.subr.bf16.mxu0 0
        %3563 = vmatpush1.bf16.msra.mxu0 %v3524
        %3564 = vmatprep.subr.bf16.mxu0 0
        %3565 = vmatpush1.bf16.msra.mxu0 %v3525
        %3566 = vmatprep.subr.bf16.mxu0 0
        %3567 = vmatpush1.bf16.msra.mxu0 %v3526
        %3568 = vmatprep.subr.bf16.mxu0 0
        %3569 = vmatpush1.bf16.msra.mxu0 %v3527
        %3570 = vmatprep.subr.bf16.mxu0 0
        %3571 = vmatpush1.bf16.msra.mxu0 0
        %3572 = vmatprep.subr.bf16.mxu0 0
        %3573 = vmatpush1.bf16.msra.mxu0 0
        %3574 = vmatprep.subr.bf16.mxu0 0
        %3575 = vmatpush1.bf16.msra.mxu0 0
        %3576 = vmatprep.subr.bf16.mxu0 0
        %3577 = vmatpush1.bf16.msra.mxu0 0
        %3578 = vmatprep.subr.bf16.mxu0 0
        %3579 = vmatpush1.bf16.msra.mxu0 0
        %3580 = vmatprep.subr.bf16.mxu0 0
        %3581 = vmatpush1.bf16.msra.mxu0 0
        %3582 = vmatprep.mubr.bf16.mxu0 %v3539
        %3583 = vmatmul.mubr.bf16.gmra.mrb[0].mxu0 %v3466
        %v3584 = vpop.f32.mrb[0].mxu0
        %v3585 = vadd.f32 0.0, %v3584
        %v3586 = vpop.f32.mrb[0].mxu0
        %v3587 = vpop.f32.mrb[0].mxu0
        %v3588 = vadd.f32 0.0, %v3587
        %v3589 = vpop.f32.mrb[0].mxu0
        %3590 = vmatprep.mubr.bf16.mxu0 %v3542
        %3591 = vmatmul.mubr.bf16.gmra.mrb[0].mxu0 %v3468
        %v3592 = vpop.f32.mrb[0].mxu0
        %v3593 = vadd.f32 0.0, %v3592
        %v3594 = vpop.f32.mrb[0].mxu0
        %v3595 = vpop.f32.mrb[0].mxu0
        %v3596 = vadd.f32 0.0, %v3595
        %v3597 = vpop.f32.mrb[0].mxu0
        %3598 = vmatprep.mubr.bf16.mxu0 %v3545
        %3599 = vmatmul.mubr.bf16.gmra.mrb[0].mxu0 %v3470
        %v3600 = vpop.f32.mrb[0].mxu0
        %v3601 = vadd.f32 0.0, %v3600
        %v3602 = vpop.f32.mrb[0].mxu0
        %v3603 = vpop.f32.mrb[0].mxu0
        %v3604 = vadd.f32 0.0, %v3603
        %v3605 = vpop.f32.mrb[0].mxu0
        %3606 = vmatprep.mubr.bf16.mxu0 %v3548
        %3607 = vmatmul.mubr.bf16.gmra.mrb[0].mxu0 %v3472
        %v3608 = vpop.f32.mrb[0].mxu0
        %v3609 = vadd.f32 0.0, %v3608
        %v3610 = vpop.f32.mrb[0].mxu0
        %v3611 = vpop.f32.mrb[0].mxu0
        %v3612 = vadd.f32 0.0, %v3611
        %v3613 = vpop.f32.mrb[0].mxu0
        %3614 = vdwg.mxu0
        %v3615 = vadd.f32 %v3421, %v3585
        %v3616 = vadd.f32 %v3422, %v3588
        %v3617 = vadd.f32 %v3423, %v3593
        %v3618 = vadd.f32 %v3424, %v3596
        %v3619 = vadd.f32 %v3425, %v3601
        %v3620 = vadd.f32 %v3426, %v3604
        %v3621 = vadd.f32 %v3427, %v3609
        %v3622 = vadd.f32 %v3428, %v3612
        %s3623 = scalar_lea.vmem [#allocation2], 16
        %v3624 = vld [vmem:[%s3623] sm:$0xf]
        %v3625 = vld [vmem:[%s3623 + $0x8] sm:$0xf]
        %v3626 = vld [vmem:[%s3623 + $0x10] sm:$0xf]
        %v3627 = vld [vmem:[%s3623 + $0x18] sm:$0xf]
        %v3628 = vld [vmem:[%s3623 + $0x20] sm:$0xf]
        %v3629 = vld [vmem:[%s3623 + $0x28] sm:$0xf]
        %v3630 = vld [vmem:[%s3623 + $0x30] sm:$0xf]
        %v3631 = vld [vmem:[%s3623 + $0x38] sm:$0xf]
        %s3632 = scalar_lea.vmem [#allocation3], 32
        %v3633 = vld [vmem:[%s3632] sm:$0xff]
        %v3634 = vld [vmem:[%s3632 + $0x10] sm:$0xff]
        %v3635 = vld [vmem:[%s3632 + $0x20] sm:$0xff]
        %v3636 = vld [vmem:[%s3632 + $0x30] sm:$0xff]
        %v3637 = vld [vmem:[%s3632 + $0x40] sm:$0xff]
        %v3638 = vld [vmem:[%s3632 + $0x50] sm:$0xff]
        %v3639 = vld [vmem:[%s3632 + $0x60] sm:$0xff]
        %v3640 = vld [vmem:[%s3632 + $0x70] sm:$0xff]
        %s3641 = scalar_lea.vmem %s3, 168
        %v3642 = vld [vmem:[%s3641] sm:$0xf]
        %v3643 = vld [vmem:[%s3641 + $0x4] sm:$0xf]
        %v3644 = vld [vmem:[%s3641 + $0x8] sm:$0xf]
        %v3645 = vld [vmem:[%s3641 + $0xc] sm:$0xf]
        %v3646 = vld [vmem:[%s3641 + $0x10] sm:$0xf]
        %v3647 = vld [vmem:[%s3641 + $0x14] sm:$0xf]
        %v3648 = vld [vmem:[%s3641 + $0x18] sm:$0xf]
        %v3657 = vunpack.c.l.b16 %v3624
        %v3658 = vunpack.c.l.b16 %v3625
        %v3659 = vunpack.c.l.b16 %v3626
        %v3660 = vunpack.c.l.b16 %v3627
        %v3661 = vunpack.c.l.b16 %v3628
        %v3662 = vunpack.c.l.b16 %v3629
        %v3663 = vunpack.c.l.b16 %v3630
        %v3664 = vunpack.c.l.b16 %v3631
        %v3665 = vpack.c.b16 %v3658, %v3657
        %v3666 = vpack.c.b16 %v3660, %v3659
        %v3667 = vpack.c.b16 %v3662, %v3661
        %v3668 = vpack.c.b16 %v3664, %v3663
        %v3676 = vunpack.c.l.b16 %v3642
        %v3677 = vunpack.c.l.b16 %v3643
        %v3678 = vunpack.c.l.b16 %v3644
        %v3679 = vunpack.c.l.b16 %v3645
        %v3680 = vunpack.c.l.b16 %v3646
        %v3681 = vunpack.c.l.b16 %v3647
        %v3682 = vunpack.c.l.b16 %v3648
        %v3683 = vpack.c.b16 %v3677, %v3676
        %v3684 = vpack.c.b16 %v3679, %v3678
        %v3685 = vpack.c.b16 %v3681, %v3680
        %v3686 = vpack.c.b16 %v3682, %v3682
        %v3691 = vsel %vm1153, %v3665, 0
        %v3694 = vsel %vm1153, %v3666, 0
        %v3697 = vsel %vm1153, %v3667, 0
        %v3700 = vsel %vm1153, %v3668, 0
        %v3703 = vsel %vm497, %v3686, 0
        %3705 = vmatprep.subr.bf16.mxu0 0
        %3706 = vmatpush1.bf16.msra.mxu0 %v3683
        %3707 = vmatprep.subr.bf16.mxu0 0
        %3708 = vmatpush1.bf16.msra.mxu0 %v3684
        %3709 = vmatprep.subr.bf16.mxu0 0
        %3710 = vmatpush1.bf16.msra.mxu0 %v3685
        %3711 = vmatprep.subr.bf16.mxu0 0
        %3712 = vmatpush1.bf16.msra.mxu0 %v3703
        %3713 = vmatprep.subr.bf16.mxu0 0
        %3714 = vmatpush1.bf16.msra.mxu0 0
        %3715 = vmatprep.subr.bf16.mxu0 0
        %3716 = vmatpush1.bf16.msra.mxu0 0
        %3717 = vmatprep.subr.bf16.mxu0 0
        %3718 = vmatpush1.bf16.msra.mxu0 0
        %3719 = vmatprep.subr.bf16.mxu0 0
        %3720 = vmatpush1.bf16.msra.mxu0 0
        %3721 = vmatprep.subr.bf16.mxu0 0
        %3722 = vmatpush1.bf16.msra.mxu0 0
        %3723 = vmatprep.subr.bf16.mxu0 0
        %3724 = vmatpush1.bf16.msra.mxu0 0
        %3725 = vmatprep.subr.bf16.mxu0 0
        %3726 = vmatpush1.bf16.msra.mxu0 0
        %3727 = vmatprep.subr.bf16.mxu0 0
        %3728 = vmatpush1.bf16.msra.mxu0 0
        %3729 = vmatprep.subr.bf16.mxu0 0
        %3730 = vmatpush1.bf16.msra.mxu0 0
        %3731 = vmatprep.subr.bf16.mxu0 0
        %3732 = vmatpush1.bf16.msra.mxu0 0
        %3733 = vmatprep.subr.bf16.mxu0 0
        %3734 = vmatpush1.bf16.msra.mxu0 0
        %3735 = vmatprep.subr.bf16.mxu0 0
        %3736 = vmatpush1.bf16.msra.mxu0 0
        %3737 = vmatprep.mubr.bf16.mxu0 0
        %3738 = vmatmul.mubr.bf16.gmra.mrb[0].mxu0 %v3691
        %v3739 = vpop.f32.mrb[0].mxu0
        %v3740 = vadd.f32 0.0, %v3739
        %v3741 = vpop.f32.mrb[0].mxu0
        %v3742 = vpop.f32.mrb[0].mxu0
        %v3743 = vadd.f32 0.0, %v3742
        %v3744 = vpop.f32.mrb[0].mxu0
        %3745 = vmatprep.mubr.bf16.mxu0 0
        %3746 = vmatmul.mubr.bf16.gmra.mrb[0].mxu0 %v3694
        %v3747 = vpop.f32.mrb[0].mxu0
        %v3748 = vadd.f32 0.0, %v3747
        %v3749 = vpop.f32.mrb[0].mxu0
        %v3750 = vpop.f32.mrb[0].mxu0
        %v3751 = vadd.f32 0.0, %v3750
        %v3752 = vpop.f32.mrb[0].mxu0
        %3753 = vmatprep.mubr.bf16.mxu0 0
        %3754 = vmatmul.mubr.bf16.gmra.mrb[0].mxu0 %v3697
        %v3755 = vpop.f32.mrb[0].mxu0
        %v3756 = vadd.f32 0.0, %v3755
        %v3757 = vpop.f32.mrb[0].mxu0
        %v3758 = vpop.f32.mrb[0].mxu0
        %v3759 = vadd.f32 0.0, %v3758
        %v3760 = vpop.f32.mrb[0].mxu0
        %3761 = vmatprep.mubr.bf16.mxu0 0
        %3762 = vmatmul.mubr.bf16.gmra.mrb[0].mxu0 %v3700
        %v3763 = vpop.f32.mrb[0].mxu0
        %v3764 = vadd.f32 0.0, %v3763
        %v3765 = vpop.f32.mrb[0].mxu0
        %v3766 = vpop.f32.mrb[0].mxu0
        %v3767 = vadd.f32 0.0, %v3766
        %v3768 = vpop.f32.mrb[0].mxu0
        %3769 = vdwg.mxu0
        %v3770 = vadd.f32 %v3615, %v3740
        %v3771 = vadd.f32 %v3616, %v3743
        %v3772 = vadd.f32 %v3617, %v3748
        %v3773 = vadd.f32 %v3618, %v3751
        %v3774 = vadd.f32 %v3619, %v3756
        %v3775 = vadd.f32 %v3620, %v3759
        %v3776 = vadd.f32 %v3621, %v3764
        %v3777 = vadd.f32 %v3622, %v3767
        %s3778 = scalar_lea.vmem %s4, 480
        %v3779 = vld [vmem:[%s3778] sm:$0xf]
        %v3780 = vld [vmem:[%s3778 + $0x4] sm:$0xf]
        %v3781 = vld [vmem:[%s3778 + $0x8] sm:$0xf]
        %v3782 = vld [vmem:[%s3778 + $0xc] sm:$0xf]
        %v3783 = vld [vmem:[%s3778 + $0x10] sm:$0xf]
        %v3784 = vld [vmem:[%s3778 + $0x14] sm:$0xf]
        %v3785 = vld [vmem:[%s3778 + $0x18] sm:$0xf]
        %v3786 = vld [vmem:[%s3778 + $0x1c] sm:$0xf]
        %v3787 = vld [vmem:[%s3778 + $0x20] sm:$0xf]
        %v3788 = vld [vmem:[%s3778 + $0x24] sm:$0xf]
        %v3789 = vld [vmem:[%s3778 + $0x28] sm:$0xf]
        %v3790 = vld [vmem:[%s3778 + $0x2c] sm:$0xf]
        %v3791 = vld [vmem:[%s3778 + $0x30] sm:$0xf]
        %v3792 = vld [vmem:[%s3778 + $0x34] sm:$0xf]
        %v3793 = vld [vmem:[%s3778 + $0x38] sm:$0xf]
        %v3794 = vld [vmem:[%s3778 + $0x3c] sm:$0xf]
        %v3795 = vld [vmem:[%s3778 + $0x40] sm:$0xf]
        %v3796 = vld [vmem:[%s3778 + $0x44] sm:$0xf]
        %v3797 = vld [vmem:[%s3778 + $0x48] sm:$0xf]
        %v3798 = vld [vmem:[%s3778 + $0x4c] sm:$0xf]
        %v3807 = vunpack.c.l.b16 %v3633
        %v3808 = vunpack.c.h.b16 %v3633
        %v3809 = vunpack.c.l.b16 %v3634
        %v3810 = vunpack.c.h.b16 %v3634
        %v3811 = vunpack.c.l.b16 %v3635
        %v3812 = vunpack.c.h.b16 %v3635
        %v3813 = vunpack.c.l.b16 %v3636
        %v3814 = vunpack.c.h.b16 %v3636
        %v3815 = vunpack.c.l.b16 %v3637
        %v3816 = vunpack.c.h.b16 %v3637
        %v3817 = vunpack.c.l.b16 %v3638
        %v3818 = vunpack.c.h.b16 %v3638
        %v3819 = vunpack.c.l.b16 %v3639
        %v3820 = vunpack.c.h.b16 %v3639
        %v3821 = vunpack.c.l.b16 %v3640
        %v3822 = vunpack.c.h.b16 %v3640
        %v3823 = vpack.c.b16 %v3809, %v3807
        %v3824 = vpack.c.b16 %v3810, %v3808
        %v3825 = vpack.c.b16 %v3813, %v3811
        %v3826 = vpack.c.b16 %v3814, %v3812
        %v3827 = vpack.c.b16 %v3817, %v3815
        %v3828 = vpack.c.b16 %v3818, %v3816
        %v3829 = vpack.c.b16 %v3821, %v3819
        %v3830 = vpack.c.b16 %v3822, %v3820
        %v3855 = vunpack.c.l.b16 %v3779
        %v3856 = vunpack.c.l.b16 %v3780
        %v3857 = vunpack.c.l.b16 %v3781
        %v3858 = vunpack.c.l.b16 %v3782
        %v3859 = vunpack.c.l.b16 %v3783
        %v3860 = vunpack.c.l.b16 %v3784
        %v3861 = vunpack.c.l.b16 %v3785
        %v3862 = vunpack.c.l.b16 %v3786
        %v3863 = vunpack.c.l.b16 %v3787
        %v3864 = vunpack.c.l.b16 %v3788
        %v3865 = vunpack.c.l.b16 %v3789
        %v3866 = vunpack.c.l.b16 %v3790
        %v3867 = vunpack.c.l.b16 %v3791
        %v3868 = vunpack.c.l.b16 %v3792
        %v3869 = vunpack.c.l.b16 %v3793
        %v3870 = vunpack.c.l.b16 %v3794
        %v3871 = vunpack.c.l.b16 %v3795
        %v3872 = vunpack.c.l.b16 %v3796
        %v3873 = vunpack.c.l.b16 %v3797
        %v3874 = vunpack.c.l.b16 %v3798
        %v3875 = vpack.c.b16 %v3856, %v3855
        %v3876 = vpack.c.b16 %v3858, %v3857
        %v3877 = vpack.c.b16 %v3860, %v3859
        %v3878 = vpack.c.b16 %v3862, %v3861
        %v3879 = vpack.c.b16 %v3864, %v3863
        %v3880 = vpack.c.b16 %v3866, %v3865
        %v3881 = vpack.c.b16 %v3868, %v3867
        %v3882 = vpack.c.b16 %v3870, %v3869
        %v3883 = vpack.c.b16 %v3872, %v3871
        %v3884 = vpack.c.b16 %v3874, %v3873
        %v3896 = vsel %vm1034, %v3824, 0
        %v3899 = vsel %vm1034, %v3826, 0
        %v3902 = vsel %vm1034, %v3828, 0
        %v3905 = vsel %vm1034, %v3830, 0
        %3907 = vmatprep.subr.bf16.mxu0 0
        %3908 = vmatpush1.bf16.msra.mxu0 %v3875
        %3909 = vmatprep.subr.bf16.mxu0 0
        %3910 = vmatpush1.bf16.msra.mxu0 %v3876
        %3911 = vmatprep.subr.bf16.mxu0 0
        %3912 = vmatpush1.bf16.msra.mxu0 %v3877
        %3913 = vmatprep.subr.bf16.mxu0 0
        %3914 = vmatpush1.bf16.msra.mxu0 %v3878
        %3915 = vmatprep.subr.bf16.mxu0 0
        %3916 = vmatpush1.bf16.msra.mxu0 %v3879
        %3917 = vmatprep.subr.bf16.mxu0 0
        %3918 = vmatpush1.bf16.msra.mxu0 %v3880
        %3919 = vmatprep.subr.bf16.mxu0 0
        %3920 = vmatpush1.bf16.msra.mxu0 %v3881
        %3921 = vmatprep.subr.bf16.mxu0 0
        %3922 = vmatpush1.bf16.msra.mxu0 %v3882
        %3923 = vmatprep.subr.bf16.mxu0 0
        %3924 = vmatpush1.bf16.msra.mxu0 %v3883
        %3925 = vmatprep.subr.bf16.mxu0 0
        %3926 = vmatpush1.bf16.msra.mxu0 %v3884
        %3927 = vmatprep.subr.bf16.mxu0 0
        %3928 = vmatpush1.bf16.msra.mxu0 0
        %3929 = vmatprep.subr.bf16.mxu0 0
        %3930 = vmatpush1.bf16.msra.mxu0 0
        %3931 = vmatprep.subr.bf16.mxu0 0
        %3932 = vmatpush1.bf16.msra.mxu0 0
        %3933 = vmatprep.subr.bf16.mxu0 0
        %3934 = vmatpush1.bf16.msra.mxu0 0
        %3935 = vmatprep.subr.bf16.mxu0 0
        %3936 = vmatpush1.bf16.msra.mxu0 0
        %3937 = vmatprep.subr.bf16.mxu0 0
        %3938 = vmatpush1.bf16.msra.mxu0 0
        %3939 = vmatprep.mubr.bf16.mxu0 %v3896
        %3940 = vmatmul.mubr.bf16.gmra.mrb[0].mxu0 %v3823
        %v3941 = vpop.f32.mrb[0].mxu0
        %v3942 = vadd.f32 0.0, %v3941
        %v3943 = vpop.f32.mrb[0].mxu0
        %v3944 = vpop.f32.mrb[0].mxu0
        %v3945 = vadd.f32 0.0, %v3944
        %v3946 = vpop.f32.mrb[0].mxu0
        %3947 = vmatprep.mubr.bf16.mxu0 %v3899
        %3948 = vmatmul.mubr.bf16.gmra.mrb[0].mxu0 %v3825
        %v3949 = vpop.f32.mrb[0].mxu0
        %v3950 = vadd.f32 0.0, %v3949
        %v3951 = vpop.f32.mrb[0].mxu0
        %v3952 = vpop.f32.mrb[0].mxu0
        %v3953 = vadd.f32 0.0, %v3952
        %v3954 = vpop.f32.mrb[0].mxu0
        %3955 = vmatprep.mubr.bf16.mxu0 %v3902
        %3956 = vmatmul.mubr.bf16.gmra.mrb[0].mxu0 %v3827
        %v3957 = vpop.f32.mrb[0].mxu0
        %v3958 = vadd.f32 0.0, %v3957
        %v3959 = vpop.f32.mrb[0].mxu0
        %v3960 = vpop.f32.mrb[0].mxu0
        %v3961 = vadd.f32 0.0, %v3960
        %v3962 = vpop.f32.mrb[0].mxu0
        %3963 = vmatprep.mubr.bf16.mxu0 %v3905
        %3964 = vmatmul.mubr.bf16.gmra.mrb[0].mxu0 %v3829
        %v3965 = vpop.f32.mrb[0].mxu0
        %v3966 = vadd.f32 0.0, %v3965
        %v3967 = vpop.f32.mrb[0].mxu0
        %v3968 = vpop.f32.mrb[0].mxu0
        %v3969 = vadd.f32 0.0, %v3968
        %v3970 = vpop.f32.mrb[0].mxu0
        %3971 = vdwg.mxu0
        %v3972 = vadd.f32 %v3770, %v3942
        %v3973 = vadd.f32 %v3771, %v3945
        %v3974 = vadd.f32 %v3772, %v3950
        %v3975 = vadd.f32 %v3773, %v3953
        %v3976 = vadd.f32 %v3774, %v3958
        %v3977 = vadd.f32 %v3775, %v3961
        %v3978 = vadd.f32 %v3776, %v3966
        %v3979 = vadd.f32 %v3777, %v3969
        %v3980 = vld [vmem:[%s3623] sm:$0xf]
        %v3981 = vld [vmem:[%s3623 + $0x4] sm:$0x1]
        %v3982 = vld [vmem:[%s3623 + $0x8] sm:$0xf]
        %v3983 = vld [vmem:[%s3623 + $0xc] sm:$0x1]
        %v3984 = vld [vmem:[%s3623 + $0x10] sm:$0xf]
        %v3985 = vld [vmem:[%s3623 + $0x14] sm:$0x1]
        %v3986 = vld [vmem:[%s3623 + $0x18] sm:$0xf]
        %v3987 = vld [vmem:[%s3623 + $0x1c] sm:$0x1]
        %v3988 = vld [vmem:[%s3623 + $0x20] sm:$0xf]
        %v3989 = vld [vmem:[%s3623 + $0x24] sm:$0x1]
        %v3990 = vld [vmem:[%s3623 + $0x28] sm:$0xf]
        %v3991 = vld [vmem:[%s3623 + $0x2c] sm:$0x1]
        %v3992 = vld [vmem:[%s3623 + $0x30] sm:$0xf]
        %v3993 = vld [vmem:[%s3623 + $0x34] sm:$0x1]
        %v3994 = vld [vmem:[%s3623 + $0x38] sm:$0xf]
        %v3995 = vld [vmem:[%s3623 + $0x3c] sm:$0x1]
        %v3997 = vshrl.u32 %v3980, 16
        %v3999 = vrot.slane %v3997, 4
        %v4000 = vshll.u32 %v3980, 16
        %v4002 = vrot.slane %v4000, 5
        %v4003 = vor.u32 %v3999, %v4002
        %v4004 = vrot.slane %v4003, 4
        %v4006 = vshll.u32 %v3981, 16
        %v4008 = vrot.slane %v4006, 5
        %v4009 = vsel %vm1252, %v4004, %v4008
        %v4011 = vshrl.u32 %v3982, 16
        %v4013 = vrot.slane %v4011, 4
        %v4014 = vshll.u32 %v3982, 16
        %v4016 = vrot.slane %v4014, 5
        %v4017 = vor.u32 %v4013, %v4016
        %v4018 = vrot.slane %v4017, 4
        %v4020 = vshll.u32 %v3983, 16
        %v4022 = vrot.slane %v4020, 5
        %v4023 = vsel %vm1252, %v4018, %v4022
        %v4025 = vshrl.u32 %v3984, 16
        %v4027 = vrot.slane %v4025, 4
        %v4028 = vshll.u32 %v3984, 16
        %v4030 = vrot.slane %v4028, 5
        %v4031 = vor.u32 %v4027, %v4030
        %v4032 = vrot.slane %v4031, 4
        %v4034 = vshll.u32 %v3985, 16
        %v4036 = vrot.slane %v4034, 5
        %v4037 = vsel %vm1252, %v4032, %v4036
        %v4039 = vshrl.u32 %v3986, 16
        %v4041 = vrot.slane %v4039, 4
        %v4042 = vshll.u32 %v3986, 16
        %v4044 = vrot.slane %v4042, 5
        %v4045 = vor.u32 %v4041, %v4044
        %v4046 = vrot.slane %v4045, 4
        %v4048 = vshll.u32 %v3987, 16
        %v4050 = vrot.slane %v4048, 5
        %v4051 = vsel %vm1252, %v4046, %v4050
        %v4053 = vshrl.u32 %v3988, 16
        %v4055 = vrot.slane %v4053, 4
        %v4056 = vshll.u32 %v3988, 16
        %v4058 = vrot.slane %v4056, 5
        %v4059 = vor.u32 %v4055, %v4058
        %v4060 = vrot.slane %v4059, 4
        %v4062 = vshll.u32 %v3989, 16
        %v4064 = vrot.slane %v4062, 5
        %v4065 = vsel %vm1252, %v4060, %v4064
        %v4067 = vshrl.u32 %v3990, 16
        %v4069 = vrot.slane %v4067, 4
        %v4070 = vshll.u32 %v3990, 16
        %v4072 = vrot.slane %v4070, 5
        %v4073 = vor.u32 %v4069, %v4072
        %v4074 = vrot.slane %v4073, 4
        %v4076 = vshll.u32 %v3991, 16
        %v4078 = vrot.slane %v4076, 5
        %v4079 = vsel %vm1252, %v4074, %v4078
        %v4081 = vshrl.u32 %v3992, 16
        %v4083 = vrot.slane %v4081, 4
        %v4084 = vshll.u32 %v3992, 16
        %v4086 = vrot.slane %v4084, 5
        %v4087 = vor.u32 %v4083, %v4086
        %v4088 = vrot.slane %v4087, 4
        %v4090 = vshll.u32 %v3993, 16
        %v4092 = vrot.slane %v4090, 5
        %v4093 = vsel %vm1252, %v4088, %v4092
        %v4095 = vshrl.u32 %v3994, 16
        %v4097 = vrot.slane %v4095, 4
        %v4098 = vshll.u32 %v3994, 16
        %v4100 = vrot.slane %v4098, 5
        %v4101 = vor.u32 %v4097, %v4100
        %v4102 = vrot.slane %v4101, 4
        %v4104 = vshll.u32 %v3995, 16
        %v4106 = vrot.slane %v4104, 5
        %v4107 = vsel %vm1252, %v4102, %v4106
        %v4108 = vld [vmem:[%s3632] sm:$0xff]
        %v4109 = vld [vmem:[%s3632 + $0x8] sm:$0x11]
        %v4110 = vld [vmem:[%s3632 + $0x10] sm:$0xff]
        %v4111 = vld [vmem:[%s3632 + $0x18] sm:$0x11]
        %v4112 = vld [vmem:[%s3632 + $0x20] sm:$0xff]
        %v4113 = vld [vmem:[%s3632 + $0x28] sm:$0x11]
        %v4114 = vld [vmem:[%s3632 + $0x30] sm:$0xff]
        %v4115 = vld [vmem:[%s3632 + $0x38] sm:$0x11]
        %v4116 = vld [vmem:[%s3632 + $0x40] sm:$0xff]
        %v4117 = vld [vmem:[%s3632 + $0x48] sm:$0x11]
        %v4118 = vld [vmem:[%s3632 + $0x50] sm:$0xff]
        %v4119 = vld [vmem:[%s3632 + $0x58] sm:$0x11]
        %v4120 = vld [vmem:[%s3632 + $0x60] sm:$0xff]
        %v4121 = vld [vmem:[%s3632 + $0x68] sm:$0x11]
        %v4122 = vld [vmem:[%s3632 + $0x70] sm:$0xff]
        %v4123 = vld [vmem:[%s3632 + $0x78] sm:$0x11]
        %v4125 = vshrl.u32 %v4108, 16
        %v4127 = vrot.slane %v4125, 4
        %v4128 = vshll.u32 %v4108, 16
        %v4130 = vrot.slane %v4128, 5
        %v4131 = vor.u32 %v4127, %v4130
        %v4132 = vrot.slane %v4131, 4
        %v4134 = vshll.u32 %v4109, 16
        %v4136 = vrot.slane %v4134, 5
        %v4137 = vsel %vm1252, %v4132, %v4136
        %v4139 = vshrl.u32 %v4110, 16
        %v4141 = vrot.slane %v4139, 4
        %v4142 = vshll.u32 %v4110, 16
        %v4144 = vrot.slane %v4142, 5
        %v4145 = vor.u32 %v4141, %v4144
        %v4146 = vrot.slane %v4145, 4
        %v4148 = vshll.u32 %v4111, 16
        %v4150 = vrot.slane %v4148, 5
        %v4151 = vsel %vm1252, %v4146, %v4150
        %v4153 = vshrl.u32 %v4112, 16
        %v4155 = vrot.slane %v4153, 4
        %v4156 = vshll.u32 %v4112, 16
        %v4158 = vrot.slane %v4156, 5
        %v4159 = vor.u32 %v4155, %v4158
        %v4160 = vrot.slane %v4159, 4
        %v4162 = vshll.u32 %v4113, 16
        %v4164 = vrot.slane %v4162, 5
        %v4165 = vsel %vm1252, %v4160, %v4164
        %v4167 = vshrl.u32 %v4114, 16
        %v4169 = vrot.slane %v4167, 4
        %v4170 = vshll.u32 %v4114, 16
        %v4172 = vrot.slane %v4170, 5
        %v4173 = vor.u32 %v4169, %v4172
        %v4174 = vrot.slane %v4173, 4
        %v4176 = vshll.u32 %v4115, 16
        %v4178 = vrot.slane %v4176, 5
        %v4179 = vsel %vm1252, %v4174, %v4178
        %v4181 = vshrl.u32 %v4116, 16
        %v4183 = vrot.slane %v4181, 4
        %v4184 = vshll.u32 %v4116, 16
        %v4186 = vrot.slane %v4184, 5
        %v4187 = vor.u32 %v4183, %v4186
        %v4188 = vrot.slane %v4187, 4
        %v4190 = vshll.u32 %v4117, 16
        %v4192 = vrot.slane %v4190, 5
        %v4193 = vsel %vm1252, %v4188, %v4192
        %v4195 = vshrl.u32 %v4118, 16
        %v4197 = vrot.slane %v4195, 4
        %v4198 = vshll.u32 %v4118, 16
        %v4200 = vrot.slane %v4198, 5
        %v4201 = vor.u32 %v4197, %v4200
        %v4202 = vrot.slane %v4201, 4
        %v4204 = vshll.u32 %v4119, 16
        %v4206 = vrot.slane %v4204, 5
        %v4207 = vsel %vm1252, %v4202, %v4206
        %v4209 = vshrl.u32 %v4120, 16
        %v4211 = vrot.slane %v4209, 4
        %v4212 = vshll.u32 %v4120, 16
        %v4214 = vrot.slane %v4212, 5
        %v4215 = vor.u32 %v4211, %v4214
        %v4216 = vrot.slane %v4215, 4
        %v4218 = vshll.u32 %v4121, 16
        %v4220 = vrot.slane %v4218, 5
        %v4221 = vsel %vm1252, %v4216, %v4220
        %v4223 = vshrl.u32 %v4122, 16
        %v4225 = vrot.slane %v4223, 4
        %v4226 = vshll.u32 %v4122, 16
        %v4228 = vrot.slane %v4226, 5
        %v4229 = vor.u32 %v4225, %v4228
        %v4230 = vrot.slane %v4229, 4
        %v4232 = vshll.u32 %v4123, 16
        %v4234 = vrot.slane %v4232, 5
        %v4235 = vsel %vm1252, %v4230, %v4234
        %s4236 = scalar_lea.vmem %s3, 196
        %v4237 = vld [vmem:[%s4236] sm:$0xf]
        %v4238 = vld [vmem:[%s4236 + $0x4] sm:$0xf]
        %v4239 = vld [vmem:[%s4236 + $0x8] sm:$0xf]
        %v4240 = vld [vmem:[%s4236 + $0xc] sm:$0xf]
        %v4241 = vld [vmem:[%s4236 + $0x10] sm:$0xf]
        %v4242 = vld [vmem:[%s4236 + $0x14] sm:$0xf]
        %v4243 = vld [vmem:[%s4236 + $0x18] sm:$0xf]
        %v4244 = vunpack.c.l.b16 %v4009
        %v4245 = vunpack.c.l.b16 %v4023
        %v4246 = vunpack.c.l.b16 %v4037
        %v4247 = vunpack.c.l.b16 %v4051
        %v4248 = vunpack.c.l.b16 %v4065
        %v4249 = vunpack.c.l.b16 %v4079
        %v4250 = vunpack.c.l.b16 %v4093
        %v4251 = vunpack.c.l.b16 %v4107
        %v4252 = vpack.c.b16 %v4245, %v4244
        %v4253 = vpack.c.b16 %v4247, %v4246
        %v4254 = vpack.c.b16 %v4249, %v4248
        %v4255 = vpack.c.b16 %v4251, %v4250
        %v4263 = vunpack.c.l.b16 %v4237
        %v4264 = vunpack.c.l.b16 %v4238
        %v4265 = vunpack.c.l.b16 %v4239
        %v4266 = vunpack.c.l.b16 %v4240
        %v4267 = vunpack.c.l.b16 %v4241
        %v4268 = vunpack.c.l.b16 %v4242
        %v4269 = vunpack.c.l.b16 %v4243
        %v4270 = vpack.c.b16 %v4264, %v4263
        %v4271 = vpack.c.b16 %v4266, %v4265
        %v4272 = vpack.c.b16 %v4268, %v4267
        %v4273 = vpack.c.b16 %v4269, %v4269
        %v4278 = vsel %vm1153, %v4252, 0
        %v4281 = vsel %vm1153, %v4253, 0
        %v4284 = vsel %vm1153, %v4254, 0
        %v4287 = vsel %vm1153, %v4255, 0
        %v4290 = vsel %vm497, %v4273, 0
        %4292 = vmatprep.subr.bf16.mxu0 0
        %4293 = vmatpush1.bf16.msra.mxu0 %v4270
        %4294 = vmatprep.subr.bf16.mxu0 0
        %4295 = vmatpush1.bf16.msra.mxu0 %v4271
        %4296 = vmatprep.subr.bf16.mxu0 0
        %4297 = vmatpush1.bf16.msra.mxu0 %v4272
        %4298 = vmatprep.subr.bf16.mxu0 0
        %4299 = vmatpush1.bf16.msra.mxu0 %v4290
        %4300 = vmatprep.subr.bf16.mxu0 0
        %4301 = vmatpush1.bf16.msra.mxu0 0
        %4302 = vmatprep.subr.bf16.mxu0 0
        %4303 = vmatpush1.bf16.msra.mxu0 0
        %4304 = vmatprep.subr.bf16.mxu0 0
        %4305 = vmatpush1.bf16.msra.mxu0 0
        %4306 = vmatprep.subr.bf16.mxu0 0
        %4307 = vmatpush1.bf16.msra.mxu0 0
        %4308 = vmatprep.subr.bf16.mxu0 0
        %4309 = vmatpush1.bf16.msra.mxu0 0
        %4310 = vmatprep.subr.bf16.mxu0 0
        %4311 = vmatpush1.bf16.msra.mxu0 0
        %4312 = vmatprep.subr.bf16.mxu0 0
        %4313 = vmatpush1.bf16.msra.mxu0 0
        %4314 = vmatprep.subr.bf16.mxu0 0
        %4315 = vmatpush1.bf16.msra.mxu0 0
        %4316 = vmatprep.subr.bf16.mxu0 0
        %4317 = vmatpush1.bf16.msra.mxu0 0
        %4318 = vmatprep.subr.bf16.mxu0 0
        %4319 = vmatpush1.bf16.msra.mxu0 0
        %4320 = vmatprep.subr.bf16.mxu0 0
        %4321 = vmatpush1.bf16.msra.mxu0 0
        %4322 = vmatprep.subr.bf16.mxu0 0
        %4323 = vmatpush1.bf16.msra.mxu0 0
        %4324 = vmatprep.mubr.bf16.mxu0 0
        %4325 = vmatmul.mubr.bf16.gmra.mrb[0].mxu0 %v4278
        %v4326 = vpop.f32.mrb[0].mxu0
        %v4327 = vadd.f32 0.0, %v4326
        %v4328 = vpop.f32.mrb[0].mxu0
        %v4329 = vpop.f32.mrb[0].mxu0
        %v4330 = vadd.f32 0.0, %v4329
        %v4331 = vpop.f32.mrb[0].mxu0
        %4332 = vmatprep.mubr.bf16.mxu0 0
        %4333 = vmatmul.mubr.bf16.gmra.mrb[0].mxu0 %v4281
        %v4334 = vpop.f32.mrb[0].mxu0
        %v4335 = vadd.f32 0.0, %v4334
        %v4336 = vpop.f32.mrb[0].mxu0
        %v4337 = vpop.f32.mrb[0].mxu0
        %v4338 = vadd.f32 0.0, %v4337
        %v4339 = vpop.f32.mrb[0].mxu0
        %4340 = vmatprep.mubr.bf16.mxu0 0
        %4341 = vmatmul.mubr.bf16.gmra.mrb[0].mxu0 %v4284
        %v4342 = vpop.f32.mrb[0].mxu0
        %v4343 = vadd.f32 0.0, %v4342
        %v4344 = vpop.f32.mrb[0].mxu0
        %v4345 = vpop.f32.mrb[0].mxu0
        %v4346 = vadd.f32 0.0, %v4345
        %v4347 = vpop.f32.mrb[0].mxu0
        %4348 = vmatprep.mubr.bf16.mxu0 0
        %4349 = vmatmul.mubr.bf16.gmra.mrb[0].mxu0 %v4287
        %v4350 = vpop.f32.mrb[0].mxu0
        %v4351 = vadd.f32 0.0, %v4350
        %v4352 = vpop.f32.mrb[0].mxu0
        %v4353 = vpop.f32.mrb[0].mxu0
        %v4354 = vadd.f32 0.0, %v4353
        %v4355 = vpop.f32.mrb[0].mxu0
        %4356 = vdwg.mxu0
        %v4357 = vadd.f32 %v3972, %v4327
        %v4358 = vadd.f32 %v3973, %v4330
        %v4359 = vadd.f32 %v3974, %v4335
        %v4360 = vadd.f32 %v3975, %v4338
        %v4361 = vadd.f32 %v3976, %v4343
        %v4362 = vadd.f32 %v3977, %v4346
        %v4363 = vadd.f32 %v3978, %v4351
        %v4364 = vadd.f32 %v3979, %v4354
        %s4365 = scalar_lea.vmem %s4, 560
        %v4366 = vld [vmem:[%s4365] sm:$0xf]
        %v4367 = vld [vmem:[%s4365 + $0x4] sm:$0xf]
        %v4368 = vld [vmem:[%s4365 + $0x8] sm:$0xf]
        %v4369 = vld [vmem:[%s4365 + $0xc] sm:$0xf]
        %v4370 = vld [vmem:[%s4365 + $0x10] sm:$0xf]
        %v4371 = vld [vmem:[%s4365 + $0x14] sm:$0xf]
        %v4372 = vld [vmem:[%s4365 + $0x18] sm:$0xf]
        %v4373 = vld [vmem:[%s4365 + $0x1c] sm:$0xf]
        %v4374 = vld [vmem:[%s4365 + $0x20] sm:$0xf]
        %v4375 = vld [vmem:[%s4365 + $0x24] sm:$0xf]
        %v4376 = vld [vmem:[%s4365 + $0x28] sm:$0xf]
        %v4377 = vld [vmem:[%s4365 + $0x2c] sm:$0xf]
        %v4378 = vld [vmem:[%s4365 + $0x30] sm:$0xf]
        %v4379 = vld [vmem:[%s4365 + $0x34] sm:$0xf]
        %v4380 = vld [vmem:[%s4365 + $0x38] sm:$0xf]
        %v4381 = vld [vmem:[%s4365 + $0x3c] sm:$0xf]
        %v4382 = vld [vmem:[%s4365 + $0x40] sm:$0xf]
        %v4383 = vld [vmem:[%s4365 + $0x44] sm:$0xf]
        %v4384 = vld [vmem:[%s4365 + $0x48] sm:$0xf]
        %v4385 = vld [vmem:[%s4365 + $0x4c] sm:$0xf]
        %v4386 = vunpack.c.l.b16 %v4137
        %v4387 = vunpack.c.h.b16 %v4137
        %v4388 = vunpack.c.l.b16 %v4151
        %v4389 = vunpack.c.h.b16 %v4151
        %v4390 = vunpack.c.l.b16 %v4165
        %v4391 = vunpack.c.h.b16 %v4165
        %v4392 = vunpack.c.l.b16 %v4179
        %v4393 = vunpack.c.h.b16 %v4179
        %v4394 = vunpack.c.l.b16 %v4193
        %v4395 = vunpack.c.h.b16 %v4193
        %v4396 = vunpack.c.l.b16 %v4207
        %v4397 = vunpack.c.h.b16 %v4207
        %v4398 = vunpack.c.l.b16 %v4221
        %v4399 = vunpack.c.h.b16 %v4221
        %v4400 = vunpack.c.l.b16 %v4235
        %v4401 = vunpack.c.h.b16 %v4235
        %v4402 = vpack.c.b16 %v4388, %v4386
        %v4403 = vpack.c.b16 %v4389, %v4387
        %v4404 = vpack.c.b16 %v4392, %v4390
        %v4405 = vpack.c.b16 %v4393, %v4391
        %v4406 = vpack.c.b16 %v4396, %v4394
        %v4407 = vpack.c.b16 %v4397, %v4395
        %v4408 = vpack.c.b16 %v4400, %v4398
        %v4409 = vpack.c.b16 %v4401, %v4399
        %v4434 = vunpack.c.l.b16 %v4366
        %v4435 = vunpack.c.l.b16 %v4367
        %v4436 = vunpack.c.l.b16 %v4368
        %v4437 = vunpack.c.l.b16 %v4369
        %v4438 = vunpack.c.l.b16 %v4370
        %v4439 = vunpack.c.l.b16 %v4371
        %v4440 = vunpack.c.l.b16 %v4372
        %v4441 = vunpack.c.l.b16 %v4373
        %v4442 = vunpack.c.l.b16 %v4374
        %v4443 = vunpack.c.l.b16 %v4375
        %v4444 = vunpack.c.l.b16 %v4376
        %v4445 = vunpack.c.l.b16 %v4377
        %v4446 = vunpack.c.l.b16 %v4378
        %v4447 = vunpack.c.l.b16 %v4379
        %v4448 = vunpack.c.l.b16 %v4380
        %v4449 = vunpack.c.l.b16 %v4381
        %v4450 = vunpack.c.l.b16 %v4382
        %v4451 = vunpack.c.l.b16 %v4383
        %v4452 = vunpack.c.l.b16 %v4384
        %v4453 = vunpack.c.l.b16 %v4385
        %v4454 = vpack.c.b16 %v4435, %v4434
        %v4455 = vpack.c.b16 %v4437, %v4436
        %v4456 = vpack.c.b16 %v4439, %v4438
        %v4457 = vpack.c.b16 %v4441, %v4440
        %v4458 = vpack.c.b16 %v4443, %v4442
        %v4459 = vpack.c.b16 %v4445, %v4444
        %v4460 = vpack.c.b16 %v4447, %v4446
        %v4461 = vpack.c.b16 %v4449, %v4448
        %v4462 = vpack.c.b16 %v4451, %v4450
        %v4463 = vpack.c.b16 %v4453, %v4452
        %v4475 = vsel %vm1034, %v4403, 0
        %v4478 = vsel %vm1034, %v4405, 0
        %v4481 = vsel %vm1034, %v4407, 0
        %v4484 = vsel %vm1034, %v4409, 0
        %4486 = vmatprep.subr.bf16.mxu0 0
        %4487 = vmatpush1.bf16.msra.mxu0 %v4454
        %4488 = vmatprep.subr.bf16.mxu0 0
        %4489 = vmatpush1.bf16.msra.mxu0 %v4455
        %4490 = vmatprep.subr.bf16.mxu0 0
        %4491 = vmatpush1.bf16.msra.mxu0 %v4456
        %4492 = vmatprep.subr.bf16.mxu0 0
        %4493 = vmatpush1.bf16.msra.mxu0 %v4457
        %4494 = vmatprep.subr.bf16.mxu0 0
        %4495 = vmatpush1.bf16.msra.mxu0 %v4458
        %4496 = vmatprep.subr.bf16.mxu0 0
        %4497 = vmatpush1.bf16.msra.mxu0 %v4459
        %4498 = vmatprep.subr.bf16.mxu0 0
        %4499 = vmatpush1.bf16.msra.mxu0 %v4460
        %4500 = vmatprep.subr.bf16.mxu0 0
        %4501 = vmatpush1.bf16.msra.mxu0 %v4461
        %4502 = vmatprep.subr.bf16.mxu0 0
        %4503 = vmatpush1.bf16.msra.mxu0 %v4462
        %4504 = vmatprep.subr.bf16.mxu0 0
        %4505 = vmatpush1.bf16.msra.mxu0 %v4463
        %4506 = vmatprep.subr.bf16.mxu0 0
        %4507 = vmatpush1.bf16.msra.mxu0 0
        %4508 = vmatprep.subr.bf16.mxu0 0
        %4509 = vmatpush1.bf16.msra.mxu0 0
        %4510 = vmatprep.subr.bf16.mxu0 0
        %4511 = vmatpush1.bf16.msra.mxu0 0
        %4512 = vmatprep.subr.bf16.mxu0 0
        %4513 = vmatpush1.bf16.msra.mxu0 0
        %4514 = vmatprep.subr.bf16.mxu0 0
        %4515 = vmatpush1.bf16.msra.mxu0 0
        %4516 = vmatprep.subr.bf16.mxu0 0
        %4517 = vmatpush1.bf16.msra.mxu0 0
        %4518 = vmatprep.mubr.bf16.mxu0 %v4475
        %4519 = vmatmul.mubr.bf16.gmra.mrb[0].mxu0 %v4402
        %v4520 = vpop.f32.mrb[0].mxu0
        %v4521 = vadd.f32 0.0, %v4520
        %v4522 = vpop.f32.mrb[0].mxu0
        %v4523 = vpop.f32.mrb[0].mxu0
        %v4524 = vadd.f32 0.0, %v4523
        %v4525 = vpop.f32.mrb[0].mxu0
        %4526 = vmatprep.mubr.bf16.mxu0 %v4478
        %4527 = vmatmul.mubr.bf16.gmra.mrb[0].mxu0 %v4404
        %v4528 = vpop.f32.mrb[0].mxu0
        %v4529 = vadd.f32 0.0, %v4528
        %v4530 = vpop.f32.mrb[0].mxu0
        %v4531 = vpop.f32.mrb[0].mxu0
        %v4532 = vadd.f32 0.0, %v4531
        %v4533 = vpop.f32.mrb[0].mxu0
        %4534 = vmatprep.mubr.bf16.mxu0 %v4481
        %4535 = vmatmul.mubr.bf16.gmra.mrb[0].mxu0 %v4406
        %v4536 = vpop.f32.mrb[0].mxu0
        %v4537 = vadd.f32 0.0, %v4536
        %v4538 = vpop.f32.mrb[0].mxu0
        %v4539 = vpop.f32.mrb[0].mxu0
        %v4540 = vadd.f32 0.0, %v4539
        %v4541 = vpop.f32.mrb[0].mxu0
        %4542 = vmatprep.mubr.bf16.mxu0 %v4484
        %4543 = vmatmul.mubr.bf16.gmra.mrb[0].mxu0 %v4408
        %v4544 = vpop.f32.mrb[0].mxu0
        %v4545 = vadd.f32 0.0, %v4544
        %v4546 = vpop.f32.mrb[0].mxu0
        %v4547 = vpop.f32.mrb[0].mxu0
        %v4548 = vadd.f32 0.0, %v4547
        %v4549 = vpop.f32.mrb[0].mxu0
        %4550 = vdwg.mxu0
        %v4551 = vadd.f32 %v4357, %v4521
        %v4552 = vadd.f32 %v4358, %v4524
        %v4553 = vadd.f32 %v4359, %v4529
        %v4554 = vadd.f32 %v4360, %v4532
        %v4555 = vadd.f32 %v4361, %v4537
        %v4556 = vadd.f32 %v4362, %v4540
        %v4557 = vadd.f32 %v4363, %v4545
        %v4558 = vadd.f32 %v4364, %v4548
        %v4559 = vld [vmem:[%s3623] sm:$0xe]
        %v4560 = vld [vmem:[%s3623 + $0x8] sm:$0xe]
        %v4561 = vld [vmem:[%s3623 + $0x10] sm:$0xe]
        %v4562 = vld [vmem:[%s3623 + $0x18] sm:$0xe]
        %v4563 = vld [vmem:[%s3623 + $0x20] sm:$0xe]
        %v4564 = vld [vmem:[%s3623 + $0x28] sm:$0xe]
        %v4565 = vld [vmem:[%s3623 + $0x30] sm:$0xe]
        %v4566 = vld [vmem:[%s3623 + $0x38] sm:$0xe]
        %v4583 = vrot.slane %v4559, 5
        %v4584 = vrot.slane %v4583, 4
        %v4585 = vrot.slane %v3981, 5
        %v4586 = vsel %vm1842, %v4584, %v4585
        %v4587 = vrot.slane %v4560, 5
        %v4588 = vrot.slane %v4587, 4
        %v4589 = vrot.slane %v3983, 5
        %v4590 = vsel %vm1842, %v4588, %v4589
        %v4591 = vrot.slane %v4561, 5
        %v4592 = vrot.slane %v4591, 4
        %v4593 = vrot.slane %v3985, 5
        %v4594 = vsel %vm1842, %v4592, %v4593
        %v4595 = vrot.slane %v4562, 5
        %v4596 = vrot.slane %v4595, 4
        %v4597 = vrot.slane %v3987, 5
        %v4598 = vsel %vm1842, %v4596, %v4597
        %v4599 = vrot.slane %v4563, 5
        %v4600 = vrot.slane %v4599, 4
        %v4601 = vrot.slane %v3989, 5
        %v4602 = vsel %vm1842, %v4600, %v4601
        %v4603 = vrot.slane %v4564, 5
        %v4604 = vrot.slane %v4603, 4
        %v4605 = vrot.slane %v3991, 5
        %v4606 = vsel %vm1842, %v4604, %v4605
        %v4607 = vrot.slane %v4565, 5
        %v4608 = vrot.slane %v4607, 4
        %v4609 = vrot.slane %v3993, 5
        %v4610 = vsel %vm1842, %v4608, %v4609
        %v4611 = vrot.slane %v4566, 5
        %v4612 = vrot.slane %v4611, 4
        %v4613 = vrot.slane %v3995, 5
        %v4614 = vsel %vm1842, %v4612, %v4613
        %v4615 = vld [vmem:[%s3632] sm:$0xee]
        %v4616 = vld [vmem:[%s3632 + $0x10] sm:$0xee]
        %v4617 = vld [vmem:[%s3632 + $0x20] sm:$0xee]
        %v4618 = vld [vmem:[%s3632 + $0x30] sm:$0xee]
        %v4619 = vld [vmem:[%s3632 + $0x40] sm:$0xee]
        %v4620 = vld [vmem:[%s3632 + $0x50] sm:$0xee]
        %v4621 = vld [vmem:[%s3632 + $0x60] sm:$0xee]
        %v4622 = vld [vmem:[%s3632 + $0x70] sm:$0xee]
        %v4639 = vrot.slane %v4615, 5
        %v4640 = vrot.slane %v4639, 4
        %v4641 = vrot.slane %v4109, 5
        %v4642 = vsel %vm1842, %v4640, %v4641
        %v4643 = vrot.slane %v4616, 5
        %v4644 = vrot.slane %v4643, 4
        %v4645 = vrot.slane %v4111, 5
        %v4646 = vsel %vm1842, %v4644, %v4645
        %v4647 = vrot.slane %v4617, 5
        %v4648 = vrot.slane %v4647, 4
        %v4649 = vrot.slane %v4113, 5
        %v4650 = vsel %vm1842, %v4648, %v4649
        %v4651 = vrot.slane %v4618, 5
        %v4652 = vrot.slane %v4651, 4
        %v4653 = vrot.slane %v4115, 5
        %v4654 = vsel %vm1842, %v4652, %v4653
        %v4655 = vrot.slane %v4619, 5
        %v4656 = vrot.slane %v4655, 4
        %v4657 = vrot.slane %v4117, 5
        %v4658 = vsel %vm1842, %v4656, %v4657
        %v4659 = vrot.slane %v4620, 5
        %v4660 = vrot.slane %v4659, 4
        %v4661 = vrot.slane %v4119, 5
        %v4662 = vsel %vm1842, %v4660, %v4661
        %v4663 = vrot.slane %v4621, 5
        %v4664 = vrot.slane %v4663, 4
        %v4665 = vrot.slane %v4121, 5
        %v4666 = vsel %vm1842, %v4664, %v4665
        %v4667 = vrot.slane %v4622, 5
        %v4668 = vrot.slane %v4667, 4
        %v4669 = vrot.slane %v4123, 5
        %v4670 = vsel %vm1842, %v4668, %v4669
        %s4671 = scalar_lea.vmem %s3, 224
        %v4672 = vld [vmem:[%s4671] sm:$0xf]
        %v4673 = vld [vmem:[%s4671 + $0x4] sm:$0xf]
        %v4674 = vld [vmem:[%s4671 + $0x8] sm:$0xf]
        %v4675 = vld [vmem:[%s4671 + $0xc] sm:$0xf]
        %v4676 = vld [vmem:[%s4671 + $0x10] sm:$0xf]
        %v4677 = vld [vmem:[%s4671 + $0x14] sm:$0xf]
        %v4678 = vld [vmem:[%s4671 + $0x18] sm:$0xf]
        %v4679 = vunpack.c.l.b16 %v4586
        %v4680 = vunpack.c.l.b16 %v4590
        %v4681 = vunpack.c.l.b16 %v4594
        %v4682 = vunpack.c.l.b16 %v4598
        %v4683 = vunpack.c.l.b16 %v4602
        %v4684 = vunpack.c.l.b16 %v4606
        %v4685 = vunpack.c.l.b16 %v4610
        %v4686 = vunpack.c.l.b16 %v4614
        %v4687 = vpack.c.b16 %v4680, %v4679
        %v4688 = vpack.c.b16 %v4682, %v4681
        %v4689 = vpack.c.b16 %v4684, %v4683
        %v4690 = vpack.c.b16 %v4686, %v4685
        %v4698 = vunpack.c.l.b16 %v4672
        %v4699 = vunpack.c.l.b16 %v4673
        %v4700 = vunpack.c.l.b16 %v4674
        %v4701 = vunpack.c.l.b16 %v4675
        %v4702 = vunpack.c.l.b16 %v4676
        %v4703 = vunpack.c.l.b16 %v4677
        %v4704 = vunpack.c.l.b16 %v4678
        %v4705 = vpack.c.b16 %v4699, %v4698
        %v4706 = vpack.c.b16 %v4701, %v4700
        %v4707 = vpack.c.b16 %v4703, %v4702
        %v4708 = vpack.c.b16 %v4704, %v4704
        %v4713 = vsel %vm1153, %v4687, 0
        %v4716 = vsel %vm1153, %v4688, 0
        %v4719 = vsel %vm1153, %v4689, 0
        %v4722 = vsel %vm1153, %v4690, 0
        %v4725 = vsel %vm497, %v4708, 0
        %4727 = vmatprep.subr.bf16.mxu0 0
        %4728 = vmatpush1.bf16.msra.mxu0 %v4705
        %4729 = vmatprep.subr.bf16.mxu0 0
        %4730 = vmatpush1.bf16.msra.mxu0 %v4706
        %4731 = vmatprep.subr.bf16.mxu0 0
        %4732 = vmatpush1.bf16.msra.mxu0 %v4707
        %4733 = vmatprep.subr.bf16.mxu0 0
        %4734 = vmatpush1.bf16.msra.mxu0 %v4725
        %4735 = vmatprep.subr.bf16.mxu0 0
        %4736 = vmatpush1.bf16.msra.mxu0 0
        %4737 = vmatprep.subr.bf16.mxu0 0
        %4738 = vmatpush1.bf16.msra.mxu0 0
        %4739 = vmatprep.subr.bf16.mxu0 0
        %4740 = vmatpush1.bf16.msra.mxu0 0
        %4741 = vmatprep.subr.bf16.mxu0 0
        %4742 = vmatpush1.bf16.msra.mxu0 0
        %4743 = vmatprep.subr.bf16.mxu0 0
        %4744 = vmatpush1.bf16.msra.mxu0 0
        %4745 = vmatprep.subr.bf16.mxu0 0
        %4746 = vmatpush1.bf16.msra.mxu0 0
        %4747 = vmatprep.subr.bf16.mxu0 0
        %4748 = vmatpush1.bf16.msra.mxu0 0
        %4749 = vmatprep.subr.bf16.mxu0 0
        %4750 = vmatpush1.bf16.msra.mxu0 0
        %4751 = vmatprep.subr.bf16.mxu0 0
        %4752 = vmatpush1.bf16.msra.mxu0 0
        %4753 = vmatprep.subr.bf16.mxu0 0
        %4754 = vmatpush1.bf16.msra.mxu0 0
        %4755 = vmatprep.subr.bf16.mxu0 0
        %4756 = vmatpush1.bf16.msra.mxu0 0
        %4757 = vmatprep.subr.bf16.mxu0 0
        %4758 = vmatpush1.bf16.msra.mxu0 0
        %4759 = vmatprep.mubr.bf16.mxu0 0
        %4760 = vmatmul.mubr.bf16.gmra.mrb[0].mxu0 %v4713
        %v4761 = vpop.f32.mrb[0].mxu0
        %v4762 = vadd.f32 0.0, %v4761
        %v4763 = vpop.f32.mrb[0].mxu0
        %v4764 = vpop.f32.mrb[0].mxu0
        %v4765 = vadd.f32 0.0, %v4764
        %v4766 = vpop.f32.mrb[0].mxu0
        %4767 = vmatprep.mubr.bf16.mxu0 0
        %4768 = vmatmul.mubr.bf16.gmra.mrb[0].mxu0 %v4716
        %v4769 = vpop.f32.mrb[0].mxu0
        %v4770 = vadd.f32 0.0, %v4769
        %v4771 = vpop.f32.mrb[0].mxu0
        %v4772 = vpop.f32.mrb[0].mxu0
        %v4773 = vadd.f32 0.0, %v4772
        %v4774 = vpop.f32.mrb[0].mxu0
        %4775 = vmatprep.mubr.bf16.mxu0 0
        %4776 = vmatmul.mubr.bf16.gmra.mrb[0].mxu0 %v4719
        %v4777 = vpop.f32.mrb[0].mxu0
        %v4778 = vadd.f32 0.0, %v4777
        %v4779 = vpop.f32.mrb[0].mxu0
        %v4780 = vpop.f32.mrb[0].mxu0
        %v4781 = vadd.f32 0.0, %v4780
        %v4782 = vpop.f32.mrb[0].mxu0
        %4783 = vmatprep.mubr.bf16.mxu0 0
        %4784 = vmatmul.mubr.bf16.gmra.mrb[0].mxu0 %v4722
        %v4785 = vpop.f32.mrb[0].mxu0
        %v4786 = vadd.f32 0.0, %v4785
        %v4787 = vpop.f32.mrb[0].mxu0
        %v4788 = vpop.f32.mrb[0].mxu0
        %v4789 = vadd.f32 0.0, %v4788
        %v4790 = vpop.f32.mrb[0].mxu0
        %4791 = vdwg.mxu0
        %v4792 = vadd.f32 %v4551, %v4762
        %v4793 = vadd.f32 %v4552, %v4765
        %v4794 = vadd.f32 %v4553, %v4770
        %v4795 = vadd.f32 %v4554, %v4773
        %v4796 = vadd.f32 %v4555, %v4778
        %v4797 = vadd.f32 %v4556, %v4781
        %v4798 = vadd.f32 %v4557, %v4786
        %v4799 = vadd.f32 %v4558, %v4789
        %s4800 = scalar_lea.vmem %s4, 640
        %v4801 = vld [vmem:[%s4800] sm:$0xf]
        %v4802 = vld [vmem:[%s4800 + $0x4] sm:$0xf]
        %v4803 = vld [vmem:[%s4800 + $0x8] sm:$0xf]
        %v4804 = vld [vmem:[%s4800 + $0xc] sm:$0xf]
        %v4805 = vld [vmem:[%s4800 + $0x10] sm:$0xf]
        %v4806 = vld [vmem:[%s4800 + $0x14] sm:$0xf]
        %v4807 = vld [vmem:[%s4800 + $0x18] sm:$0xf]
        %v4808 = vld [vmem:[%s4800 + $0x1c] sm:$0xf]
        %v4809 = vld [vmem:[%s4800 + $0x20] sm:$0xf]
        %v4810 = vld [vmem:[%s4800 + $0x24] sm:$0xf]
        %v4811 = vld [vmem:[%s4800 + $0x28] sm:$0xf]
        %v4812 = vld [vmem:[%s4800 + $0x2c] sm:$0xf]
        %v4813 = vld [vmem:[%s4800 + $0x30] sm:$0xf]
        %v4814 = vld [vmem:[%s4800 + $0x34] sm:$0xf]
        %v4815 = vld [vmem:[%s4800 + $0x38] sm:$0xf]
        %v4816 = vld [vmem:[%s4800 + $0x3c] sm:$0xf]
        %v4817 = vld [vmem:[%s4800 + $0x40] sm:$0xf]
        %v4818 = vld [vmem:[%s4800 + $0x44] sm:$0xf]
        %v4819 = vld [vmem:[%s4800 + $0x48] sm:$0xf]
        %v4820 = vld [vmem:[%s4800 + $0x4c] sm:$0xf]
        %v4821 = vunpack.c.l.b16 %v4642
        %v4822 = vunpack.c.h.b16 %v4642
        %v4823 = vunpack.c.l.b16 %v4646
        %v4824 = vunpack.c.h.b16 %v4646
        %v4825 = vunpack.c.l.b16 %v4650
        %v4826 = vunpack.c.h.b16 %v4650
        %v4827 = vunpack.c.l.b16 %v4654
        %v4828 = vunpack.c.h.b16 %v4654
        %v4829 = vunpack.c.l.b16 %v4658
        %v4830 = vunpack.c.h.b16 %v4658
        %v4831 = vunpack.c.l.b16 %v4662
        %v4832 = vunpack.c.h.b16 %v4662
        %v4833 = vunpack.c.l.b16 %v4666
        %v4834 = vunpack.c.h.b16 %v4666
        %v4835 = vunpack.c.l.b16 %v4670
        %v4836 = vunpack.c.h.b16 %v4670
        %v4837 = vpack.c.b16 %v4823, %v4821
        %v4838 = vpack.c.b16 %v4824, %v4822
        %v4839 = vpack.c.b16 %v4827, %v4825
        %v4840 = vpack.c.b16 %v4828, %v4826
        %v4841 = vpack.c.b16 %v4831, %v4829
        %v4842 = vpack.c.b16 %v4832, %v4830
        %v4843 = vpack.c.b16 %v4835, %v4833
        %v4844 = vpack.c.b16 %v4836, %v4834
        %v4869 = vunpack.c.l.b16 %v4801
        %v4870 = vunpack.c.l.b16 %v4802
        %v4871 = vunpack.c.l.b16 %v4803
        %v4872 = vunpack.c.l.b16 %v4804
        %v4873 = vunpack.c.l.b16 %v4805
        %v4874 = vunpack.c.l.b16 %v4806
        %v4875 = vunpack.c.l.b16 %v4807
        %v4876 = vunpack.c.l.b16 %v4808
        %v4877 = vunpack.c.l.b16 %v4809
        %v4878 = vunpack.c.l.b16 %v4810
        %v4879 = vunpack.c.l.b16 %v4811
        %v4880 = vunpack.c.l.b16 %v4812
        %v4881 = vunpack.c.l.b16 %v4813
        %v4882 = vunpack.c.l.b16 %v4814
        %v4883 = vunpack.c.l.b16 %v4815
        %v4884 = vunpack.c.l.b16 %v4816
        %v4885 = vunpack.c.l.b16 %v4817
        %v4886 = vunpack.c.l.b16 %v4818
        %v4887 = vunpack.c.l.b16 %v4819
        %v4888 = vunpack.c.l.b16 %v4820
        %v4889 = vpack.c.b16 %v4870, %v4869
        %v4890 = vpack.c.b16 %v4872, %v4871
        %v4891 = vpack.c.b16 %v4874, %v4873
        %v4892 = vpack.c.b16 %v4876, %v4875
        %v4893 = vpack.c.b16 %v4878, %v4877
        %v4894 = vpack.c.b16 %v4880, %v4879
        %v4895 = vpack.c.b16 %v4882, %v4881
        %v4896 = vpack.c.b16 %v4884, %v4883
        %v4897 = vpack.c.b16 %v4886, %v4885
        %v4898 = vpack.c.b16 %v4888, %v4887
        %v4910 = vsel %vm1034, %v4838, 0
        %v4913 = vsel %vm1034, %v4840, 0
        %v4916 = vsel %vm1034, %v4842, 0
        %v4919 = vsel %vm1034, %v4844, 0
        %4921 = vmatprep.subr.bf16.mxu0 0
        %4922 = vmatpush1.bf16.msra.mxu0 %v4889
        %4923 = vmatprep.subr.bf16.mxu0 0
        %4924 = vmatpush1.bf16.msra.mxu0 %v4890
        %4925 = vmatprep.subr.bf16.mxu0 0
        %4926 = vmatpush1.bf16.msra.mxu0 %v4891
        %4927 = vmatprep.subr.bf16.mxu0 0
        %4928 = vmatpush1.bf16.msra.mxu0 %v4892
        %4929 = vmatprep.subr.bf16.mxu0 0
        %4930 = vmatpush1.bf16.msra.mxu0 %v4893
        %4931 = vmatprep.subr.bf16.mxu0 0
        %4932 = vmatpush1.bf16.msra.mxu0 %v4894
        %4933 = vmatprep.subr.bf16.mxu0 0
        %4934 = vmatpush1.bf16.msra.mxu0 %v4895
        %4935 = vmatprep.subr.bf16.mxu0 0
        %4936 = vmatpush1.bf16.msra.mxu0 %v4896
        %4937 = vmatprep.subr.bf16.mxu0 0
        %4938 = vmatpush1.bf16.msra.mxu0 %v4897
        %4939 = vmatprep.subr.bf16.mxu0 0
        %4940 = vmatpush1.bf16.msra.mxu0 %v4898
        %4941 = vmatprep.subr.bf16.mxu0 0
        %4942 = vmatpush1.bf16.msra.mxu0 0
        %4943 = vmatprep.subr.bf16.mxu0 0
        %4944 = vmatpush1.bf16.msra.mxu0 0
        %4945 = vmatprep.subr.bf16.mxu0 0
        %4946 = vmatpush1.bf16.msra.mxu0 0
        %4947 = vmatprep.subr.bf16.mxu0 0
        %4948 = vmatpush1.bf16.msra.mxu0 0
        %4949 = vmatprep.subr.bf16.mxu0 0
        %4950 = vmatpush1.bf16.msra.mxu0 0
        %4951 = vmatprep.subr.bf16.mxu0 0
        %4952 = vmatpush1.bf16.msra.mxu0 0
        %4953 = vmatprep.mubr.bf16.mxu0 %v4910
        %4954 = vmatmul.mubr.bf16.gmra.mrb[0].mxu0 %v4837
        %v4955 = vpop.f32.mrb[0].mxu0
        %v4956 = vadd.f32 0.0, %v4955
        %v4957 = vpop.f32.mrb[0].mxu0
        %v4958 = vpop.f32.mrb[0].mxu0
        %v4959 = vadd.f32 0.0, %v4958
        %v4960 = vpop.f32.mrb[0].mxu0
        %4961 = vmatprep.mubr.bf16.mxu0 %v4913
        %4962 = vmatmul.mubr.bf16.gmra.mrb[0].mxu0 %v4839
        %v4963 = vpop.f32.mrb[0].mxu0
        %v4964 = vadd.f32 0.0, %v4963
        %v4965 = vpop.f32.mrb[0].mxu0
        %v4966 = vpop.f32.mrb[0].mxu0
        %v4967 = vadd.f32 0.0, %v4966
        %v4968 = vpop.f32.mrb[0].mxu0
        %4969 = vmatprep.mubr.bf16.mxu0 %v4916
        %4970 = vmatmul.mubr.bf16.gmra.mrb[0].mxu0 %v4841
        %v4971 = vpop.f32.mrb[0].mxu0
        %v4972 = vadd.f32 0.0, %v4971
        %v4973 = vpop.f32.mrb[0].mxu0
        %v4974 = vpop.f32.mrb[0].mxu0
        %v4975 = vadd.f32 0.0, %v4974
        %v4976 = vpop.f32.mrb[0].mxu0
        %4977 = vmatprep.mubr.bf16.mxu0 %v4919
        %4978 = vmatmul.mubr.bf16.gmra.mrb[0].mxu0 %v4843
        %v4979 = vpop.f32.mrb[0].mxu0
        %v4980 = vadd.f32 0.0, %v4979
        %v4981 = vpop.f32.mrb[0].mxu0
        %v4982 = vpop.f32.mrb[0].mxu0
        %v4983 = vadd.f32 0.0, %v4982
        %v4984 = vpop.f32.mrb[0].mxu0
        %4985 = vdwg.mxu0
        %v4986 = vadd.f32 %v4792, %v4956
        %v4987 = vadd.f32 %v4793, %v4959
        %v4988 = vadd.f32 %v4794, %v4964
        %v4989 = vadd.f32 %v4795, %v4967
        %v4990 = vadd.f32 %v4796, %v4972
        %v4991 = vadd.f32 %v4797, %v4975
        %v4992 = vadd.f32 %v4798, %v4980
        %v4993 = vadd.f32 %v4799, %v4983
        %v4994 = vadd.f32 %v4986, %v4987
        %v4995 = vadd.f32 %v4994, %v4988
        %v4996 = vadd.f32 %v4995, %v4989
        %v4997 = vadd.f32 %v4996, %v4990
        %v4998 = vadd.f32 %v4997, %v4991
        %v4999 = vadd.f32 %v4998, %v4992
        %v5000 = vadd.f32 %v4999, %v4993
        %v5001 = vrot.slane %v5000, 4
        %v5002 = vadd.f32 %v5000, %v5001
        %v5003 = vrot.slane %v5002, 2
        %v5004 = vadd.f32 %v5002, %v5003
        %v5005 = vrot.slane %v5004, 1
        %v5006 = vadd.f32 %v5004, %v5005
        %v5007 = vmul.f32 %v4986, %v4986
        %v5008 = vmul.f32 %v4987, %v4987
        %v5009 = vmul.f32 %v4988, %v4988
        %v5010 = vmul.f32 %v4989, %v4989
        %v5011 = vmul.f32 %v4990, %v4990
        %v5012 = vmul.f32 %v4991, %v4991
        %v5013 = vmul.f32 %v4992, %v4992
        %v5014 = vmul.f32 %v4993, %v4993
        %v5015 = vadd.f32 %v5007, %v5008
        %v5016 = vadd.f32 %v5015, %v5009
        %v5017 = vadd.f32 %v5016, %v5010
        %v5018 = vadd.f32 %v5017, %v5011
        %v5019 = vadd.f32 %v5018, %v5012
        %v5020 = vadd.f32 %v5019, %v5013
        %v5021 = vadd.f32 %v5020, %v5014
        %v5022 = vrot.slane %v5021, 4
        %v5023 = vadd.f32 %v5021, %v5022
        %v5024 = vrot.slane %v5023, 2
        %v5025 = vadd.f32 %v5023, %v5024
        %v5026 = vrot.slane %v5025, 1
        %v5027 = vadd.f32 %v5025, %v5026
        %v5028 = vrcp.pop 64.0
        %v5029 = vmul.f32 %v5006, %v5028
        %v5030 = vmul.f32 %v5027, %v5028
        %v5031 = vmul.f32 %v5029, %v5029
        %v5032 = vsub.f32 %v5030, %v5031
        %v5033 = vmax.f32 %v5032, 0.0
        %v5034 = vsub.f32 %v4986, %v5029
        %v5035 = vsub.f32 %v4987, %v5029
        %v5036 = vsub.f32 %v4988, %v5029
        %v5037 = vsub.f32 %v4989, %v5029
        %v5038 = vsub.f32 %v4990, %v5029
        %v5039 = vsub.f32 %v4991, %v5029
        %v5040 = vsub.f32 %v4992, %v5029
        %v5041 = vsub.f32 %v4993, %v5029
        %v5042 = vadd.f32 %v5033, 1e-05
        %v5043 = vrsqrt.pop %v5042
        %v5044 = vmul.f32 %v5034, %v5043
        %v5045 = vmul.f32 %v5035, %v5043
        %v5046 = vmul.f32 %v5036, %v5043
        %v5047 = vmul.f32 %v5037, %v5043
        %v5048 = vmul.f32 %v5038, %v5043
        %v5049 = vmul.f32 %v5039, %v5043
        %v5050 = vmul.f32 %v5040, %v5043
        %v5051 = vmul.f32 %v5041, %v5043
        %v5052 = vmax.f32 %v5044, 0.0
        %v5053 = vmax.f32 %v5045, 0.0
        %v5054 = vmax.f32 %v5046, 0.0
        %v5055 = vmax.f32 %v5047, 0.0
        %v5056 = vmax.f32 %v5048, 0.0
        %v5057 = vmax.f32 %v5049, 0.0
        %v5058 = vmax.f32 %v5050, 0.0
        %v5059 = vmax.f32 %v5051, 0.0
        %5060 = vst [vmem:[#allocation4] sm:$0xf] 0
        %5061 = vst [vmem:[#allocation4 + $0x4] sm:$0x1] 0
        %5062 = vst [vmem:[#allocation4 + $0x8] sm:$0xf] 0
        %5063 = vst [vmem:[#allocation4 + $0xc] sm:$0x1] 0
        %5064 = vst [vmem:[#allocation4 + $0x10] sm:$0xf] 0
        %5065 = vst [vmem:[#allocation4 + $0x14] sm:$0x1] 0
        %5066 = vst [vmem:[#allocation4 + $0x18] sm:$0xf] 0
        %5067 = vst [vmem:[#allocation4 + $0x1c] sm:$0x1] 0
        %5068 = vst [vmem:[#allocation4 + $0x20] sm:$0xf] 0
        %5069 = vst [vmem:[#allocation4 + $0x24] sm:$0x1] 0
        %5070 = vst [vmem:[#allocation4 + $0x28] sm:$0xf] 0
        %5071 = vst [vmem:[#allocation4 + $0x2c] sm:$0x1] 0
        %5072 = vst [vmem:[#allocation4 + $0x30] sm:$0xf] 0
        %5073 = vst [vmem:[#allocation4 + $0x34] sm:$0x1] 0
        %5074 = vst [vmem:[#allocation4 + $0x38] sm:$0xf] 0
        %5075 = vst [vmem:[#allocation4 + $0x3c] sm:$0x1] 0
        %5076 = vst [vmem:[#allocation4 + $0x40] sm:$0xf] 0
        %5077 = vst [vmem:[#allocation4 + $0x44] sm:$0x1] 0
        %5078 = vst [vmem:[#allocation4 + $0x48] sm:$0xf] 0
        %5079 = vst [vmem:[#allocation4 + $0x4c] sm:$0x1] 0
        %v5080 = vpack.c.bf16 %v5052, %v5052
        %v5081 = vpack.c.bf16 %v5053, %v5053
        %v5082 = vpack.c.bf16 %v5054, %v5054
        %v5083 = vpack.c.bf16 %v5055, %v5055
        %v5084 = vpack.c.bf16 %v5056, %v5056
        %v5085 = vpack.c.bf16 %v5057, %v5057
        %v5086 = vpack.c.bf16 %v5058, %v5058
        %v5087 = vpack.c.bf16 %v5059, %v5059
        %v5096 = vunpack.c.l.b16 %v5080
        %v5097 = vunpack.c.l.b16 %v5081
        %v5098 = vunpack.c.l.b16 %v5082
        %v5099 = vunpack.c.l.b16 %v5083
        %v5100 = vunpack.c.l.b16 %v5084
        %v5101 = vunpack.c.l.b16 %v5085
        %v5102 = vunpack.c.l.b16 %v5086
        %v5103 = vunpack.c.l.b16 %v5087
        %v5104 = vpack.c.b16 %v5096, %v5096
        %v5105 = vpack.c.b16 %v5097, %v5097
        %v5106 = vpack.c.b16 %v5098, %v5098
        %v5107 = vpack.c.b16 %v5099, %v5099
        %v5108 = vpack.c.b16 %v5100, %v5100
        %v5109 = vpack.c.b16 %v5101, %v5101
        %v5110 = vpack.c.b16 %v5102, %v5102
        %v5111 = vpack.c.b16 %v5103, %v5103
        %v5113 = vshrl.u32 %v5104, 16
        %v5115 = vrot.slane %v5113, 7
        %v5116 = vshll.u32 %v5104, 16
        %v5118 = vor.u32 %v5115, %v5116
        %v5119 = vrot.slane %v5115, 4
        %v5121 = vshrl.u32 %v5105, 16
        %v5123 = vrot.slane %v5121, 7
        %v5124 = vshll.u32 %v5105, 16
        %v5126 = vor.u32 %v5123, %v5124
        %v5127 = vrot.slane %v5123, 4
        %v5129 = vshrl.u32 %v5106, 16
        %v5131 = vrot.slane %v5129, 7
        %v5132 = vshll.u32 %v5106, 16
        %v5134 = vor.u32 %v5131, %v5132
        %v5135 = vrot.slane %v5131, 4
        %v5137 = vshrl.u32 %v5107, 16
        %v5139 = vrot.slane %v5137, 7
        %v5140 = vshll.u32 %v5107, 16
        %v5142 = vor.u32 %v5139, %v5140
        %v5143 = vrot.slane %v5139, 4
        %v5145 = vshrl.u32 %v5108, 16
        %v5147 = vrot.slane %v5145, 7
        %v5148 = vshll.u32 %v5108, 16
        %v5150 = vor.u32 %v5147, %v5148
        %v5151 = vrot.slane %v5147, 4
        %v5153 = vshrl.u32 %v5109, 16
        %v5155 = vrot.slane %v5153, 7
        %v5156 = vshll.u32 %v5109, 16
        %v5158 = vor.u32 %v5155, %v5156
        %v5159 = vrot.slane %v5155, 4
        %v5161 = vshrl.u32 %v5110, 16
        %v5163 = vrot.slane %v5161, 7
        %v5164 = vshll.u32 %v5110, 16
        %v5166 = vor.u32 %v5163, %v5164
        %v5167 = vrot.slane %v5163, 4
        %v5169 = vshrl.u32 %v5111, 16
        %v5171 = vrot.slane %v5169, 7
        %v5172 = vshll.u32 %v5111, 16
        %v5174 = vor.u32 %v5171, %v5172
        %v5175 = vrot.slane %v5171, 4
        %s5192 = scalar_lea.vmem [#allocation4], 8
        %v5193 = vld [vmem:[%s5192] sm:$0xf]
        %v5194 = vsel %vm836, %v5118, %v5193
        %5195 = vst [vmem:[%s5192] sm:$0xf] %v5194
        %v5196 = vld [vmem:[%s5192 + $0x4] sm:$0x1]
        %v5197 = vsel %vm845, %v5119, %v5196
        %5198 = vst [vmem:[%s5192 + $0x4] sm:$0x1] %v5197
        %v5199 = vld [vmem:[%s5192 + $0x8] sm:$0xf]
        %v5200 = vsel %vm836, %v5126, %v5199
        %5201 = vst [vmem:[%s5192 + $0x8] sm:$0xf] %v5200
        %v5202 = vld [vmem:[%s5192 + $0xc] sm:$0x1]
        %v5203 = vsel %vm845, %v5127, %v5202
        %5204 = vst [vmem:[%s5192 + $0xc] sm:$0x1] %v5203
        %v5205 = vld [vmem:[%s5192 + $0x10] sm:$0xf]
        %v5206 = vsel %vm836, %v5134, %v5205
        %5207 = vst [vmem:[%s5192 + $0x10] sm:$0xf] %v5206
        %v5208 = vld [vmem:[%s5192 + $0x14] sm:$0x1]
        %v5209 = vsel %vm845, %v5135, %v5208
        %5210 = vst [vmem:[%s5192 + $0x14] sm:$0x1] %v5209
        %v5211 = vld [vmem:[%s5192 + $0x18] sm:$0xf]
        %v5212 = vsel %vm836, %v5142, %v5211
        %5213 = vst [vmem:[%s5192 + $0x18] sm:$0xf] %v5212
        %v5214 = vld [vmem:[%s5192 + $0x1c] sm:$0x1]
        %v5215 = vsel %vm845, %v5143, %v5214
        %5216 = vst [vmem:[%s5192 + $0x1c] sm:$0x1] %v5215
        %v5217 = vld [vmem:[%s5192 + $0x20] sm:$0xf]
        %v5218 = vsel %vm836, %v5150, %v5217
        %5219 = vst [vmem:[%s5192 + $0x20] sm:$0xf] %v5218
        %v5220 = vld [vmem:[%s5192 + $0x24] sm:$0x1]
        %v5221 = vsel %vm845, %v5151, %v5220
        %5222 = vst [vmem:[%s5192 + $0x24] sm:$0x1] %v5221
        %v5223 = vld [vmem:[%s5192 + $0x28] sm:$0xf]
        %v5224 = vsel %vm836, %v5158, %v5223
        %5225 = vst [vmem:[%s5192 + $0x28] sm:$0xf] %v5224
        %v5226 = vld [vmem:[%s5192 + $0x2c] sm:$0x1]
        %v5227 = vsel %vm845, %v5159, %v5226
        %5228 = vst [vmem:[%s5192 + $0x2c] sm:$0x1] %v5227
        %v5229 = vld [vmem:[%s5192 + $0x30] sm:$0xf]
        %v5230 = vsel %vm836, %v5166, %v5229
        %5231 = vst [vmem:[%s5192 + $0x30] sm:$0xf] %v5230
        %v5232 = vld [vmem:[%s5192 + $0x34] sm:$0x1]
        %v5233 = vsel %vm845, %v5167, %v5232
        %5234 = vst [vmem:[%s5192 + $0x34] sm:$0x1] %v5233
        %v5235 = vld [vmem:[%s5192 + $0x38] sm:$0xf]
        %v5236 = vsel %vm836, %v5174, %v5235
        %5237 = vst [vmem:[%s5192 + $0x38] sm:$0xf] %v5236
        %v5238 = vld [vmem:[%s5192 + $0x3c] sm:$0x1]
        %v5239 = vsel %vm845, %v5175, %v5238
        %5240 = vst [vmem:[%s5192 + $0x3c] sm:$0x1] %v5239
        %v5241 = vld [vmem:[#allocation4] sm:$0xf]
        %v5242 = vld [vmem:[#allocation4 + $0x8] sm:$0xf]
        %v5243 = vld [vmem:[#allocation4 + $0x10] sm:$0xf]
        %v5244 = vld [vmem:[#allocation4 + $0x18] sm:$0xf]
        %v5245 = vld [vmem:[#allocation4 + $0x20] sm:$0xf]
        %v5246 = vld [vmem:[#allocation4 + $0x28] sm:$0xf]
        %v5247 = vld [vmem:[#allocation4 + $0x30] sm:$0xf]
        %v5248 = vld [vmem:[#allocation4 + $0x38] sm:$0xf]
        %v5249 = vld [vmem:[%s5] sm:$0xf]
        %v5250 = vld [vmem:[%s5 + $0x4] sm:$0xf]
        %v5251 = vld [vmem:[%s5 + $0x8] sm:$0xf]
        %v5252 = vld [vmem:[%s5 + $0xc] sm:$0xf]
        %v5253 = vld [vmem:[%s5 + $0x10] sm:$0xf]
        %v5254 = vld [vmem:[%s5 + $0x14] sm:$0xf]
        %v5255 = vld [vmem:[%s5 + $0x18] sm:$0xf]
        %v5256 = vld [vmem:[%s5 + $0x1c] sm:$0xf]
        %v5257 = vld [vmem:[%s5 + $0x20] sm:$0xf]
        %v5258 = vld [vmem:[%s5 + $0x24] sm:$0xf]
        %v5259 = vld [vmem:[%s5 + $0x28] sm:$0xf]
        %v5260 = vld [vmem:[%s5 + $0x2c] sm:$0xf]
        %v5261 = vld [vmem:[%s5 + $0x30] sm:$0xf]
        %v5262 = vld [vmem:[%s5 + $0x34] sm:$0xf]
        %v5263 = vld [vmem:[%s5 + $0x38] sm:$0xf]
        %v5264 = vld [vmem:[%s5 + $0x3c] sm:$0xf]
        %v5265 = vld [vmem:[#allocation4 + $0x4] sm:$0x1]
        %v5266 = vld [vmem:[#allocation4 + $0xc] sm:$0x1]
        %v5267 = vld [vmem:[#allocation4 + $0x14] sm:$0x1]
        %v5268 = vld [vmem:[#allocation4 + $0x1c] sm:$0x1]
        %v5269 = vld [vmem:[#allocation4 + $0x24] sm:$0x1]
        %v5270 = vld [vmem:[#allocation4 + $0x2c] sm:$0x1]
        %v5271 = vld [vmem:[#allocation4 + $0x34] sm:$0x1]
        %v5272 = vld [vmem:[#allocation4 + $0x3c] sm:$0x1]
        %v5274 = vshrl.u32 %v5241, 16
        %v5276 = vrot.slane %v5274, 4
        %v5277 = vshll.u32 %v5241, 16
        %v5279 = vrot.slane %v5277, 5
        %v5280 = vor.u32 %v5276, %v5279
        %v5281 = vrot.slane %v5280, 4
        %v5283 = vshll.u32 %v5265, 16
        %v5285 = vrot.slane %v5283, 5
        %v5286 = vsel %vm1252, %v5281, %v5285
        %v5288 = vshrl.u32 %v5242, 16
        %v5290 = vrot.slane %v5288, 4
        %v5291 = vshll.u32 %v5242, 16
        %v5293 = vrot.slane %v5291, 5
        %v5294 = vor.u32 %v5290, %v5293
        %v5295 = vrot.slane %v5294, 4
        %v5297 = vshll.u32 %v5266, 16
        %v5299 = vrot.slane %v5297, 5
        %v5300 = vsel %vm1252, %v5295, %v5299
        %v5302 = vshrl.u32 %v5243, 16
        %v5304 = vrot.slane %v5302, 4
        %v5305 = vshll.u32 %v5243, 16
        %v5307 = vrot.slane %v5305, 5
        %v5308 = vor.u32 %v5304, %v5307
        %v5309 = vrot.slane %v5308, 4
        %v5311 = vshll.u32 %v5267, 16
        %v5313 = vrot.slane %v5311, 5
        %v5314 = vsel %vm1252, %v5309, %v5313
        %v5316 = vshrl.u32 %v5244, 16
        %v5318 = vrot.slane %v5316, 4
        %v5319 = vshll.u32 %v5244, 16
        %v5321 = vrot.slane %v5319, 5
        %v5322 = vor.u32 %v5318, %v5321
        %v5323 = vrot.slane %v5322, 4
        %v5325 = vshll.u32 %v5268, 16
        %v5327 = vrot.slane %v5325, 5
        %v5328 = vsel %vm1252, %v5323, %v5327
        %v5330 = vshrl.u32 %v5245, 16
        %v5332 = vrot.slane %v5330, 4
        %v5333 = vshll.u32 %v5245, 16
        %v5335 = vrot.slane %v5333, 5
        %v5336 = vor.u32 %v5332, %v5335
        %v5337 = vrot.slane %v5336, 4
        %v5339 = vshll.u32 %v5269, 16
        %v5341 = vrot.slane %v5339, 5
        %v5342 = vsel %vm1252, %v5337, %v5341
        %v5344 = vshrl.u32 %v5246, 16
        %v5346 = vrot.slane %v5344, 4
        %v5347 = vshll.u32 %v5246, 16
        %v5349 = vrot.slane %v5347, 5
        %v5350 = vor.u32 %v5346, %v5349
        %v5351 = vrot.slane %v5350, 4
        %v5353 = vshll.u32 %v5270, 16
        %v5355 = vrot.slane %v5353, 5
        %v5356 = vsel %vm1252, %v5351, %v5355
        %v5358 = vshrl.u32 %v5247, 16
        %v5360 = vrot.slane %v5358, 4
        %v5361 = vshll.u32 %v5247, 16
        %v5363 = vrot.slane %v5361, 5
        %v5364 = vor.u32 %v5360, %v5363
        %v5365 = vrot.slane %v5364, 4
        %v5367 = vshll.u32 %v5271, 16
        %v5369 = vrot.slane %v5367, 5
        %v5370 = vsel %vm1252, %v5365, %v5369
        %v5372 = vshrl.u32 %v5248, 16
        %v5374 = vrot.slane %v5372, 4
        %v5375 = vshll.u32 %v5248, 16
        %v5377 = vrot.slane %v5375, 5
        %v5378 = vor.u32 %v5374, %v5377
        %v5379 = vrot.slane %v5378, 4
        %v5381 = vshll.u32 %v5272, 16
        %v5383 = vrot.slane %v5381, 5
        %v5384 = vsel %vm1252, %v5379, %v5383
        %s5385 = scalar_lea.vmem %s5, 64
        %v5386 = vld [vmem:[%s5385] sm:$0xf]
        %v5387 = vld [vmem:[%s5385 + $0x4] sm:$0xf]
        %v5388 = vld [vmem:[%s5385 + $0x8] sm:$0xf]
        %v5389 = vld [vmem:[%s5385 + $0xc] sm:$0xf]
        %v5390 = vld [vmem:[%s5385 + $0x10] sm:$0xf]
        %v5391 = vld [vmem:[%s5385 + $0x14] sm:$0xf]
        %v5392 = vld [vmem:[%s5385 + $0x18] sm:$0xf]
        %v5393 = vld [vmem:[%s5385 + $0x1c] sm:$0xf]
        %v5394 = vld [vmem:[%s5385 + $0x20] sm:$0xf]
        %v5395 = vld [vmem:[%s5385 + $0x24] sm:$0xf]
        %v5396 = vld [vmem:[%s5385 + $0x28] sm:$0xf]
        %v5397 = vld [vmem:[%s5385 + $0x2c] sm:$0xf]
        %v5398 = vld [vmem:[%s5385 + $0x30] sm:$0xf]
        %v5399 = vld [vmem:[%s5385 + $0x34] sm:$0xf]
        %v5400 = vld [vmem:[%s5385 + $0x38] sm:$0xf]
        %v5401 = vld [vmem:[%s5385 + $0x3c] sm:$0xf]
        %v5402 = vunpack.c.l.b16 %v5286
        %v5403 = vunpack.c.l.b16 %v5300
        %v5404 = vunpack.c.l.b16 %v5314
        %v5405 = vunpack.c.l.b16 %v5328
        %v5406 = vunpack.c.l.b16 %v5342
        %v5407 = vunpack.c.l.b16 %v5356
        %v5408 = vunpack.c.l.b16 %v5370
        %v5409 = vunpack.c.l.b16 %v5384
        %v5410 = vpack.c.b16 %v5403, %v5402
        %v5411 = vpack.c.b16 %v5405, %v5404
        %v5412 = vpack.c.b16 %v5407, %v5406
        %v5413 = vpack.c.b16 %v5409, %v5408
        %v5434 = vunpack.c.l.b16 %v5386
        %v5435 = vunpack.c.l.b16 %v5387
        %v5436 = vunpack.c.l.b16 %v5388
        %v5437 = vunpack.c.l.b16 %v5389
        %v5438 = vunpack.c.l.b16 %v5390
        %v5439 = vunpack.c.l.b16 %v5391
        %v5440 = vunpack.c.l.b16 %v5392
        %v5441 = vunpack.c.l.b16 %v5393
        %v5442 = vunpack.c.l.b16 %v5394
        %v5443 = vunpack.c.l.b16 %v5395
        %v5444 = vunpack.c.l.b16 %v5396
        %v5445 = vunpack.c.l.b16 %v5397
        %v5446 = vunpack.c.l.b16 %v5398
        %v5447 = vunpack.c.l.b16 %v5399
        %v5448 = vunpack.c.l.b16 %v5400
        %v5449 = vunpack.c.l.b16 %v5401
        %v5450 = vpack.c.b16 %v5435, %v5434
        %v5451 = vpack.c.b16 %v5437, %v5436
        %v5452 = vpack.c.b16 %v5439, %v5438
        %v5453 = vpack.c.b16 %v5441, %v5440
        %v5454 = vpack.c.b16 %v5443, %v5442
        %v5455 = vpack.c.b16 %v5445, %v5444
        %v5456 = vpack.c.b16 %v5447, %v5446
        %v5457 = vpack.c.b16 %v5449, %v5448
        %5466 = vmatprep.subr.bf16.mxu0 0
        %5467 = vmatpush1.bf16.msra.mxu0 %v5450
        %5468 = vmatprep.subr.bf16.mxu0 0
        %5469 = vmatpush1.bf16.msra.mxu0 %v5451
        %5470 = vmatprep.subr.bf16.mxu0 0
        %5471 = vmatpush1.bf16.msra.mxu0 %v5452
        %5472 = vmatprep.subr.bf16.mxu0 0
        %5473 = vmatpush1.bf16.msra.mxu0 %v5453
        %5474 = vmatprep.subr.bf16.mxu0 0
        %5475 = vmatpush1.bf16.msra.mxu0 %v5454
        %5476 = vmatprep.subr.bf16.mxu0 0
        %5477 = vmatpush1.bf16.msra.mxu0 %v5455
        %5478 = vmatprep.subr.bf16.mxu0 0
        %5479 = vmatpush1.bf16.msra.mxu0 %v5456
        %5480 = vmatprep.subr.bf16.mxu0 0
        %5481 = vmatpush1.bf16.msra.mxu0 %v5457
        %5482 = vmatprep.subr.bf16.mxu0 0
        %5483 = vmatpush1.bf16.msra.mxu0 0
        %5484 = vmatprep.subr.bf16.mxu0 0
        %5485 = vmatpush1.bf16.msra.mxu0 0
        %5486 = vmatprep.subr.bf16.mxu0 0
        %5487 = vmatpush1.bf16.msra.mxu0 0
        %5488 = vmatprep.subr.bf16.mxu0 0
        %5489 = vmatpush1.bf16.msra.mxu0 0
        %5490 = vmatprep.subr.bf16.mxu0 0
        %5491 = vmatpush1.bf16.msra.mxu0 0
        %5492 = vmatprep.subr.bf16.mxu0 0
        %5493 = vmatpush1.bf16.msra.mxu0 0
        %5494 = vmatprep.subr.bf16.mxu0 0
        %5495 = vmatpush1.bf16.msra.mxu0 0
        %5496 = vmatprep.subr.bf16.mxu0 0
        %5497 = vmatpush1.bf16.msra.mxu0 0
        %5498 = vmatprep.mubr.bf16.mxu0 0
        %5499 = vmatmul.mubr.bf16.gmra.mrb[0].mxu0 %v5410
        %v5500 = vpop.f32.mrb[0].mxu0
        %v5501 = vadd.f32 0.0, %v5500
        %v5502 = vpop.f32.mrb[0].mxu0
        %v5503 = vpop.f32.mrb[0].mxu0
        %v5504 = vadd.f32 0.0, %v5503
        %v5505 = vpop.f32.mrb[0].mxu0
        %5506 = vmatprep.mubr.bf16.mxu0 0
        %5507 = vmatmul.mubr.bf16.gmra.mrb[0].mxu0 %v5411
        %v5508 = vpop.f32.mrb[0].mxu0
        %v5509 = vadd.f32 0.0, %v5508
        %v5510 = vpop.f32.mrb[0].mxu0
        %v5511 = vpop.f32.mrb[0].mxu0
        %v5512 = vadd.f32 0.0, %v5511
        %v5513 = vpop.f32.mrb[0].mxu0
        %5514 = vmatprep.mubr.bf16.mxu0 0
        %5515 = vmatmul.mubr.bf16.gmra.mrb[0].mxu0 %v5412
        %v5516 = vpop.f32.mrb[0].mxu0
        %v5517 = vadd.f32 0.0, %v5516
        %v5518 = vpop.f32.mrb[0].mxu0
        %v5519 = vpop.f32.mrb[0].mxu0
        %v5520 = vadd.f32 0.0, %v5519
        %v5521 = vpop.f32.mrb[0].mxu0
        %5522 = vmatprep.mubr.bf16.mxu0 0
        %5523 = vmatmul.mubr.bf16.gmra.mrb[0].mxu0 %v5413
        %v5524 = vpop.f32.mrb[0].mxu0
        %v5525 = vadd.f32 0.0, %v5524
        %v5526 = vpop.f32.mrb[0].mxu0
        %v5527 = vpop.f32.mrb[0].mxu0
        %v5528 = vadd.f32 0.0, %v5527
        %v5529 = vpop.f32.mrb[0].mxu0
        %5530 = vdwg.mxu0
        %v5539 = vunpack.c.l.b16 %v5241
        %v5540 = vunpack.c.l.b16 %v5242
        %v5541 = vunpack.c.l.b16 %v5243
        %v5542 = vunpack.c.l.b16 %v5244
        %v5543 = vunpack.c.l.b16 %v5245
        %v5544 = vunpack.c.l.b16 %v5246
        %v5545 = vunpack.c.l.b16 %v5247
        %v5546 = vunpack.c.l.b16 %v5248
        %v5547 = vpack.c.b16 %v5540, %v5539
        %v5548 = vpack.c.b16 %v5542, %v5541
        %v5549 = vpack.c.b16 %v5544, %v5543
        %v5550 = vpack.c.b16 %v5546, %v5545
        %v5571 = vunpack.c.l.b16 %v5249
        %v5572 = vunpack.c.l.b16 %v5250
        %v5573 = vunpack.c.l.b16 %v5251
        %v5574 = vunpack.c.l.b16 %v5252
        %v5575 = vunpack.c.l.b16 %v5253
        %v5576 = vunpack.c.l.b16 %v5254
        %v5577 = vunpack.c.l.b16 %v5255
        %v5578 = vunpack.c.l.b16 %v5256
        %v5579 = vunpack.c.l.b16 %v5257
        %v5580 = vunpack.c.l.b16 %v5258
        %v5581 = vunpack.c.l.b16 %v5259
        %v5582 = vunpack.c.l.b16 %v5260
        %v5583 = vunpack.c.l.b16 %v5261
        %v5584 = vunpack.c.l.b16 %v5262
        %v5585 = vunpack.c.l.b16 %v5263
        %v5586 = vunpack.c.l.b16 %v5264
        %v5587 = vpack.c.b16 %v5572, %v5571
        %v5588 = vpack.c.b16 %v5574, %v5573
        %v5589 = vpack.c.b16 %v5576, %v5575
        %v5590 = vpack.c.b16 %v5578, %v5577
        %v5591 = vpack.c.b16 %v5580, %v5579
        %v5592 = vpack.c.b16 %v5582, %v5581
        %v5593 = vpack.c.b16 %v5584, %v5583
        %v5594 = vpack.c.b16 %v5586, %v5585
        %5603 = vmatprep.subr.bf16.mxu0 0
        %5604 = vmatpush1.bf16.msra.mxu0 %v5587
        %5605 = vmatprep.subr.bf16.mxu0 0
        %5606 = vmatpush1.bf16.msra.mxu0 %v5588
        %5607 = vmatprep.subr.bf16.mxu0 0
        %5608 = vmatpush1.bf16.msra.mxu0 %v5589
        %5609 = vmatprep.subr.bf16.mxu0 0
        %5610 = vmatpush1.bf16.msra.mxu0 %v5590
        %5611 = vmatprep.subr.bf16.mxu0 0
        %5612 = vmatpush1.bf16.msra.mxu0 %v5591
        %5613 = vmatprep.subr.bf16.mxu0 0
        %5614 = vmatpush1.bf16.msra.mxu0 %v5592
        %5615 = vmatprep.subr.bf16.mxu0 0
        %5616 = vmatpush1.bf16.msra.mxu0 %v5593
        %5617 = vmatprep.subr.bf16.mxu0 0
        %5618 = vmatpush1.bf16.msra.mxu0 %v5594
        %5619 = vmatprep.subr.bf16.mxu0 0
        %5620 = vmatpush1.bf16.msra.mxu0 0
        %5621 = vmatprep.subr.bf16.mxu0 0
        %5622 = vmatpush1.bf16.msra.mxu0 0
        %5623 = vmatprep.subr.bf16.mxu0 0
        %5624 = vmatpush1.bf16.msra.mxu0 0
        %5625 = vmatprep.subr.bf16.mxu0 0
        %5626 = vmatpush1.bf16.msra.mxu0 0
        %5627 = vmatprep.subr.bf16.mxu0 0
        %5628 = vmatpush1.bf16.msra.mxu0 0
        %5629 = vmatprep.subr.bf16.mxu0 0
        %5630 = vmatpush1.bf16.msra.mxu0 0
        %5631 = vmatprep.subr.bf16.mxu0 0
        %5632 = vmatpush1.bf16.msra.mxu0 0
        %5633 = vmatprep.subr.bf16.mxu0 0
        %5634 = vmatpush1.bf16.msra.mxu0 0
        %5635 = vmatprep.mubr.bf16.mxu0 0
        %5636 = vmatmul.mubr.bf16.gmra.mrb[0].mxu0 %v5547
        %v5637 = vpop.f32.mrb[0].mxu0
        %v5638 = vadd.f32 %v5501, %v5637
        %v5639 = vpop.f32.mrb[0].mxu0
        %v5640 = vpop.f32.mrb[0].mxu0
        %v5641 = vadd.f32 %v5504, %v5640
        %v5642 = vpop.f32.mrb[0].mxu0
        %5643 = vmatprep.mubr.bf16.mxu0 0
        %5644 = vmatmul.mubr.bf16.gmra.mrb[0].mxu0 %v5548
        %v5645 = vpop.f32.mrb[0].mxu0
        %v5646 = vadd.f32 %v5509, %v5645
        %v5647 = vpop.f32.mrb[0].mxu0
        %v5648 = vpop.f32.mrb[0].mxu0
        %v5649 = vadd.f32 %v5512, %v5648
        %v5650 = vpop.f32.mrb[0].mxu0
        %5651 = vmatprep.mubr.bf16.mxu0 0
        %5652 = vmatmul.mubr.bf16.gmra.mrb[0].mxu0 %v5549
        %v5653 = vpop.f32.mrb[0].mxu0
        %v5654 = vadd.f32 %v5517, %v5653
        %v5655 = vpop.f32.mrb[0].mxu0
        %v5656 = vpop.f32.mrb[0].mxu0
        %v5657 = vadd.f32 %v5520, %v5656
        %v5658 = vpop.f32.mrb[0].mxu0
        %5659 = vmatprep.mubr.bf16.mxu0 0
        %5660 = vmatmul.mubr.bf16.gmra.mrb[0].mxu0 %v5550
        %v5661 = vpop.f32.mrb[0].mxu0
        %v5662 = vadd.f32 %v5525, %v5661
        %v5663 = vpop.f32.mrb[0].mxu0
        %v5664 = vpop.f32.mrb[0].mxu0
        %v5665 = vadd.f32 %v5528, %v5664
        %v5666 = vpop.f32.mrb[0].mxu0
        %5667 = vdwg.mxu0
        %v5668 = vld [vmem:[#allocation4] sm:$0xe]
        %v5669 = vld [vmem:[#allocation4 + $0x8] sm:$0xe]
        %v5670 = vld [vmem:[#allocation4 + $0x10] sm:$0xe]
        %v5671 = vld [vmem:[#allocation4 + $0x18] sm:$0xe]
        %v5672 = vld [vmem:[#allocation4 + $0x20] sm:$0xe]
        %v5673 = vld [vmem:[#allocation4 + $0x28] sm:$0xe]
        %v5674 = vld [vmem:[#allocation4 + $0x30] sm:$0xe]
        %v5675 = vld [vmem:[#allocation4 + $0x38] sm:$0xe]
        %v5692 = vrot.slane %v5668, 5
        %v5693 = vrot.slane %v5692, 4
        %v5694 = vrot.slane %v5265, 5
        %v5695 = vsel %vm1842, %v5693, %v5694
        %v5696 = vrot.slane %v5669, 5
        %v5697 = vrot.slane %v5696, 4
        %v5698 = vrot.slane %v5266, 5
        %v5699 = vsel %vm1842, %v5697, %v5698
        %v5700 = vrot.slane %v5670, 5
        %v5701 = vrot.slane %v5700, 4
        %v5702 = vrot.slane %v5267, 5
        %v5703 = vsel %vm1842, %v5701, %v5702
        %v5704 = vrot.slane %v5671, 5
        %v5705 = vrot.slane %v5704, 4
        %v5706 = vrot.slane %v5268, 5
        %v5707 = vsel %vm1842, %v5705, %v5706
        %v5708 = vrot.slane %v5672, 5
        %v5709 = vrot.slane %v5708, 4
        %v5710 = vrot.slane %v5269, 5
        %v5711 = vsel %vm1842, %v5709, %v5710
        %v5712 = vrot.slane %v5673, 5
        %v5713 = vrot.slane %v5712, 4
        %v5714 = vrot.slane %v5270, 5
        %v5715 = vsel %vm1842, %v5713, %v5714
        %v5716 = vrot.slane %v5674, 5
        %v5717 = vrot.slane %v5716, 4
        %v5718 = vrot.slane %v5271, 5
        %v5719 = vsel %vm1842, %v5717, %v5718
        %v5720 = vrot.slane %v5675, 5
        %v5721 = vrot.slane %v5720, 4
        %v5722 = vrot.slane %v5272, 5
        %v5723 = vsel %vm1842, %v5721, %v5722
        %s5724 = scalar_lea.vmem %s5, 128
        %v5725 = vld [vmem:[%s5724] sm:$0xf]
        %v5726 = vld [vmem:[%s5724 + $0x4] sm:$0xf]
        %v5727 = vld [vmem:[%s5724 + $0x8] sm:$0xf]
        %v5728 = vld [vmem:[%s5724 + $0xc] sm:$0xf]
        %v5729 = vld [vmem:[%s5724 + $0x10] sm:$0xf]
        %v5730 = vld [vmem:[%s5724 + $0x14] sm:$0xf]
        %v5731 = vld [vmem:[%s5724 + $0x18] sm:$0xf]
        %v5732 = vld [vmem:[%s5724 + $0x1c] sm:$0xf]
        %v5733 = vld [vmem:[%s5724 + $0x20] sm:$0xf]
        %v5734 = vld [vmem:[%s5724 + $0x24] sm:$0xf]
        %v5735 = vld [vmem:[%s5724 + $0x28] sm:$0xf]
        %v5736 = vld [vmem:[%s5724 + $0x2c] sm:$0xf]
        %v5737 = vld [vmem:[%s5724 + $0x30] sm:$0xf]
        %v5738 = vld [vmem:[%s5724 + $0x34] sm:$0xf]
        %v5739 = vld [vmem:[%s5724 + $0x38] sm:$0xf]
        %v5740 = vld [vmem:[%s5724 + $0x3c] sm:$0xf]
        %v5741 = vunpack.c.l.b16 %v5695
        %v5742 = vunpack.c.l.b16 %v5699
        %v5743 = vunpack.c.l.b16 %v5703
        %v5744 = vunpack.c.l.b16 %v5707
        %v5745 = vunpack.c.l.b16 %v5711
        %v5746 = vunpack.c.l.b16 %v5715
        %v5747 = vunpack.c.l.b16 %v5719
        %v5748 = vunpack.c.l.b16 %v5723
        %v5749 = vpack.c.b16 %v5742, %v5741
        %v5750 = vpack.c.b16 %v5744, %v5743
        %v5751 = vpack.c.b16 %v5746, %v5745
        %v5752 = vpack.c.b16 %v5748, %v5747
        %v5773 = vunpack.c.l.b16 %v5725
        %v5774 = vunpack.c.l.b16 %v5726
        %v5775 = vunpack.c.l.b16 %v5727
        %v5776 = vunpack.c.l.b16 %v5728
        %v5777 = vunpack.c.l.b16 %v5729
        %v5778 = vunpack.c.l.b16 %v5730
        %v5779 = vunpack.c.l.b16 %v5731
        %v5780 = vunpack.c.l.b16 %v5732
        %v5781 = vunpack.c.l.b16 %v5733
        %v5782 = vunpack.c.l.b16 %v5734
        %v5783 = vunpack.c.l.b16 %v5735
        %v5784 = vunpack.c.l.b16 %v5736
        %v5785 = vunpack.c.l.b16 %v5737
        %v5786 = vunpack.c.l.b16 %v5738
        %v5787 = vunpack.c.l.b16 %v5739
        %v5788 = vunpack.c.l.b16 %v5740
        %v5789 = vpack.c.b16 %v5774, %v5773
        %v5790 = vpack.c.b16 %v5776, %v5775
        %v5791 = vpack.c.b16 %v5778, %v5777
        %v5792 = vpack.c.b16 %v5780, %v5779
        %v5793 = vpack.c.b16 %v5782, %v5781
        %v5794 = vpack.c.b16 %v5784, %v5783
        %v5795 = vpack.c.b16 %v5786, %v5785
        %v5796 = vpack.c.b16 %v5788, %v5787
        %5805 = vmatprep.subr.bf16.mxu0 0
        %5806 = vmatpush1.bf16.msra.mxu0 %v5789
        %5807 = vmatprep.subr.bf16.mxu0 0
        %5808 = vmatpush1.bf16.msra.mxu0 %v5790
        %5809 = vmatprep.subr.bf16.mxu0 0
        %5810 = vmatpush1.bf16.msra.mxu0 %v5791
        %5811 = vmatprep.subr.bf16.mxu0 0
        %5812 = vmatpush1.bf16.msra.mxu0 %v5792
        %5813 = vmatprep.subr.bf16.mxu0 0
        %5814 = vmatpush1.bf16.msra.mxu0 %v5793
        %5815 = vmatprep.subr.bf16.mxu0 0
        %5816 = vmatpush1.bf16.msra.mxu0 %v5794
        %5817 = vmatprep.subr.bf16.mxu0 0
        %5818 = vmatpush1.bf16.msra.mxu0 %v5795
        %5819 = vmatprep.subr.bf16.mxu0 0
        %5820 = vmatpush1.bf16.msra.mxu0 %v5796
        %5821 = vmatprep.subr.bf16.mxu0 0
        %5822 = vmatpush1.bf16.msra.mxu0 0
        %5823 = vmatprep.subr.bf16.mxu0 0
        %5824 = vmatpush1.bf16.msra.mxu0 0
        %5825 = vmatprep.subr.bf16.mxu0 0
        %5826 = vmatpush1.bf16.msra.mxu0 0
        %5827 = vmatprep.subr.bf16.mxu0 0
        %5828 = vmatpush1.bf16.msra.mxu0 0
        %5829 = vmatprep.subr.bf16.mxu0 0
        %5830 = vmatpush1.bf16.msra.mxu0 0
        %5831 = vmatprep.subr.bf16.mxu0 0
        %5832 = vmatpush1.bf16.msra.mxu0 0
        %5833 = vmatprep.subr.bf16.mxu0 0
        %5834 = vmatpush1.bf16.msra.mxu0 0
        %5835 = vmatprep.subr.bf16.mxu0 0
        %5836 = vmatpush1.bf16.msra.mxu0 0
        %5837 = vmatprep.mubr.bf16.mxu0 0
        %5838 = vmatmul.mubr.bf16.gmra.mrb[0].mxu0 %v5749
        %v5839 = vpop.f32.mrb[0].mxu0
        %v5840 = vadd.f32 0.0, %v5839
        %v5841 = vpop.f32.mrb[0].mxu0
        %v5842 = vpop.f32.mrb[0].mxu0
        %v5843 = vadd.f32 0.0, %v5842
        %v5844 = vpop.f32.mrb[0].mxu0
        %5845 = vmatprep.mubr.bf16.mxu0 0
        %5846 = vmatmul.mubr.bf16.gmra.mrb[0].mxu0 %v5750
        %v5847 = vpop.f32.mrb[0].mxu0
        %v5848 = vadd.f32 0.0, %v5847
        %v5849 = vpop.f32.mrb[0].mxu0
        %v5850 = vpop.f32.mrb[0].mxu0
        %v5851 = vadd.f32 0.0, %v5850
        %v5852 = vpop.f32.mrb[0].mxu0
        %5853 = vmatprep.mubr.bf16.mxu0 0
        %5854 = vmatmul.mubr.bf16.gmra.mrb[0].mxu0 %v5751
        %v5855 = vpop.f32.mrb[0].mxu0
        %v5856 = vadd.f32 0.0, %v5855
        %v5857 = vpop.f32.mrb[0].mxu0
        %v5858 = vpop.f32.mrb[0].mxu0
        %v5859 = vadd.f32 0.0, %v5858
        %v5860 = vpop.f32.mrb[0].mxu0
        %5861 = vmatprep.mubr.bf16.mxu0 0
        %5862 = vmatmul.mubr.bf16.gmra.mrb[0].mxu0 %v5752
        %v5863 = vpop.f32.mrb[0].mxu0
        %v5864 = vadd.f32 0.0, %v5863
        %v5865 = vpop.f32.mrb[0].mxu0
        %v5866 = vpop.f32.mrb[0].mxu0
        %v5867 = vadd.f32 0.0, %v5866
        %v5868 = vpop.f32.mrb[0].mxu0
        %5869 = vdwg.mxu0
        %v5870 = vadd.f32 %v5638, %v5840
        %v5871 = vadd.f32 %v5641, %v5843
        %v5872 = vadd.f32 %v5646, %v5848
        %v5873 = vadd.f32 %v5649, %v5851
        %v5874 = vadd.f32 %v5654, %v5856
        %v5875 = vadd.f32 %v5657, %v5859
        %v5876 = vadd.f32 %v5662, %v5864
        %v5877 = vadd.f32 %v5665, %v5867
        %v5878 = vld [vmem:[%s5192] sm:$0xf]
        %v5879 = vld [vmem:[%s5192 + $0x8] sm:$0xf]
        %v5880 = vld [vmem:[%s5192 + $0x10] sm:$0xf]
        %v5881 = vld [vmem:[%s5192 + $0x18] sm:$0xf]
        %v5882 = vld [vmem:[%s5192 + $0x20] sm:$0xf]
        %v5883 = vld [vmem:[%s5192 + $0x28] sm:$0xf]
        %v5884 = vld [vmem:[%s5192 + $0x30] sm:$0xf]
        %v5885 = vld [vmem:[%s5192 + $0x38] sm:$0xf]
        %s5886 = scalar_lea.vmem %s5, 192
        %v5887 = vld [vmem:[%s5886] sm:$0xf]
        %v5888 = vld [vmem:[%s5886 + $0x4] sm:$0xf]
        %v5889 = vld [vmem:[%s5886 + $0x8] sm:$0xf]
        %v5890 = vld [vmem:[%s5886 + $0xc] sm:$0xf]
        %v5891 = vld [vmem:[%s5886 + $0x10] sm:$0xf]
        %v5892 = vld [vmem:[%s5886 + $0x14] sm:$0xf]
        %v5893 = vld [vmem:[%s5886 + $0x18] sm:$0xf]
        %v5894 = vld [vmem:[%s5886 + $0x1c] sm:$0xf]
        %v5895 = vld [vmem:[%s5886 + $0x20] sm:$0xf]
        %v5896 = vld [vmem:[%s5886 + $0x24] sm:$0xf]
        %v5897 = vld [vmem:[%s5886 + $0x28] sm:$0xf]
        %v5898 = vld [vmem:[%s5886 + $0x2c] sm:$0xf]
        %v5899 = vld [vmem:[%s5886 + $0x30] sm:$0xf]
        %v5900 = vld [vmem:[%s5886 + $0x34] sm:$0xf]
        %v5901 = vld [vmem:[%s5886 + $0x38] sm:$0xf]
        %v5902 = vld [vmem:[%s5886 + $0x3c] sm:$0xf]
        %v5911 = vunpack.c.l.b16 %v5878
        %v5912 = vunpack.c.l.b16 %v5879
        %v5913 = vunpack.c.l.b16 %v5880
        %v5914 = vunpack.c.l.b16 %v5881
        %v5915 = vunpack.c.l.b16 %v5882
        %v5916 = vunpack.c.l.b16 %v5883
        %v5917 = vunpack.c.l.b16 %v5884
        %v5918 = vunpack.c.l.b16 %v5885
        %v5919 = vpack.c.b16 %v5912, %v5911
        %v5920 = vpack.c.b16 %v5914, %v5913
        %v5921 = vpack.c.b16 %v5916, %v5915
        %v5922 = vpack.c.b16 %v5918, %v5917
        %v5943 = vunpack.c.l.b16 %v5887
        %v5944 = vunpack.c.l.b16 %v5888
        %v5945 = vunpack.c.l.b16 %v5889
        %v5946 = vunpack.c.l.b16 %v5890
        %v5947 = vunpack.c.l.b16 %v5891
        %v5948 = vunpack.c.l.b16 %v5892
        %v5949 = vunpack.c.l.b16 %v5893
        %v5950 = vunpack.c.l.b16 %v5894
        %v5951 = vunpack.c.l.b16 %v5895
        %v5952 = vunpack.c.l.b16 %v5896
        %v5953 = vunpack.c.l.b16 %v5897
        %v5954 = vunpack.c.l.b16 %v5898
        %v5955 = vunpack.c.l.b16 %v5899
        %v5956 = vunpack.c.l.b16 %v5900
        %v5957 = vunpack.c.l.b16 %v5901
        %v5958 = vunpack.c.l.b16 %v5902
        %v5959 = vpack.c.b16 %v5944, %v5943
        %v5960 = vpack.c.b16 %v5946, %v5945
        %v5961 = vpack.c.b16 %v5948, %v5947
        %v5962 = vpack.c.b16 %v5950, %v5949
        %v5963 = vpack.c.b16 %v5952, %v5951
        %v5964 = vpack.c.b16 %v5954, %v5953
        %v5965 = vpack.c.b16 %v5956, %v5955
        %v5966 = vpack.c.b16 %v5958, %v5957
        %5975 = vmatprep.subr.bf16.mxu0 0
        %5976 = vmatpush1.bf16.msra.mxu0 %v5959
        %5977 = vmatprep.subr.bf16.mxu0 0
        %5978 = vmatpush1.bf16.msra.mxu0 %v5960
        %5979 = vmatprep.subr.bf16.mxu0 0
        %5980 = vmatpush1.bf16.msra.mxu0 %v5961
        %5981 = vmatprep.subr.bf16.mxu0 0
        %5982 = vmatpush1.bf16.msra.mxu0 %v5962
        %5983 = vmatprep.subr.bf16.mxu0 0
        %5984 = vmatpush1.bf16.msra.mxu0 %v5963
        %5985 = vmatprep.subr.bf16.mxu0 0
        %5986 = vmatpush1.bf16.msra.mxu0 %v5964
        %5987 = vmatprep.subr.bf16.mxu0 0
        %5988 = vmatpush1.bf16.msra.mxu0 %v5965
        %5989 = vmatprep.subr.bf16.mxu0 0
        %5990 = vmatpush1.bf16.msra.mxu0 %v5966
        %5991 = vmatprep.subr.bf16.mxu0 0
        %5992 = vmatpush1.bf16.msra.mxu0 0
        %5993 = vmatprep.subr.bf16.mxu0 0
        %5994 = vmatpush1.bf16.msra.mxu0 0
        %5995 = vmatprep.subr.bf16.mxu0 0
        %5996 = vmatpush1.bf16.msra.mxu0 0
        %5997 = vmatprep.subr.bf16.mxu0 0
        %5998 = vmatpush1.bf16.msra.mxu0 0
        %5999 = vmatprep.subr.bf16.mxu0 0
        %6000 = vmatpush1.bf16.msra.mxu0 0
        %6001 = vmatprep.subr.bf16.mxu0 0
        %6002 = vmatpush1.bf16.msra.mxu0 0
        %6003 = vmatprep.subr.bf16.mxu0 0
        %6004 = vmatpush1.bf16.msra.mxu0 0
        %6005 = vmatprep.subr.bf16.mxu0 0
        %6006 = vmatpush1.bf16.msra.mxu0 0
        %6007 = vmatprep.mubr.bf16.mxu0 0
        %6008 = vmatmul.mubr.bf16.gmra.mrb[0].mxu0 %v5919
        %v6009 = vpop.f32.mrb[0].mxu0
        %v6010 = vadd.f32 0.0, %v6009
        %v6011 = vpop.f32.mrb[0].mxu0
        %v6012 = vpop.f32.mrb[0].mxu0
        %v6013 = vadd.f32 0.0, %v6012
        %v6014 = vpop.f32.mrb[0].mxu0
        %6015 = vmatprep.mubr.bf16.mxu0 0
        %6016 = vmatmul.mubr.bf16.gmra.mrb[0].mxu0 %v5920
        %v6017 = vpop.f32.mrb[0].mxu0
        %v6018 = vadd.f32 0.0, %v6017
        %v6019 = vpop.f32.mrb[0].mxu0
        %v6020 = vpop.f32.mrb[0].mxu0
        %v6021 = vadd.f32 0.0, %v6020
        %v6022 = vpop.f32.mrb[0].mxu0
        %6023 = vmatprep.mubr.bf16.mxu0 0
        %6024 = vmatmul.mubr.bf16.gmra.mrb[0].mxu0 %v5921
        %v6025 = vpop.f32.mrb[0].mxu0
        %v6026 = vadd.f32 0.0, %v6025
        %v6027 = vpop.f32.mrb[0].mxu0
        %v6028 = vpop.f32.mrb[0].mxu0
        %v6029 = vadd.f32 0.0, %v6028
        %v6030 = vpop.f32.mrb[0].mxu0
        %6031 = vmatprep.mubr.bf16.mxu0 0
        %6032 = vmatmul.mubr.bf16.gmra.mrb[0].mxu0 %v5922
        %v6033 = vpop.f32.mrb[0].mxu0
        %v6034 = vadd.f32 0.0, %v6033
        %v6035 = vpop.f32.mrb[0].mxu0
        %v6036 = vpop.f32.mrb[0].mxu0
        %v6037 = vadd.f32 0.0, %v6036
        %v6038 = vpop.f32.mrb[0].mxu0
        %6039 = vdwg.mxu0
        %v6040 = vadd.f32 %v5870, %v6010
        %v6041 = vadd.f32 %v5871, %v6013
        %v6042 = vadd.f32 %v5872, %v6018
        %v6043 = vadd.f32 %v5873, %v6021
        %v6044 = vadd.f32 %v5874, %v6026
        %v6045 = vadd.f32 %v5875, %v6029
        %v6046 = vadd.f32 %v5876, %v6034
        %v6047 = vadd.f32 %v5877, %v6037
        %v6048 = vld [vmem:[%s5192] sm:$0xf]
        %v6049 = vld [vmem:[%s5192 + $0x4] sm:$0x1]
        %v6050 = vld [vmem:[%s5192 + $0x8] sm:$0xf]
        %v6051 = vld [vmem:[%s5192 + $0xc] sm:$0x1]
        %v6052 = vld [vmem:[%s5192 + $0x10] sm:$0xf]
        %v6053 = vld [vmem:[%s5192 + $0x14] sm:$0x1]
        %v6054 = vld [vmem:[%s5192 + $0x18] sm:$0xf]
        %v6055 = vld [vmem:[%s5192 + $0x1c] sm:$0x1]
        %v6056 = vld [vmem:[%s5192 + $0x20] sm:$0xf]
        %v6057 = vld [vmem:[%s5192 + $0x24] sm:$0x1]
        %v6058 = vld [vmem:[%s5192 + $0x28] sm:$0xf]
        %v6059 = vld [vmem:[%s5192 + $0x2c] sm:$0x1]
        %v6060 = vld [vmem:[%s5192 + $0x30] sm:$0xf]
        %v6061 = vld [vmem:[%s5192 + $0x34] sm:$0x1]
        %v6062 = vld [vmem:[%s5192 + $0x38] sm:$0xf]
        %v6063 = vld [vmem:[%s5192 + $0x3c] sm:$0x1]
        %v6065 = vshrl.u32 %v6048, 16
        %v6067 = vrot.slane %v6065, 4
        %v6068 = vshll.u32 %v6048, 16
        %v6070 = vrot.slane %v6068, 5
        %v6071 = vor.u32 %v6067, %v6070
        %v6072 = vrot.slane %v6071, 4
        %v6074 = vshll.u32 %v6049, 16
        %v6076 = vrot.slane %v6074, 5
        %v6077 = vsel %vm1252, %v6072, %v6076
        %v6079 = vshrl.u32 %v6050, 16
        %v6081 = vrot.slane %v6079, 4
        %v6082 = vshll.u32 %v6050, 16
        %v6084 = vrot.slane %v6082, 5
        %v6085 = vor.u32 %v6081, %v6084
        %v6086 = vrot.slane %v6085, 4
        %v6088 = vshll.u32 %v6051, 16
        %v6090 = vrot.slane %v6088, 5
        %v6091 = vsel %vm1252, %v6086, %v6090
        %v6093 = vshrl.u32 %v6052, 16
        %v6095 = vrot.slane %v6093, 4
        %v6096 = vshll.u32 %v6052, 16
        %v6098 = vrot.slane %v6096, 5
        %v6099 = vor.u32 %v6095, %v6098
        %v6100 = vrot.slane %v6099, 4
        %v6102 = vshll.u32 %v6053, 16
        %v6104 = vrot.slane %v6102, 5
        %v6105 = vsel %vm1252, %v6100, %v6104
        %v6107 = vshrl.u32 %v6054, 16
        %v6109 = vrot.slane %v6107, 4
        %v6110 = vshll.u32 %v6054, 16
        %v6112 = vrot.slane %v6110, 5
        %v6113 = vor.u32 %v6109, %v6112
        %v6114 = vrot.slane %v6113, 4
        %v6116 = vshll.u32 %v6055, 16
        %v6118 = vrot.slane %v6116, 5
        %v6119 = vsel %vm1252, %v6114, %v6118
        %v6121 = vshrl.u32 %v6056, 16
        %v6123 = vrot.slane %v6121, 4
        %v6124 = vshll.u32 %v6056, 16
        %v6126 = vrot.slane %v6124, 5
        %v6127 = vor.u32 %v6123, %v6126
        %v6128 = vrot.slane %v6127, 4
        %v6130 = vshll.u32 %v6057, 16
        %v6132 = vrot.slane %v6130, 5
        %v6133 = vsel %vm1252, %v6128, %v6132
        %v6135 = vshrl.u32 %v6058, 16
        %v6137 = vrot.slane %v6135, 4
        %v6138 = vshll.u32 %v6058, 16
        %v6140 = vrot.slane %v6138, 5
        %v6141 = vor.u32 %v6137, %v6140
        %v6142 = vrot.slane %v6141, 4
        %v6144 = vshll.u32 %v6059, 16
        %v6146 = vrot.slane %v6144, 5
        %v6147 = vsel %vm1252, %v6142, %v6146
        %v6149 = vshrl.u32 %v6060, 16
        %v6151 = vrot.slane %v6149, 4
        %v6152 = vshll.u32 %v6060, 16
        %v6154 = vrot.slane %v6152, 5
        %v6155 = vor.u32 %v6151, %v6154
        %v6156 = vrot.slane %v6155, 4
        %v6158 = vshll.u32 %v6061, 16
        %v6160 = vrot.slane %v6158, 5
        %v6161 = vsel %vm1252, %v6156, %v6160
        %v6163 = vshrl.u32 %v6062, 16
        %v6165 = vrot.slane %v6163, 4
        %v6166 = vshll.u32 %v6062, 16
        %v6168 = vrot.slane %v6166, 5
        %v6169 = vor.u32 %v6165, %v6168
        %v6170 = vrot.slane %v6169, 4
        %v6172 = vshll.u32 %v6063, 16
        %v6174 = vrot.slane %v6172, 5
        %v6175 = vsel %vm1252, %v6170, %v6174
        %s6176 = scalar_lea.vmem %s5, 256
        %v6177 = vld [vmem:[%s6176] sm:$0xf]
        %v6178 = vld [vmem:[%s6176 + $0x4] sm:$0xf]
        %v6179 = vld [vmem:[%s6176 + $0x8] sm:$0xf]
        %v6180 = vld [vmem:[%s6176 + $0xc] sm:$0xf]
        %v6181 = vld [vmem:[%s6176 + $0x10] sm:$0xf]
        %v6182 = vld [vmem:[%s6176 + $0x14] sm:$0xf]
        %v6183 = vld [vmem:[%s6176 + $0x18] sm:$0xf]
        %v6184 = vld [vmem:[%s6176 + $0x1c] sm:$0xf]
        %v6185 = vld [vmem:[%s6176 + $0x20] sm:$0xf]
        %v6186 = vld [vmem:[%s6176 + $0x24] sm:$0xf]
        %v6187 = vld [vmem:[%s6176 + $0x28] sm:$0xf]
        %v6188 = vld [vmem:[%s6176 + $0x2c] sm:$0xf]
        %v6189 = vld [vmem:[%s6176 + $0x30] sm:$0xf]
        %v6190 = vld [vmem:[%s6176 + $0x34] sm:$0xf]
        %v6191 = vld [vmem:[%s6176 + $0x38] sm:$0xf]
        %v6192 = vld [vmem:[%s6176 + $0x3c] sm:$0xf]
        %v6193 = vunpack.c.l.b16 %v6077
        %v6194 = vunpack.c.l.b16 %v6091
        %v6195 = vunpack.c.l.b16 %v6105
        %v6196 = vunpack.c.l.b16 %v6119
        %v6197 = vunpack.c.l.b16 %v6133
        %v6198 = vunpack.c.l.b16 %v6147
        %v6199 = vunpack.c.l.b16 %v6161
        %v6200 = vunpack.c.l.b16 %v6175
        %v6201 = vpack.c.b16 %v6194, %v6193
        %v6202 = vpack.c.b16 %v6196, %v6195
        %v6203 = vpack.c.b16 %v6198, %v6197
        %v6204 = vpack.c.b16 %v6200, %v6199
        %v6225 = vunpack.c.l.b16 %v6177
        %v6226 = vunpack.c.l.b16 %v6178
        %v6227 = vunpack.c.l.b16 %v6179
        %v6228 = vunpack.c.l.b16 %v6180
        %v6229 = vunpack.c.l.b16 %v6181
        %v6230 = vunpack.c.l.b16 %v6182
        %v6231 = vunpack.c.l.b16 %v6183
        %v6232 = vunpack.c.l.b16 %v6184
        %v6233 = vunpack.c.l.b16 %v6185
        %v6234 = vunpack.c.l.b16 %v6186
        %v6235 = vunpack.c.l.b16 %v6187
        %v6236 = vunpack.c.l.b16 %v6188
        %v6237 = vunpack.c.l.b16 %v6189
        %v6238 = vunpack.c.l.b16 %v6190
        %v6239 = vunpack.c.l.b16 %v6191
        %v6240 = vunpack.c.l.b16 %v6192
        %v6241 = vpack.c.b16 %v6226, %v6225
        %v6242 = vpack.c.b16 %v6228, %v6227
        %v6243 = vpack.c.b16 %v6230, %v6229
        %v6244 = vpack.c.b16 %v6232, %v6231
        %v6245 = vpack.c.b16 %v6234, %v6233
        %v6246 = vpack.c.b16 %v6236, %v6235
        %v6247 = vpack.c.b16 %v6238, %v6237
        %v6248 = vpack.c.b16 %v6240, %v6239
        %6257 = vmatprep.subr.bf16.mxu0 0
        %6258 = vmatpush1.bf16.msra.mxu0 %v6241
        %6259 = vmatprep.subr.bf16.mxu0 0
        %6260 = vmatpush1.bf16.msra.mxu0 %v6242
        %6261 = vmatprep.subr.bf16.mxu0 0
        %6262 = vmatpush1.bf16.msra.mxu0 %v6243
        %6263 = vmatprep.subr.bf16.mxu0 0
        %6264 = vmatpush1.bf16.msra.mxu0 %v6244
        %6265 = vmatprep.subr.bf16.mxu0 0
        %6266 = vmatpush1.bf16.msra.mxu0 %v6245
        %6267 = vmatprep.subr.bf16.mxu0 0
        %6268 = vmatpush1.bf16.msra.mxu0 %v6246
        %6269 = vmatprep.subr.bf16.mxu0 0
        %6270 = vmatpush1.bf16.msra.mxu0 %v6247
        %6271 = vmatprep.subr.bf16.mxu0 0
        %6272 = vmatpush1.bf16.msra.mxu0 %v6248
        %6273 = vmatprep.subr.bf16.mxu0 0
        %6274 = vmatpush1.bf16.msra.mxu0 0
        %6275 = vmatprep.subr.bf16.mxu0 0
        %6276 = vmatpush1.bf16.msra.mxu0 0
        %6277 = vmatprep.subr.bf16.mxu0 0
        %6278 = vmatpush1.bf16.msra.mxu0 0
        %6279 = vmatprep.subr.bf16.mxu0 0
        %6280 = vmatpush1.bf16.msra.mxu0 0
        %6281 = vmatprep.subr.bf16.mxu0 0
        %6282 = vmatpush1.bf16.msra.mxu0 0
        %6283 = vmatprep.subr.bf16.mxu0 0
        %6284 = vmatpush1.bf16.msra.mxu0 0
        %6285 = vmatprep.subr.bf16.mxu0 0
        %6286 = vmatpush1.bf16.msra.mxu0 0
        %6287 = vmatprep.subr.bf16.mxu0 0
        %6288 = vmatpush1.bf16.msra.mxu0 0
        %6289 = vmatprep.mubr.bf16.mxu0 0
        %6290 = vmatmul.mubr.bf16.gmra.mrb[0].mxu0 %v6201
        %v6291 = vpop.f32.mrb[0].mxu0
        %v6292 = vadd.f32 0.0, %v6291
        %v6293 = vpop.f32.mrb[0].mxu0
        %v6294 = vpop.f32.mrb[0].mxu0
        %v6295 = vadd.f32 0.0, %v6294
        %v6296 = vpop.f32.mrb[0].mxu0
        %6297 = vmatprep.mubr.bf16.mxu0 0
        %6298 = vmatmul.mubr.bf16.gmra.mrb[0].mxu0 %v6202
        %v6299 = vpop.f32.mrb[0].mxu0
        %v6300 = vadd.f32 0.0, %v6299
        %v6301 = vpop.f32.mrb[0].mxu0
        %v6302 = vpop.f32.mrb[0].mxu0
        %v6303 = vadd.f32 0.0, %v6302
        %v6304 = vpop.f32.mrb[0].mxu0
        %6305 = vmatprep.mubr.bf16.mxu0 0
        %6306 = vmatmul.mubr.bf16.gmra.mrb[0].mxu0 %v6203
        %v6307 = vpop.f32.mrb[0].mxu0
        %v6308 = vadd.f32 0.0, %v6307
        %v6309 = vpop.f32.mrb[0].mxu0
        %v6310 = vpop.f32.mrb[0].mxu0
        %v6311 = vadd.f32 0.0, %v6310
        %v6312 = vpop.f32.mrb[0].mxu0
        %6313 = vmatprep.mubr.bf16.mxu0 0
        %6314 = vmatmul.mubr.bf16.gmra.mrb[0].mxu0 %v6204
        %v6315 = vpop.f32.mrb[0].mxu0
        %v6316 = vadd.f32 0.0, %v6315
        %v6317 = vpop.f32.mrb[0].mxu0
        %v6318 = vpop.f32.mrb[0].mxu0
        %v6319 = vadd.f32 0.0, %v6318
        %v6320 = vpop.f32.mrb[0].mxu0
        %6321 = vdwg.mxu0
        %v6322 = vadd.f32 %v6040, %v6292
        %v6323 = vadd.f32 %v6041, %v6295
        %v6324 = vadd.f32 %v6042, %v6300
        %v6325 = vadd.f32 %v6043, %v6303
        %v6326 = vadd.f32 %v6044, %v6308
        %v6327 = vadd.f32 %v6045, %v6311
        %v6328 = vadd.f32 %v6046, %v6316
        %v6329 = vadd.f32 %v6047, %v6319
        %v6330 = vld [vmem:[%s5192] sm:$0xe]
        %v6331 = vld [vmem:[%s5192 + $0x8] sm:$0xe]
        %v6332 = vld [vmem:[%s5192 + $0x10] sm:$0xe]
        %v6333 = vld [vmem:[%s5192 + $0x18] sm:$0xe]
        %v6334 = vld [vmem:[%s5192 + $0x20] sm:$0xe]
        %v6335 = vld [vmem:[%s5192 + $0x28] sm:$0xe]
        %v6336 = vld [vmem:[%s5192 + $0x30] sm:$0xe]
        %v6337 = vld [vmem:[%s5192 + $0x38] sm:$0xe]
        %v6354 = vrot.slane %v6330, 5
        %v6355 = vrot.slane %v6354, 4
        %v6356 = vrot.slane %v6049, 5
        %v6357 = vsel %vm1842, %v6355, %v6356
        %v6358 = vrot.slane %v6331, 5
        %v6359 = vrot.slane %v6358, 4
        %v6360 = vrot.slane %v6051, 5
        %v6361 = vsel %vm1842, %v6359, %v6360
        %v6362 = vrot.slane %v6332, 5
        %v6363 = vrot.slane %v6362, 4
        %v6364 = vrot.slane %v6053, 5
        %v6365 = vsel %vm1842, %v6363, %v6364
        %v6366 = vrot.slane %v6333, 5
        %v6367 = vrot.slane %v6366, 4
        %v6368 = vrot.slane %v6055, 5
        %v6369 = vsel %vm1842, %v6367, %v6368
        %v6370 = vrot.slane %v6334, 5
        %v6371 = vrot.slane %v6370, 4
        %v6372 = vrot.slane %v6057, 5
        %v6373 = vsel %vm1842, %v6371, %v6372
        %v6374 = vrot.slane %v6335, 5
        %v6375 = vrot.slane %v6374, 4
        %v6376 = vrot.slane %v6059, 5
        %v6377 = vsel %vm1842, %v6375, %v6376
        %v6378 = vrot.slane %v6336, 5
        %v6379 = vrot.slane %v6378, 4
        %v6380 = vrot.slane %v6061, 5
        %v6381 = vsel %vm1842, %v6379, %v6380
        %v6382 = vrot.slane %v6337, 5
        %v6383 = vrot.slane %v6382, 4
        %v6384 = vrot.slane %v6063, 5
        %v6385 = vsel %vm1842, %v6383, %v6384
        %s6386 = scalar_lea.vmem %s5, 320
        %v6387 = vld [vmem:[%s6386] sm:$0xf]
        %v6388 = vld [vmem:[%s6386 + $0x4] sm:$0xf]
        %v6389 = vld [vmem:[%s6386 + $0x8] sm:$0xf]
        %v6390 = vld [vmem:[%s6386 + $0xc] sm:$0xf]
        %v6391 = vld [vmem:[%s6386 + $0x10] sm:$0xf]
        %v6392 = vld [vmem:[%s6386 + $0x14] sm:$0xf]
        %v6393 = vld [vmem:[%s6386 + $0x18] sm:$0xf]
        %v6394 = vld [vmem:[%s6386 + $0x1c] sm:$0xf]
        %v6395 = vld [vmem:[%s6386 + $0x20] sm:$0xf]
        %v6396 = vld [vmem:[%s6386 + $0x24] sm:$0xf]
        %v6397 = vld [vmem:[%s6386 + $0x28] sm:$0xf]
        %v6398 = vld [vmem:[%s6386 + $0x2c] sm:$0xf]
        %v6399 = vld [vmem:[%s6386 + $0x30] sm:$0xf]
        %v6400 = vld [vmem:[%s6386 + $0x34] sm:$0xf]
        %v6401 = vld [vmem:[%s6386 + $0x38] sm:$0xf]
        %v6402 = vld [vmem:[%s6386 + $0x3c] sm:$0xf]
        %v6403 = vunpack.c.l.b16 %v6357
        %v6404 = vunpack.c.l.b16 %v6361
        %v6405 = vunpack.c.l.b16 %v6365
        %v6406 = vunpack.c.l.b16 %v6369
        %v6407 = vunpack.c.l.b16 %v6373
        %v6408 = vunpack.c.l.b16 %v6377
        %v6409 = vunpack.c.l.b16 %v6381
        %v6410 = vunpack.c.l.b16 %v6385
        %v6411 = vpack.c.b16 %v6404, %v6403
        %v6412 = vpack.c.b16 %v6406, %v6405
        %v6413 = vpack.c.b16 %v6408, %v6407
        %v6414 = vpack.c.b16 %v6410, %v6409
        %v6435 = vunpack.c.l.b16 %v6387
        %v6436 = vunpack.c.l.b16 %v6388
        %v6437 = vunpack.c.l.b16 %v6389
        %v6438 = vunpack.c.l.b16 %v6390
        %v6439 = vunpack.c.l.b16 %v6391
        %v6440 = vunpack.c.l.b16 %v6392
        %v6441 = vunpack.c.l.b16 %v6393
        %v6442 = vunpack.c.l.b16 %v6394
        %v6443 = vunpack.c.l.b16 %v6395
        %v6444 = vunpack.c.l.b16 %v6396
        %v6445 = vunpack.c.l.b16 %v6397
        %v6446 = vunpack.c.l.b16 %v6398
        %v6447 = vunpack.c.l.b16 %v6399
        %v6448 = vunpack.c.l.b16 %v6400
        %v6449 = vunpack.c.l.b16 %v6401
        %v6450 = vunpack.c.l.b16 %v6402
        %v6451 = vpack.c.b16 %v6436, %v6435
        %v6452 = vpack.c.b16 %v6438, %v6437
        %v6453 = vpack.c.b16 %v6440, %v6439
        %v6454 = vpack.c.b16 %v6442, %v6441
        %v6455 = vpack.c.b16 %v6444, %v6443
        %v6456 = vpack.c.b16 %v6446, %v6445
        %v6457 = vpack.c.b16 %v6448, %v6447
        %v6458 = vpack.c.b16 %v6450, %v6449
        %6467 = vmatprep.subr.bf16.mxu0 0
        %6468 = vmatpush1.bf16.msra.mxu0 %v6451
        %6469 = vmatprep.subr.bf16.mxu0 0
        %6470 = vmatpush1.bf16.msra.mxu0 %v6452
        %6471 = vmatprep.subr.bf16.mxu0 0
        %6472 = vmatpush1.bf16.msra.mxu0 %v6453
        %6473 = vmatprep.subr.bf16.mxu0 0
        %6474 = vmatpush1.bf16.msra.mxu0 %v6454
        %6475 = vmatprep.subr.bf16.mxu0 0
        %6476 = vmatpush1.bf16.msra.mxu0 %v6455
        %6477 = vmatprep.subr.bf16.mxu0 0
        %6478 = vmatpush1.bf16.msra.mxu0 %v6456
        %6479 = vmatprep.subr.bf16.mxu0 0
        %6480 = vmatpush1.bf16.msra.mxu0 %v6457
        %6481 = vmatprep.subr.bf16.mxu0 0
        %6482 = vmatpush1.bf16.msra.mxu0 %v6458
        %6483 = vmatprep.subr.bf16.mxu0 0
        %6484 = vmatpush1.bf16.msra.mxu0 0
        %6485 = vmatprep.subr.bf16.mxu0 0
        %6486 = vmatpush1.bf16.msra.mxu0 0
        %6487 = vmatprep.subr.bf16.mxu0 0
        %6488 = vmatpush1.bf16.msra.mxu0 0
        %6489 = vmatprep.subr.bf16.mxu0 0
        %6490 = vmatpush1.bf16.msra.mxu0 0
        %6491 = vmatprep.subr.bf16.mxu0 0
        %6492 = vmatpush1.bf16.msra.mxu0 0
        %6493 = vmatprep.subr.bf16.mxu0 0
        %6494 = vmatpush1.bf16.msra.mxu0 0
        %6495 = vmatprep.subr.bf16.mxu0 0
        %6496 = vmatpush1.bf16.msra.mxu0 0
        %6497 = vmatprep.subr.bf16.mxu0 0
        %6498 = vmatpush1.bf16.msra.mxu0 0
        %6499 = vmatprep.mubr.bf16.mxu0 0
        %6500 = vmatmul.mubr.bf16.gmra.mrb[0].mxu0 %v6411
        %v6501 = vpop.f32.mrb[0].mxu0
        %v6502 = vadd.f32 0.0, %v6501
        %v6503 = vpop.f32.mrb[0].mxu0
        %v6504 = vpop.f32.mrb[0].mxu0
        %v6505 = vadd.f32 0.0, %v6504
        %v6506 = vpop.f32.mrb[0].mxu0
        %6507 = vmatprep.mubr.bf16.mxu0 0
        %6508 = vmatmul.mubr.bf16.gmra.mrb[0].mxu0 %v6412
        %v6509 = vpop.f32.mrb[0].mxu0
        %v6510 = vadd.f32 0.0, %v6509
        %v6511 = vpop.f32.mrb[0].mxu0
        %v6512 = vpop.f32.mrb[0].mxu0
        %v6513 = vadd.f32 0.0, %v6512
        %v6514 = vpop.f32.mrb[0].mxu0
        %6515 = vmatprep.mubr.bf16.mxu0 0
        %6516 = vmatmul.mubr.bf16.gmra.mrb[0].mxu0 %v6413
        %v6517 = vpop.f32.mrb[0].mxu0
        %v6518 = vadd.f32 0.0, %v6517
        %v6519 = vpop.f32.mrb[0].mxu0
        %v6520 = vpop.f32.mrb[0].mxu0
        %v6521 = vadd.f32 0.0, %v6520
        %v6522 = vpop.f32.mrb[0].mxu0
        %6523 = vmatprep.mubr.bf16.mxu0 0
        %6524 = vmatmul.mubr.bf16.gmra.mrb[0].mxu0 %v6414
        %v6525 = vpop.f32.mrb[0].mxu0
        %v6526 = vadd.f32 0.0, %v6525
        %v6527 = vpop.f32.mrb[0].mxu0
        %v6528 = vpop.f32.mrb[0].mxu0
        %v6529 = vadd.f32 0.0, %v6528
        %v6530 = vpop.f32.mrb[0].mxu0
        %6531 = vdwg.mxu0
        %v6532 = vadd.f32 %v6322, %v6502
        %v6533 = vadd.f32 %v6323, %v6505
        %v6534 = vadd.f32 %v6324, %v6510
        %v6535 = vadd.f32 %v6325, %v6513
        %v6536 = vadd.f32 %v6326, %v6518
        %v6537 = vadd.f32 %v6327, %v6521
        %v6538 = vadd.f32 %v6328, %v6526
        %v6539 = vadd.f32 %v6329, %v6529
        %s6540 = scalar_lea.vmem [#allocation4], 16
        %v6541 = vld [vmem:[%s6540] sm:$0xf]
        %v6542 = vld [vmem:[%s6540 + $0x8] sm:$0xf]
        %v6543 = vld [vmem:[%s6540 + $0x10] sm:$0xf]
        %v6544 = vld [vmem:[%s6540 + $0x18] sm:$0xf]
        %v6545 = vld [vmem:[%s6540 + $0x20] sm:$0xf]
        %v6546 = vld [vmem:[%s6540 + $0x28] sm:$0xf]
        %v6547 = vld [vmem:[%s6540 + $0x30] sm:$0xf]
        %v6548 = vld [vmem:[%s6540 + $0x38] sm:$0xf]
        %s6549 = scalar_lea.vmem %s5, 384
        %v6550 = vld [vmem:[%s6549] sm:$0xf]
        %v6551 = vld [vmem:[%s6549 + $0x4] sm:$0xf]
        %v6552 = vld [vmem:[%s6549 + $0x8] sm:$0xf]
        %v6553 = vld [vmem:[%s6549 + $0xc] sm:$0xf]
        %v6554 = vld [vmem:[%s6549 + $0x10] sm:$0xf]
        %v6555 = vld [vmem:[%s6549 + $0x14] sm:$0xf]
        %v6556 = vld [vmem:[%s6549 + $0x18] sm:$0xf]
        %v6557 = vld [vmem:[%s6549 + $0x1c] sm:$0xf]
        %v6558 = vld [vmem:[%s6549 + $0x20] sm:$0xf]
        %v6559 = vld [vmem:[%s6549 + $0x24] sm:$0xf]
        %v6560 = vld [vmem:[%s6549 + $0x28] sm:$0xf]
        %v6561 = vld [vmem:[%s6549 + $0x2c] sm:$0xf]
        %v6562 = vld [vmem:[%s6549 + $0x30] sm:$0xf]
        %v6563 = vld [vmem:[%s6549 + $0x34] sm:$0xf]
        %v6564 = vld [vmem:[%s6549 + $0x38] sm:$0xf]
        %v6565 = vld [vmem:[%s6549 + $0x3c] sm:$0xf]
        %v6574 = vunpack.c.l.b16 %v6541
        %v6575 = vunpack.c.l.b16 %v6542
        %v6576 = vunpack.c.l.b16 %v6543
        %v6577 = vunpack.c.l.b16 %v6544
        %v6578 = vunpack.c.l.b16 %v6545
        %v6579 = vunpack.c.l.b16 %v6546
        %v6580 = vunpack.c.l.b16 %v6547
        %v6581 = vunpack.c.l.b16 %v6548
        %v6582 = vpack.c.b16 %v6575, %v6574
        %v6583 = vpack.c.b16 %v6577, %v6576
        %v6584 = vpack.c.b16 %v6579, %v6578
        %v6585 = vpack.c.b16 %v6581, %v6580
        %v6606 = vunpack.c.l.b16 %v6550
        %v6607 = vunpack.c.l.b16 %v6551
        %v6608 = vunpack.c.l.b16 %v6552
        %v6609 = vunpack.c.l.b16 %v6553
        %v6610 = vunpack.c.l.b16 %v6554
        %v6611 = vunpack.c.l.b16 %v6555
        %v6612 = vunpack.c.l.b16 %v6556
        %v6613 = vunpack.c.l.b16 %v6557
        %v6614 = vunpack.c.l.b16 %v6558
        %v6615 = vunpack.c.l.b16 %v6559
        %v6616 = vunpack.c.l.b16 %v6560
        %v6617 = vunpack.c.l.b16 %v6561
        %v6618 = vunpack.c.l.b16 %v6562
        %v6619 = vunpack.c.l.b16 %v6563
        %v6620 = vunpack.c.l.b16 %v6564
        %v6621 = vunpack.c.l.b16 %v6565
        %v6622 = vpack.c.b16 %v6607, %v6606
        %v6623 = vpack.c.b16 %v6609, %v6608
        %v6624 = vpack.c.b16 %v6611, %v6610
        %v6625 = vpack.c.b16 %v6613, %v6612
        %v6626 = vpack.c.b16 %v6615, %v6614
        %v6627 = vpack.c.b16 %v6617, %v6616
        %v6628 = vpack.c.b16 %v6619, %v6618
        %v6629 = vpack.c.b16 %v6621, %v6620
        %6638 = vmatprep.subr.bf16.mxu0 0
        %6639 = vmatpush1.bf16.msra.mxu0 %v6622
        %6640 = vmatprep.subr.bf16.mxu0 0
        %6641 = vmatpush1.bf16.msra.mxu0 %v6623
        %6642 = vmatprep.subr.bf16.mxu0 0
        %6643 = vmatpush1.bf16.msra.mxu0 %v6624
        %6644 = vmatprep.subr.bf16.mxu0 0
        %6645 = vmatpush1.bf16.msra.mxu0 %v6625
        %6646 = vmatprep.subr.bf16.mxu0 0
        %6647 = vmatpush1.bf16.msra.mxu0 %v6626
        %6648 = vmatprep.subr.bf16.mxu0 0
        %6649 = vmatpush1.bf16.msra.mxu0 %v6627
        %6650 = vmatprep.subr.bf16.mxu0 0
        %6651 = vmatpush1.bf16.msra.mxu0 %v6628
        %6652 = vmatprep.subr.bf16.mxu0 0
        %6653 = vmatpush1.bf16.msra.mxu0 %v6629
        %6654 = vmatprep.subr.bf16.mxu0 0
        %6655 = vmatpush1.bf16.msra.mxu0 0
        %6656 = vmatprep.subr.bf16.mxu0 0
        %6657 = vmatpush1.bf16.msra.mxu0 0
        %6658 = vmatprep.subr.bf16.mxu0 0
        %6659 = vmatpush1.bf16.msra.mxu0 0
        %6660 = vmatprep.subr.bf16.mxu0 0
        %6661 = vmatpush1.bf16.msra.mxu0 0
        %6662 = vmatprep.subr.bf16.mxu0 0
        %6663 = vmatpush1.bf16.msra.mxu0 0
        %6664 = vmatprep.subr.bf16.mxu0 0
        %6665 = vmatpush1.bf16.msra.mxu0 0
        %6666 = vmatprep.subr.bf16.mxu0 0
        %6667 = vmatpush1.bf16.msra.mxu0 0
        %6668 = vmatprep.subr.bf16.mxu0 0
        %6669 = vmatpush1.bf16.msra.mxu0 0
        %6670 = vmatprep.mubr.bf16.mxu0 0
        %6671 = vmatmul.mubr.bf16.gmra.mrb[0].mxu0 %v6582
        %v6672 = vpop.f32.mrb[0].mxu0
        %v6673 = vadd.f32 0.0, %v6672
        %v6674 = vpop.f32.mrb[0].mxu0
        %v6675 = vpop.f32.mrb[0].mxu0
        %v6676 = vadd.f32 0.0, %v6675
        %v6677 = vpop.f32.mrb[0].mxu0
        %6678 = vmatprep.mubr.bf16.mxu0 0
        %6679 = vmatmul.mubr.bf16.gmra.mrb[0].mxu0 %v6583
        %v6680 = vpop.f32.mrb[0].mxu0
        %v6681 = vadd.f32 0.0, %v6680
        %v6682 = vpop.f32.mrb[0].mxu0
        %v6683 = vpop.f32.mrb[0].mxu0
        %v6684 = vadd.f32 0.0, %v6683
        %v6685 = vpop.f32.mrb[0].mxu0
        %6686 = vmatprep.mubr.bf16.mxu0 0
        %6687 = vmatmul.mubr.bf16.gmra.mrb[0].mxu0 %v6584
        %v6688 = vpop.f32.mrb[0].mxu0
        %v6689 = vadd.f32 0.0, %v6688
        %v6690 = vpop.f32.mrb[0].mxu0
        %v6691 = vpop.f32.mrb[0].mxu0
        %v6692 = vadd.f32 0.0, %v6691
        %v6693 = vpop.f32.mrb[0].mxu0
        %6694 = vmatprep.mubr.bf16.mxu0 0
        %6695 = vmatmul.mubr.bf16.gmra.mrb[0].mxu0 %v6585
        %v6696 = vpop.f32.mrb[0].mxu0
        %v6697 = vadd.f32 0.0, %v6696
        %v6698 = vpop.f32.mrb[0].mxu0
        %v6699 = vpop.f32.mrb[0].mxu0
        %v6700 = vadd.f32 0.0, %v6699
        %v6701 = vpop.f32.mrb[0].mxu0
        %6702 = vdwg.mxu0
        %v6703 = vadd.f32 %v6532, %v6673
        %v6704 = vadd.f32 %v6533, %v6676
        %v6705 = vadd.f32 %v6534, %v6681
        %v6706 = vadd.f32 %v6535, %v6684
        %v6707 = vadd.f32 %v6536, %v6689
        %v6708 = vadd.f32 %v6537, %v6692
        %v6709 = vadd.f32 %v6538, %v6697
        %v6710 = vadd.f32 %v6539, %v6700
        %v6711 = vld [vmem:[%s6540] sm:$0xf]
        %v6712 = vld [vmem:[%s6540 + $0x4] sm:$0x1]
        %v6713 = vld [vmem:[%s6540 + $0x8] sm:$0xf]
        %v6714 = vld [vmem:[%s6540 + $0xc] sm:$0x1]
        %v6715 = vld [vmem:[%s6540 + $0x10] sm:$0xf]
        %v6716 = vld [vmem:[%s6540 + $0x14] sm:$0x1]
        %v6717 = vld [vmem:[%s6540 + $0x18] sm:$0xf]
        %v6718 = vld [vmem:[%s6540 + $0x1c] sm:$0x1]
        %v6719 = vld [vmem:[%s6540 + $0x20] sm:$0xf]
        %v6720 = vld [vmem:[%s6540 + $0x24] sm:$0x1]
        %v6721 = vld [vmem:[%s6540 + $0x28] sm:$0xf]
        %v6722 = vld [vmem:[%s6540 + $0x2c] sm:$0x1]
        %v6723 = vld [vmem:[%s6540 + $0x30] sm:$0xf]
        %v6724 = vld [vmem:[%s6540 + $0x34] sm:$0x1]
        %v6725 = vld [vmem:[%s6540 + $0x38] sm:$0xf]
        %v6726 = vld [vmem:[%s6540 + $0x3c] sm:$0x1]
        %v6728 = vshrl.u32 %v6711, 16
        %v6730 = vrot.slane %v6728, 4
        %v6731 = vshll.u32 %v6711, 16
        %v6733 = vrot.slane %v6731, 5
        %v6734 = vor.u32 %v6730, %v6733
        %v6735 = vrot.slane %v6734, 4
        %v6737 = vshll.u32 %v6712, 16
        %v6739 = vrot.slane %v6737, 5
        %v6740 = vsel %vm1252, %v6735, %v6739
        %v6742 = vshrl.u32 %v6713, 16
        %v6744 = vrot.slane %v6742, 4
        %v6745 = vshll.u32 %v6713, 16
        %v6747 = vrot.slane %v6745, 5
        %v6748 = vor.u32 %v6744, %v6747
        %v6749 = vrot.slane %v6748, 4
        %v6751 = vshll.u32 %v6714, 16
        %v6753 = vrot.slane %v6751, 5
        %v6754 = vsel %vm1252, %v6749, %v6753
        %v6756 = vshrl.u32 %v6715, 16
        %v6758 = vrot.slane %v6756, 4
        %v6759 = vshll.u32 %v6715, 16
        %v6761 = vrot.slane %v6759, 5
        %v6762 = vor.u32 %v6758, %v6761
        %v6763 = vrot.slane %v6762, 4
        %v6765 = vshll.u32 %v6716, 16
        %v6767 = vrot.slane %v6765, 5
        %v6768 = vsel %vm1252, %v6763, %v6767
        %v6770 = vshrl.u32 %v6717, 16
        %v6772 = vrot.slane %v6770, 4
        %v6773 = vshll.u32 %v6717, 16
        %v6775 = vrot.slane %v6773, 5
        %v6776 = vor.u32 %v6772, %v6775
        %v6777 = vrot.slane %v6776, 4
        %v6779 = vshll.u32 %v6718, 16
        %v6781 = vrot.slane %v6779, 5
        %v6782 = vsel %vm1252, %v6777, %v6781
        %v6784 = vshrl.u32 %v6719, 16
        %v6786 = vrot.slane %v6784, 4
        %v6787 = vshll.u32 %v6719, 16
        %v6789 = vrot.slane %v6787, 5
        %v6790 = vor.u32 %v6786, %v6789
        %v6791 = vrot.slane %v6790, 4
        %v6793 = vshll.u32 %v6720, 16
        %v6795 = vrot.slane %v6793, 5
        %v6796 = vsel %vm1252, %v6791, %v6795
        %v6798 = vshrl.u32 %v6721, 16
        %v6800 = vrot.slane %v6798, 4
        %v6801 = vshll.u32 %v6721, 16
        %v6803 = vrot.slane %v6801, 5
        %v6804 = vor.u32 %v6800, %v6803
        %v6805 = vrot.slane %v6804, 4
        %v6807 = vshll.u32 %v6722, 16
        %v6809 = vrot.slane %v6807, 5
        %v6810 = vsel %vm1252, %v6805, %v6809
        %v6812 = vshrl.u32 %v6723, 16
        %v6814 = vrot.slane %v6812, 4
        %v6815 = vshll.u32 %v6723, 16
        %v6817 = vrot.slane %v6815, 5
        %v6818 = vor.u32 %v6814, %v6817
        %v6819 = vrot.slane %v6818, 4
        %v6821 = vshll.u32 %v6724, 16
        %v6823 = vrot.slane %v6821, 5
        %v6824 = vsel %vm1252, %v6819, %v6823
        %v6826 = vshrl.u32 %v6725, 16
        %v6828 = vrot.slane %v6826, 4
        %v6829 = vshll.u32 %v6725, 16
        %v6831 = vrot.slane %v6829, 5
        %v6832 = vor.u32 %v6828, %v6831
        %v6833 = vrot.slane %v6832, 4
        %v6835 = vshll.u32 %v6726, 16
        %v6837 = vrot.slane %v6835, 5
        %v6838 = vsel %vm1252, %v6833, %v6837
        %s6839 = scalar_lea.vmem %s5, 448
        %v6840 = vld [vmem:[%s6839] sm:$0xf]
        %v6841 = vld [vmem:[%s6839 + $0x4] sm:$0xf]
        %v6842 = vld [vmem:[%s6839 + $0x8] sm:$0xf]
        %v6843 = vld [vmem:[%s6839 + $0xc] sm:$0xf]
        %v6844 = vld [vmem:[%s6839 + $0x10] sm:$0xf]
        %v6845 = vld [vmem:[%s6839 + $0x14] sm:$0xf]
        %v6846 = vld [vmem:[%s6839 + $0x18] sm:$0xf]
        %v6847 = vld [vmem:[%s6839 + $0x1c] sm:$0xf]
        %v6848 = vld [vmem:[%s6839 + $0x20] sm:$0xf]
        %v6849 = vld [vmem:[%s6839 + $0x24] sm:$0xf]
        %v6850 = vld [vmem:[%s6839 + $0x28] sm:$0xf]
        %v6851 = vld [vmem:[%s6839 + $0x2c] sm:$0xf]
        %v6852 = vld [vmem:[%s6839 + $0x30] sm:$0xf]
        %v6853 = vld [vmem:[%s6839 + $0x34] sm:$0xf]
        %v6854 = vld [vmem:[%s6839 + $0x38] sm:$0xf]
        %v6855 = vld [vmem:[%s6839 + $0x3c] sm:$0xf]
        %v6856 = vunpack.c.l.b16 %v6740
        %v6857 = vunpack.c.l.b16 %v6754
        %v6858 = vunpack.c.l.b16 %v6768
        %v6859 = vunpack.c.l.b16 %v6782
        %v6860 = vunpack.c.l.b16 %v6796
        %v6861 = vunpack.c.l.b16 %v6810
        %v6862 = vunpack.c.l.b16 %v6824
        %v6863 = vunpack.c.l.b16 %v6838
        %v6864 = vpack.c.b16 %v6857, %v6856
        %v6865 = vpack.c.b16 %v6859, %v6858
        %v6866 = vpack.c.b16 %v6861, %v6860
        %v6867 = vpack.c.b16 %v6863, %v6862
        %v6888 = vunpack.c.l.b16 %v6840
        %v6889 = vunpack.c.l.b16 %v6841
        %v6890 = vunpack.c.l.b16 %v6842
        %v6891 = vunpack.c.l.b16 %v6843
        %v6892 = vunpack.c.l.b16 %v6844
        %v6893 = vunpack.c.l.b16 %v6845
        %v6894 = vunpack.c.l.b16 %v6846
        %v6895 = vunpack.c.l.b16 %v6847
        %v6896 = vunpack.c.l.b16 %v6848
        %v6897 = vunpack.c.l.b16 %v6849
        %v6898 = vunpack.c.l.b16 %v6850
        %v6899 = vunpack.c.l.b16 %v6851
        %v6900 = vunpack.c.l.b16 %v6852
        %v6901 = vunpack.c.l.b16 %v6853
        %v6902 = vunpack.c.l.b16 %v6854
        %v6903 = vunpack.c.l.b16 %v6855
        %v6904 = vpack.c.b16 %v6889, %v6888
        %v6905 = vpack.c.b16 %v6891, %v6890
        %v6906 = vpack.c.b16 %v6893, %v6892
        %v6907 = vpack.c.b16 %v6895, %v6894
        %v6908 = vpack.c.b16 %v6897, %v6896
        %v6909 = vpack.c.b16 %v6899, %v6898
        %v6910 = vpack.c.b16 %v6901, %v6900
        %v6911 = vpack.c.b16 %v6903, %v6902
        %6920 = vmatprep.subr.bf16.mxu0 0
        %6921 = vmatpush1.bf16.msra.mxu0 %v6904
        %6922 = vmatprep.subr.bf16.mxu0 0
        %6923 = vmatpush1.bf16.msra.mxu0 %v6905
        %6924 = vmatprep.subr.bf16.mxu0 0
        %6925 = vmatpush1.bf16.msra.mxu0 %v6906
        %6926 = vmatprep.subr.bf16.mxu0 0
        %6927 = vmatpush1.bf16.msra.mxu0 %v6907
        %6928 = vmatprep.subr.bf16.mxu0 0
        %6929 = vmatpush1.bf16.msra.mxu0 %v6908
        %6930 = vmatprep.subr.bf16.mxu0 0
        %6931 = vmatpush1.bf16.msra.mxu0 %v6909
        %6932 = vmatprep.subr.bf16.mxu0 0
        %6933 = vmatpush1.bf16.msra.mxu0 %v6910
        %6934 = vmatprep.subr.bf16.mxu0 0
        %6935 = vmatpush1.bf16.msra.mxu0 %v6911
        %6936 = vmatprep.subr.bf16.mxu0 0
        %6937 = vmatpush1.bf16.msra.mxu0 0
        %6938 = vmatprep.subr.bf16.mxu0 0
        %6939 = vmatpush1.bf16.msra.mxu0 0
        %6940 = vmatprep.subr.bf16.mxu0 0
        %6941 = vmatpush1.bf16.msra.mxu0 0
        %6942 = vmatprep.subr.bf16.mxu0 0
        %6943 = vmatpush1.bf16.msra.mxu0 0
        %6944 = vmatprep.subr.bf16.mxu0 0
        %6945 = vmatpush1.bf16.msra.mxu0 0
        %6946 = vmatprep.subr.bf16.mxu0 0
        %6947 = vmatpush1.bf16.msra.mxu0 0
        %6948 = vmatprep.subr.bf16.mxu0 0
        %6949 = vmatpush1.bf16.msra.mxu0 0
        %6950 = vmatprep.subr.bf16.mxu0 0
        %6951 = vmatpush1.bf16.msra.mxu0 0
        %6952 = vmatprep.mubr.bf16.mxu0 0
        %6953 = vmatmul.mubr.bf16.gmra.mrb[0].mxu0 %v6864
        %v6954 = vpop.f32.mrb[0].mxu0
        %v6955 = vadd.f32 0.0, %v6954
        %v6956 = vpop.f32.mrb[0].mxu0
        %v6957 = vpop.f32.mrb[0].mxu0
        %v6958 = vadd.f32 0.0, %v6957
        %v6959 = vpop.f32.mrb[0].mxu0
        %6960 = vmatprep.mubr.bf16.mxu0 0
        %6961 = vmatmul.mubr.bf16.gmra.mrb[0].mxu0 %v6865
        %v6962 = vpop.f32.mrb[0].mxu0
        %v6963 = vadd.f32 0.0, %v6962
        %v6964 = vpop.f32.mrb[0].mxu0
        %v6965 = vpop.f32.mrb[0].mxu0
        %v6966 = vadd.f32 0.0, %v6965
        %v6967 = vpop.f32.mrb[0].mxu0
        %6968 = vmatprep.mubr.bf16.mxu0 0
        %6969 = vmatmul.mubr.bf16.gmra.mrb[0].mxu0 %v6866
        %v6970 = vpop.f32.mrb[0].mxu0
        %v6971 = vadd.f32 0.0, %v6970
        %v6972 = vpop.f32.mrb[0].mxu0
        %v6973 = vpop.f32.mrb[0].mxu0
        %v6974 = vadd.f32 0.0, %v6973
        %v6975 = vpop.f32.mrb[0].mxu0
        %6976 = vmatprep.mubr.bf16.mxu0 0
        %6977 = vmatmul.mubr.bf16.gmra.mrb[0].mxu0 %v6867
        %v6978 = vpop.f32.mrb[0].mxu0
        %v6979 = vadd.f32 0.0, %v6978
        %v6980 = vpop.f32.mrb[0].mxu0
        %v6981 = vpop.f32.mrb[0].mxu0
        %v6982 = vadd.f32 0.0, %v6981
        %v6983 = vpop.f32.mrb[0].mxu0
        %6984 = vdwg.mxu0
        %v6985 = vadd.f32 %v6703, %v6955
        %v6986 = vadd.f32 %v6704, %v6958
        %v6987 = vadd.f32 %v6705, %v6963
        %v6988 = vadd.f32 %v6706, %v6966
        %v6989 = vadd.f32 %v6707, %v6971
        %v6990 = vadd.f32 %v6708, %v6974
        %v6991 = vadd.f32 %v6709, %v6979
        %v6992 = vadd.f32 %v6710, %v6982
        %v6993 = vld [vmem:[%s6540] sm:$0xe]
        %v6994 = vld [vmem:[%s6540 + $0x8] sm:$0xe]
        %v6995 = vld [vmem:[%s6540 + $0x10] sm:$0xe]
        %v6996 = vld [vmem:[%s6540 + $0x18] sm:$0xe]
        %v6997 = vld [vmem:[%s6540 + $0x20] sm:$0xe]
        %v6998 = vld [vmem:[%s6540 + $0x28] sm:$0xe]
        %v6999 = vld [vmem:[%s6540 + $0x30] sm:$0xe]
        %v7000 = vld [vmem:[%s6540 + $0x38] sm:$0xe]
        %v7017 = vrot.slane %v6993, 5
        %v7018 = vrot.slane %v7017, 4
        %v7019 = vrot.slane %v6712, 5
        %v7020 = vsel %vm1842, %v7018, %v7019
        %v7021 = vrot.slane %v6994, 5
        %v7022 = vrot.slane %v7021, 4
        %v7023 = vrot.slane %v6714, 5
        %v7024 = vsel %vm1842, %v7022, %v7023
        %v7025 = vrot.slane %v6995, 5
        %v7026 = vrot.slane %v7025, 4
        %v7027 = vrot.slane %v6716, 5
        %v7028 = vsel %vm1842, %v7026, %v7027
        %v7029 = vrot.slane %v6996, 5
        %v7030 = vrot.slane %v7029, 4
        %v7031 = vrot.slane %v6718, 5
        %v7032 = vsel %vm1842, %v7030, %v7031
        %v7033 = vrot.slane %v6997, 5
        %v7034 = vrot.slane %v7033, 4
        %v7035 = vrot.slane %v6720, 5
        %v7036 = vsel %vm1842, %v7034, %v7035
        %v7037 = vrot.slane %v6998, 5
        %v7038 = vrot.slane %v7037, 4
        %v7039 = vrot.slane %v6722, 5
        %v7040 = vsel %vm1842, %v7038, %v7039
        %v7041 = vrot.slane %v6999, 5
        %v7042 = vrot.slane %v7041, 4
        %v7043 = vrot.slane %v6724, 5
        %v7044 = vsel %vm1842, %v7042, %v7043
        %v7045 = vrot.slane %v7000, 5
        %v7046 = vrot.slane %v7045, 4
        %v7047 = vrot.slane %v6726, 5
        %v7048 = vsel %vm1842, %v7046, %v7047
        %s7049 = scalar_lea.vmem %s5, 512
        %v7050 = vld [vmem:[%s7049] sm:$0xf]
        %v7051 = vld [vmem:[%s7049 + $0x4] sm:$0xf]
        %v7052 = vld [vmem:[%s7049 + $0x8] sm:$0xf]
        %v7053 = vld [vmem:[%s7049 + $0xc] sm:$0xf]
        %v7054 = vld [vmem:[%s7049 + $0x10] sm:$0xf]
        %v7055 = vld [vmem:[%s7049 + $0x14] sm:$0xf]
        %v7056 = vld [vmem:[%s7049 + $0x18] sm:$0xf]
        %v7057 = vld [vmem:[%s7049 + $0x1c] sm:$0xf]
        %v7058 = vld [vmem:[%s7049 + $0x20] sm:$0xf]
        %v7059 = vld [vmem:[%s7049 + $0x24] sm:$0xf]
        %v7060 = vld [vmem:[%s7049 + $0x28] sm:$0xf]
        %v7061 = vld [vmem:[%s7049 + $0x2c] sm:$0xf]
        %v7062 = vld [vmem:[%s7049 + $0x30] sm:$0xf]
        %v7063 = vld [vmem:[%s7049 + $0x34] sm:$0xf]
        %v7064 = vld [vmem:[%s7049 + $0x38] sm:$0xf]
        %v7065 = vld [vmem:[%s7049 + $0x3c] sm:$0xf]
        %v7066 = vunpack.c.l.b16 %v7020
        %v7067 = vunpack.c.l.b16 %v7024
        %v7068 = vunpack.c.l.b16 %v7028
        %v7069 = vunpack.c.l.b16 %v7032
        %v7070 = vunpack.c.l.b16 %v7036
        %v7071 = vunpack.c.l.b16 %v7040
        %v7072 = vunpack.c.l.b16 %v7044
        %v7073 = vunpack.c.l.b16 %v7048
        %v7074 = vpack.c.b16 %v7067, %v7066
        %v7075 = vpack.c.b16 %v7069, %v7068
        %v7076 = vpack.c.b16 %v7071, %v7070
        %v7077 = vpack.c.b16 %v7073, %v7072
        %v7098 = vunpack.c.l.b16 %v7050
        %v7099 = vunpack.c.l.b16 %v7051
        %v7100 = vunpack.c.l.b16 %v7052
        %v7101 = vunpack.c.l.b16 %v7053
        %v7102 = vunpack.c.l.b16 %v7054
        %v7103 = vunpack.c.l.b16 %v7055
        %v7104 = vunpack.c.l.b16 %v7056
        %v7105 = vunpack.c.l.b16 %v7057
        %v7106 = vunpack.c.l.b16 %v7058
        %v7107 = vunpack.c.l.b16 %v7059
        %v7108 = vunpack.c.l.b16 %v7060
        %v7109 = vunpack.c.l.b16 %v7061
        %v7110 = vunpack.c.l.b16 %v7062
        %v7111 = vunpack.c.l.b16 %v7063
        %v7112 = vunpack.c.l.b16 %v7064
        %v7113 = vunpack.c.l.b16 %v7065
        %v7114 = vpack.c.b16 %v7099, %v7098
        %v7115 = vpack.c.b16 %v7101, %v7100
        %v7116 = vpack.c.b16 %v7103, %v7102
        %v7117 = vpack.c.b16 %v7105, %v7104
        %v7118 = vpack.c.b16 %v7107, %v7106
        %v7119 = vpack.c.b16 %v7109, %v7108
        %v7120 = vpack.c.b16 %v7111, %v7110
        %v7121 = vpack.c.b16 %v7113, %v7112
        %7130 = vmatprep.subr.bf16.mxu0 0
        %7131 = vmatpush1.bf16.msra.mxu0 %v7114
        %7132 = vmatprep.subr.bf16.mxu0 0
        %7133 = vmatpush1.bf16.msra.mxu0 %v7115
        %7134 = vmatprep.subr.bf16.mxu0 0
        %7135 = vmatpush1.bf16.msra.mxu0 %v7116
        %7136 = vmatprep.subr.bf16.mxu0 0
        %7137 = vmatpush1.bf16.msra.mxu0 %v7117
        %7138 = vmatprep.subr.bf16.mxu0 0
        %7139 = vmatpush1.bf16.msra.mxu0 %v7118
        %7140 = vmatprep.subr.bf16.mxu0 0
        %7141 = vmatpush1.bf16.msra.mxu0 %v7119
        %7142 = vmatprep.subr.bf16.mxu0 0
        %7143 = vmatpush1.bf16.msra.mxu0 %v7120
        %7144 = vmatprep.subr.bf16.mxu0 0
        %7145 = vmatpush1.bf16.msra.mxu0 %v7121
        %7146 = vmatprep.subr.bf16.mxu0 0
        %7147 = vmatpush1.bf16.msra.mxu0 0
        %7148 = vmatprep.subr.bf16.mxu0 0
        %7149 = vmatpush1.bf16.msra.mxu0 0
        %7150 = vmatprep.subr.bf16.mxu0 0
        %7151 = vmatpush1.bf16.msra.mxu0 0
        %7152 = vmatprep.subr.bf16.mxu0 0
        %7153 = vmatpush1.bf16.msra.mxu0 0
        %7154 = vmatprep.subr.bf16.mxu0 0
        %7155 = vmatpush1.bf16.msra.mxu0 0
        %7156 = vmatprep.subr.bf16.mxu0 0
        %7157 = vmatpush1.bf16.msra.mxu0 0
        %7158 = vmatprep.subr.bf16.mxu0 0
        %7159 = vmatpush1.bf16.msra.mxu0 0
        %7160 = vmatprep.subr.bf16.mxu0 0
        %7161 = vmatpush1.bf16.msra.mxu0 0
        %7162 = vmatprep.mubr.bf16.mxu0 0
        %7163 = vmatmul.mubr.bf16.gmra.mrb[0].mxu0 %v7074
        %v7164 = vpop.f32.mrb[0].mxu0
        %v7165 = vadd.f32 0.0, %v7164
        %v7166 = vpop.f32.mrb[0].mxu0
        %v7167 = vpop.f32.mrb[0].mxu0
        %v7168 = vadd.f32 0.0, %v7167
        %v7169 = vpop.f32.mrb[0].mxu0
        %7170 = vmatprep.mubr.bf16.mxu0 0
        %7171 = vmatmul.mubr.bf16.gmra.mrb[0].mxu0 %v7075
        %v7172 = vpop.f32.mrb[0].mxu0
        %v7173 = vadd.f32 0.0, %v7172
        %v7174 = vpop.f32.mrb[0].mxu0
        %v7175 = vpop.f32.mrb[0].mxu0
        %v7176 = vadd.f32 0.0, %v7175
        %v7177 = vpop.f32.mrb[0].mxu0
        %7178 = vmatprep.mubr.bf16.mxu0 0
        %7179 = vmatmul.mubr.bf16.gmra.mrb[0].mxu0 %v7076
        %v7180 = vpop.f32.mrb[0].mxu0
        %v7181 = vadd.f32 0.0, %v7180
        %v7182 = vpop.f32.mrb[0].mxu0
        %v7183 = vpop.f32.mrb[0].mxu0
        %v7184 = vadd.f32 0.0, %v7183
        %v7185 = vpop.f32.mrb[0].mxu0
        %7186 = vmatprep.mubr.bf16.mxu0 0
        %7187 = vmatmul.mubr.bf16.gmra.mrb[0].mxu0 %v7077
        %v7188 = vpop.f32.mrb[0].mxu0
        %v7189 = vadd.f32 0.0, %v7188
        %v7190 = vpop.f32.mrb[0].mxu0
        %v7191 = vpop.f32.mrb[0].mxu0
        %v7192 = vadd.f32 0.0, %v7191
        %v7193 = vpop.f32.mrb[0].mxu0
        %7194 = vdwg.mxu0
        %v7195 = vadd.f32 %v6985, %v7165
        %v7196 = vadd.f32 %v6986, %v7168
        %v7197 = vadd.f32 %v6987, %v7173
        %v7198 = vadd.f32 %v6988, %v7176
        %v7199 = vadd.f32 %v6989, %v7181
        %v7200 = vadd.f32 %v6990, %v7184
        %v7201 = vadd.f32 %v6991, %v7189
        %v7202 = vadd.f32 %v6992, %v7192
        %v7203 = vadd.f32 %v7195, %v7196
        %v7204 = vadd.f32 %v7203, %v7197
        %v7205 = vadd.f32 %v7204, %v7198
        %v7206 = vadd.f32 %v7205, %v7199
        %v7207 = vadd.f32 %v7206, %v7200
        %v7208 = vadd.f32 %v7207, %v7201
        %v7209 = vadd.f32 %v7208, %v7202
        %v7210 = vrot.slane %v7209, 4
        %v7211 = vadd.f32 %v7209, %v7210
        %v7212 = vrot.slane %v7211, 2
        %v7213 = vadd.f32 %v7211, %v7212
        %v7214 = vrot.slane %v7213, 1
        %v7215 = vadd.f32 %v7213, %v7214
        %v7216 = vmul.f32 %v7195, %v7195
        %v7217 = vmul.f32 %v7196, %v7196
        %v7218 = vmul.f32 %v7197, %v7197
        %v7219 = vmul.f32 %v7198, %v7198
        %v7220 = vmul.f32 %v7199, %v7199
        %v7221 = vmul.f32 %v7200, %v7200
        %v7222 = vmul.f32 %v7201, %v7201
        %v7223 = vmul.f32 %v7202, %v7202
        %v7224 = vadd.f32 %v7216, %v7217
        %v7225 = vadd.f32 %v7224, %v7218
        %v7226 = vadd.f32 %v7225, %v7219
        %v7227 = vadd.f32 %v7226, %v7220
        %v7228 = vadd.f32 %v7227, %v7221
        %v7229 = vadd.f32 %v7228, %v7222
        %v7230 = vadd.f32 %v7229, %v7223
        %v7231 = vrot.slane %v7230, 4
        %v7232 = vadd.f32 %v7230, %v7231
        %v7233 = vrot.slane %v7232, 2
        %v7234 = vadd.f32 %v7232, %v7233
        %v7235 = vrot.slane %v7234, 1
        %v7236 = vadd.f32 %v7234, %v7235
        %v7237 = vmul.f32 %v7215, %v5028
        %v7238 = vmul.f32 %v7236, %v5028
        %v7239 = vmul.f32 %v7237, %v7237
        %v7240 = vsub.f32 %v7238, %v7239
        %v7241 = vmax.f32 %v7240, 0.0
        %v7242 = vsub.f32 %v7195, %v7237
        %v7243 = vsub.f32 %v7196, %v7237
        %v7244 = vsub.f32 %v7197, %v7237
        %v7245 = vsub.f32 %v7198, %v7237
        %v7246 = vsub.f32 %v7199, %v7237
        %v7247 = vsub.f32 %v7200, %v7237
        %v7248 = vsub.f32 %v7201, %v7237
        %v7249 = vsub.f32 %v7202, %v7237
        %v7250 = vadd.f32 %v7241, 1e-05
        %v7251 = vrsqrt.pop %v7250
        %v7252 = vmul.f32 %v7242, %v7251
        %v7253 = vmul.f32 %v7243, %v7251
        %v7254 = vmul.f32 %v7244, %v7251
        %v7255 = vmul.f32 %v7245, %v7251
        %v7256 = vmul.f32 %v7246, %v7251
        %v7257 = vmul.f32 %v7247, %v7251
        %v7258 = vmul.f32 %v7248, %v7251
        %v7259 = vmul.f32 %v7249, %v7251
        %v7260 = vmax.f32 %v7252, 0.0
        %v7261 = vmax.f32 %v7253, 0.0
        %v7262 = vmax.f32 %v7254, 0.0
        %v7263 = vmax.f32 %v7255, 0.0
        %v7264 = vmax.f32 %v7256, 0.0
        %v7265 = vmax.f32 %v7257, 0.0
        %v7266 = vmax.f32 %v7258, 0.0
        %v7267 = vmax.f32 %v7259, 0.0
        %v7268 = vld [vmem:[%s6] sm:$0xff]
        %v7269 = vld [vmem:[%s6 + $0x8] sm:$0xff]
        %v7270 = vld [vmem:[%s6 + $0x10] sm:$0xff]
        %v7271 = vld [vmem:[%s6 + $0x18] sm:$0xff]
        %v7272 = vld [vmem:[%s6 + $0x20] sm:$0xff]
        %v7273 = vld [vmem:[%s6 + $0x28] sm:$0xff]
        %v7274 = vld [vmem:[%s6 + $0x30] sm:$0xff]
        %v7275 = vld [vmem:[%s6 + $0x38] sm:$0xff]
        %v7276 = vld [vmem:[%s6 + $0x40] sm:$0xff]
        %v7277 = vld [vmem:[%s6 + $0x48] sm:$0xff]
        %v7278 = vld [vmem:[%s6 + $0x50] sm:$0xff]
        %v7279 = vld [vmem:[%s6 + $0x58] sm:$0xff]
        %v7280 = vld [vmem:[%s6 + $0x60] sm:$0xff]
        %v7281 = vld [vmem:[%s6 + $0x68] sm:$0xff]
        %v7282 = vld [vmem:[%s6 + $0x70] sm:$0xff]
        %v7283 = vld [vmem:[%s6 + $0x78] sm:$0xff]
        %v7284 = vld [vmem:[%s7] sm:$0x1]
        %v7286 = vlaneseq
        %v7287 = vshrl.u32 %v7286, 7
        %v7288 = vsub.s32 0, %v7287
        %v7289 = vrot.slane %v7284, %v7288
        %7291 = vmatprep.subr.mxu0 0.0
        %7292 = vmatpush1.msra.mxu0 %v7268
        %7293 = vmatprep.subr.mxu0 0.0
        %7294 = vmatpush1.msra.mxu0 %v7269
        %7295 = vmatprep.subr.mxu0 0.0
        %7296 = vmatpush1.msra.mxu0 %v7270
        %7297 = vmatprep.subr.mxu0 0.0
        %7298 = vmatpush1.msra.mxu0 %v7271
        %7299 = vmatprep.subr.mxu0 0.0
        %7300 = vmatpush1.msra.mxu0 %v7272
        %7301 = vmatprep.subr.mxu0 0.0
        %7302 = vmatpush1.msra.mxu0 %v7273
        %7303 = vmatprep.subr.mxu0 0.0
        %7304 = vmatpush1.msra.mxu0 %v7274
        %7305 = vmatprep.subr.mxu0 0.0
        %7306 = vmatpush1.msra.mxu0 %v7275
        %7307 = vmatprep.subr.mxu0 0.0
        %7308 = vmatpush1.msra.mxu0 %v7276
        %7309 = vmatprep.subr.mxu0 0.0
        %7310 = vmatpush1.msra.mxu0 %v7277
        %7311 = vmatprep.subr.mxu0 0.0
        %7312 = vmatpush1.msra.mxu0 %v7278
        %7313 = vmatprep.subr.mxu0 0.0
        %7314 = vmatpush1.msra.mxu0 %v7279
        %7315 = vmatprep.subr.mxu0 0.0
        %7316 = vmatpush1.msra.mxu0 %v7280
        %7317 = vmatprep.subr.mxu0 0.0
        %7318 = vmatpush1.msra.mxu0 %v7281
        %7319 = vmatprep.subr.mxu0 0.0
        %7320 = vmatpush1.msra.mxu0 %v7282
        %7321 = vmatprep.subr.mxu0 0.0
        %7322 = vmatpush1.msra.mxu0 %v7283
        %7323 = vmatprep.subr.mxu0 0.0
        %7324 = vmatpush1.msra.mxu0 0.0
        %7325 = vmatprep.subr.mxu0 0.0
        %7326 = vmatpush1.msra.mxu0 0.0
        %7327 = vmatprep.subr.mxu0 0.0
        %7328 = vmatpush1.msra.mxu0 0.0
        %7329 = vmatprep.subr.mxu0 0.0
        %7330 = vmatpush1.msra.mxu0 0.0
        %7331 = vmatprep.subr.mxu0 0.0
        %7332 = vmatpush1.msra.mxu0 0.0
        %7333 = vmatprep.subr.mxu0 0.0
        %7334 = vmatpush1.msra.mxu0 0.0
        %7335 = vmatprep.subr.mxu0 0.0
        %7336 = vmatpush1.msra.mxu0 0.0
        %7337 = vmatprep.subr.mxu0 0.0
        %7338 = vmatpush1.msra.mxu0 0.0
        %7339 = vmatprep.subr.mxu0 0.0
        %7340 = vmatpush1.msra.mxu0 0.0
        %7341 = vmatprep.subr.mxu0 0.0
        %7342 = vmatpush1.msra.mxu0 0.0
        %7343 = vmatprep.subr.mxu0 0.0
        %7344 = vmatpush1.msra.mxu0 0.0
        %7345 = vmatprep.subr.mxu0 0.0
        %7346 = vmatpush1.msra.mxu0 0.0
        %7347 = vmatprep.subr.mxu0 0.0
        %7348 = vmatpush1.msra.mxu0 0.0
        %7349 = vmatprep.subr.mxu0 0.0
        %7350 = vmatpush1.msra.mxu0 0.0
        %7351 = vmatprep.subr.mxu0 0.0
        %7352 = vmatpush1.msra.mxu0 0.0
        %7353 = vmatprep.subr.mxu0 0.0
        %7354 = vmatpush1.msra.mxu0 0.0
        %7355 = vmatprep.mubr.f32.mxu0 0.0
        %7356 = vmatmul.mubr.f32.gmra.mrb[0].mxu0 %v7260
        %v7357 = vpop.f32.mrb[0].mxu0
        %v7358 = vadd.f32 %v7289, %v7357
        %v7359 = vpop.f32.mrb[0].mxu0
        %7360 = vmatprep.mubr.f32.mxu0 0.0
        %7361 = vmatmul.mubr.f32.gmra.mrb[0].mxu0 %v7261
        %v7362 = vpop.f32.mrb[0].mxu0
        %v7363 = vadd.f32 %v7289, %v7362
        %v7364 = vpop.f32.mrb[0].mxu0
        %7365 = vmatprep.mubr.f32.mxu0 0.0
        %7366 = vmatmul.mubr.f32.gmra.mrb[0].mxu0 %v7262
        %v7367 = vpop.f32.mrb[0].mxu0
        %v7368 = vadd.f32 %v7289, %v7367
        %v7369 = vpop.f32.mrb[0].mxu0
        %7370 = vmatprep.mubr.f32.mxu0 0.0
        %7371 = vmatmul.mubr.f32.gmra.mrb[0].mxu0 %v7263
        %v7372 = vpop.f32.mrb[0].mxu0
        %v7373 = vadd.f32 %v7289, %v7372
        %v7374 = vpop.f32.mrb[0].mxu0
        %7375 = vmatprep.mubr.f32.mxu0 0.0
        %7376 = vmatmul.mubr.f32.gmra.mrb[0].mxu0 %v7264
        %v7377 = vpop.f32.mrb[0].mxu0
        %v7378 = vadd.f32 %v7289, %v7377
        %v7379 = vpop.f32.mrb[0].mxu0
        %7380 = vmatprep.mubr.f32.mxu0 0.0
        %7381 = vmatmul.mubr.f32.gmra.mrb[0].mxu0 %v7265
        %v7382 = vpop.f32.mrb[0].mxu0
        %v7383 = vadd.f32 %v7289, %v7382
        %v7384 = vpop.f32.mrb[0].mxu0
        %7385 = vmatprep.mubr.f32.mxu0 0.0
        %7386 = vmatmul.mubr.f32.gmra.mrb[0].mxu0 %v7266
        %v7387 = vpop.f32.mrb[0].mxu0
        %v7388 = vadd.f32 %v7289, %v7387
        %v7389 = vpop.f32.mrb[0].mxu0
        %7390 = vmatprep.mubr.f32.mxu0 0.0
        %7391 = vmatmul.mubr.f32.gmra.mrb[0].mxu0 %v7267
        %v7392 = vpop.f32.mrb[0].mxu0
        %v7393 = vadd.f32 %v7289, %v7392
        %v7394 = vpop.f32.mrb[0].mxu0
        %7395 = vdwg.mxu0
        %7396 = vst.msk [vmem:[%s313] sm:$0xff] %vm1034, %v7358
        %7397 = vst.msk [vmem:[%s313 + $0x8] sm:$0xff] %vm1034, %v7363
        %7398 = vst.msk [vmem:[%s313 + $0x10] sm:$0xff] %vm1034, %v7368
        %7399 = vst.msk [vmem:[%s313 + $0x18] sm:$0xff] %vm1034, %v7373
        %7400 = vst.msk [vmem:[%s313 + $0x20] sm:$0xff] %vm1034, %v7378
        %7401 = vst.msk [vmem:[%s313 + $0x28] sm:$0xff] %vm1034, %v7383
        %7402 = vst.msk [vmem:[%s313 + $0x30] sm:$0xff] %vm1034, %v7388
        %7403 = vst.msk [vmem:[%s313 + $0x38] sm:$0xff] %vm1034, %v7393
        %s7404 = sand.u32 %s208, 1
        %s7405 = scalar_lea.sflag [#allocation6], %s7404
        %s7406 = sand.u32 %s208, 1
        %s7407 = smul.addr %s7406, 64
        %s7408 = scalar_lea.vmem [#allocation5], %s7407
        // Predicated region
        $region53: #{encoder_eff_forward.1} parent=51 // pred_check
          %p7409 = pneg %p218
        $region54: #{encoder_eff_forward.1} parent=51 // pred_check_branch
          %7411 = sbr.rel (%p7409) target = $region56
        $region55: #{encoder_eff_forward.1} parent=51 // pred_region
          %s7413 = ssub.s32 1024, 1024
          %7414 = vsyncadd %s7405, %s7413
          %s7415 = smul.addr %s22, 8
          %s7416 = smul.addr %s7415, 128
          %s7417 = scalar_lea.hbm %s8, %s7416
          %s7418 = sshll.u32 %s7408, 4
          %s7419 = int_to_ptr.vmem [resolvable:$true] %s7418
          %7424 = dma.vmem_to_hbm [thread:$0]  %s7419, 1024, %s7417, %s7405, 128, 128, 8
        $region56: #{encoder_eff_forward.1} parent=51 // pred_fallthru
          _
      $region52: #{encoder_eff_forward.1} parent=5 // pred_fallthru
        _
      %p7425 = scmp.le.s32.totalorder 2, %s17
      // Predicated region
      $region57: #{encoder_eff_forward.1} parent=5 // pred_check
        %p7426 = pneg %p7425
      $region58: #{encoder_eff_forward.1} parent=5 // pred_check_branch
        %7428 = sbr.rel (%p7426) target = $region60
      $region59: #{encoder_eff_forward.1} parent=5 // pred_region
        %s7429 = ssub.s32 %s17, 2
        // Predicated region
        $region61: #{encoder_eff_forward.1} parent=59 // pred_check
          %p7430 = pneg %p224
        $region62: #{encoder_eff_forward.1} parent=59 // pred_check_branch
          %7432 = sbr.rel (%p7430) target = $region64
        $region63: #{encoder_eff_forward.1} parent=59 // pred_region
          %s7433 = sand.u32 %s209, 1
          %s7434 = scalar_lea.sflag [#allocation6], %s7433
          %s7435 = sand.u32 %s209, 1
          %s7436 = smul.addr %s7435, 64
          %s7437 = scalar_lea.vmem [#allocation5], %s7436
          %7438 = dma.done %s7434, 1024
        $region64: #{encoder_eff_forward.1} parent=59 // pred_fallthru
          _
      $region60: #{encoder_eff_forward.1} parent=5 // pred_fallthru
        _
    $region6: #{encoder_eff_forward.1} parent=1 // loop_footer
      %s21 = sadd.s32 1, %s17
    $region7: #{encoder_eff_forward.1} parent=1 // loop_footer_branch
      %16 = sbr.rel target = $region3
    $region8: #{encoder_eff_forward.1} parent=1 // loop_exit
      _
    %7439 = vsyncpa [#allocation6], 1
    %s7440 = scalar_lea.sflag [#allocation6], 1
    %7441 = vsyncpa %s7440, 1

</llo_original>
